<compile_context>
chip_gen: v6e
topology: v6e:2x2x1
jax: 0.10.0
libtpu: 0.0.40
codegen_flags: <defaults>
</compile_context>

<pallas_src>
import functools

import numpy as np
import jax
import jax.numpy as jnp
from jax import lax
from jax.experimental import pallas as pl
from jax.experimental.pallas import tpu as pltpu

BN_EPS = 1e-5
_DOT = functools.partial(jnp.dot, preferred_element_type=jnp.float32,
                         precision=lax.Precision.HIGHEST)


def _make_inception2_kernel(B, H, W, P, L):
    Wp = W // L
    Ht = 3 * P + 4 * H
    inv_L = 1.0 / L
    inv_Lm1 = 1.0 / (L - 1)
    n_pool = float(B * Ht)

    def kernel(xt_ref, xit_ref, xjt_ref, xmt_ref, st_ref, dwt_ref, sbc_ref, bn_ref,
               o_rows_ref, o_pairs_ref):
        XT = xt_ref[...]      # (W, B*H)   raw rows, time on sublanes
        XIT = xit_ref[...]    # (W, B*P)   pair lhs rows
        XJT = xjt_ref[...]    # (W, B*P)   pair rhs rows
        XMT = xmt_ref[...]    # (W, B*H)   gathered input for the ts_mean reshape quirk
        ST = st_ref[...]      # (Wp, W)    0/1 window-sum matrix
        DWT = dwt_ref[...]    # (Wp, W)    decay-linear weights
        SBC = sbc_ref[...]    # (W, Wp)    window -> time broadcast matrix (ST.T)

        def wsum(m):          # (W, n) -> (Wp, n) window sums on the MXU
            return _DOT(ST, m)

        # ---- per-row window stats, shape (Wp, B*H): windows on sublanes, rows on lanes
        mean_r = wsum(XT) * inv_L
        cr = XT - _DOT(SBC, mean_r)                       # centered (two-pass, matches np.std)
        std_r = jnp.sqrt(wsum(cr * cr) * inv_L)           # population std (ddof=0)
        decay = _DOT(DWT, XT)                             # ts_decaylinear
        zscore = mean_r / (std_r + 0.01)                  # ts_zcore
        mean_scr = wsum(XMT) * inv_L                      # ts_mean (scrambled layout baked in)

        # ---- per-pair window stats, shape (Wp, B*P)
        mean_i = wsum(XIT) * inv_L
        mean_j = wsum(XJT) * inv_L
        ci = XIT - _DOT(SBC, mean_i)
        cj = XJT - _DOT(SBC, mean_j)
        std_i = jnp.sqrt(wsum(ci * ci) * inv_L)
        std_j = jnp.sqrt(wsum(cj * cj) * inv_L)
        cov = wsum(ci * cj) * inv_Lm1                     # ts_cov4d: /(L-1)
        corr = cov / (std_i * std_j + 0.01)               # ts_corr4d
        mul = wsum(XIT * XJT) * inv_L                     # ts_mul

        # ---- training-mode BatchNorm2d(1): batch statistics over the whole block
        def bn(v, idx):
            g = bn_ref[2 * idx]
            b = bn_ref[2 * idx + 1]
            m = jnp.mean(v, keepdims=True)
            var = jnp.mean(jnp.square(v - m), keepdims=True)
            return (v - m) * (g * lax.rsqrt(var + BN_EPS)) + b

        cov_bn = bn(cov, 0)        # bc1
        corr_bn = bn(corr, 1)      # bc4
        decay_bn = bn(decay, 2)    # bc6
        std_bn = bn(std_r, 3)      # bc7
        mean_bn = bn(mean_scr, 4)  # bc8 (BN stats are permutation-invariant)
        z_bn = bn(zscore, 5)       # bc9
        mul_bn = bn(mul, 6)        # bc10

        # feature1 row order along H is [cov, corr, decay, std, mean, zscore, mul].
        # The (1,10)/(1,10) pools reduce over the full Wp axis -> sublane reductions
        # yielding lane vectors of per-row pooled values.
        blocks = (cov_bn, corr_bn, decay_bn, std_bn, mean_bn, z_bn, mul_bn)
        pooled = [(jnp.max(v, axis=0), jnp.mean(v, axis=0), jnp.min(v, axis=0))
                  for v in blocks]

        # bc_pool{1,2,3}: BN over all B*Ht pooled values of each pool type.
        for k in range(3):
            vals = [p[k] for p in pooled]
            mean_p = sum(jnp.sum(v) for v in vals) / n_pool
            var_p = sum(jnp.sum(jnp.square(v - mean_p)) for v in vals) / n_pool
            g = bn_ref[14 + 2 * k]
            b = bn_ref[15 + 2 * k]
            scale = g * lax.rsqrt(var_p + BN_EPS)
            o_pairs_ref[k, 0] = (vals[0] - mean_p) * scale + b   # cov
            o_pairs_ref[k, 1] = (vals[1] - mean_p) * scale + b   # corr
            o_rows_ref[k, 0] = (vals[2] - mean_p) * scale + b    # decaylinear
            o_rows_ref[k, 1] = (vals[3] - mean_p) * scale + b    # std
            o_rows_ref[k, 2] = (vals[4] - mean_p) * scale + b    # mean (scrambled rows)
            o_rows_ref[k, 3] = (vals[5] - mean_p) * scale + b    # zscore
            o_pairs_ref[k, 2] = (vals[6] - mean_p) * scale + b   # mul

    return kernel


def inception2_forward(data, params, num, num_rev, stride):
    """Pallas equivalent of Inception2.forward. data: (B, 1, 9, W) float32."""
    data = jnp.asarray(data, jnp.float32)
    B, C, H, W = data.shape
    assert C == 1
    assert stride >= 2 and W % stride == 0, "ragged tail windows not supported"
    L = stride
    Wp = W // L
    P = len(num)
    BH, BP = B * H, B * P
    Ht = 3 * P + 4 * H

    x = jnp.reshape(data, (B, H, W))
    Xr = jnp.reshape(x, (BH, W))                               # rows ordered (b, h)
    XI = jnp.reshape(x[:, np.asarray(num), :], (BP, W))        # rows ordered (b, pair)
    XJ = jnp.reshape(x[:, np.asarray(num_rev), :], (BP, W))

    # ts_mean quirk: the reference reshapes (Wp,B,H)->(B,H,Wp) without transposing.
    # Gather the input so the kernel produces that scrambled block directly.
    k = np.arange(BH)[:, None] * Wp + np.arange(Wp)[None, :]   # (BH, Wp) flat dest index
    src_row = (k % BH)[:, :, None]
    src_col = (k // BH)[:, :, None] * L + np.arange(L)[None, None, :]
    XM = jnp.reshape(Xr[src_row, src_col], (BH, W))

    # Window-selection / decay-weight matrices (windows on sublanes).
    ST = np.zeros((Wp, W), np.float32)
    DWT = np.zeros((Wp, W), np.float32)
    dw = np.arange(1, L + 1, dtype=np.float32)
    dw = dw / dw.sum()
    for w in range(Wp):
        ST[w, w * L:(w + 1) * L] = 1.0
        DWT[w, w * L:(w + 1) * L] = dw

    bn_names = ["bc1", "bc4", "bc6", "bc7", "bc8", "bc9", "bc10",
                "bc_pool1", "bc_pool2", "bc_pool3"]
    bn_vec = jnp.concatenate(
        [jnp.stack([jnp.asarray(params[n]["weight"], jnp.float32),
                    jnp.asarray(params[n]["bias"], jnp.float32)]) for n in bn_names])

    kernel = _make_inception2_kernel(B, H, W, P, L)
    vmem = pl.BlockSpec(memory_space=pltpu.MemorySpace.VMEM)
    smem = pl.BlockSpec(memory_space=pltpu.MemorySpace.SMEM)
    out_rows, out_pairs = pl.pallas_call(
        kernel,
        out_shape=(jax.ShapeDtypeStruct((3, 4, BH), jnp.float32),
                   jax.ShapeDtypeStruct((3, 3, BP), jnp.float32)),
        in_specs=[vmem, vmem, vmem, vmem, vmem, vmem, vmem, smem],
        out_specs=(vmem, vmem),
    )(Xr.T, XI.T, XJ.T, XM.T, jnp.asarray(ST), jnp.asarray(DWT),
      jnp.asarray(ST.T), bn_vec)

    # Reassemble pool_cat.flatten(1): per batch [max | avg | min], each in feature1
    # row order [cov, corr, decay, std, mean, zscore, mul].  Pure layout plumbing.
    orw = jnp.reshape(out_rows, (3, 4, B, H))
    opr = jnp.reshape(out_pairs, (3, 3, B, P))

    def pool_block(pk):
        return jnp.concatenate([opr[pk, 0], opr[pk, 1], orw[pk, 0], orw[pk, 1],
                                orw[pk, 2], orw[pk, 3], opr[pk, 2]], axis=1)  # (B, Ht)

    out = jnp.concatenate([pool_block(0), pool_block(1), pool_block(2)], axis=1)
    assert out.shape == (B, 3 * Ht)
    return out


def _reference_numpy(data, params, num, num_rev, stride):
    """Literal numpy transcription of Inception2.forward (training-mode BN)."""
    M = np.asarray(data, np.float32)
    B, _, H, W = M.shape
    P, L, Wp = len(num), stride, data.shape[3] // stride
    ni = np.asarray(num)[:, None]       # (P,1) -> 5-D fancy indexing as in the module
    nj = np.asarray(num_rev)[:, None]
    wins = [(i * L, (i + 1) * L) for i in range(Wp)]

    def ts_cov():
        l = []
        for s, e in wins:
            d1, d2 = M[:, :, ni, s:e], M[:, :, nj, s:e]
            m1, m2 = d1.mean(axis=4, keepdims=True), d2.mean(axis=4, keepdims=True)
            l.append((((d1 - m1) * (d2 - m2)).sum(axis=4, keepdims=True)
                      / (d1.shape[4] - 1)).mean(axis=3, keepdims=True))
        return np.squeeze(np.array(l)).transpose(1, 2, 0).reshape(-1, 1, P, Wp)

    def ts_corr():
        l = []
        for s, e in wins:
            d1, d2 = M[:, :, ni, s:e], M[:, :, nj, s:e]
            l.append((d1.std(axis=4, keepdims=True) * d2.std(axis=4, keepdims=True))
                     .mean(axis=3, keepdims=True))
        std = np.squeeze(np.array(l)).transpose(1, 2, 0).reshape(-1, 1, P, Wp) + 0.01
        return ts_cov() / std

    def ts_decay():
        wgt = np.arange(1, L + 1); wgt = wgt / wgt.sum()
        l = [(M[:, :, :, s:e] * wgt).sum(axis=3, keepdims=True) for s, e in wins]
        return np.squeeze(np.array(l)).transpose(1, 2, 0).reshape(-1, 1, H, Wp)

    def ts_std():
        l = [M[:, :, :, s:e].std(axis=3, keepdims=True) for s, e in wins]
        return np.squeeze(np.array(l)).transpose(1, 2, 0).reshape(-1, 1, H, Wp)

    def ts_mean():
        l = [M[:, :, :, s:e].mean(axis=3, keepdims=True) for s, e in wins]
        return np.squeeze(np.array(l)).reshape(-1, 1, H, Wp)   # NOTE: no transpose (as in torch code)

    def ts_zscore():
        l = []
        for s, e in wins:
            d = M[:, :, :, s:e]
            l.append(d.mean(axis=3, keepdims=True) / (d.std(axis=3, keepdims=True) + 0.01))
        return np.squeeze(np.array(l)).transpose(1, 2, 0).reshape(-1, 1, H, Wp)

    def ts_mul():
        l = []
        for s, e in wins:
            d1, d2 = M[:, :, ni, s:e], M[:, :, nj, s:e]
            l.append((d1 * d2).mean(axis=4, keepdims=True).mean(axis=3, keepdims=True))
        return np.squeeze(np.array(l)).transpose(1, 2, 0).reshape(-1, 1, P, Wp)

    def bn(v, name):
        g = np.float32(params[name]["weight"]); b = np.float32(params[name]["bias"])
        return (v - v.mean()) / np.sqrt(v.var() + BN_EPS) * g + b

    feature1 = np.concatenate(
        [bn(ts_cov(), "bc1"), bn(ts_corr(), "bc4"), bn(ts_decay(), "bc6"),
         bn(ts_std(), "bc7"), bn(ts_mean(), "bc8"), bn(ts_zscore(), "bc9"),
         bn(ts_mul(), "bc10")], axis=2)
    maxp = bn(feature1.max(axis=3, keepdims=True), "bc_pool1")
    avgp = bn(feature1.mean(axis=3, keepdims=True), "bc_pool2")
    minp = bn(feature1.min(axis=3, keepdims=True), "bc_pool3")   # -maxpool(-x)
    return np.concatenate([maxp, avgp, minp], axis=2).reshape(B, -1)


if __name__ == "__main__":
    key = jax.random.PRNGKey(0)
    k_data, k_bn = jax.random.split(key)

    # Module spec: input B*1*9*30, rolling window (stride) = 3, pooling width 10.
    B, H, W, STRIDE = 2, 9, 30, 3
    pairs = [(i, j) for i in range(H) for j in range(i, H)]      # 45 pairs -> output (B, 513)
    num = [i for i, _ in pairs]
    num_rev = [j for _, j in pairs]

    data = jax.random.normal(k_data, (B, 1, H, W), jnp.float32)

    # BatchNorm2d(1) affine params (fresh torch module is weight=1, bias=0;
    # randomize slightly to exercise the parameter path).
    bn_names = ["bc1", "bc4", "bc6", "bc7", "bc8", "bc9", "bc10",
                "bc_pool1", "bc_pool2", "bc_pool3"]
    params = {}
    for i, n in enumerate(bn_names):
        kw, kb = jax.random.split(jax.random.fold_in(k_bn, i))
        params[n] = {"weight": 1.0 + 0.1 * jax.random.normal(kw, ()),
                     "bias": 0.1 * jax.random.normal(kb, ())}

    out = jax.block_until_ready(inception2_forward(data, params, num, num_rev, STRIDE))
    assert out.shape == (B, 3 * (3 * len(num) + 4 * H))          # (2, 513)

    np_params = {n: {"weight": np.asarray(params[n]["weight"]),
                     "bias": np.asarray(params[n]["bias"])} for n in bn_names}
    ref = _reference_numpy(np.asarray(data), np_params, num, num_rev, STRIDE)
    np.testing.assert_allclose(np.asarray(out), ref, rtol=1e-3, atol=1e-3)

    print("KERNEL_OK")
</pallas_src>

<mosaic_0001>
module attributes {stable_mosaic.version = 11 : i64} {
  func.func @kernel(%arg0: memref<30x18xf32, #tpu.memory_space<vmem>>, %arg1: memref<30x90xf32, #tpu.memory_space<vmem>>, %arg2: memref<30x90xf32, #tpu.memory_space<vmem>>, %arg3: memref<30x18xf32, #tpu.memory_space<vmem>>, %arg4: memref<10x30xf32, #tpu.memory_space<vmem>>, %arg5: memref<10x30xf32, #tpu.memory_space<vmem>>, %arg6: memref<30x10xf32, #tpu.memory_space<vmem>>, %arg7: memref<20xf32, #tpu.memory_space<smem>>, %arg8: memref<3x4x18xf32, #tpu.memory_space<vmem>>, %arg9: memref<3x3x90xf32, #tpu.memory_space<vmem>>) attributes {dimension_semantics = [], scalar_prefetch = 0 : i64, scratch_operands = 0 : i64, tpu.core_type = #tpu.core_type<tc>} {
    %c0 = arith.constant 0 : index
    %c0_0 = arith.constant 0 : index
    %0 = vector.load %arg0[%c0, %c0_0] : memref<30x18xf32, #tpu.memory_space<vmem>>, vector<30x18xf32>
    %c0_1 = arith.constant 0 : index
    %c0_2 = arith.constant 0 : index
    %1 = vector.load %arg1[%c0_1, %c0_2] : memref<30x90xf32, #tpu.memory_space<vmem>>, vector<30x90xf32>
    %c0_3 = arith.constant 0 : index
    %c0_4 = arith.constant 0 : index
    %2 = vector.load %arg2[%c0_3, %c0_4] : memref<30x90xf32, #tpu.memory_space<vmem>>, vector<30x90xf32>
    %c0_5 = arith.constant 0 : index
    %c0_6 = arith.constant 0 : index
    %3 = vector.load %arg3[%c0_5, %c0_6] : memref<30x18xf32, #tpu.memory_space<vmem>>, vector<30x18xf32>
    %c0_7 = arith.constant 0 : index
    %c0_8 = arith.constant 0 : index
    %4 = vector.load %arg4[%c0_7, %c0_8] : memref<10x30xf32, #tpu.memory_space<vmem>>, vector<10x30xf32>
    %c0_9 = arith.constant 0 : index
    %c0_10 = arith.constant 0 : index
    %5 = vector.load %arg5[%c0_9, %c0_10] : memref<10x30xf32, #tpu.memory_space<vmem>>, vector<10x30xf32>
    %c0_11 = arith.constant 0 : index
    %c0_12 = arith.constant 0 : index
    %6 = vector.load %arg6[%c0_11, %c0_12] : memref<30x10xf32, #tpu.memory_space<vmem>>, vector<30x10xf32>
    %cst = arith.constant dense<0.000000e+00> : vector<10x18xf32>
    %7 = tpu.matmul %4, %0, %cst {dimension_numbers = #tpu.dot_dimension_numbers<[1], [0], [0], [1], [0, 0, 1, 1], [], []>, precision = #tpu.contract_precision<fp32>} : vector<10x30xf32>, vector<30x18xf32>, vector<10x18xf32> -> vector<10x18xf32>
    %cst_13 = arith.constant 0.333333343 : f32
    %8 = vector.broadcast %cst_13 : f32 to vector<10x18xf32>
    %9 = arith.mulf %7, %8 : vector<10x18xf32>
    %cst_14 = arith.constant dense<0.000000e+00> : vector<30x18xf32>
    %10 = tpu.matmul %6, %9, %cst_14 {dimension_numbers = #tpu.dot_dimension_numbers<[1], [0], [0], [1], [0, 0, 1, 1], [], []>, precision = #tpu.contract_precision<fp32>} : vector<30x10xf32>, vector<10x18xf32>, vector<30x18xf32> -> vector<30x18xf32>
    %11 = arith.subf %0, %10 : vector<30x18xf32>
    %12 = arith.mulf %11, %11 : vector<30x18xf32>
    %cst_15 = arith.constant dense<0.000000e+00> : vector<10x18xf32>
    %13 = tpu.matmul %4, %12, %cst_15 {dimension_numbers = #tpu.dot_dimension_numbers<[1], [0], [0], [1], [0, 0, 1, 1], [], []>, precision = #tpu.contract_precision<fp32>} : vector<10x30xf32>, vector<30x18xf32>, vector<10x18xf32> -> vector<10x18xf32>
    %cst_16 = arith.constant 0.333333343 : f32
    %14 = vector.broadcast %cst_16 : f32 to vector<10x18xf32>
    %15 = arith.mulf %13, %14 : vector<10x18xf32>
    %16 = math.sqrt %15 : vector<10x18xf32>
    %cst_17 = arith.constant dense<0.000000e+00> : vector<10x18xf32>
    %17 = tpu.matmul %5, %0, %cst_17 {dimension_numbers = #tpu.dot_dimension_numbers<[1], [0], [0], [1], [0, 0, 1, 1], [], []>, precision = #tpu.contract_precision<fp32>} : vector<10x30xf32>, vector<30x18xf32>, vector<10x18xf32> -> vector<10x18xf32>
    %cst_18 = arith.constant 0.00999999977 : f32
    %18 = vector.broadcast %cst_18 : f32 to vector<10x18xf32>
    %19 = arith.addf %16, %18 : vector<10x18xf32>
    %20 = arith.divf %9, %19 : vector<10x18xf32>
    %cst_19 = arith.constant dense<0.000000e+00> : vector<10x18xf32>
    %21 = tpu.matmul %4, %3, %cst_19 {dimension_numbers = #tpu.dot_dimension_numbers<[1], [0], [0], [1], [0, 0, 1, 1], [], []>, precision = #tpu.contract_precision<fp32>} : vector<10x30xf32>, vector<30x18xf32>, vector<10x18xf32> -> vector<10x18xf32>
    %cst_20 = arith.constant 0.333333343 : f32
    %22 = vector.broadcast %cst_20 : f32 to vector<10x18xf32>
    %23 = arith.mulf %21, %22 : vector<10x18xf32>
    %cst_21 = arith.constant dense<0.000000e+00> : vector<10x90xf32>
    %24 = tpu.matmul %4, %1, %cst_21 {dimension_numbers = #tpu.dot_dimension_numbers<[1], [0], [0], [1], [0, 0, 1, 1], [], []>, precision = #tpu.contract_precision<fp32>} : vector<10x30xf32>, vector<30x90xf32>, vector<10x90xf32> -> vector<10x90xf32>
    %cst_22 = arith.constant 0.333333343 : f32
    %25 = vector.broadcast %cst_22 : f32 to vector<10x90xf32>
    %26 = arith.mulf %24, %25 : vector<10x90xf32>
    %cst_23 = arith.constant dense<0.000000e+00> : vector<10x90xf32>
    %27 = tpu.matmul %4, %2, %cst_23 {dimension_numbers = #tpu.dot_dimension_numbers<[1], [0], [0], [1], [0, 0, 1, 1], [], []>, precision = #tpu.contract_precision<fp32>} : vector<10x30xf32>, vector<30x90xf32>, vector<10x90xf32> -> vector<10x90xf32>
    %cst_24 = arith.constant 0.333333343 : f32
    %28 = vector.broadcast %cst_24 : f32 to vector<10x90xf32>
    %29 = arith.mulf %27, %28 : vector<10x90xf32>
    %cst_25 = arith.constant dense<0.000000e+00> : vector<30x90xf32>
    %30 = tpu.matmul %6, %26, %cst_25 {dimension_numbers = #tpu.dot_dimension_numbers<[1], [0], [0], [1], [0, 0, 1, 1], [], []>, precision = #tpu.contract_precision<fp32>} : vector<30x10xf32>, vector<10x90xf32>, vector<30x90xf32> -> vector<30x90xf32>
    %31 = arith.subf %1, %30 : vector<30x90xf32>
    %cst_26 = arith.constant dense<0.000000e+00> : vector<30x90xf32>
    %32 = tpu.matmul %6, %29, %cst_26 {dimension_numbers = #tpu.dot_dimension_numbers<[1], [0], [0], [1], [0, 0, 1, 1], [], []>, precision = #tpu.contract_precision<fp32>} : vector<30x10xf32>, vector<10x90xf32>, vector<30x90xf32> -> vector<30x90xf32>
    %33 = arith.subf %2, %32 : vector<30x90xf32>
    %34 = arith.mulf %31, %31 : vector<30x90xf32>
    %cst_27 = arith.constant dense<0.000000e+00> : vector<10x90xf32>
    %35 = tpu.matmul %4, %34, %cst_27 {dimension_numbers = #tpu.dot_dimension_numbers<[1], [0], [0], [1], [0, 0, 1, 1], [], []>, precision = #tpu.contract_precision<fp32>} : vector<10x30xf32>, vector<30x90xf32>, vector<10x90xf32> -> vector<10x90xf32>
    %cst_28 = arith.constant 0.333333343 : f32
    %36 = vector.broadcast %cst_28 : f32 to vector<10x90xf32>
    %37 = arith.mulf %35, %36 : vector<10x90xf32>
    %38 = math.sqrt %37 : vector<10x90xf32>
    %39 = arith.mulf %33, %33 : vector<30x90xf32>
    %cst_29 = arith.constant dense<0.000000e+00> : vector<10x90xf32>
    %40 = tpu.matmul %4, %39, %cst_29 {dimension_numbers = #tpu.dot_dimension_numbers<[1], [0], [0], [1], [0, 0, 1, 1], [], []>, precision = #tpu.contract_precision<fp32>} : vector<10x30xf32>, vector<30x90xf32>, vector<10x90xf32> -> vector<10x90xf32>
    %cst_30 = arith.constant 0.333333343 : f32
    %41 = vector.broadcast %cst_30 : f32 to vector<10x90xf32>
    %42 = arith.mulf %40, %41 : vector<10x90xf32>
    %43 = math.sqrt %42 : vector<10x90xf32>
    %44 = arith.mulf %31, %33 : vector<30x90xf32>
    %cst_31 = arith.constant dense<0.000000e+00> : vector<10x90xf32>
    %45 = tpu.matmul %4, %44, %cst_31 {dimension_numbers = #tpu.dot_dimension_numbers<[1], [0], [0], [1], [0, 0, 1, 1], [], []>, precision = #tpu.contract_precision<fp32>} : vector<10x30xf32>, vector<30x90xf32>, vector<10x90xf32> -> vector<10x90xf32>
    %cst_32 = arith.constant 5.000000e-01 : f32
    %46 = vector.broadcast %cst_32 : f32 to vector<10x90xf32>
    %47 = arith.mulf %45, %46 : vector<10x90xf32>
    %48 = arith.mulf %38, %43 : vector<10x90xf32>
    %cst_33 = arith.constant 0.00999999977 : f32
    %49 = vector.broadcast %cst_33 : f32 to vector<10x90xf32>
    %50 = arith.addf %48, %49 : vector<10x90xf32>
    %51 = arith.divf %47, %50 : vector<10x90xf32>
    %52 = arith.mulf %1, %2 : vector<30x90xf32>
    %cst_34 = arith.constant dense<0.000000e+00> : vector<10x90xf32>
    %53 = tpu.matmul %4, %52, %cst_34 {dimension_numbers = #tpu.dot_dimension_numbers<[1], [0], [0], [1], [0, 0, 1, 1], [], []>, precision = #tpu.contract_precision<fp32>} : vector<10x30xf32>, vector<30x90xf32>, vector<10x90xf32> -> vector<10x90xf32>
    %cst_35 = arith.constant 0.333333343 : f32
    %54 = vector.broadcast %cst_35 : f32 to vector<10x90xf32>
    %55 = arith.mulf %53, %54 : vector<10x90xf32>
    %c0_36 = arith.constant 0 : index
    %56 = memref.load %arg7[%c0_36] : memref<20xf32, #tpu.memory_space<smem>>
    %c1 = arith.constant 1 : index
    %57 = memref.load %arg7[%c1] : memref<20xf32, #tpu.memory_space<smem>>
    %58 = vector.shape_cast %47 : vector<10x90xf32> to vector<1x10x90xf32>
    %cst_37 = arith.constant dense<0.000000e+00> : vector<1xf32>
    %59 = vector.multi_reduction <add>, %58, %cst_37 [1, 2] : vector<1x10x90xf32> to vector<1xf32>
    %60 = vector.shape_cast %59 : vector<1xf32> to vector<1x1x1xf32>
    %61 = vector.extract %60[0, 0, 0] : f32 from vector<1x1x1xf32>
    %62 = vector.broadcast %61 : f32 to vector<1x1xf32>
    %cst_38 = arith.constant 9.000000e+02 : f32
    %63 = vector.broadcast %cst_38 : f32 to vector<1x1xf32>
    %64 = arith.divf %62, %63 : vector<1x1xf32>
    %65 = vector.broadcast %64 : vector<1x1xf32> to vector<10x90xf32>
    %66 = arith.subf %47, %65 : vector<10x90xf32>
    %67 = arith.mulf %66, %66 : vector<10x90xf32>
    %68 = vector.shape_cast %67 : vector<10x90xf32> to vector<1x10x90xf32>
    %cst_39 = arith.constant dense<0.000000e+00> : vector<1xf32>
    %69 = vector.multi_reduction <add>, %68, %cst_39 [1, 2] : vector<1x10x90xf32> to vector<1xf32>
    %70 = vector.shape_cast %69 : vector<1xf32> to vector<1x1x1xf32>
    %71 = vector.extract %70[0, 0, 0] : f32 from vector<1x1x1xf32>
    %72 = vector.broadcast %71 : f32 to vector<1x1xf32>
    %cst_40 = arith.constant 9.000000e+02 : f32
    %73 = vector.broadcast %cst_40 : f32 to vector<1x1xf32>
    %74 = arith.divf %72, %73 : vector<1x1xf32>
    %75 = vector.broadcast %64 : vector<1x1xf32> to vector<10x90xf32>
    %76 = arith.subf %47, %75 : vector<10x90xf32>
    %cst_41 = arith.constant 9.99999974E-6 : f32
    %77 = vector.broadcast %cst_41 : f32 to vector<1x1xf32>
    %78 = arith.addf %74, %77 : vector<1x1xf32>
    %79 = math.rsqrt %78 : vector<1x1xf32>
    %80 = vector.broadcast %56 : f32 to vector<1x1xf32>
    %81 = arith.mulf %80, %79 : vector<1x1xf32>
    %82 = vector.broadcast %81 : vector<1x1xf32> to vector<10x90xf32>
    %83 = arith.mulf %76, %82 : vector<10x90xf32>
    %84 = vector.broadcast %57 : f32 to vector<10x90xf32>
    %85 = arith.addf %83, %84 : vector<10x90xf32>
    %c2 = arith.constant 2 : index
    %86 = memref.load %arg7[%c2] : memref<20xf32, #tpu.memory_space<smem>>
    %c3 = arith.constant 3 : index
    %87 = memref.load %arg7[%c3] : memref<20xf32, #tpu.memory_space<smem>>
    %88 = vector.shape_cast %51 : vector<10x90xf32> to vector<1x10x90xf32>
    %cst_42 = arith.constant dense<0.000000e+00> : vector<1xf32>
    %89 = vector.multi_reduction <add>, %88, %cst_42 [1, 2] : vector<1x10x90xf32> to vector<1xf32>
    %90 = vector.shape_cast %89 : vector<1xf32> to vector<1x1x1xf32>
    %91 = vector.extract %90[0, 0, 0] : f32 from vector<1x1x1xf32>
    %92 = vector.broadcast %91 : f32 to vector<1x1xf32>
    %cst_43 = arith.constant 9.000000e+02 : f32
    %93 = vector.broadcast %cst_43 : f32 to vector<1x1xf32>
    %94 = arith.divf %92, %93 : vector<1x1xf32>
    %95 = vector.broadcast %94 : vector<1x1xf32> to vector<10x90xf32>
    %96 = arith.subf %51, %95 : vector<10x90xf32>
    %97 = arith.mulf %96, %96 : vector<10x90xf32>
    %98 = vector.shape_cast %97 : vector<10x90xf32> to vector<1x10x90xf32>
    %cst_44 = arith.constant dense<0.000000e+00> : vector<1xf32>
    %99 = vector.multi_reduction <add>, %98, %cst_44 [1, 2] : vector<1x10x90xf32> to vector<1xf32>
    %100 = vector.shape_cast %99 : vector<1xf32> to vector<1x1x1xf32>
    %101 = vector.extract %100[0, 0, 0] : f32 from vector<1x1x1xf32>
    %102 = vector.broadcast %101 : f32 to vector<1x1xf32>
    %cst_45 = arith.constant 9.000000e+02 : f32
    %103 = vector.broadcast %cst_45 : f32 to vector<1x1xf32>
    %104 = arith.divf %102, %103 : vector<1x1xf32>
    %105 = vector.broadcast %94 : vector<1x1xf32> to vector<10x90xf32>
    %106 = arith.subf %51, %105 : vector<10x90xf32>
    %cst_46 = arith.constant 9.99999974E-6 : f32
    %107 = vector.broadcast %cst_46 : f32 to vector<1x1xf32>
    %108 = arith.addf %104, %107 : vector<1x1xf32>
    %109 = math.rsqrt %108 : vector<1x1xf32>
    %110 = vector.broadcast %86 : f32 to vector<1x1xf32>
    %111 = arith.mulf %110, %109 : vector<1x1xf32>
    %112 = vector.broadcast %111 : vector<1x1xf32> to vector<10x90xf32>
    %113 = arith.mulf %106, %112 : vector<10x90xf32>
    %114 = vector.broadcast %87 : f32 to vector<10x90xf32>
    %115 = arith.addf %113, %114 : vector<10x90xf32>
    %c4 = arith.constant 4 : index
    %116 = memref.load %arg7[%c4] : memref<20xf32, #tpu.memory_space<smem>>
    %c5 = arith.constant 5 : index
    %117 = memref.load %arg7[%c5] : memref<20xf32, #tpu.memory_space<smem>>
    %118 = vector.shape_cast %17 : vector<10x18xf32> to vector<1x10x18xf32>
    %cst_47 = arith.constant dense<0.000000e+00> : vector<1xf32>
    %119 = vector.multi_reduction <add>, %118, %cst_47 [1, 2] : vector<1x10x18xf32> to vector<1xf32>
    %120 = vector.shape_cast %119 : vector<1xf32> to vector<1x1x1xf32>
    %121 = vector.extract %120[0, 0, 0] : f32 from vector<1x1x1xf32>
    %122 = vector.broadcast %121 : f32 to vector<1x1xf32>
    %cst_48 = arith.constant 1.800000e+02 : f32
    %123 = vector.broadcast %cst_48 : f32 to vector<1x1xf32>
    %124 = arith.divf %122, %123 : vector<1x1xf32>
    %125 = vector.broadcast %124 : vector<1x1xf32> to vector<10x18xf32>
    %126 = arith.subf %17, %125 : vector<10x18xf32>
    %127 = arith.mulf %126, %126 : vector<10x18xf32>
    %128 = vector.shape_cast %127 : vector<10x18xf32> to vector<1x10x18xf32>
    %cst_49 = arith.constant dense<0.000000e+00> : vector<1xf32>
    %129 = vector.multi_reduction <add>, %128, %cst_49 [1, 2] : vector<1x10x18xf32> to vector<1xf32>
    %130 = vector.shape_cast %129 : vector<1xf32> to vector<1x1x1xf32>
    %131 = vector.extract %130[0, 0, 0] : f32 from vector<1x1x1xf32>
    %132 = vector.broadcast %131 : f32 to vector<1x1xf32>
    %cst_50 = arith.constant 1.800000e+02 : f32
    %133 = vector.broadcast %cst_50 : f32 to vector<1x1xf32>
    %134 = arith.divf %132, %133 : vector<1x1xf32>
    %135 = vector.broadcast %124 : vector<1x1xf32> to vector<10x18xf32>
    %136 = arith.subf %17, %135 : vector<10x18xf32>
    %cst_51 = arith.constant 9.99999974E-6 : f32
    %137 = vector.broadcast %cst_51 : f32 to vector<1x1xf32>
    %138 = arith.addf %134, %137 : vector<1x1xf32>
    %139 = math.rsqrt %138 : vector<1x1xf32>
    %140 = vector.broadcast %116 : f32 to vector<1x1xf32>
    %141 = arith.mulf %140, %139 : vector<1x1xf32>
    %142 = vector.broadcast %141 : vector<1x1xf32> to vector<10x18xf32>
    %143 = arith.mulf %136, %142 : vector<10x18xf32>
    %144 = vector.broadcast %117 : f32 to vector<10x18xf32>
    %145 = arith.addf %143, %144 : vector<10x18xf32>
    %c6 = arith.constant 6 : index
    %146 = memref.load %arg7[%c6] : memref<20xf32, #tpu.memory_space<smem>>
    %c7 = arith.constant 7 : index
    %147 = memref.load %arg7[%c7] : memref<20xf32, #tpu.memory_space<smem>>
    %148 = vector.shape_cast %16 : vector<10x18xf32> to vector<1x10x18xf32>
    %cst_52 = arith.constant dense<0.000000e+00> : vector<1xf32>
    %149 = vector.multi_reduction <add>, %148, %cst_52 [1, 2] : vector<1x10x18xf32> to vector<1xf32>
    %150 = vector.shape_cast %149 : vector<1xf32> to vector<1x1x1xf32>
    %151 = vector.extract %150[0, 0, 0] : f32 from vector<1x1x1xf32>
    %152 = vector.broadcast %151 : f32 to vector<1x1xf32>
    %cst_53 = arith.constant 1.800000e+02 : f32
    %153 = vector.broadcast %cst_53 : f32 to vector<1x1xf32>
    %154 = arith.divf %152, %153 : vector<1x1xf32>
    %155 = vector.broadcast %154 : vector<1x1xf32> to vector<10x18xf32>
    %156 = arith.subf %16, %155 : vector<10x18xf32>
    %157 = arith.mulf %156, %156 : vector<10x18xf32>
    %158 = vector.shape_cast %157 : vector<10x18xf32> to vector<1x10x18xf32>
    %cst_54 = arith.constant dense<0.000000e+00> : vector<1xf32>
    %159 = vector.multi_reduction <add>, %158, %cst_54 [1, 2] : vector<1x10x18xf32> to vector<1xf32>
    %160 = vector.shape_cast %159 : vector<1xf32> to vector<1x1x1xf32>
    %161 = vector.extract %160[0, 0, 0] : f32 from vector<1x1x1xf32>
    %162 = vector.broadcast %161 : f32 to vector<1x1xf32>
    %cst_55 = arith.constant 1.800000e+02 : f32
    %163 = vector.broadcast %cst_55 : f32 to vector<1x1xf32>
    %164 = arith.divf %162, %163 : vector<1x1xf32>
    %165 = vector.broadcast %154 : vector<1x1xf32> to vector<10x18xf32>
    %166 = arith.subf %16, %165 : vector<10x18xf32>
    %cst_56 = arith.constant 9.99999974E-6 : f32
    %167 = vector.broadcast %cst_56 : f32 to vector<1x1xf32>
    %168 = arith.addf %164, %167 : vector<1x1xf32>
    %169 = math.rsqrt %168 : vector<1x1xf32>
    %170 = vector.broadcast %146 : f32 to vector<1x1xf32>
    %171 = arith.mulf %170, %169 : vector<1x1xf32>
    %172 = vector.broadcast %171 : vector<1x1xf32> to vector<10x18xf32>
    %173 = arith.mulf %166, %172 : vector<10x18xf32>
    %174 = vector.broadcast %147 : f32 to vector<10x18xf32>
    %175 = arith.addf %173, %174 : vector<10x18xf32>
    %c8 = arith.constant 8 : index
    %176 = memref.load %arg7[%c8] : memref<20xf32, #tpu.memory_space<smem>>
    %c9 = arith.constant 9 : index
    %177 = memref.load %arg7[%c9] : memref<20xf32, #tpu.memory_space<smem>>
    %178 = vector.shape_cast %23 : vector<10x18xf32> to vector<1x10x18xf32>
    %cst_57 = arith.constant dense<0.000000e+00> : vector<1xf32>
    %179 = vector.multi_reduction <add>, %178, %cst_57 [1, 2] : vector<1x10x18xf32> to vector<1xf32>
    %180 = vector.shape_cast %179 : vector<1xf32> to vector<1x1x1xf32>
    %181 = vector.extract %180[0, 0, 0] : f32 from vector<1x1x1xf32>
    %182 = vector.broadcast %181 : f32 to vector<1x1xf32>
    %cst_58 = arith.constant 1.800000e+02 : f32
    %183 = vector.broadcast %cst_58 : f32 to vector<1x1xf32>
    %184 = arith.divf %182, %183 : vector<1x1xf32>
    %185 = vector.broadcast %184 : vector<1x1xf32> to vector<10x18xf32>
    %186 = arith.subf %23, %185 : vector<10x18xf32>
    %187 = arith.mulf %186, %186 : vector<10x18xf32>
    %188 = vector.shape_cast %187 : vector<10x18xf32> to vector<1x10x18xf32>
    %cst_59 = arith.constant dense<0.000000e+00> : vector<1xf32>
    %189 = vector.multi_reduction <add>, %188, %cst_59 [1, 2] : vector<1x10x18xf32> to vector<1xf32>
    %190 = vector.shape_cast %189 : vector<1xf32> to vector<1x1x1xf32>
    %191 = vector.extract %190[0, 0, 0] : f32 from vector<1x1x1xf32>
    %192 = vector.broadcast %191 : f32 to vector<1x1xf32>
    %cst_60 = arith.constant 1.800000e+02 : f32
    %193 = vector.broadcast %cst_60 : f32 to vector<1x1xf32>
    %194 = arith.divf %192, %193 : vector<1x1xf32>
    %195 = vector.broadcast %184 : vector<1x1xf32> to vector<10x18xf32>
    %196 = arith.subf %23, %195 : vector<10x18xf32>
    %cst_61 = arith.constant 9.99999974E-6 : f32
    %197 = vector.broadcast %cst_61 : f32 to vector<1x1xf32>
    %198 = arith.addf %194, %197 : vector<1x1xf32>
    %199 = math.rsqrt %198 : vector<1x1xf32>
    %200 = vector.broadcast %176 : f32 to vector<1x1xf32>
    %201 = arith.mulf %200, %199 : vector<1x1xf32>
    %202 = vector.broadcast %201 : vector<1x1xf32> to vector<10x18xf32>
    %203 = arith.mulf %196, %202 : vector<10x18xf32>
    %204 = vector.broadcast %177 : f32 to vector<10x18xf32>
    %205 = arith.addf %203, %204 : vector<10x18xf32>
    %c10 = arith.constant 10 : index
    %206 = memref.load %arg7[%c10] : memref<20xf32, #tpu.memory_space<smem>>
    %c11 = arith.constant 11 : index
    %207 = memref.load %arg7[%c11] : memref<20xf32, #tpu.memory_space<smem>>
    %208 = vector.shape_cast %20 : vector<10x18xf32> to vector<1x10x18xf32>
    %cst_62 = arith.constant dense<0.000000e+00> : vector<1xf32>
    %209 = vector.multi_reduction <add>, %208, %cst_62 [1, 2] : vector<1x10x18xf32> to vector<1xf32>
    %210 = vector.shape_cast %209 : vector<1xf32> to vector<1x1x1xf32>
    %211 = vector.extract %210[0, 0, 0] : f32 from vector<1x1x1xf32>
    %212 = vector.broadcast %211 : f32 to vector<1x1xf32>
    %cst_63 = arith.constant 1.800000e+02 : f32
    %213 = vector.broadcast %cst_63 : f32 to vector<1x1xf32>
    %214 = arith.divf %212, %213 : vector<1x1xf32>
    %215 = vector.broadcast %214 : vector<1x1xf32> to vector<10x18xf32>
    %216 = arith.subf %20, %215 : vector<10x18xf32>
    %217 = arith.mulf %216, %216 : vector<10x18xf32>
    %218 = vector.shape_cast %217 : vector<10x18xf32> to vector<1x10x18xf32>
    %cst_64 = arith.constant dense<0.000000e+00> : vector<1xf32>
    %219 = vector.multi_reduction <add>, %218, %cst_64 [1, 2] : vector<1x10x18xf32> to vector<1xf32>
    %220 = vector.shape_cast %219 : vector<1xf32> to vector<1x1x1xf32>
    %221 = vector.extract %220[0, 0, 0] : f32 from vector<1x1x1xf32>
    %222 = vector.broadcast %221 : f32 to vector<1x1xf32>
    %cst_65 = arith.constant 1.800000e+02 : f32
    %223 = vector.broadcast %cst_65 : f32 to vector<1x1xf32>
    %224 = arith.divf %222, %223 : vector<1x1xf32>
    %225 = vector.broadcast %214 : vector<1x1xf32> to vector<10x18xf32>
    %226 = arith.subf %20, %225 : vector<10x18xf32>
    %cst_66 = arith.constant 9.99999974E-6 : f32
    %227 = vector.broadcast %cst_66 : f32 to vector<1x1xf32>
    %228 = arith.addf %224, %227 : vector<1x1xf32>
    %229 = math.rsqrt %228 : vector<1x1xf32>
    %230 = vector.broadcast %206 : f32 to vector<1x1xf32>
    %231 = arith.mulf %230, %229 : vector<1x1xf32>
    %232 = vector.broadcast %231 : vector<1x1xf32> to vector<10x18xf32>
    %233 = arith.mulf %226, %232 : vector<10x18xf32>
    %234 = vector.broadcast %207 : f32 to vector<10x18xf32>
    %235 = arith.addf %233, %234 : vector<10x18xf32>
    %c12 = arith.constant 12 : index
    %236 = memref.load %arg7[%c12] : memref<20xf32, #tpu.memory_space<smem>>
    %c13 = arith.constant 13 : index
    %237 = memref.load %arg7[%c13] : memref<20xf32, #tpu.memory_space<smem>>
    %238 = vector.shape_cast %55 : vector<10x90xf32> to vector<1x10x90xf32>
    %cst_67 = arith.constant dense<0.000000e+00> : vector<1xf32>
    %239 = vector.multi_reduction <add>, %238, %cst_67 [1, 2] : vector<1x10x90xf32> to vector<1xf32>
    %240 = vector.shape_cast %239 : vector<1xf32> to vector<1x1x1xf32>
    %241 = vector.extract %240[0, 0, 0] : f32 from vector<1x1x1xf32>
    %242 = vector.broadcast %241 : f32 to vector<1x1xf32>
    %cst_68 = arith.constant 9.000000e+02 : f32
    %243 = vector.broadcast %cst_68 : f32 to vector<1x1xf32>
    %244 = arith.divf %242, %243 : vector<1x1xf32>
    %245 = vector.broadcast %244 : vector<1x1xf32> to vector<10x90xf32>
    %246 = arith.subf %55, %245 : vector<10x90xf32>
    %247 = arith.mulf %246, %246 : vector<10x90xf32>
    %248 = vector.shape_cast %247 : vector<10x90xf32> to vector<1x10x90xf32>
    %cst_69 = arith.constant dense<0.000000e+00> : vector<1xf32>
    %249 = vector.multi_reduction <add>, %248, %cst_69 [1, 2] : vector<1x10x90xf32> to vector<1xf32>
    %250 = vector.shape_cast %249 : vector<1xf32> to vector<1x1x1xf32>
    %251 = vector.extract %250[0, 0, 0] : f32 from vector<1x1x1xf32>
    %252 = vector.broadcast %251 : f32 to vector<1x1xf32>
    %cst_70 = arith.constant 9.000000e+02 : f32
    %253 = vector.broadcast %cst_70 : f32 to vector<1x1xf32>
    %254 = arith.divf %252, %253 : vector<1x1xf32>
    %255 = vector.broadcast %244 : vector<1x1xf32> to vector<10x90xf32>
    %256 = arith.subf %55, %255 : vector<10x90xf32>
    %cst_71 = arith.constant 9.99999974E-6 : f32
    %257 = vector.broadcast %cst_71 : f32 to vector<1x1xf32>
    %258 = arith.addf %254, %257 : vector<1x1xf32>
    %259 = math.rsqrt %258 : vector<1x1xf32>
    %260 = vector.broadcast %236 : f32 to vector<1x1xf32>
    %261 = arith.mulf %260, %259 : vector<1x1xf32>
    %262 = vector.broadcast %261 : vector<1x1xf32> to vector<10x90xf32>
    %263 = arith.mulf %256, %262 : vector<10x90xf32>
    %264 = vector.broadcast %237 : f32 to vector<10x90xf32>
    %265 = arith.addf %263, %264 : vector<10x90xf32>
    %cst_72 = arith.constant dense<0xFF800000> : vector<90xf32>
    %266 = vector.multi_reduction <maximumf>, %85, %cst_72 [0] : vector<10x90xf32> to vector<90xf32>
    %cst_73 = arith.constant dense<0.000000e+00> : vector<90xf32>
    %267 = vector.multi_reduction <add>, %85, %cst_73 [0] : vector<10x90xf32> to vector<90xf32>
    %cst_74 = arith.constant 1.000000e+01 : f32
    %268 = vector.broadcast %cst_74 : f32 to vector<90xf32>
    %269 = arith.divf %267, %268 : vector<90xf32>
    %cst_75 = arith.constant dense<0x7F800000> : vector<90xf32>
    %270 = vector.multi_reduction <minimumf>, %85, %cst_75 [0] : vector<10x90xf32> to vector<90xf32>
    %cst_76 = arith.constant dense<0xFF800000> : vector<90xf32>
    %271 = vector.multi_reduction <maximumf>, %115, %cst_76 [0] : vector<10x90xf32> to vector<90xf32>
    %cst_77 = arith.constant dense<0.000000e+00> : vector<90xf32>
    %272 = vector.multi_reduction <add>, %115, %cst_77 [0] : vector<10x90xf32> to vector<90xf32>
    %cst_78 = arith.constant 1.000000e+01 : f32
    %273 = vector.broadcast %cst_78 : f32 to vector<90xf32>
    %274 = arith.divf %272, %273 : vector<90xf32>
    %cst_79 = arith.constant dense<0x7F800000> : vector<90xf32>
    %275 = vector.multi_reduction <minimumf>, %115, %cst_79 [0] : vector<10x90xf32> to vector<90xf32>
    %cst_80 = arith.constant dense<0xFF800000> : vector<18xf32>
    %276 = vector.multi_reduction <maximumf>, %145, %cst_80 [0] : vector<10x18xf32> to vector<18xf32>
    %cst_81 = arith.constant dense<0.000000e+00> : vector<18xf32>
    %277 = vector.multi_reduction <add>, %145, %cst_81 [0] : vector<10x18xf32> to vector<18xf32>
    %cst_82 = arith.constant 1.000000e+01 : f32
    %278 = vector.broadcast %cst_82 : f32 to vector<18xf32>
    %279 = arith.divf %277, %278 : vector<18xf32>
    %cst_83 = arith.constant dense<0x7F800000> : vector<18xf32>
    %280 = vector.multi_reduction <minimumf>, %145, %cst_83 [0] : vector<10x18xf32> to vector<18xf32>
    %cst_84 = arith.constant dense<0xFF800000> : vector<18xf32>
    %281 = vector.multi_reduction <maximumf>, %175, %cst_84 [0] : vector<10x18xf32> to vector<18xf32>
    %cst_85 = arith.constant dense<0.000000e+00> : vector<18xf32>
    %282 = vector.multi_reduction <add>, %175, %cst_85 [0] : vector<10x18xf32> to vector<18xf32>
    %cst_86 = arith.constant 1.000000e+01 : f32
    %283 = vector.broadcast %cst_86 : f32 to vector<18xf32>
    %284 = arith.divf %282, %283 : vector<18xf32>
    %cst_87 = arith.constant dense<0x7F800000> : vector<18xf32>
    %285 = vector.multi_reduction <minimumf>, %175, %cst_87 [0] : vector<10x18xf32> to vector<18xf32>
    %cst_88 = arith.constant dense<0xFF800000> : vector<18xf32>
    %286 = vector.multi_reduction <maximumf>, %205, %cst_88 [0] : vector<10x18xf32> to vector<18xf32>
    %cst_89 = arith.constant dense<0.000000e+00> : vector<18xf32>
    %287 = vector.multi_reduction <add>, %205, %cst_89 [0] : vector<10x18xf32> to vector<18xf32>
    %cst_90 = arith.constant 1.000000e+01 : f32
    %288 = vector.broadcast %cst_90 : f32 to vector<18xf32>
    %289 = arith.divf %287, %288 : vector<18xf32>
    %cst_91 = arith.constant dense<0x7F800000> : vector<18xf32>
    %290 = vector.multi_reduction <minimumf>, %205, %cst_91 [0] : vector<10x18xf32> to vector<18xf32>
    %cst_92 = arith.constant dense<0xFF800000> : vector<18xf32>
    %291 = vector.multi_reduction <maximumf>, %235, %cst_92 [0] : vector<10x18xf32> to vector<18xf32>
    %cst_93 = arith.constant dense<0.000000e+00> : vector<18xf32>
    %292 = vector.multi_reduction <add>, %235, %cst_93 [0] : vector<10x18xf32> to vector<18xf32>
    %cst_94 = arith.constant 1.000000e+01 : f32
    %293 = vector.broadcast %cst_94 : f32 to vector<18xf32>
    %294 = arith.divf %292, %293 : vector<18xf32>
    %cst_95 = arith.constant dense<0x7F800000> : vector<18xf32>
    %295 = vector.multi_reduction <minimumf>, %235, %cst_95 [0] : vector<10x18xf32> to vector<18xf32>
    %cst_96 = arith.constant dense<0xFF800000> : vector<90xf32>
    %296 = vector.multi_reduction <maximumf>, %265, %cst_96 [0] : vector<10x90xf32> to vector<90xf32>
    %cst_97 = arith.constant dense<0.000000e+00> : vector<90xf32>
    %297 = vector.multi_reduction <add>, %265, %cst_97 [0] : vector<10x90xf32> to vector<90xf32>
    %cst_98 = arith.constant 1.000000e+01 : f32
    %298 = vector.broadcast %cst_98 : f32 to vector<90xf32>
    %299 = arith.divf %297, %298 : vector<90xf32>
    %cst_99 = arith.constant dense<0x7F800000> : vector<90xf32>
    %300 = vector.multi_reduction <minimumf>, %265, %cst_99 [0] : vector<10x90xf32> to vector<90xf32>
    %301 = vector.shape_cast %266 : vector<90xf32> to vector<1x90xf32>
    %cst_100 = arith.constant dense<0.000000e+00> : vector<1xf32>
    %302 = vector.multi_reduction <add>, %301, %cst_100 [1] : vector<1x90xf32> to vector<1xf32>
    %303 = vector.shape_cast %302 : vector<1xf32> to vector<1x1xf32>
    %304 = vector.extract %303[0, 0] : f32 from vector<1x1xf32>
    %cst_101 = arith.constant 0.000000e+00 : f32
    %305 = arith.addf %cst_101, %304 : f32
    %306 = vector.shape_cast %271 : vector<90xf32> to vector<1x90xf32>
    %cst_102 = arith.constant dense<0.000000e+00> : vector<1xf32>
    %307 = vector.multi_reduction <add>, %306, %cst_102 [1] : vector<1x90xf32> to vector<1xf32>
    %308 = vector.shape_cast %307 : vector<1xf32> to vector<1x1xf32>
    %309 = vector.extract %308[0, 0] : f32 from vector<1x1xf32>
    %310 = arith.addf %305, %309 : f32
    %311 = vector.shape_cast %276 : vector<18xf32> to vector<1x18xf32>
    %cst_103 = arith.constant dense<0.000000e+00> : vector<1xf32>
    %312 = vector.multi_reduction <add>, %311, %cst_103 [1] : vector<1x18xf32> to vector<1xf32>
    %313 = vector.shape_cast %312 : vector<1xf32> to vector<1x1xf32>
    %314 = vector.extract %313[0, 0] : f32 from vector<1x1xf32>
    %315 = arith.addf %310, %314 : f32
    %316 = vector.shape_cast %281 : vector<18xf32> to vector<1x18xf32>
    %cst_104 = arith.constant dense<0.000000e+00> : vector<1xf32>
    %317 = vector.multi_reduction <add>, %316, %cst_104 [1] : vector<1x18xf32> to vector<1xf32>
    %318 = vector.shape_cast %317 : vector<1xf32> to vector<1x1xf32>
    %319 = vector.extract %318[0, 0] : f32 from vector<1x1xf32>
    %320 = arith.addf %315, %319 : f32
    %321 = vector.shape_cast %286 : vector<18xf32> to vector<1x18xf32>
    %cst_105 = arith.constant dense<0.000000e+00> : vector<1xf32>
    %322 = vector.multi_reduction <add>, %321, %cst_105 [1] : vector<1x18xf32> to vector<1xf32>
    %323 = vector.shape_cast %322 : vector<1xf32> to vector<1x1xf32>
    %324 = vector.extract %323[0, 0] : f32 from vector<1x1xf32>
    %325 = arith.addf %320, %324 : f32
    %326 = vector.shape_cast %291 : vector<18xf32> to vector<1x18xf32>
    %cst_106 = arith.constant dense<0.000000e+00> : vector<1xf32>
    %327 = vector.multi_reduction <add>, %326, %cst_106 [1] : vector<1x18xf32> to vector<1xf32>
    %328 = vector.shape_cast %327 : vector<1xf32> to vector<1x1xf32>
    %329 = vector.extract %328[0, 0] : f32 from vector<1x1xf32>
    %330 = arith.addf %325, %329 : f32
    %331 = vector.shape_cast %296 : vector<90xf32> to vector<1x90xf32>
    %cst_107 = arith.constant dense<0.000000e+00> : vector<1xf32>
    %332 = vector.multi_reduction <add>, %331, %cst_107 [1] : vector<1x90xf32> to vector<1xf32>
    %333 = vector.shape_cast %332 : vector<1xf32> to vector<1x1xf32>
    %334 = vector.extract %333[0, 0] : f32 from vector<1x1xf32>
    %335 = arith.addf %330, %334 : f32
    %cst_108 = arith.constant 3.420000e+02 : f32
    %336 = arith.divf %335, %cst_108 : f32
    %337 = vector.broadcast %336 : f32 to vector<90xf32>
    %338 = arith.subf %266, %337 : vector<90xf32>
    %339 = arith.mulf %338, %338 : vector<90xf32>
    %340 = vector.shape_cast %339 : vector<90xf32> to vector<1x90xf32>
    %cst_109 = arith.constant dense<0.000000e+00> : vector<1xf32>
    %341 = vector.multi_reduction <add>, %340, %cst_109 [1] : vector<1x90xf32> to vector<1xf32>
    %342 = vector.shape_cast %341 : vector<1xf32> to vector<1x1xf32>
    %343 = vector.extract %342[0, 0] : f32 from vector<1x1xf32>
    %cst_110 = arith.constant 0.000000e+00 : f32
    %344 = arith.addf %cst_110, %343 : f32
    %345 = vector.broadcast %336 : f32 to vector<90xf32>
    %346 = arith.subf %271, %345 : vector<90xf32>
    %347 = arith.mulf %346, %346 : vector<90xf32>
    %348 = vector.shape_cast %347 : vector<90xf32> to vector<1x90xf32>
    %cst_111 = arith.constant dense<0.000000e+00> : vector<1xf32>
    %349 = vector.multi_reduction <add>, %348, %cst_111 [1] : vector<1x90xf32> to vector<1xf32>
    %350 = vector.shape_cast %349 : vector<1xf32> to vector<1x1xf32>
    %351 = vector.extract %350[0, 0] : f32 from vector<1x1xf32>
    %352 = arith.addf %344, %351 : f32
    %353 = vector.broadcast %336 : f32 to vector<18xf32>
    %354 = arith.subf %276, %353 : vector<18xf32>
    %355 = arith.mulf %354, %354 : vector<18xf32>
    %356 = vector.shape_cast %355 : vector<18xf32> to vector<1x18xf32>
    %cst_112 = arith.constant dense<0.000000e+00> : vector<1xf32>
    %357 = vector.multi_reduction <add>, %356, %cst_112 [1] : vector<1x18xf32> to vector<1xf32>
    %358 = vector.shape_cast %357 : vector<1xf32> to vector<1x1xf32>
    %359 = vector.extract %358[0, 0] : f32 from vector<1x1xf32>
    %360 = arith.addf %352, %359 : f32
    %361 = vector.broadcast %336 : f32 to vector<18xf32>
    %362 = arith.subf %281, %361 : vector<18xf32>
    %363 = arith.mulf %362, %362 : vector<18xf32>
    %364 = vector.shape_cast %363 : vector<18xf32> to vector<1x18xf32>
    %cst_113 = arith.constant dense<0.000000e+00> : vector<1xf32>
    %365 = vector.multi_reduction <add>, %364, %cst_113 [1] : vector<1x18xf32> to vector<1xf32>
    %366 = vector.shape_cast %365 : vector<1xf32> to vector<1x1xf32>
    %367 = vector.extract %366[0, 0] : f32 from vector<1x1xf32>
    %368 = arith.addf %360, %367 : f32
    %369 = vector.broadcast %336 : f32 to vector<18xf32>
    %370 = arith.subf %286, %369 : vector<18xf32>
    %371 = arith.mulf %370, %370 : vector<18xf32>
    %372 = vector.shape_cast %371 : vector<18xf32> to vector<1x18xf32>
    %cst_114 = arith.constant dense<0.000000e+00> : vector<1xf32>
    %373 = vector.multi_reduction <add>, %372, %cst_114 [1] : vector<1x18xf32> to vector<1xf32>
    %374 = vector.shape_cast %373 : vector<1xf32> to vector<1x1xf32>
    %375 = vector.extract %374[0, 0] : f32 from vector<1x1xf32>
    %376 = arith.addf %368, %375 : f32
    %377 = vector.broadcast %336 : f32 to vector<18xf32>
    %378 = arith.subf %291, %377 : vector<18xf32>
    %379 = arith.mulf %378, %378 : vector<18xf32>
    %380 = vector.shape_cast %379 : vector<18xf32> to vector<1x18xf32>
    %cst_115 = arith.constant dense<0.000000e+00> : vector<1xf32>
    %381 = vector.multi_reduction <add>, %380, %cst_115 [1] : vector<1x18xf32> to vector<1xf32>
    %382 = vector.shape_cast %381 : vector<1xf32> to vector<1x1xf32>
    %383 = vector.extract %382[0, 0] : f32 from vector<1x1xf32>
    %384 = arith.addf %376, %383 : f32
    %385 = vector.broadcast %336 : f32 to vector<90xf32>
    %386 = arith.subf %296, %385 : vector<90xf32>
    %387 = arith.mulf %386, %386 : vector<90xf32>
    %388 = vector.shape_cast %387 : vector<90xf32> to vector<1x90xf32>
    %cst_116 = arith.constant dense<0.000000e+00> : vector<1xf32>
    %389 = vector.multi_reduction <add>, %388, %cst_116 [1] : vector<1x90xf32> to vector<1xf32>
    %390 = vector.shape_cast %389 : vector<1xf32> to vector<1x1xf32>
    %391 = vector.extract %390[0, 0] : f32 from vector<1x1xf32>
    %392 = arith.addf %384, %391 : f32
    %cst_117 = arith.constant 3.420000e+02 : f32
    %393 = arith.divf %392, %cst_117 : f32
    %c14 = arith.constant 14 : index
    %394 = memref.load %arg7[%c14] : memref<20xf32, #tpu.memory_space<smem>>
    %c15 = arith.constant 15 : index
    %395 = memref.load %arg7[%c15] : memref<20xf32, #tpu.memory_space<smem>>
    %cst_118 = arith.constant 9.99999974E-6 : f32
    %396 = arith.addf %393, %cst_118 : f32
    %397 = math.rsqrt %396 : f32
    %398 = arith.mulf %394, %397 : f32
    %399 = vector.broadcast %336 : f32 to vector<90xf32>
    %400 = arith.subf %266, %399 : vector<90xf32>
    %401 = vector.broadcast %398 : f32 to vector<90xf32>
    %402 = arith.mulf %400, %401 : vector<90xf32>
    %403 = vector.broadcast %395 : f32 to vector<90xf32>
    %404 = arith.addf %402, %403 : vector<90xf32>
    %c0_119 = arith.constant 0 : index
    %c0_120 = arith.constant 0 : index
    %c0_121 = arith.constant 0 : index
    %405 = vector.load %arg9[%c0_119, %c0_120, %c0_121] : memref<3x3x90xf32, #tpu.memory_space<vmem>>, vector<1x1x90xf32>
    %406 = vector.shape_cast %405 : vector<1x1x90xf32> to vector<90xf32>
    %407 = vector.shape_cast %404 : vector<90xf32> to vector<1x1x90xf32>
    tpu.vector_store %arg9[%c0_119, %c0_120, %c0_121], %407 {strides = array<i32>} : memref<3x3x90xf32, #tpu.memory_space<vmem>>, vector<1x1x90xf32>,
    %408 = vector.broadcast %336 : f32 to vector<90xf32>
    %409 = arith.subf %271, %408 : vector<90xf32>
    %410 = vector.broadcast %398 : f32 to vector<90xf32>
    %411 = arith.mulf %409, %410 : vector<90xf32>
    %412 = vector.broadcast %395 : f32 to vector<90xf32>
    %413 = arith.addf %411, %412 : vector<90xf32>
    %c0_122 = arith.constant 0 : index
    %c1_123 = arith.constant 1 : index
    %c0_124 = arith.constant 0 : index
    %414 = vector.load %arg9[%c0_122, %c1_123, %c0_124] : memref<3x3x90xf32, #tpu.memory_space<vmem>>, vector<1x1x90xf32>
    %415 = vector.shape_cast %414 : vector<1x1x90xf32> to vector<90xf32>
    %416 = vector.shape_cast %413 : vector<90xf32> to vector<1x1x90xf32>
    tpu.vector_store %arg9[%c0_122, %c1_123, %c0_124], %416 {strides = array<i32>} : memref<3x3x90xf32, #tpu.memory_space<vmem>>, vector<1x1x90xf32>,
    %417 = vector.broadcast %336 : f32 to vector<18xf32>
    %418 = arith.subf %276, %417 : vector<18xf32>
    %419 = vector.broadcast %398 : f32 to vector<18xf32>
    %420 = arith.mulf %418, %419 : vector<18xf32>
    %421 = vector.broadcast %395 : f32 to vector<18xf32>
    %422 = arith.addf %420, %421 : vector<18xf32>
    %c0_125 = arith.constant 0 : index
    %c0_126 = arith.constant 0 : index
    %c0_127 = arith.constant 0 : index
    %423 = vector.load %arg8[%c0_125, %c0_126, %c0_127] : memref<3x4x18xf32, #tpu.memory_space<vmem>>, vector<1x1x18xf32>
    %424 = vector.shape_cast %423 : vector<1x1x18xf32> to vector<18xf32>
    %425 = vector.shape_cast %422 : vector<18xf32> to vector<1x1x18xf32>
    tpu.vector_store %arg8[%c0_125, %c0_126, %c0_127], %425 {strides = array<i32>} : memref<3x4x18xf32, #tpu.memory_space<vmem>>, vector<1x1x18xf32>,
    %426 = vector.broadcast %336 : f32 to vector<18xf32>
    %427 = arith.subf %281, %426 : vector<18xf32>
    %428 = vector.broadcast %398 : f32 to vector<18xf32>
    %429 = arith.mulf %427, %428 : vector<18xf32>
    %430 = vector.broadcast %395 : f32 to vector<18xf32>
    %431 = arith.addf %429, %430 : vector<18xf32>
    %c0_128 = arith.constant 0 : index
    %c1_129 = arith.constant 1 : index
    %c0_130 = arith.constant 0 : index
    %432 = vector.load %arg8[%c0_128, %c1_129, %c0_130] : memref<3x4x18xf32, #tpu.memory_space<vmem>>, vector<1x1x18xf32>
    %433 = vector.shape_cast %432 : vector<1x1x18xf32> to vector<18xf32>
    %434 = vector.shape_cast %431 : vector<18xf32> to vector<1x1x18xf32>
    tpu.vector_store %arg8[%c0_128, %c1_129, %c0_130], %434 {strides = array<i32>} : memref<3x4x18xf32, #tpu.memory_space<vmem>>, vector<1x1x18xf32>,
    %435 = vector.broadcast %336 : f32 to vector<18xf32>
    %436 = arith.subf %286, %435 : vector<18xf32>
    %437 = vector.broadcast %398 : f32 to vector<18xf32>
    %438 = arith.mulf %436, %437 : vector<18xf32>
    %439 = vector.broadcast %395 : f32 to vector<18xf32>
    %440 = arith.addf %438, %439 : vector<18xf32>
    %c0_131 = arith.constant 0 : index
    %c2_132 = arith.constant 2 : index
    %c0_133 = arith.constant 0 : index
    %441 = vector.load %arg8[%c0_131, %c2_132, %c0_133] : memref<3x4x18xf32, #tpu.memory_space<vmem>>, vector<1x1x18xf32>
    %442 = vector.shape_cast %441 : vector<1x1x18xf32> to vector<18xf32>
    %443 = vector.shape_cast %440 : vector<18xf32> to vector<1x1x18xf32>
    tpu.vector_store %arg8[%c0_131, %c2_132, %c0_133], %443 {strides = array<i32>} : memref<3x4x18xf32, #tpu.memory_space<vmem>>, vector<1x1x18xf32>,
    %444 = vector.broadcast %336 : f32 to vector<18xf32>
    %445 = arith.subf %291, %444 : vector<18xf32>
    %446 = vector.broadcast %398 : f32 to vector<18xf32>
    %447 = arith.mulf %445, %446 : vector<18xf32>
    %448 = vector.broadcast %395 : f32 to vector<18xf32>
    %449 = arith.addf %447, %448 : vector<18xf32>
    %c0_134 = arith.constant 0 : index
    %c3_135 = arith.constant 3 : index
    %c0_136 = arith.constant 0 : index
    %450 = vector.load %arg8[%c0_134, %c3_135, %c0_136] : memref<3x4x18xf32, #tpu.memory_space<vmem>>, vector<1x1x18xf32>
    %451 = vector.shape_cast %450 : vector<1x1x18xf32> to vector<18xf32>
    %452 = vector.shape_cast %449 : vector<18xf32> to vector<1x1x18xf32>
    tpu.vector_store %arg8[%c0_134, %c3_135, %c0_136], %452 {strides = array<i32>} : memref<3x4x18xf32, #tpu.memory_space<vmem>>, vector<1x1x18xf32>,
    %453 = vector.broadcast %336 : f32 to vector<90xf32>
    %454 = arith.subf %296, %453 : vector<90xf32>
    %455 = vector.broadcast %398 : f32 to vector<90xf32>
    %456 = arith.mulf %454, %455 : vector<90xf32>
    %457 = vector.broadcast %395 : f32 to vector<90xf32>
    %458 = arith.addf %456, %457 : vector<90xf32>
    %c0_137 = arith.constant 0 : index
    %c2_138 = arith.constant 2 : index
    %c0_139 = arith.constant 0 : index
    %459 = vector.load %arg9[%c0_137, %c2_138, %c0_139] : memref<3x3x90xf32, #tpu.memory_space<vmem>>, vector<1x1x90xf32>
    %460 = vector.shape_cast %459 : vector<1x1x90xf32> to vector<90xf32>
    %461 = vector.shape_cast %458 : vector<90xf32> to vector<1x1x90xf32>
    tpu.vector_store %arg9[%c0_137, %c2_138, %c0_139], %461 {strides = array<i32>} : memref<3x3x90xf32, #tpu.memory_space<vmem>>, vector<1x1x90xf32>,
    %462 = vector.shape_cast %269 : vector<90xf32> to vector<1x90xf32>
    %cst_140 = arith.constant dense<0.000000e+00> : vector<1xf32>
    %463 = vector.multi_reduction <add>, %462, %cst_140 [1] : vector<1x90xf32> to vector<1xf32>
    %464 = vector.shape_cast %463 : vector<1xf32> to vector<1x1xf32>
    %465 = vector.extract %464[0, 0] : f32 from vector<1x1xf32>
    %cst_141 = arith.constant 0.000000e+00 : f32
    %466 = arith.addf %cst_141, %465 : f32
    %467 = vector.shape_cast %274 : vector<90xf32> to vector<1x90xf32>
    %cst_142 = arith.constant dense<0.000000e+00> : vector<1xf32>
    %468 = vector.multi_reduction <add>, %467, %cst_142 [1] : vector<1x90xf32> to vector<1xf32>
    %469 = vector.shape_cast %468 : vector<1xf32> to vector<1x1xf32>
    %470 = vector.extract %469[0, 0] : f32 from vector<1x1xf32>
    %471 = arith.addf %466, %470 : f32
    %472 = vector.shape_cast %279 : vector<18xf32> to vector<1x18xf32>
    %cst_143 = arith.constant dense<0.000000e+00> : vector<1xf32>
    %473 = vector.multi_reduction <add>, %472, %cst_143 [1] : vector<1x18xf32> to vector<1xf32>
    %474 = vector.shape_cast %473 : vector<1xf32> to vector<1x1xf32>
    %475 = vector.extract %474[0, 0] : f32 from vector<1x1xf32>
    %476 = arith.addf %471, %475 : f32
    %477 = vector.shape_cast %284 : vector<18xf32> to vector<1x18xf32>
    %cst_144 = arith.constant dense<0.000000e+00> : vector<1xf32>
    %478 = vector.multi_reduction <add>, %477, %cst_144 [1] : vector<1x18xf32> to vector<1xf32>
    %479 = vector.shape_cast %478 : vector<1xf32> to vector<1x1xf32>
    %480 = vector.extract %479[0, 0] : f32 from vector<1x1xf32>
    %481 = arith.addf %476, %480 : f32
    %482 = vector.shape_cast %289 : vector<18xf32> to vector<1x18xf32>
    %cst_145 = arith.constant dense<0.000000e+00> : vector<1xf32>
    %483 = vector.multi_reduction <add>, %482, %cst_145 [1] : vector<1x18xf32> to vector<1xf32>
    %484 = vector.shape_cast %483 : vector<1xf32> to vector<1x1xf32>
    %485 = vector.extract %484[0, 0] : f32 from vector<1x1xf32>
    %486 = arith.addf %481, %485 : f32
    %487 = vector.shape_cast %294 : vector<18xf32> to vector<1x18xf32>
    %cst_146 = arith.constant dense<0.000000e+00> : vector<1xf32>
    %488 = vector.multi_reduction <add>, %487, %cst_146 [1] : vector<1x18xf32> to vector<1xf32>
    %489 = vector.shape_cast %488 : vector<1xf32> to vector<1x1xf32>
    %490 = vector.extract %489[0, 0] : f32 from vector<1x1xf32>
    %491 = arith.addf %486, %490 : f32
    %492 = vector.shape_cast %299 : vector<90xf32> to vector<1x90xf32>
    %cst_147 = arith.constant dense<0.000000e+00> : vector<1xf32>
    %493 = vector.multi_reduction <add>, %492, %cst_147 [1] : vector<1x90xf32> to vector<1xf32>
    %494 = vector.shape_cast %493 : vector<1xf32> to vector<1x1xf32>
    %495 = vector.extract %494[0, 0] : f32 from vector<1x1xf32>
    %496 = arith.addf %491, %495 : f32
    %cst_148 = arith.constant 3.420000e+02 : f32
    %497 = arith.divf %496, %cst_148 : f32
    %498 = vector.broadcast %497 : f32 to vector<90xf32>
    %499 = arith.subf %269, %498 : vector<90xf32>
    %500 = arith.mulf %499, %499 : vector<90xf32>
    %501 = vector.shape_cast %500 : vector<90xf32> to vector<1x90xf32>
    %cst_149 = arith.constant dense<0.000000e+00> : vector<1xf32>
    %502 = vector.multi_reduction <add>, %501, %cst_149 [1] : vector<1x90xf32> to vector<1xf32>
    %503 = vector.shape_cast %502 : vector<1xf32> to vector<1x1xf32>
    %504 = vector.extract %503[0, 0] : f32 from vector<1x1xf32>
    %cst_150 = arith.constant 0.000000e+00 : f32
    %505 = arith.addf %cst_150, %504 : f32
    %506 = vector.broadcast %497 : f32 to vector<90xf32>
    %507 = arith.subf %274, %506 : vector<90xf32>
    %508 = arith.mulf %507, %507 : vector<90xf32>
    %509 = vector.shape_cast %508 : vector<90xf32> to vector<1x90xf32>
    %cst_151 = arith.constant dense<0.000000e+00> : vector<1xf32>
    %510 = vector.multi_reduction <add>, %509, %cst_151 [1] : vector<1x90xf32> to vector<1xf32>
    %511 = vector.shape_cast %510 : vector<1xf32> to vector<1x1xf32>
    %512 = vector.extract %511[0, 0] : f32 from vector<1x1xf32>
    %513 = arith.addf %505, %512 : f32
    %514 = vector.broadcast %497 : f32 to vector<18xf32>
    %515 = arith.subf %279, %514 : vector<18xf32>
    %516 = arith.mulf %515, %515 : vector<18xf32>
    %517 = vector.shape_cast %516 : vector<18xf32> to vector<1x18xf32>
    %cst_152 = arith.constant dense<0.000000e+00> : vector<1xf32>
    %518 = vector.multi_reduction <add>, %517, %cst_152 [1] : vector<1x18xf32> to vector<1xf32>
    %519 = vector.shape_cast %518 : vector<1xf32> to vector<1x1xf32>
    %520 = vector.extract %519[0, 0] : f32 from vector<1x1xf32>
    %521 = arith.addf %513, %520 : f32
    %522 = vector.broadcast %497 : f32 to vector<18xf32>
    %523 = arith.subf %284, %522 : vector<18xf32>
    %524 = arith.mulf %523, %523 : vector<18xf32>
    %525 = vector.shape_cast %524 : vector<18xf32> to vector<1x18xf32>
    %cst_153 = arith.constant dense<0.000000e+00> : vector<1xf32>
    %526 = vector.multi_reduction <add>, %525, %cst_153 [1] : vector<1x18xf32> to vector<1xf32>
    %527 = vector.shape_cast %526 : vector<1xf32> to vector<1x1xf32>
    %528 = vector.extract %527[0, 0] : f32 from vector<1x1xf32>
    %529 = arith.addf %521, %528 : f32
    %530 = vector.broadcast %497 : f32 to vector<18xf32>
    %531 = arith.subf %289, %530 : vector<18xf32>
    %532 = arith.mulf %531, %531 : vector<18xf32>
    %533 = vector.shape_cast %532 : vector<18xf32> to vector<1x18xf32>
    %cst_154 = arith.constant dense<0.000000e+00> : vector<1xf32>
    %534 = vector.multi_reduction <add>, %533, %cst_154 [1] : vector<1x18xf32> to vector<1xf32>
    %535 = vector.shape_cast %534 : vector<1xf32> to vector<1x1xf32>
    %536 = vector.extract %535[0, 0] : f32 from vector<1x1xf32>
    %537 = arith.addf %529, %536 : f32
    %538 = vector.broadcast %497 : f32 to vector<18xf32>
    %539 = arith.subf %294, %538 : vector<18xf32>
    %540 = arith.mulf %539, %539 : vector<18xf32>
    %541 = vector.shape_cast %540 : vector<18xf32> to vector<1x18xf32>
    %cst_155 = arith.constant dense<0.000000e+00> : vector<1xf32>
    %542 = vector.multi_reduction <add>, %541, %cst_155 [1] : vector<1x18xf32> to vector<1xf32>
    %543 = vector.shape_cast %542 : vector<1xf32> to vector<1x1xf32>
    %544 = vector.extract %543[0, 0] : f32 from vector<1x1xf32>
    %545 = arith.addf %537, %544 : f32
    %546 = vector.broadcast %497 : f32 to vector<90xf32>
    %547 = arith.subf %299, %546 : vector<90xf32>
    %548 = arith.mulf %547, %547 : vector<90xf32>
    %549 = vector.shape_cast %548 : vector<90xf32> to vector<1x90xf32>
    %cst_156 = arith.constant dense<0.000000e+00> : vector<1xf32>
    %550 = vector.multi_reduction <add>, %549, %cst_156 [1] : vector<1x90xf32> to vector<1xf32>
    %551 = vector.shape_cast %550 : vector<1xf32> to vector<1x1xf32>
    %552 = vector.extract %551[0, 0] : f32 from vector<1x1xf32>
    %553 = arith.addf %545, %552 : f32
    %cst_157 = arith.constant 3.420000e+02 : f32
    %554 = arith.divf %553, %cst_157 : f32
    %c16 = arith.constant 16 : index
    %555 = memref.load %arg7[%c16] : memref<20xf32, #tpu.memory_space<smem>>
    %c17 = arith.constant 17 : index
    %556 = memref.load %arg7[%c17] : memref<20xf32, #tpu.memory_space<smem>>
    %cst_158 = arith.constant 9.99999974E-6 : f32
    %557 = arith.addf %554, %cst_158 : f32
    %558 = math.rsqrt %557 : f32
    %559 = arith.mulf %555, %558 : f32
    %560 = vector.broadcast %497 : f32 to vector<90xf32>
    %561 = arith.subf %269, %560 : vector<90xf32>
    %562 = vector.broadcast %559 : f32 to vector<90xf32>
    %563 = arith.mulf %561, %562 : vector<90xf32>
    %564 = vector.broadcast %556 : f32 to vector<90xf32>
    %565 = arith.addf %563, %564 : vector<90xf32>
    %c1_159 = arith.constant 1 : index
    %c0_160 = arith.constant 0 : index
    %c0_161 = arith.constant 0 : index
    %566 = vector.load %arg9[%c1_159, %c0_160, %c0_161] : memref<3x3x90xf32, #tpu.memory_space<vmem>>, vector<1x1x90xf32>
    %567 = vector.shape_cast %566 : vector<1x1x90xf32> to vector<90xf32>
    %568 = vector.shape_cast %565 : vector<90xf32> to vector<1x1x90xf32>
    tpu.vector_store %arg9[%c1_159, %c0_160, %c0_161], %568 {strides = array<i32>} : memref<3x3x90xf32, #tpu.memory_space<vmem>>, vector<1x1x90xf32>,
    %569 = vector.broadcast %497 : f32 to vector<90xf32>
    %570 = arith.subf %274, %569 : vector<90xf32>
    %571 = vector.broadcast %559 : f32 to vector<90xf32>
    %572 = arith.mulf %570, %571 : vector<90xf32>
    %573 = vector.broadcast %556 : f32 to vector<90xf32>
    %574 = arith.addf %572, %573 : vector<90xf32>
    %c1_162 = arith.constant 1 : index
    %c1_163 = arith.constant 1 : index
    %c0_164 = arith.constant 0 : index
    %575 = vector.load %arg9[%c1_162, %c1_163, %c0_164] : memref<3x3x90xf32, #tpu.memory_space<vmem>>, vector<1x1x90xf32>
    %576 = vector.shape_cast %575 : vector<1x1x90xf32> to vector<90xf32>
    %577 = vector.shape_cast %574 : vector<90xf32> to vector<1x1x90xf32>
    tpu.vector_store %arg9[%c1_162, %c1_163, %c0_164], %577 {strides = array<i32>} : memref<3x3x90xf32, #tpu.memory_space<vmem>>, vector<1x1x90xf32>,
    %578 = vector.broadcast %497 : f32 to vector<18xf32>
    %579 = arith.subf %279, %578 : vector<18xf32>
    %580 = vector.broadcast %559 : f32 to vector<18xf32>
    %581 = arith.mulf %579, %580 : vector<18xf32>
    %582 = vector.broadcast %556 : f32 to vector<18xf32>
    %583 = arith.addf %581, %582 : vector<18xf32>
    %c1_165 = arith.constant 1 : index
    %c0_166 = arith.constant 0 : index
    %c0_167 = arith.constant 0 : index
    %584 = vector.load %arg8[%c1_165, %c0_166, %c0_167] : memref<3x4x18xf32, #tpu.memory_space<vmem>>, vector<1x1x18xf32>
    %585 = vector.shape_cast %584 : vector<1x1x18xf32> to vector<18xf32>
    %586 = vector.shape_cast %583 : vector<18xf32> to vector<1x1x18xf32>
    tpu.vector_store %arg8[%c1_165, %c0_166, %c0_167], %586 {strides = array<i32>} : memref<3x4x18xf32, #tpu.memory_space<vmem>>, vector<1x1x18xf32>,
    %587 = vector.broadcast %497 : f32 to vector<18xf32>
    %588 = arith.subf %284, %587 : vector<18xf32>
    %589 = vector.broadcast %559 : f32 to vector<18xf32>
    %590 = arith.mulf %588, %589 : vector<18xf32>
    %591 = vector.broadcast %556 : f32 to vector<18xf32>
    %592 = arith.addf %590, %591 : vector<18xf32>
    %c1_168 = arith.constant 1 : index
    %c1_169 = arith.constant 1 : index
    %c0_170 = arith.constant 0 : index
    %593 = vector.load %arg8[%c1_168, %c1_169, %c0_170] : memref<3x4x18xf32, #tpu.memory_space<vmem>>, vector<1x1x18xf32>
    %594 = vector.shape_cast %593 : vector<1x1x18xf32> to vector<18xf32>
    %595 = vector.shape_cast %592 : vector<18xf32> to vector<1x1x18xf32>
    tpu.vector_store %arg8[%c1_168, %c1_169, %c0_170], %595 {strides = array<i32>} : memref<3x4x18xf32, #tpu.memory_space<vmem>>, vector<1x1x18xf32>,
    %596 = vector.broadcast %497 : f32 to vector<18xf32>
    %597 = arith.subf %289, %596 : vector<18xf32>
    %598 = vector.broadcast %559 : f32 to vector<18xf32>
    %599 = arith.mulf %597, %598 : vector<18xf32>
    %600 = vector.broadcast %556 : f32 to vector<18xf32>
    %601 = arith.addf %599, %600 : vector<18xf32>
    %c1_171 = arith.constant 1 : index
    %c2_172 = arith.constant 2 : index
    %c0_173 = arith.constant 0 : index
    %602 = vector.load %arg8[%c1_171, %c2_172, %c0_173] : memref<3x4x18xf32, #tpu.memory_space<vmem>>, vector<1x1x18xf32>
    %603 = vector.shape_cast %602 : vector<1x1x18xf32> to vector<18xf32>
    %604 = vector.shape_cast %601 : vector<18xf32> to vector<1x1x18xf32>
    tpu.vector_store %arg8[%c1_171, %c2_172, %c0_173], %604 {strides = array<i32>} : memref<3x4x18xf32, #tpu.memory_space<vmem>>, vector<1x1x18xf32>,
    %605 = vector.broadcast %497 : f32 to vector<18xf32>
    %606 = arith.subf %294, %605 : vector<18xf32>
    %607 = vector.broadcast %559 : f32 to vector<18xf32>
    %608 = arith.mulf %606, %607 : vector<18xf32>
    %609 = vector.broadcast %556 : f32 to vector<18xf32>
    %610 = arith.addf %608, %609 : vector<18xf32>
    %c1_174 = arith.constant 1 : index
    %c3_175 = arith.constant 3 : index
    %c0_176 = arith.constant 0 : index
    %611 = vector.load %arg8[%c1_174, %c3_175, %c0_176] : memref<3x4x18xf32, #tpu.memory_space<vmem>>, vector<1x1x18xf32>
    %612 = vector.shape_cast %611 : vector<1x1x18xf32> to vector<18xf32>
    %613 = vector.shape_cast %610 : vector<18xf32> to vector<1x1x18xf32>
    tpu.vector_store %arg8[%c1_174, %c3_175, %c0_176], %613 {strides = array<i32>} : memref<3x4x18xf32, #tpu.memory_space<vmem>>, vector<1x1x18xf32>,
    %614 = vector.broadcast %497 : f32 to vector<90xf32>
    %615 = arith.subf %299, %614 : vector<90xf32>
    %616 = vector.broadcast %559 : f32 to vector<90xf32>
    %617 = arith.mulf %615, %616 : vector<90xf32>
    %618 = vector.broadcast %556 : f32 to vector<90xf32>
    %619 = arith.addf %617, %618 : vector<90xf32>
    %c1_177 = arith.constant 1 : index
    %c2_178 = arith.constant 2 : index
    %c0_179 = arith.constant 0 : index
    %620 = vector.load %arg9[%c1_177, %c2_178, %c0_179] : memref<3x3x90xf32, #tpu.memory_space<vmem>>, vector<1x1x90xf32>
    %621 = vector.shape_cast %620 : vector<1x1x90xf32> to vector<90xf32>
    %622 = vector.shape_cast %619 : vector<90xf32> to vector<1x1x90xf32>
    tpu.vector_store %arg9[%c1_177, %c2_178, %c0_179], %622 {strides = array<i32>} : memref<3x3x90xf32, #tpu.memory_space<vmem>>, vector<1x1x90xf32>,
    %623 = vector.shape_cast %270 : vector<90xf32> to vector<1x90xf32>
    %cst_180 = arith.constant dense<0.000000e+00> : vector<1xf32>
    %624 = vector.multi_reduction <add>, %623, %cst_180 [1] : vector<1x90xf32> to vector<1xf32>
    %625 = vector.shape_cast %624 : vector<1xf32> to vector<1x1xf32>
    %626 = vector.extract %625[0, 0] : f32 from vector<1x1xf32>
    %cst_181 = arith.constant 0.000000e+00 : f32
    %627 = arith.addf %cst_181, %626 : f32
    %628 = vector.shape_cast %275 : vector<90xf32> to vector<1x90xf32>
    %cst_182 = arith.constant dense<0.000000e+00> : vector<1xf32>
    %629 = vector.multi_reduction <add>, %628, %cst_182 [1] : vector<1x90xf32> to vector<1xf32>
    %630 = vector.shape_cast %629 : vector<1xf32> to vector<1x1xf32>
    %631 = vector.extract %630[0, 0] : f32 from vector<1x1xf32>
    %632 = arith.addf %627, %631 : f32
    %633 = vector.shape_cast %280 : vector<18xf32> to vector<1x18xf32>
    %cst_183 = arith.constant dense<0.000000e+00> : vector<1xf32>
    %634 = vector.multi_reduction <add>, %633, %cst_183 [1] : vector<1x18xf32> to vector<1xf32>
    %635 = vector.shape_cast %634 : vector<1xf32> to vector<1x1xf32>
    %636 = vector.extract %635[0, 0] : f32 from vector<1x1xf32>
    %637 = arith.addf %632, %636 : f32
    %638 = vector.shape_cast %285 : vector<18xf32> to vector<1x18xf32>
    %cst_184 = arith.constant dense<0.000000e+00> : vector<1xf32>
    %639 = vector.multi_reduction <add>, %638, %cst_184 [1] : vector<1x18xf32> to vector<1xf32>
    %640 = vector.shape_cast %639 : vector<1xf32> to vector<1x1xf32>
    %641 = vector.extract %640[0, 0] : f32 from vector<1x1xf32>
    %642 = arith.addf %637, %641 : f32
    %643 = vector.shape_cast %290 : vector<18xf32> to vector<1x18xf32>
    %cst_185 = arith.constant dense<0.000000e+00> : vector<1xf32>
    %644 = vector.multi_reduction <add>, %643, %cst_185 [1] : vector<1x18xf32> to vector<1xf32>
    %645 = vector.shape_cast %644 : vector<1xf32> to vector<1x1xf32>
    %646 = vector.extract %645[0, 0] : f32 from vector<1x1xf32>
    %647 = arith.addf %642, %646 : f32
    %648 = vector.shape_cast %295 : vector<18xf32> to vector<1x18xf32>
    %cst_186 = arith.constant dense<0.000000e+00> : vector<1xf32>
    %649 = vector.multi_reduction <add>, %648, %cst_186 [1] : vector<1x18xf32> to vector<1xf32>
    %650 = vector.shape_cast %649 : vector<1xf32> to vector<1x1xf32>
    %651 = vector.extract %650[0, 0] : f32 from vector<1x1xf32>
    %652 = arith.addf %647, %651 : f32
    %653 = vector.shape_cast %300 : vector<90xf32> to vector<1x90xf32>
    %cst_187 = arith.constant dense<0.000000e+00> : vector<1xf32>
    %654 = vector.multi_reduction <add>, %653, %cst_187 [1] : vector<1x90xf32> to vector<1xf32>
    %655 = vector.shape_cast %654 : vector<1xf32> to vector<1x1xf32>
    %656 = vector.extract %655[0, 0] : f32 from vector<1x1xf32>
    %657 = arith.addf %652, %656 : f32
    %cst_188 = arith.constant 3.420000e+02 : f32
    %658 = arith.divf %657, %cst_188 : f32
    %659 = vector.broadcast %658 : f32 to vector<90xf32>
    %660 = arith.subf %270, %659 : vector<90xf32>
    %661 = arith.mulf %660, %660 : vector<90xf32>
    %662 = vector.shape_cast %661 : vector<90xf32> to vector<1x90xf32>
    %cst_189 = arith.constant dense<0.000000e+00> : vector<1xf32>
    %663 = vector.multi_reduction <add>, %662, %cst_189 [1] : vector<1x90xf32> to vector<1xf32>
    %664 = vector.shape_cast %663 : vector<1xf32> to vector<1x1xf32>
    %665 = vector.extract %664[0, 0] : f32 from vector<1x1xf32>
    %cst_190 = arith.constant 0.000000e+00 : f32
    %666 = arith.addf %cst_190, %665 : f32
    %667 = vector.broadcast %658 : f32 to vector<90xf32>
    %668 = arith.subf %275, %667 : vector<90xf32>
    %669 = arith.mulf %668, %668 : vector<90xf32>
    %670 = vector.shape_cast %669 : vector<90xf32> to vector<1x90xf32>
    %cst_191 = arith.constant dense<0.000000e+00> : vector<1xf32>
    %671 = vector.multi_reduction <add>, %670, %cst_191 [1] : vector<1x90xf32> to vector<1xf32>
    %672 = vector.shape_cast %671 : vector<1xf32> to vector<1x1xf32>
    %673 = vector.extract %672[0, 0] : f32 from vector<1x1xf32>
    %674 = arith.addf %666, %673 : f32
    %675 = vector.broadcast %658 : f32 to vector<18xf32>
    %676 = arith.subf %280, %675 : vector<18xf32>
    %677 = arith.mulf %676, %676 : vector<18xf32>
    %678 = vector.shape_cast %677 : vector<18xf32> to vector<1x18xf32>
    %cst_192 = arith.constant dense<0.000000e+00> : vector<1xf32>
    %679 = vector.multi_reduction <add>, %678, %cst_192 [1] : vector<1x18xf32> to vector<1xf32>
    %680 = vector.shape_cast %679 : vector<1xf32> to vector<1x1xf32>
    %681 = vector.extract %680[0, 0] : f32 from vector<1x1xf32>
    %682 = arith.addf %674, %681 : f32
    %683 = vector.broadcast %658 : f32 to vector<18xf32>
    %684 = arith.subf %285, %683 : vector<18xf32>
    %685 = arith.mulf %684, %684 : vector<18xf32>
    %686 = vector.shape_cast %685 : vector<18xf32> to vector<1x18xf32>
    %cst_193 = arith.constant dense<0.000000e+00> : vector<1xf32>
    %687 = vector.multi_reduction <add>, %686, %cst_193 [1] : vector<1x18xf32> to vector<1xf32>
    %688 = vector.shape_cast %687 : vector<1xf32> to vector<1x1xf32>
    %689 = vector.extract %688[0, 0] : f32 from vector<1x1xf32>
    %690 = arith.addf %682, %689 : f32
    %691 = vector.broadcast %658 : f32 to vector<18xf32>
    %692 = arith.subf %290, %691 : vector<18xf32>
    %693 = arith.mulf %692, %692 : vector<18xf32>
    %694 = vector.shape_cast %693 : vector<18xf32> to vector<1x18xf32>
    %cst_194 = arith.constant dense<0.000000e+00> : vector<1xf32>
    %695 = vector.multi_reduction <add>, %694, %cst_194 [1] : vector<1x18xf32> to vector<1xf32>
    %696 = vector.shape_cast %695 : vector<1xf32> to vector<1x1xf32>
    %697 = vector.extract %696[0, 0] : f32 from vector<1x1xf32>
    %698 = arith.addf %690, %697 : f32
    %699 = vector.broadcast %658 : f32 to vector<18xf32>
    %700 = arith.subf %295, %699 : vector<18xf32>
    %701 = arith.mulf %700, %700 : vector<18xf32>
    %702 = vector.shape_cast %701 : vector<18xf32> to vector<1x18xf32>
    %cst_195 = arith.constant dense<0.000000e+00> : vector<1xf32>
    %703 = vector.multi_reduction <add>, %702, %cst_195 [1] : vector<1x18xf32> to vector<1xf32>
    %704 = vector.shape_cast %703 : vector<1xf32> to vector<1x1xf32>
    %705 = vector.extract %704[0, 0] : f32 from vector<1x1xf32>
    %706 = arith.addf %698, %705 : f32
    %707 = vector.broadcast %658 : f32 to vector<90xf32>
    %708 = arith.subf %300, %707 : vector<90xf32>
    %709 = arith.mulf %708, %708 : vector<90xf32>
    %710 = vector.shape_cast %709 : vector<90xf32> to vector<1x90xf32>
    %cst_196 = arith.constant dense<0.000000e+00> : vector<1xf32>
    %711 = vector.multi_reduction <add>, %710, %cst_196 [1] : vector<1x90xf32> to vector<1xf32>
    %712 = vector.shape_cast %711 : vector<1xf32> to vector<1x1xf32>
    %713 = vector.extract %712[0, 0] : f32 from vector<1x1xf32>
    %714 = arith.addf %706, %713 : f32
    %cst_197 = arith.constant 3.420000e+02 : f32
    %715 = arith.divf %714, %cst_197 : f32
    %c18 = arith.constant 18 : index
    %716 = memref.load %arg7[%c18] : memref<20xf32, #tpu.memory_space<smem>>
    %c19 = arith.constant 19 : index
    %717 = memref.load %arg7[%c19] : memref<20xf32, #tpu.memory_space<smem>>
    %cst_198 = arith.constant 9.99999974E-6 : f32
    %718 = arith.addf %715, %cst_198 : f32
    %719 = math.rsqrt %718 : f32
    %720 = arith.mulf %716, %719 : f32
    %721 = vector.broadcast %658 : f32 to vector<90xf32>
    %722 = arith.subf %270, %721 : vector<90xf32>
    %723 = vector.broadcast %720 : f32 to vector<90xf32>
    %724 = arith.mulf %722, %723 : vector<90xf32>
    %725 = vector.broadcast %717 : f32 to vector<90xf32>
    %726 = arith.addf %724, %725 : vector<90xf32>
    %c2_199 = arith.constant 2 : index
    %c0_200 = arith.constant 0 : index
    %c0_201 = arith.constant 0 : index
    %727 = vector.load %arg9[%c2_199, %c0_200, %c0_201] : memref<3x3x90xf32, #tpu.memory_space<vmem>>, vector<1x1x90xf32>
    %728 = vector.shape_cast %727 : vector<1x1x90xf32> to vector<90xf32>
    %729 = vector.shape_cast %726 : vector<90xf32> to vector<1x1x90xf32>
    tpu.vector_store %arg9[%c2_199, %c0_200, %c0_201], %729 {strides = array<i32>} : memref<3x3x90xf32, #tpu.memory_space<vmem>>, vector<1x1x90xf32>,
    %730 = vector.broadcast %658 : f32 to vector<90xf32>
    %731 = arith.subf %275, %730 : vector<90xf32>
    %732 = vector.broadcast %720 : f32 to vector<90xf32>
    %733 = arith.mulf %731, %732 : vector<90xf32>
    %734 = vector.broadcast %717 : f32 to vector<90xf32>
    %735 = arith.addf %733, %734 : vector<90xf32>
    %c2_202 = arith.constant 2 : index
    %c1_203 = arith.constant 1 : index
    %c0_204 = arith.constant 0 : index
    %736 = vector.load %arg9[%c2_202, %c1_203, %c0_204] : memref<3x3x90xf32, #tpu.memory_space<vmem>>, vector<1x1x90xf32>
    %737 = vector.shape_cast %736 : vector<1x1x90xf32> to vector<90xf32>
    %738 = vector.shape_cast %735 : vector<90xf32> to vector<1x1x90xf32>
    tpu.vector_store %arg9[%c2_202, %c1_203, %c0_204], %738 {strides = array<i32>} : memref<3x3x90xf32, #tpu.memory_space<vmem>>, vector<1x1x90xf32>,
    %739 = vector.broadcast %658 : f32 to vector<18xf32>
    %740 = arith.subf %280, %739 : vector<18xf32>
    %741 = vector.broadcast %720 : f32 to vector<18xf32>
    %742 = arith.mulf %740, %741 : vector<18xf32>
    %743 = vector.broadcast %717 : f32 to vector<18xf32>
    %744 = arith.addf %742, %743 : vector<18xf32>
    %c2_205 = arith.constant 2 : index
    %c0_206 = arith.constant 0 : index
    %c0_207 = arith.constant 0 : index
    %745 = vector.load %arg8[%c2_205, %c0_206, %c0_207] : memref<3x4x18xf32, #tpu.memory_space<vmem>>, vector<1x1x18xf32>
    %746 = vector.shape_cast %745 : vector<1x1x18xf32> to vector<18xf32>
    %747 = vector.shape_cast %744 : vector<18xf32> to vector<1x1x18xf32>
    tpu.vector_store %arg8[%c2_205, %c0_206, %c0_207], %747 {strides = array<i32>} : memref<3x4x18xf32, #tpu.memory_space<vmem>>, vector<1x1x18xf32>,
    %748 = vector.broadcast %658 : f32 to vector<18xf32>
    %749 = arith.subf %285, %748 : vector<18xf32>
    %750 = vector.broadcast %720 : f32 to vector<18xf32>
    %751 = arith.mulf %749, %750 : vector<18xf32>
    %752 = vector.broadcast %717 : f32 to vector<18xf32>
    %753 = arith.addf %751, %752 : vector<18xf32>
    %c2_208 = arith.constant 2 : index
    %c1_209 = arith.constant 1 : index
    %c0_210 = arith.constant 0 : index
    %754 = vector.load %arg8[%c2_208, %c1_209, %c0_210] : memref<3x4x18xf32, #tpu.memory_space<vmem>>, vector<1x1x18xf32>
    %755 = vector.shape_cast %754 : vector<1x1x18xf32> to vector<18xf32>
    %756 = vector.shape_cast %753 : vector<18xf32> to vector<1x1x18xf32>
    tpu.vector_store %arg8[%c2_208, %c1_209, %c0_210], %756 {strides = array<i32>} : memref<3x4x18xf32, #tpu.memory_space<vmem>>, vector<1x1x18xf32>,
    %757 = vector.broadcast %658 : f32 to vector<18xf32>
    %758 = arith.subf %290, %757 : vector<18xf32>
    %759 = vector.broadcast %720 : f32 to vector<18xf32>
    %760 = arith.mulf %758, %759 : vector<18xf32>
    %761 = vector.broadcast %717 : f32 to vector<18xf32>
    %762 = arith.addf %760, %761 : vector<18xf32>
    %c2_211 = arith.constant 2 : index
    %c2_212 = arith.constant 2 : index
    %c0_213 = arith.constant 0 : index
    %763 = vector.load %arg8[%c2_211, %c2_212, %c0_213] : memref<3x4x18xf32, #tpu.memory_space<vmem>>, vector<1x1x18xf32>
    %764 = vector.shape_cast %763 : vector<1x1x18xf32> to vector<18xf32>
    %765 = vector.shape_cast %762 : vector<18xf32> to vector<1x1x18xf32>
    tpu.vector_store %arg8[%c2_211, %c2_212, %c0_213], %765 {strides = array<i32>} : memref<3x4x18xf32, #tpu.memory_space<vmem>>, vector<1x1x18xf32>,
    %766 = vector.broadcast %658 : f32 to vector<18xf32>
    %767 = arith.subf %295, %766 : vector<18xf32>
    %768 = vector.broadcast %720 : f32 to vector<18xf32>
    %769 = arith.mulf %767, %768 : vector<18xf32>
    %770 = vector.broadcast %717 : f32 to vector<18xf32>
    %771 = arith.addf %769, %770 : vector<18xf32>
    %c2_214 = arith.constant 2 : index
    %c3_215 = arith.constant 3 : index
    %c0_216 = arith.constant 0 : index
    %772 = vector.load %arg8[%c2_214, %c3_215, %c0_216] : memref<3x4x18xf32, #tpu.memory_space<vmem>>, vector<1x1x18xf32>
    %773 = vector.shape_cast %772 : vector<1x1x18xf32> to vector<18xf32>
    %774 = vector.shape_cast %771 : vector<18xf32> to vector<1x1x18xf32>
    tpu.vector_store %arg8[%c2_214, %c3_215, %c0_216], %774 {strides = array<i32>} : memref<3x4x18xf32, #tpu.memory_space<vmem>>, vector<1x1x18xf32>,
    %775 = vector.broadcast %658 : f32 to vector<90xf32>
    %776 = arith.subf %300, %775 : vector<90xf32>
    %777 = vector.broadcast %720 : f32 to vector<90xf32>
    %778 = arith.mulf %776, %777 : vector<90xf32>
    %779 = vector.broadcast %717 : f32 to vector<90xf32>
    %780 = arith.addf %778, %779 : vector<90xf32>
    %c2_217 = arith.constant 2 : index
    %c2_218 = arith.constant 2 : index
    %c0_219 = arith.constant 0 : index
    %781 = vector.load %arg9[%c2_217, %c2_218, %c0_219] : memref<3x3x90xf32, #tpu.memory_space<vmem>>, vector<1x1x90xf32>
    %782 = vector.shape_cast %781 : vector<1x1x90xf32> to vector<90xf32>
    %783 = vector.shape_cast %780 : vector<90xf32> to vector<1x1x90xf32>
    tpu.vector_store %arg9[%c2_217, %c2_218, %c0_219], %783 {strides = array<i32>} : memref<3x3x90xf32, #tpu.memory_space<vmem>>, vector<1x1x90xf32>,
    return
  }
}

</mosaic_0001>

<llo_original>
// kernel: tpu_custom_call.1
$region0: #{tpu_custom_call.1}
  #allocation0 [shape = 'u32[]', space=smem, size = 0x4, offset = 0x4, fixed_abs, tag = 'smem constant byte address 0x4 - core index']
  #allocation1 [shape = 'u32[144,128]{1,0:T(1,128)}', space=vmem, size = 0x12000, scoped, tag = 'internal scratch']
  %s0 = inlined_call_operand.vmem [shape: f32[30,18], index: 0, kind: input, shape index: {}]
  %s1 = inlined_call_operand.vmem [shape: f32[30,90], index: 1, kind: input, shape index: {}]
  %s2 = inlined_call_operand.vmem [shape: f32[30,90], index: 2, kind: input, shape index: {}]
  %s3 = inlined_call_operand.vmem [shape: f32[30,18], index: 3, kind: input, shape index: {}]
  %s4 = inlined_call_operand.vmem [shape: f32[10,30], index: 4, kind: input, shape index: {}]
  %s5 = inlined_call_operand.vmem [shape: f32[10,30], index: 5, kind: input, shape index: {}]
  %s6 = inlined_call_operand.vmem [shape: f32[30,10], index: 6, kind: input, shape index: {}]
  %s7 = inlined_call_operand.vmem [shape: f32[20], index: 7, kind: input, shape index: {}]
  %s8 = inlined_call_operand.hbm [shape: f32[3,4,18], index: 8, kind: output, shape index: {0}]
  %s9 = inlined_call_operand.hbm [shape: f32[3,3,90], index: 9, kind: output, shape index: {1}]
  %10 = xla_tuple %s8, %s9
  %s11 = sld [smem:[#allocation0]]
  $region54: #{tpu_custom_call.1} parent=0
    _
  %s13 = ssub.s32 1, %s11
  %s14 = scalar_select 0, %s13, %s11
  $region1: #{tpu_custom_call.1} parent=0
    #allocation2 [shape = 'u8[512]{0}', space=smem, size = 0x200, scoped, tag = 'input window, operand 7, single buffered']
    #allocation3 [shape = 's32[1]{0}', space=sflag, size = 0x4, scoped, tag = 'scoped memory for tpu_custom_call.1']
    #allocation4 [shape = 's32[1]{0}', space=sflag, size = 0x4, scoped, tag = 'scoped memory for tpu_custom_call.1']
    #allocation5 [shape = 'u8[6144]{0}', space=vmem, size = 0x1800, scoped, tag = 'output window, operand 0, single buffered']
    #allocation6 [shape = 'u8[6144]{0}', space=vmem, size = 0x1800, scoped, tag = 'output window, operand 1, single buffered']
    #allocation7 [shape = 's32[1]{0}', space=sflag, size = 0x4, scoped, tag = 'scoped memory for tpu_custom_call.1']
    %15 = vsyncpa [#allocation4], 0
    %16 = vsyncpa [#allocation3], 0
    %17 = vsyncpa [#allocation7], 0
    // Predicated region
    $region2: #{tpu_custom_call.1} parent=1 // pred_check
      _
    $region3: #{tpu_custom_call.1} parent=1 // pred_check_branch
      %19 = sbr.rel (0) target = $region5
    $region4: #{tpu_custom_call.1} parent=1 // pred_region
      _
    $region5: #{tpu_custom_call.1} parent=1 // pred_fallthru
      _
    // Predicated region
    $region6: #{tpu_custom_call.1} parent=1 // pred_check
      _
    $region7: #{tpu_custom_call.1} parent=1 // pred_check_branch
      %21 = sbr.rel (0) target = $region9
    $region8: #{tpu_custom_call.1} parent=1 // pred_region
      _
    $region9: #{tpu_custom_call.1} parent=1 // pred_fallthru
      _
    // Predicated region
    $region10: #{tpu_custom_call.1} parent=1 // pred_check
      _
    $region11: #{tpu_custom_call.1} parent=1 // pred_check_branch
      %23 = sbr.rel (0) target = $region13
    $region12: #{tpu_custom_call.1} parent=1 // pred_region
      _
    $region13: #{tpu_custom_call.1} parent=1 // pred_fallthru
      _
    // Predicated region
    $region14: #{tpu_custom_call.1} parent=1 // pred_check
      _
    $region15: #{tpu_custom_call.1} parent=1 // pred_check_branch
      %25 = sbr.rel (0) target = $region17
    $region16: #{tpu_custom_call.1} parent=1 // pred_region
      _
    $region17: #{tpu_custom_call.1} parent=1 // pred_fallthru
      _
    // Predicated region
    $region18: #{tpu_custom_call.1} parent=1 // pred_check
      _
    $region19: #{tpu_custom_call.1} parent=1 // pred_check_branch
      %27 = sbr.rel (0) target = $region21
    $region20: #{tpu_custom_call.1} parent=1 // pred_region
      _
    $region21: #{tpu_custom_call.1} parent=1 // pred_fallthru
      _
    // Predicated region
    $region22: #{tpu_custom_call.1} parent=1 // pred_check
      _
    $region23: #{tpu_custom_call.1} parent=1 // pred_check_branch
      %29 = sbr.rel (0) target = $region25
    $region24: #{tpu_custom_call.1} parent=1 // pred_region
      _
    $region25: #{tpu_custom_call.1} parent=1 // pred_fallthru
      _
    // Predicated region
    $region26: #{tpu_custom_call.1} parent=1 // pred_check
      _
    $region27: #{tpu_custom_call.1} parent=1 // pred_check_branch
      %31 = sbr.rel (0) target = $region29
    $region28: #{tpu_custom_call.1} parent=1 // pred_region
      _
    $region29: #{tpu_custom_call.1} parent=1 // pred_fallthru
      _
    // Predicated region
    $region30: #{tpu_custom_call.1} parent=1 // pred_check
      _
    $region31: #{tpu_custom_call.1} parent=1 // pred_check_branch
      %33 = sbr.rel (0) target = $region33
    $region32: #{tpu_custom_call.1} parent=1 // pred_region
      %s35 = ssub.s32 16, 16
      %36 = vsyncadd [#allocation4], %s35
      %s38 = sshll.u32 %s7, 4
      %s39 = int_to_ptr.vmem [resolvable:$true] %s38
      %41 = dma.vmem_to_smem %s39, 16, [#allocation2], [#allocation4]
    $region33: #{tpu_custom_call.1} parent=1 // pred_fallthru
      _
    // Predicated region
    $region34: #{tpu_custom_call.1} parent=1 // pred_check
      _
    $region35: #{tpu_custom_call.1} parent=1 // pred_check_branch
      %43 = sbr.rel (0) target = $region37
    $region36: #{tpu_custom_call.1} parent=1 // pred_region
      %44 = dma.done [#allocation4], 16
    $region37: #{tpu_custom_call.1} parent=1 // pred_fallthru
      _
    %45 = sfence
    %v46 = vld [vmem:[%s0] sm:$0xff]
    %v47 = vld [vmem:[%s0 + $0x8] sm:$0xff]
    %v48 = vld [vmem:[%s0 + $0x10] sm:$0xff]
    %v49 = vld [vmem:[%s0 + $0x18] sm:$0x3f]
    %v50 = vld [vmem:[%s1] sm:$0xff]
    %v51 = vld [vmem:[%s1 + $0x8] sm:$0xff]
    %v52 = vld [vmem:[%s1 + $0x10] sm:$0xff]
    %v53 = vld [vmem:[%s1 + $0x18] sm:$0x3f]
    %v54 = vld [vmem:[%s2] sm:$0xff]
    %v55 = vld [vmem:[%s2 + $0x8] sm:$0xff]
    %v56 = vld [vmem:[%s2 + $0x10] sm:$0xff]
    %v57 = vld [vmem:[%s2 + $0x18] sm:$0x3f]
    %v58 = vld [vmem:[%s3] sm:$0xff]
    %v59 = vld [vmem:[%s3 + $0x8] sm:$0xff]
    %v60 = vld [vmem:[%s3 + $0x10] sm:$0xff]
    %v61 = vld [vmem:[%s3 + $0x18] sm:$0x3f]
    %v62 = vld [vmem:[%s4] sm:$0xff]
    %v63 = vld [vmem:[%s4 + $0x8] sm:$0x3]
    %v64 = vld [vmem:[%s5] sm:$0xff]
    %v65 = vld [vmem:[%s5 + $0x8] sm:$0x3]
    %v66 = vld [vmem:[%s6] sm:$0xff]
    %v67 = vld [vmem:[%s6 + $0x8] sm:$0xff]
    %v68 = vld [vmem:[%s6 + $0x10] sm:$0xff]
    %v69 = vld [vmem:[%s6 + $0x18] sm:$0x3f]
    %vm70 = vcmask 244736
    %v72 = vsel %vm70, %v62, 0
    %v75 = vsel %vm70, %v63, 0
    %vm77 = vcmask 1045504
    %v79 = vsel %vm77, %v49, 0
    %81 = vmatprep.subr.mxu0 0.0
    %82 = vmatpush1.msra.mxu0 0.0
    %83 = vmatprep.subr.mxu0 0.0
    %84 = vmatpush1.msra.mxu0 0.0
    %85 = vmatprep.subr.mxu0 0.0
    %86 = vmatpush1.msra.mxu0 0.0
    %87 = vmatprep.subr.mxu0 0.0
    %88 = vmatpush1.msra.mxu0 0.0
    %89 = vmatprep.subr.mxu0 0.0
    %90 = vmatpush1.msra.mxu0 0.0
    %91 = vmatprep.subr.mxu0 0.0
    %92 = vmatpush1.msra.mxu0 0.0
    %93 = vmatprep.subr.mxu0 0.0
    %94 = vmatpush1.msra.mxu0 0.0
    %95 = vmatprep.subr.mxu0 0.0
    %96 = vmatpush1.msra.mxu0 0.0
    %97 = vmatprep.subr.mxu0 0.0
    %98 = vmatpush1.msra.mxu0 0.0
    %99 = vmatprep.subr.mxu0 0.0
    %100 = vmatpush1.msra.mxu0 0.0
    %101 = vmatprep.subr.mxu0 0.0
    %102 = vmatpush1.msra.mxu0 0.0
    %103 = vmatprep.subr.mxu0 0.0
    %104 = vmatpush1.msra.mxu0 0.0
    %105 = vmatprep.subr.mxu0 0.0
    %v106 = vand.u32 %v79, 4294901760
    %107 = vmatpush1.msra.mxu0 %v106
    %108 = vmatprep.subr.mxu0 0.0
    %v109 = vand.u32 %v48, 4294901760
    %110 = vmatpush1.msra.mxu0 %v109
    %111 = vmatprep.subr.mxu0 0.0
    %v112 = vand.u32 %v47, 4294901760
    %113 = vmatpush1.msra.mxu0 %v112
    %114 = vmatprep.subr.mxu0 0.0
    %v115 = vand.u32 %v46, 4294901760
    %116 = vmatpush1.msra.mxu0 %v115
    %117 = vmatprep.subr.mxu0 0.0
    %118 = vmatpush2.msra.mxu0 0.0
    %119 = vmatprep.subr.mxu0 0.0
    %120 = vmatpush2.msra.mxu0 0.0
    %121 = vmatprep.subr.mxu0 0.0
    %122 = vmatpush2.msra.mxu0 0.0
    %123 = vmatprep.subr.mxu0 0.0
    %124 = vmatpush2.msra.mxu0 0.0
    %125 = vmatprep.subr.mxu0 0.0
    %126 = vmatpush2.msra.mxu0 0.0
    %127 = vmatprep.subr.mxu0 0.0
    %128 = vmatpush2.msra.mxu0 0.0
    %129 = vmatprep.subr.mxu0 0.0
    %130 = vmatpush2.msra.mxu0 0.0
    %131 = vmatprep.subr.mxu0 0.0
    %132 = vmatpush2.msra.mxu0 0.0
    %133 = vmatprep.subr.mxu0 0.0
    %134 = vmatpush2.msra.mxu0 0.0
    %135 = vmatprep.subr.mxu0 0.0
    %136 = vmatpush2.msra.mxu0 0.0
    %137 = vmatprep.subr.mxu0 0.0
    %138 = vmatpush2.msra.mxu0 0.0
    %139 = vmatprep.subr.mxu0 0.0
    %140 = vmatpush2.msra.mxu0 0.0
    %141 = vmatprep.subr.mxu0 0.0
    %142 = vmatpush2.msra.mxu0 0.0
    %143 = vmatprep.subr.mxu0 0.0
    %144 = vmatpush2.msra.mxu0 0.0
    %145 = vmatprep.subr.mxu0 0.0
    %146 = vmatpush2.msra.mxu0 0.0
    %147 = vmatprep.subr.mxu0 0.0
    %148 = vmatpush2.msra.mxu0 0.0
    %149 = vmatprep.mubr.f32.mxu0 0.0
    %v150 = vand.u32 %v72, 4294901760
    %v151 = vsub.f32 %v72, %v150
    %v152 = vand.u32 %v151, 4294901760
    %v153 = vsub.f32 %v151, %v152
    %v154 = vand.u32 %v153, 4294901760
    %155 = vmatmul.mubr.f32.gmra.mxu0 %v154
    %v156 = vpop.f32.mrf.mxu0
    %v157 = vadd.f32 0.0, %v156
    %v158 = vpop.f32.mrf.mxu0
    %159 = vmatprep.mubr.f32.mxu0 0.0
    %v160 = vand.u32 %v75, 4294901760
    %v161 = vsub.f32 %v75, %v160
    %v162 = vand.u32 %v161, 4294901760
    %v163 = vsub.f32 %v161, %v162
    %v164 = vand.u32 %v163, 4294901760
    %165 = vmatmul.mubr.f32.gmra.mxu0 %v164
    %v166 = vpop.f32.mrf.mxu0
    %v167 = vadd.f32 0.0, %v166
    %v168 = vpop.f32.mrf.mxu0
    %169 = vdwg.mxu0
    %170 = vmatprep.subr.mxu0 0.0
    %171 = vmatpush1.msra.mxu0 0.0
    %172 = vmatprep.subr.mxu0 0.0
    %173 = vmatpush1.msra.mxu0 0.0
    %174 = vmatprep.subr.mxu0 0.0
    %175 = vmatpush1.msra.mxu0 0.0
    %176 = vmatprep.subr.mxu0 0.0
    %177 = vmatpush1.msra.mxu0 0.0
    %178 = vmatprep.subr.mxu0 0.0
    %179 = vmatpush1.msra.mxu0 0.0
    %180 = vmatprep.subr.mxu0 0.0
    %181 = vmatpush1.msra.mxu0 0.0
    %182 = vmatprep.subr.mxu0 0.0
    %183 = vmatpush1.msra.mxu0 0.0
    %184 = vmatprep.subr.mxu0 0.0
    %185 = vmatpush1.msra.mxu0 0.0
    %186 = vmatprep.subr.mxu0 0.0
    %187 = vmatpush1.msra.mxu0 0.0
    %188 = vmatprep.subr.mxu0 0.0
    %189 = vmatpush1.msra.mxu0 0.0
    %190 = vmatprep.subr.mxu0 0.0
    %191 = vmatpush1.msra.mxu0 0.0
    %192 = vmatprep.subr.mxu0 0.0
    %193 = vmatpush1.msra.mxu0 0.0
    %194 = vmatprep.subr.mxu0 0.0
    %v195 = vand.u32 %v79, 4294901760
    %v196 = vsub.f32 %v79, %v195
    %v197 = vand.u32 %v196, 4294901760
    %v198 = vsub.f32 %v196, %v197
    %v199 = vand.u32 %v198, 4294901760
    %200 = vmatpush1.msra.mxu0 %v199
    %201 = vmatprep.subr.mxu0 0.0
    %v202 = vand.u32 %v48, 4294901760
    %v203 = vsub.f32 %v48, %v202
    %v204 = vand.u32 %v203, 4294901760
    %v205 = vsub.f32 %v203, %v204
    %v206 = vand.u32 %v205, 4294901760
    %207 = vmatpush1.msra.mxu0 %v206
    %208 = vmatprep.subr.mxu0 0.0
    %v209 = vand.u32 %v47, 4294901760
    %v210 = vsub.f32 %v47, %v209
    %v211 = vand.u32 %v210, 4294901760
    %v212 = vsub.f32 %v210, %v211
    %v213 = vand.u32 %v212, 4294901760
    %214 = vmatpush1.msra.mxu0 %v213
    %215 = vmatprep.subr.mxu0 0.0
    %v216 = vand.u32 %v46, 4294901760
    %v217 = vsub.f32 %v46, %v216
    %v218 = vand.u32 %v217, 4294901760
    %v219 = vsub.f32 %v217, %v218
    %v220 = vand.u32 %v219, 4294901760
    %221 = vmatpush1.msra.mxu0 %v220
    %222 = vmatprep.subr.mxu0 0.0
    %223 = vmatpush2.msra.mxu0 0.0
    %224 = vmatprep.subr.mxu0 0.0
    %225 = vmatpush2.msra.mxu0 0.0
    %226 = vmatprep.subr.mxu0 0.0
    %227 = vmatpush2.msra.mxu0 0.0
    %228 = vmatprep.subr.mxu0 0.0
    %229 = vmatpush2.msra.mxu0 0.0
    %230 = vmatprep.subr.mxu0 0.0
    %231 = vmatpush2.msra.mxu0 0.0
    %232 = vmatprep.subr.mxu0 0.0
    %233 = vmatpush2.msra.mxu0 0.0
    %234 = vmatprep.subr.mxu0 0.0
    %235 = vmatpush2.msra.mxu0 0.0
    %236 = vmatprep.subr.mxu0 0.0
    %237 = vmatpush2.msra.mxu0 0.0
    %238 = vmatprep.subr.mxu0 0.0
    %239 = vmatpush2.msra.mxu0 0.0
    %240 = vmatprep.subr.mxu0 0.0
    %241 = vmatpush2.msra.mxu0 0.0
    %242 = vmatprep.subr.mxu0 0.0
    %243 = vmatpush2.msra.mxu0 0.0
    %244 = vmatprep.subr.mxu0 0.0
    %245 = vmatpush2.msra.mxu0 0.0
    %246 = vmatprep.subr.mxu0 0.0
    %247 = vmatpush2.msra.mxu0 0.0
    %248 = vmatprep.subr.mxu0 0.0
    %249 = vmatpush2.msra.mxu0 0.0
    %250 = vmatprep.subr.mxu0 0.0
    %251 = vmatpush2.msra.mxu0 0.0
    %252 = vmatprep.subr.mxu0 0.0
    %253 = vmatpush2.msra.mxu0 0.0
    %254 = vmatprep.mubr.f32.mxu0 0.0
    %v255 = vand.u32 %v72, 4294901760
    %256 = vmatmul.mubr.f32.gmra.mxu0 %v255
    %v257 = vpop.f32.mrf.mxu0
    %v258 = vadd.f32 %v157, %v257
    %v259 = vpop.f32.mrf.mxu0
    %260 = vmatprep.mubr.f32.mxu0 0.0
    %v261 = vand.u32 %v75, 4294901760
    %262 = vmatmul.mubr.f32.gmra.mxu0 %v261
    %v263 = vpop.f32.mrf.mxu0
    %v264 = vadd.f32 %v167, %v263
    %v265 = vpop.f32.mrf.mxu0
    %266 = vdwg.mxu0
    %267 = vmatprep.subr.mxu0 0.0
    %268 = vmatpush1.msra.mxu0 0.0
    %269 = vmatprep.subr.mxu0 0.0
    %270 = vmatpush1.msra.mxu0 0.0
    %271 = vmatprep.subr.mxu0 0.0
    %272 = vmatpush1.msra.mxu0 0.0
    %273 = vmatprep.subr.mxu0 0.0
    %274 = vmatpush1.msra.mxu0 0.0
    %275 = vmatprep.subr.mxu0 0.0
    %276 = vmatpush1.msra.mxu0 0.0
    %277 = vmatprep.subr.mxu0 0.0
    %278 = vmatpush1.msra.mxu0 0.0
    %279 = vmatprep.subr.mxu0 0.0
    %280 = vmatpush1.msra.mxu0 0.0
    %281 = vmatprep.subr.mxu0 0.0
    %282 = vmatpush1.msra.mxu0 0.0
    %283 = vmatprep.subr.mxu0 0.0
    %284 = vmatpush1.msra.mxu0 0.0
    %285 = vmatprep.subr.mxu0 0.0
    %286 = vmatpush1.msra.mxu0 0.0
    %287 = vmatprep.subr.mxu0 0.0
    %288 = vmatpush1.msra.mxu0 0.0
    %289 = vmatprep.subr.mxu0 0.0
    %290 = vmatpush1.msra.mxu0 0.0
    %291 = vmatprep.subr.mxu0 0.0
    %v292 = vand.u32 %v79, 4294901760
    %v293 = vsub.f32 %v79, %v292
    %294 = vmatpush1.msra.mxu0 %v293
    %295 = vmatprep.subr.mxu0 0.0
    %v296 = vand.u32 %v48, 4294901760
    %v297 = vsub.f32 %v48, %v296
    %298 = vmatpush1.msra.mxu0 %v297
    %299 = vmatprep.subr.mxu0 0.0
    %v300 = vand.u32 %v47, 4294901760
    %v301 = vsub.f32 %v47, %v300
    %302 = vmatpush1.msra.mxu0 %v301
    %303 = vmatprep.subr.mxu0 0.0
    %v304 = vand.u32 %v46, 4294901760
    %v305 = vsub.f32 %v46, %v304
    %306 = vmatpush1.msra.mxu0 %v305
    %307 = vmatprep.subr.mxu0 0.0
    %308 = vmatpush2.msra.mxu0 0.0
    %309 = vmatprep.subr.mxu0 0.0
    %310 = vmatpush2.msra.mxu0 0.0
    %311 = vmatprep.subr.mxu0 0.0
    %312 = vmatpush2.msra.mxu0 0.0
    %313 = vmatprep.subr.mxu0 0.0
    %314 = vmatpush2.msra.mxu0 0.0
    %315 = vmatprep.subr.mxu0 0.0
    %316 = vmatpush2.msra.mxu0 0.0
    %317 = vmatprep.subr.mxu0 0.0
    %318 = vmatpush2.msra.mxu0 0.0
    %319 = vmatprep.subr.mxu0 0.0
    %320 = vmatpush2.msra.mxu0 0.0
    %321 = vmatprep.subr.mxu0 0.0
    %322 = vmatpush2.msra.mxu0 0.0
    %323 = vmatprep.subr.mxu0 0.0
    %324 = vmatpush2.msra.mxu0 0.0
    %325 = vmatprep.subr.mxu0 0.0
    %326 = vmatpush2.msra.mxu0 0.0
    %327 = vmatprep.subr.mxu0 0.0
    %328 = vmatpush2.msra.mxu0 0.0
    %329 = vmatprep.subr.mxu0 0.0
    %330 = vmatpush2.msra.mxu0 0.0
    %331 = vmatprep.subr.mxu0 0.0
    %332 = vmatpush2.msra.mxu0 0.0
    %333 = vmatprep.subr.mxu0 0.0
    %334 = vmatpush2.msra.mxu0 0.0
    %335 = vmatprep.subr.mxu0 0.0
    %336 = vmatpush2.msra.mxu0 0.0
    %337 = vmatprep.subr.mxu0 0.0
    %338 = vmatpush2.msra.mxu0 0.0
    %339 = vmatprep.mubr.f32.mxu0 0.0
    %v340 = vand.u32 %v72, 4294901760
    %v341 = vsub.f32 %v72, %v340
    %342 = vmatmul.mubr.f32.gmra.mxu0 %v341
    %v343 = vpop.f32.mrf.mxu0
    %v344 = vadd.f32 %v258, %v343
    %v345 = vpop.f32.mrf.mxu0
    %346 = vmatprep.mubr.f32.mxu0 0.0
    %v347 = vand.u32 %v75, 4294901760
    %v348 = vsub.f32 %v75, %v347
    %349 = vmatmul.mubr.f32.gmra.mxu0 %v348
    %v350 = vpop.f32.mrf.mxu0
    %v351 = vadd.f32 %v264, %v350
    %v352 = vpop.f32.mrf.mxu0
    %353 = vdwg.mxu0
    %354 = vmatprep.subr.mxu0 0.0
    %355 = vmatpush1.msra.mxu0 0.0
    %356 = vmatprep.subr.mxu0 0.0
    %357 = vmatpush1.msra.mxu0 0.0
    %358 = vmatprep.subr.mxu0 0.0
    %359 = vmatpush1.msra.mxu0 0.0
    %360 = vmatprep.subr.mxu0 0.0
    %361 = vmatpush1.msra.mxu0 0.0
    %362 = vmatprep.subr.mxu0 0.0
    %363 = vmatpush1.msra.mxu0 0.0
    %364 = vmatprep.subr.mxu0 0.0
    %365 = vmatpush1.msra.mxu0 0.0
    %366 = vmatprep.subr.mxu0 0.0
    %367 = vmatpush1.msra.mxu0 0.0
    %368 = vmatprep.subr.mxu0 0.0
    %369 = vmatpush1.msra.mxu0 0.0
    %370 = vmatprep.subr.mxu0 0.0
    %371 = vmatpush1.msra.mxu0 0.0
    %372 = vmatprep.subr.mxu0 0.0
    %373 = vmatpush1.msra.mxu0 0.0
    %374 = vmatprep.subr.mxu0 0.0
    %375 = vmatpush1.msra.mxu0 0.0
    %376 = vmatprep.subr.mxu0 0.0
    %377 = vmatpush1.msra.mxu0 0.0
    %378 = vmatprep.subr.mxu0 0.0
    %v379 = vand.u32 %v79, 4294901760
    %380 = vmatpush1.msra.mxu0 %v379
    %381 = vmatprep.subr.mxu0 0.0
    %v382 = vand.u32 %v48, 4294901760
    %383 = vmatpush1.msra.mxu0 %v382
    %384 = vmatprep.subr.mxu0 0.0
    %v385 = vand.u32 %v47, 4294901760
    %386 = vmatpush1.msra.mxu0 %v385
    %387 = vmatprep.subr.mxu0 0.0
    %v388 = vand.u32 %v46, 4294901760
    %389 = vmatpush1.msra.mxu0 %v388
    %390 = vmatprep.subr.mxu0 0.0
    %391 = vmatpush2.msra.mxu0 0.0
    %392 = vmatprep.subr.mxu0 0.0
    %393 = vmatpush2.msra.mxu0 0.0
    %394 = vmatprep.subr.mxu0 0.0
    %395 = vmatpush2.msra.mxu0 0.0
    %396 = vmatprep.subr.mxu0 0.0
    %397 = vmatpush2.msra.mxu0 0.0
    %398 = vmatprep.subr.mxu0 0.0
    %399 = vmatpush2.msra.mxu0 0.0
    %400 = vmatprep.subr.mxu0 0.0
    %401 = vmatpush2.msra.mxu0 0.0
    %402 = vmatprep.subr.mxu0 0.0
    %403 = vmatpush2.msra.mxu0 0.0
    %404 = vmatprep.subr.mxu0 0.0
    %405 = vmatpush2.msra.mxu0 0.0
    %406 = vmatprep.subr.mxu0 0.0
    %407 = vmatpush2.msra.mxu0 0.0
    %408 = vmatprep.subr.mxu0 0.0
    %409 = vmatpush2.msra.mxu0 0.0
    %410 = vmatprep.subr.mxu0 0.0
    %411 = vmatpush2.msra.mxu0 0.0
    %412 = vmatprep.subr.mxu0 0.0
    %413 = vmatpush2.msra.mxu0 0.0
    %414 = vmatprep.subr.mxu0 0.0
    %415 = vmatpush2.msra.mxu0 0.0
    %416 = vmatprep.subr.mxu0 0.0
    %417 = vmatpush2.msra.mxu0 0.0
    %418 = vmatprep.subr.mxu0 0.0
    %419 = vmatpush2.msra.mxu0 0.0
    %420 = vmatprep.subr.mxu0 0.0
    %421 = vmatpush2.msra.mxu0 0.0
    %422 = vmatprep.mubr.f32.mxu0 0.0
    %v423 = vand.u32 %v72, 4294901760
    %v424 = vsub.f32 %v72, %v423
    %v425 = vand.u32 %v424, 4294901760
    %426 = vmatmul.mubr.f32.gmra.mxu0 %v425
    %v427 = vpop.f32.mrf.mxu0
    %v428 = vadd.f32 %v344, %v427
    %v429 = vpop.f32.mrf.mxu0
    %430 = vmatprep.mubr.f32.mxu0 0.0
    %v431 = vand.u32 %v75, 4294901760
    %v432 = vsub.f32 %v75, %v431
    %v433 = vand.u32 %v432, 4294901760
    %434 = vmatmul.mubr.f32.gmra.mxu0 %v433
    %v435 = vpop.f32.mrf.mxu0
    %v436 = vadd.f32 %v351, %v435
    %v437 = vpop.f32.mrf.mxu0
    %438 = vdwg.mxu0
    %439 = vmatprep.subr.mxu0 0.0
    %440 = vmatpush1.msra.mxu0 0.0
    %441 = vmatprep.subr.mxu0 0.0
    %442 = vmatpush1.msra.mxu0 0.0
    %443 = vmatprep.subr.mxu0 0.0
    %444 = vmatpush1.msra.mxu0 0.0
    %445 = vmatprep.subr.mxu0 0.0
    %446 = vmatpush1.msra.mxu0 0.0
    %447 = vmatprep.subr.mxu0 0.0
    %448 = vmatpush1.msra.mxu0 0.0
    %449 = vmatprep.subr.mxu0 0.0
    %450 = vmatpush1.msra.mxu0 0.0
    %451 = vmatprep.subr.mxu0 0.0
    %452 = vmatpush1.msra.mxu0 0.0
    %453 = vmatprep.subr.mxu0 0.0
    %454 = vmatpush1.msra.mxu0 0.0
    %455 = vmatprep.subr.mxu0 0.0
    %456 = vmatpush1.msra.mxu0 0.0
    %457 = vmatprep.subr.mxu0 0.0
    %458 = vmatpush1.msra.mxu0 0.0
    %459 = vmatprep.subr.mxu0 0.0
    %460 = vmatpush1.msra.mxu0 0.0
    %461 = vmatprep.subr.mxu0 0.0
    %462 = vmatpush1.msra.mxu0 0.0
    %463 = vmatprep.subr.mxu0 0.0
    %v464 = vand.u32 %v79, 4294901760
    %v465 = vsub.f32 %v79, %v464
    %v466 = vand.u32 %v465, 4294901760
    %467 = vmatpush1.msra.mxu0 %v466
    %468 = vmatprep.subr.mxu0 0.0
    %v469 = vand.u32 %v48, 4294901760
    %v470 = vsub.f32 %v48, %v469
    %v471 = vand.u32 %v470, 4294901760
    %472 = vmatpush1.msra.mxu0 %v471
    %473 = vmatprep.subr.mxu0 0.0
    %v474 = vand.u32 %v47, 4294901760
    %v475 = vsub.f32 %v47, %v474
    %v476 = vand.u32 %v475, 4294901760
    %477 = vmatpush1.msra.mxu0 %v476
    %478 = vmatprep.subr.mxu0 0.0
    %v479 = vand.u32 %v46, 4294901760
    %v480 = vsub.f32 %v46, %v479
    %v481 = vand.u32 %v480, 4294901760
    %482 = vmatpush1.msra.mxu0 %v481
    %483 = vmatprep.subr.mxu0 0.0
    %484 = vmatpush2.msra.mxu0 0.0
    %485 = vmatprep.subr.mxu0 0.0
    %486 = vmatpush2.msra.mxu0 0.0
    %487 = vmatprep.subr.mxu0 0.0
    %488 = vmatpush2.msra.mxu0 0.0
    %489 = vmatprep.subr.mxu0 0.0
    %490 = vmatpush2.msra.mxu0 0.0
    %491 = vmatprep.subr.mxu0 0.0
    %492 = vmatpush2.msra.mxu0 0.0
    %493 = vmatprep.subr.mxu0 0.0
    %494 = vmatpush2.msra.mxu0 0.0
    %495 = vmatprep.subr.mxu0 0.0
    %496 = vmatpush2.msra.mxu0 0.0
    %497 = vmatprep.subr.mxu0 0.0
    %498 = vmatpush2.msra.mxu0 0.0
    %499 = vmatprep.subr.mxu0 0.0
    %500 = vmatpush2.msra.mxu0 0.0
    %501 = vmatprep.subr.mxu0 0.0
    %502 = vmatpush2.msra.mxu0 0.0
    %503 = vmatprep.subr.mxu0 0.0
    %504 = vmatpush2.msra.mxu0 0.0
    %505 = vmatprep.subr.mxu0 0.0
    %506 = vmatpush2.msra.mxu0 0.0
    %507 = vmatprep.subr.mxu0 0.0
    %508 = vmatpush2.msra.mxu0 0.0
    %509 = vmatprep.subr.mxu0 0.0
    %510 = vmatpush2.msra.mxu0 0.0
    %511 = vmatprep.subr.mxu0 0.0
    %512 = vmatpush2.msra.mxu0 0.0
    %513 = vmatprep.subr.mxu0 0.0
    %514 = vmatpush2.msra.mxu0 0.0
    %515 = vmatprep.mubr.f32.mxu0 0.0
    %v516 = vand.u32 %v72, 4294901760
    %517 = vmatmul.mubr.f32.gmra.mxu0 %v516
    %v518 = vpop.f32.mrf.mxu0
    %v519 = vadd.f32 %v428, %v518
    %v520 = vpop.f32.mrf.mxu0
    %521 = vmatprep.mubr.f32.mxu0 0.0
    %v522 = vand.u32 %v75, 4294901760
    %523 = vmatmul.mubr.f32.gmra.mxu0 %v522
    %v524 = vpop.f32.mrf.mxu0
    %v525 = vadd.f32 %v436, %v524
    %v526 = vpop.f32.mrf.mxu0
    %527 = vdwg.mxu0
    %528 = vmatprep.subr.mxu0 0.0
    %529 = vmatpush1.msra.mxu0 0.0
    %530 = vmatprep.subr.mxu0 0.0
    %531 = vmatpush1.msra.mxu0 0.0
    %532 = vmatprep.subr.mxu0 0.0
    %533 = vmatpush1.msra.mxu0 0.0
    %534 = vmatprep.subr.mxu0 0.0
    %535 = vmatpush1.msra.mxu0 0.0
    %536 = vmatprep.subr.mxu0 0.0
    %537 = vmatpush1.msra.mxu0 0.0
    %538 = vmatprep.subr.mxu0 0.0
    %539 = vmatpush1.msra.mxu0 0.0
    %540 = vmatprep.subr.mxu0 0.0
    %541 = vmatpush1.msra.mxu0 0.0
    %542 = vmatprep.subr.mxu0 0.0
    %543 = vmatpush1.msra.mxu0 0.0
    %544 = vmatprep.subr.mxu0 0.0
    %545 = vmatpush1.msra.mxu0 0.0
    %546 = vmatprep.subr.mxu0 0.0
    %547 = vmatpush1.msra.mxu0 0.0
    %548 = vmatprep.subr.mxu0 0.0
    %549 = vmatpush1.msra.mxu0 0.0
    %550 = vmatprep.subr.mxu0 0.0
    %551 = vmatpush1.msra.mxu0 0.0
    %552 = vmatprep.subr.mxu0 0.0
    %v553 = vand.u32 %v79, 4294901760
    %554 = vmatpush1.msra.mxu0 %v553
    %555 = vmatprep.subr.mxu0 0.0
    %v556 = vand.u32 %v48, 4294901760
    %557 = vmatpush1.msra.mxu0 %v556
    %558 = vmatprep.subr.mxu0 0.0
    %v559 = vand.u32 %v47, 4294901760
    %560 = vmatpush1.msra.mxu0 %v559
    %561 = vmatprep.subr.mxu0 0.0
    %v562 = vand.u32 %v46, 4294901760
    %563 = vmatpush1.msra.mxu0 %v562
    %564 = vmatprep.subr.mxu0 0.0
    %565 = vmatpush2.msra.mxu0 0.0
    %566 = vmatprep.subr.mxu0 0.0
    %567 = vmatpush2.msra.mxu0 0.0
    %568 = vmatprep.subr.mxu0 0.0
    %569 = vmatpush2.msra.mxu0 0.0
    %570 = vmatprep.subr.mxu0 0.0
    %571 = vmatpush2.msra.mxu0 0.0
    %572 = vmatprep.subr.mxu0 0.0
    %573 = vmatpush2.msra.mxu0 0.0
    %574 = vmatprep.subr.mxu0 0.0
    %575 = vmatpush2.msra.mxu0 0.0
    %576 = vmatprep.subr.mxu0 0.0
    %577 = vmatpush2.msra.mxu0 0.0
    %578 = vmatprep.subr.mxu0 0.0
    %579 = vmatpush2.msra.mxu0 0.0
    %580 = vmatprep.subr.mxu0 0.0
    %581 = vmatpush2.msra.mxu0 0.0
    %582 = vmatprep.subr.mxu0 0.0
    %583 = vmatpush2.msra.mxu0 0.0
    %584 = vmatprep.subr.mxu0 0.0
    %585 = vmatpush2.msra.mxu0 0.0
    %586 = vmatprep.subr.mxu0 0.0
    %587 = vmatpush2.msra.mxu0 0.0
    %588 = vmatprep.subr.mxu0 0.0
    %589 = vmatpush2.msra.mxu0 0.0
    %590 = vmatprep.subr.mxu0 0.0
    %591 = vmatpush2.msra.mxu0 0.0
    %592 = vmatprep.subr.mxu0 0.0
    %593 = vmatpush2.msra.mxu0 0.0
    %594 = vmatprep.subr.mxu0 0.0
    %595 = vmatpush2.msra.mxu0 0.0
    %596 = vmatprep.mubr.f32.mxu0 0.0
    %v597 = vand.u32 %v72, 4294901760
    %598 = vmatmul.mubr.f32.gmra.mxu0 %v597
    %v599 = vpop.f32.mrf.mxu0
    %v600 = vadd.f32 %v519, %v599
    %v601 = vpop.f32.mrf.mxu0
    %602 = vmatprep.mubr.f32.mxu0 0.0
    %v603 = vand.u32 %v75, 4294901760
    %604 = vmatmul.mubr.f32.gmra.mxu0 %v603
    %v605 = vpop.f32.mrf.mxu0
    %v606 = vadd.f32 %v525, %v605
    %v607 = vpop.f32.mrf.mxu0
    %608 = vdwg.mxu0
    %v609 = vmul.f32 %v600, 0.33333334
    %v610 = vmul.f32 %v606, 0.33333334
    %vm611 = vcmask 80896
    %v613 = vsel %vm611, %v66, 0
    %v616 = vsel %vm611, %v67, 0
    %v619 = vsel %vm611, %v68, 0
    %v622 = vsel %vm611, %v69, 0
    %vm624 = vcmask 1041408
    %v626 = vsel %vm624, %v610, 0
    %628 = vmatprep.subr.mxu0 0.0
    %629 = vmatpush1.msra.mxu0 0.0
    %630 = vmatprep.subr.mxu0 0.0
    %631 = vmatpush1.msra.mxu0 0.0
    %632 = vmatprep.subr.mxu0 0.0
    %633 = vmatpush1.msra.mxu0 0.0
    %634 = vmatprep.subr.mxu0 0.0
    %635 = vmatpush1.msra.mxu0 0.0
    %636 = vmatprep.subr.mxu0 0.0
    %637 = vmatpush1.msra.mxu0 0.0
    %638 = vmatprep.subr.mxu0 0.0
    %639 = vmatpush1.msra.mxu0 0.0
    %640 = vmatprep.subr.mxu0 0.0
    %641 = vmatpush1.msra.mxu0 0.0
    %642 = vmatprep.subr.mxu0 0.0
    %643 = vmatpush1.msra.mxu0 0.0
    %644 = vmatprep.subr.mxu0 0.0
    %645 = vmatpush1.msra.mxu0 0.0
    %646 = vmatprep.subr.mxu0 0.0
    %647 = vmatpush1.msra.mxu0 0.0
    %648 = vmatprep.subr.mxu0 0.0
    %649 = vmatpush1.msra.mxu0 0.0
    %650 = vmatprep.subr.mxu0 0.0
    %651 = vmatpush1.msra.mxu0 0.0
    %652 = vmatprep.subr.mxu0 0.0
    %653 = vmatpush1.msra.mxu0 0.0
    %654 = vmatprep.subr.mxu0 0.0
    %655 = vmatpush1.msra.mxu0 0.0
    %656 = vmatprep.subr.mxu0 0.0
    %v657 = vand.u32 %v626, 4294901760
    %658 = vmatpush1.msra.mxu0 %v657
    %659 = vmatprep.subr.mxu0 0.0
    %v660 = vand.u32 %v609, 4294901760
    %661 = vmatpush1.msra.mxu0 %v660
    %662 = vmatprep.subr.mxu0 0.0
    %663 = vmatpush2.msra.mxu0 0.0
    %664 = vmatprep.subr.mxu0 0.0
    %665 = vmatpush2.msra.mxu0 0.0
    %666 = vmatprep.subr.mxu0 0.0
    %667 = vmatpush2.msra.mxu0 0.0
    %668 = vmatprep.subr.mxu0 0.0
    %669 = vmatpush2.msra.mxu0 0.0
    %670 = vmatprep.subr.mxu0 0.0
    %671 = vmatpush2.msra.mxu0 0.0
    %672 = vmatprep.subr.mxu0 0.0
    %673 = vmatpush2.msra.mxu0 0.0
    %674 = vmatprep.subr.mxu0 0.0
    %675 = vmatpush2.msra.mxu0 0.0
    %676 = vmatprep.subr.mxu0 0.0
    %677 = vmatpush2.msra.mxu0 0.0
    %678 = vmatprep.subr.mxu0 0.0
    %679 = vmatpush2.msra.mxu0 0.0
    %680 = vmatprep.subr.mxu0 0.0
    %681 = vmatpush2.msra.mxu0 0.0
    %682 = vmatprep.subr.mxu0 0.0
    %683 = vmatpush2.msra.mxu0 0.0
    %684 = vmatprep.subr.mxu0 0.0
    %685 = vmatpush2.msra.mxu0 0.0
    %686 = vmatprep.subr.mxu0 0.0
    %687 = vmatpush2.msra.mxu0 0.0
    %688 = vmatprep.subr.mxu0 0.0
    %689 = vmatpush2.msra.mxu0 0.0
    %690 = vmatprep.subr.mxu0 0.0
    %691 = vmatpush2.msra.mxu0 0.0
    %692 = vmatprep.subr.mxu0 0.0
    %693 = vmatpush2.msra.mxu0 0.0
    %694 = vmatprep.mubr.f32.mxu0 0.0
    %v695 = vand.u32 %v613, 4294901760
    %v696 = vsub.f32 %v613, %v695
    %v697 = vand.u32 %v696, 4294901760
    %v698 = vsub.f32 %v696, %v697
    %v699 = vand.u32 %v698, 4294901760
    %700 = vmatmul.mubr.f32.gmra.mxu0 %v699
    %v701 = vpop.f32.mrf.mxu0
    %v702 = vadd.f32 0.0, %v701
    %v703 = vpop.f32.mrf.mxu0
    %704 = vmatprep.mubr.f32.mxu0 0.0
    %v705 = vand.u32 %v616, 4294901760
    %v706 = vsub.f32 %v616, %v705
    %v707 = vand.u32 %v706, 4294901760
    %v708 = vsub.f32 %v706, %v707
    %v709 = vand.u32 %v708, 4294901760
    %710 = vmatmul.mubr.f32.gmra.mxu0 %v709
    %v711 = vpop.f32.mrf.mxu0
    %v712 = vadd.f32 0.0, %v711
    %v713 = vpop.f32.mrf.mxu0
    %714 = vmatprep.mubr.f32.mxu0 0.0
    %v715 = vand.u32 %v619, 4294901760
    %v716 = vsub.f32 %v619, %v715
    %v717 = vand.u32 %v716, 4294901760
    %v718 = vsub.f32 %v716, %v717
    %v719 = vand.u32 %v718, 4294901760
    %720 = vmatmul.mubr.f32.gmra.mxu0 %v719
    %v721 = vpop.f32.mrf.mxu0
    %v722 = vadd.f32 0.0, %v721
    %v723 = vpop.f32.mrf.mxu0
    %724 = vmatprep.mubr.f32.mxu0 0.0
    %v725 = vand.u32 %v622, 4294901760
    %v726 = vsub.f32 %v622, %v725
    %v727 = vand.u32 %v726, 4294901760
    %v728 = vsub.f32 %v726, %v727
    %v729 = vand.u32 %v728, 4294901760
    %730 = vmatmul.mubr.f32.gmra.mxu0 %v729
    %v731 = vpop.f32.mrf.mxu0
    %v732 = vadd.f32 0.0, %v731
    %v733 = vpop.f32.mrf.mxu0
    %734 = vdwg.mxu0
    %735 = vmatprep.subr.mxu0 0.0
    %736 = vmatpush1.msra.mxu0 0.0
    %737 = vmatprep.subr.mxu0 0.0
    %738 = vmatpush1.msra.mxu0 0.0
    %739 = vmatprep.subr.mxu0 0.0
    %740 = vmatpush1.msra.mxu0 0.0
    %741 = vmatprep.subr.mxu0 0.0
    %742 = vmatpush1.msra.mxu0 0.0
    %743 = vmatprep.subr.mxu0 0.0
    %744 = vmatpush1.msra.mxu0 0.0
    %745 = vmatprep.subr.mxu0 0.0
    %746 = vmatpush1.msra.mxu0 0.0
    %747 = vmatprep.subr.mxu0 0.0
    %748 = vmatpush1.msra.mxu0 0.0
    %749 = vmatprep.subr.mxu0 0.0
    %750 = vmatpush1.msra.mxu0 0.0
    %751 = vmatprep.subr.mxu0 0.0
    %752 = vmatpush1.msra.mxu0 0.0
    %753 = vmatprep.subr.mxu0 0.0
    %754 = vmatpush1.msra.mxu0 0.0
    %755 = vmatprep.subr.mxu0 0.0
    %756 = vmatpush1.msra.mxu0 0.0
    %757 = vmatprep.subr.mxu0 0.0
    %758 = vmatpush1.msra.mxu0 0.0
    %759 = vmatprep.subr.mxu0 0.0
    %760 = vmatpush1.msra.mxu0 0.0
    %761 = vmatprep.subr.mxu0 0.0
    %762 = vmatpush1.msra.mxu0 0.0
    %763 = vmatprep.subr.mxu0 0.0
    %v764 = vand.u32 %v626, 4294901760
    %v765 = vsub.f32 %v626, %v764
    %v766 = vand.u32 %v765, 4294901760
    %v767 = vsub.f32 %v765, %v766
    %v768 = vand.u32 %v767, 4294901760
    %769 = vmatpush1.msra.mxu0 %v768
    %770 = vmatprep.subr.mxu0 0.0
    %v771 = vand.u32 %v609, 4294901760
    %v772 = vsub.f32 %v609, %v771
    %v773 = vand.u32 %v772, 4294901760
    %v774 = vsub.f32 %v772, %v773
    %v775 = vand.u32 %v774, 4294901760
    %776 = vmatpush1.msra.mxu0 %v775
    %777 = vmatprep.subr.mxu0 0.0
    %778 = vmatpush2.msra.mxu0 0.0
    %779 = vmatprep.subr.mxu0 0.0
    %780 = vmatpush2.msra.mxu0 0.0
    %781 = vmatprep.subr.mxu0 0.0
    %782 = vmatpush2.msra.mxu0 0.0
    %783 = vmatprep.subr.mxu0 0.0
    %784 = vmatpush2.msra.mxu0 0.0
    %785 = vmatprep.subr.mxu0 0.0
    %786 = vmatpush2.msra.mxu0 0.0
    %787 = vmatprep.subr.mxu0 0.0
    %788 = vmatpush2.msra.mxu0 0.0
    %789 = vmatprep.subr.mxu0 0.0
    %790 = vmatpush2.msra.mxu0 0.0
    %791 = vmatprep.subr.mxu0 0.0
    %792 = vmatpush2.msra.mxu0 0.0
    %793 = vmatprep.subr.mxu0 0.0
    %794 = vmatpush2.msra.mxu0 0.0
    %795 = vmatprep.subr.mxu0 0.0
    %796 = vmatpush2.msra.mxu0 0.0
    %797 = vmatprep.subr.mxu0 0.0
    %798 = vmatpush2.msra.mxu0 0.0
    %799 = vmatprep.subr.mxu0 0.0
    %800 = vmatpush2.msra.mxu0 0.0
    %801 = vmatprep.subr.mxu0 0.0
    %802 = vmatpush2.msra.mxu0 0.0
    %803 = vmatprep.subr.mxu0 0.0
    %804 = vmatpush2.msra.mxu0 0.0
    %805 = vmatprep.subr.mxu0 0.0
    %806 = vmatpush2.msra.mxu0 0.0
    %807 = vmatprep.subr.mxu0 0.0
    %808 = vmatpush2.msra.mxu0 0.0
    %809 = vmatprep.mubr.f32.mxu0 0.0
    %v810 = vand.u32 %v613, 4294901760
    %811 = vmatmul.mubr.f32.gmra.mxu0 %v810
    %v812 = vpop.f32.mrf.mxu0
    %v813 = vadd.f32 %v702, %v812
    %v814 = vpop.f32.mrf.mxu0
    %815 = vmatprep.mubr.f32.mxu0 0.0
    %v816 = vand.u32 %v616, 4294901760
    %817 = vmatmul.mubr.f32.gmra.mxu0 %v816
    %v818 = vpop.f32.mrf.mxu0
    %v819 = vadd.f32 %v712, %v818
    %v820 = vpop.f32.mrf.mxu0
    %821 = vmatprep.mubr.f32.mxu0 0.0
    %v822 = vand.u32 %v619, 4294901760
    %823 = vmatmul.mubr.f32.gmra.mxu0 %v822
    %v824 = vpop.f32.mrf.mxu0
    %v825 = vadd.f32 %v722, %v824
    %v826 = vpop.f32.mrf.mxu0
    %827 = vmatprep.mubr.f32.mxu0 0.0
    %v828 = vand.u32 %v622, 4294901760
    %829 = vmatmul.mubr.f32.gmra.mxu0 %v828
    %v830 = vpop.f32.mrf.mxu0
    %v831 = vadd.f32 %v732, %v830
    %v832 = vpop.f32.mrf.mxu0
    %833 = vdwg.mxu0
    %834 = vmatprep.subr.mxu0 0.0
    %835 = vmatpush1.msra.mxu0 0.0
    %836 = vmatprep.subr.mxu0 0.0
    %837 = vmatpush1.msra.mxu0 0.0
    %838 = vmatprep.subr.mxu0 0.0
    %839 = vmatpush1.msra.mxu0 0.0
    %840 = vmatprep.subr.mxu0 0.0
    %841 = vmatpush1.msra.mxu0 0.0
    %842 = vmatprep.subr.mxu0 0.0
    %843 = vmatpush1.msra.mxu0 0.0
    %844 = vmatprep.subr.mxu0 0.0
    %845 = vmatpush1.msra.mxu0 0.0
    %846 = vmatprep.subr.mxu0 0.0
    %847 = vmatpush1.msra.mxu0 0.0
    %848 = vmatprep.subr.mxu0 0.0
    %849 = vmatpush1.msra.mxu0 0.0
    %850 = vmatprep.subr.mxu0 0.0
    %851 = vmatpush1.msra.mxu0 0.0
    %852 = vmatprep.subr.mxu0 0.0
    %853 = vmatpush1.msra.mxu0 0.0
    %854 = vmatprep.subr.mxu0 0.0
    %855 = vmatpush1.msra.mxu0 0.0
    %856 = vmatprep.subr.mxu0 0.0
    %857 = vmatpush1.msra.mxu0 0.0
    %858 = vmatprep.subr.mxu0 0.0
    %859 = vmatpush1.msra.mxu0 0.0
    %860 = vmatprep.subr.mxu0 0.0
    %861 = vmatpush1.msra.mxu0 0.0
    %862 = vmatprep.subr.mxu0 0.0
    %v863 = vand.u32 %v626, 4294901760
    %v864 = vsub.f32 %v626, %v863
    %865 = vmatpush1.msra.mxu0 %v864
    %866 = vmatprep.subr.mxu0 0.0
    %v867 = vand.u32 %v609, 4294901760
    %v868 = vsub.f32 %v609, %v867
    %869 = vmatpush1.msra.mxu0 %v868
    %870 = vmatprep.subr.mxu0 0.0
    %871 = vmatpush2.msra.mxu0 0.0
    %872 = vmatprep.subr.mxu0 0.0
    %873 = vmatpush2.msra.mxu0 0.0
    %874 = vmatprep.subr.mxu0 0.0
    %875 = vmatpush2.msra.mxu0 0.0
    %876 = vmatprep.subr.mxu0 0.0
    %877 = vmatpush2.msra.mxu0 0.0
    %878 = vmatprep.subr.mxu0 0.0
    %879 = vmatpush2.msra.mxu0 0.0
    %880 = vmatprep.subr.mxu0 0.0
    %881 = vmatpush2.msra.mxu0 0.0
    %882 = vmatprep.subr.mxu0 0.0
    %883 = vmatpush2.msra.mxu0 0.0
    %884 = vmatprep.subr.mxu0 0.0
    %885 = vmatpush2.msra.mxu0 0.0
    %886 = vmatprep.subr.mxu0 0.0
    %887 = vmatpush2.msra.mxu0 0.0
    %888 = vmatprep.subr.mxu0 0.0
    %889 = vmatpush2.msra.mxu0 0.0
    %890 = vmatprep.subr.mxu0 0.0
    %891 = vmatpush2.msra.mxu0 0.0
    %892 = vmatprep.subr.mxu0 0.0
    %893 = vmatpush2.msra.mxu0 0.0
    %894 = vmatprep.subr.mxu0 0.0
    %895 = vmatpush2.msra.mxu0 0.0
    %896 = vmatprep.subr.mxu0 0.0
    %897 = vmatpush2.msra.mxu0 0.0
    %898 = vmatprep.subr.mxu0 0.0
    %899 = vmatpush2.msra.mxu0 0.0
    %900 = vmatprep.subr.mxu0 0.0
    %901 = vmatpush2.msra.mxu0 0.0
    %902 = vmatprep.mubr.f32.mxu0 0.0
    %v903 = vand.u32 %v613, 4294901760
    %v904 = vsub.f32 %v613, %v903
    %905 = vmatmul.mubr.f32.gmra.mxu0 %v904
    %v906 = vpop.f32.mrf.mxu0
    %v907 = vadd.f32 %v813, %v906
    %v908 = vpop.f32.mrf.mxu0
    %909 = vmatprep.mubr.f32.mxu0 0.0
    %v910 = vand.u32 %v616, 4294901760
    %v911 = vsub.f32 %v616, %v910
    %912 = vmatmul.mubr.f32.gmra.mxu0 %v911
    %v913 = vpop.f32.mrf.mxu0
    %v914 = vadd.f32 %v819, %v913
    %v915 = vpop.f32.mrf.mxu0
    %916 = vmatprep.mubr.f32.mxu0 0.0
    %v917 = vand.u32 %v619, 4294901760
    %v918 = vsub.f32 %v619, %v917
    %919 = vmatmul.mubr.f32.gmra.mxu0 %v918
    %v920 = vpop.f32.mrf.mxu0
    %v921 = vadd.f32 %v825, %v920
    %v922 = vpop.f32.mrf.mxu0
    %923 = vmatprep.mubr.f32.mxu0 0.0
    %v924 = vand.u32 %v622, 4294901760
    %v925 = vsub.f32 %v622, %v924
    %926 = vmatmul.mubr.f32.gmra.mxu0 %v925
    %v927 = vpop.f32.mrf.mxu0
    %v928 = vadd.f32 %v831, %v927
    %v929 = vpop.f32.mrf.mxu0
    %930 = vdwg.mxu0
    %931 = vmatprep.subr.mxu0 0.0
    %932 = vmatpush1.msra.mxu0 0.0
    %933 = vmatprep.subr.mxu0 0.0
    %934 = vmatpush1.msra.mxu0 0.0
    %935 = vmatprep.subr.mxu0 0.0
    %936 = vmatpush1.msra.mxu0 0.0
    %937 = vmatprep.subr.mxu0 0.0
    %938 = vmatpush1.msra.mxu0 0.0
    %939 = vmatprep.subr.mxu0 0.0
    %940 = vmatpush1.msra.mxu0 0.0
    %941 = vmatprep.subr.mxu0 0.0
    %942 = vmatpush1.msra.mxu0 0.0
    %943 = vmatprep.subr.mxu0 0.0
    %944 = vmatpush1.msra.mxu0 0.0
    %945 = vmatprep.subr.mxu0 0.0
    %946 = vmatpush1.msra.mxu0 0.0
    %947 = vmatprep.subr.mxu0 0.0
    %948 = vmatpush1.msra.mxu0 0.0
    %949 = vmatprep.subr.mxu0 0.0
    %950 = vmatpush1.msra.mxu0 0.0
    %951 = vmatprep.subr.mxu0 0.0
    %952 = vmatpush1.msra.mxu0 0.0
    %953 = vmatprep.subr.mxu0 0.0
    %954 = vmatpush1.msra.mxu0 0.0
    %955 = vmatprep.subr.mxu0 0.0
    %956 = vmatpush1.msra.mxu0 0.0
    %957 = vmatprep.subr.mxu0 0.0
    %958 = vmatpush1.msra.mxu0 0.0
    %959 = vmatprep.subr.mxu0 0.0
    %v960 = vand.u32 %v626, 4294901760
    %961 = vmatpush1.msra.mxu0 %v960
    %962 = vmatprep.subr.mxu0 0.0
    %v963 = vand.u32 %v609, 4294901760
    %964 = vmatpush1.msra.mxu0 %v963
    %965 = vmatprep.subr.mxu0 0.0
    %966 = vmatpush2.msra.mxu0 0.0
    %967 = vmatprep.subr.mxu0 0.0
    %968 = vmatpush2.msra.mxu0 0.0
    %969 = vmatprep.subr.mxu0 0.0
    %970 = vmatpush2.msra.mxu0 0.0
    %971 = vmatprep.subr.mxu0 0.0
    %972 = vmatpush2.msra.mxu0 0.0
    %973 = vmatprep.subr.mxu0 0.0
    %974 = vmatpush2.msra.mxu0 0.0
    %975 = vmatprep.subr.mxu0 0.0
    %976 = vmatpush2.msra.mxu0 0.0
    %977 = vmatprep.subr.mxu0 0.0
    %978 = vmatpush2.msra.mxu0 0.0
    %979 = vmatprep.subr.mxu0 0.0
    %980 = vmatpush2.msra.mxu0 0.0
    %981 = vmatprep.subr.mxu0 0.0
    %982 = vmatpush2.msra.mxu0 0.0
    %983 = vmatprep.subr.mxu0 0.0
    %984 = vmatpush2.msra.mxu0 0.0
    %985 = vmatprep.subr.mxu0 0.0
    %986 = vmatpush2.msra.mxu0 0.0
    %987 = vmatprep.subr.mxu0 0.0
    %988 = vmatpush2.msra.mxu0 0.0
    %989 = vmatprep.subr.mxu0 0.0
    %990 = vmatpush2.msra.mxu0 0.0
    %991 = vmatprep.subr.mxu0 0.0
    %992 = vmatpush2.msra.mxu0 0.0
    %993 = vmatprep.subr.mxu0 0.0
    %994 = vmatpush2.msra.mxu0 0.0
    %995 = vmatprep.subr.mxu0 0.0
    %996 = vmatpush2.msra.mxu0 0.0
    %997 = vmatprep.mubr.f32.mxu0 0.0
    %v998 = vand.u32 %v613, 4294901760
    %v999 = vsub.f32 %v613, %v998
    %v1000 = vand.u32 %v999, 4294901760
    %1001 = vmatmul.mubr.f32.gmra.mxu0 %v1000
    %v1002 = vpop.f32.mrf.mxu0
    %v1003 = vadd.f32 %v907, %v1002
    %v1004 = vpop.f32.mrf.mxu0
    %1005 = vmatprep.mubr.f32.mxu0 0.0
    %v1006 = vand.u32 %v616, 4294901760
    %v1007 = vsub.f32 %v616, %v1006
    %v1008 = vand.u32 %v1007, 4294901760
    %1009 = vmatmul.mubr.f32.gmra.mxu0 %v1008
    %v1010 = vpop.f32.mrf.mxu0
    %v1011 = vadd.f32 %v914, %v1010
    %v1012 = vpop.f32.mrf.mxu0
    %1013 = vmatprep.mubr.f32.mxu0 0.0
    %v1014 = vand.u32 %v619, 4294901760
    %v1015 = vsub.f32 %v619, %v1014
    %v1016 = vand.u32 %v1015, 4294901760
    %1017 = vmatmul.mubr.f32.gmra.mxu0 %v1016
    %v1018 = vpop.f32.mrf.mxu0
    %v1019 = vadd.f32 %v921, %v1018
    %v1020 = vpop.f32.mrf.mxu0
    %1021 = vmatprep.mubr.f32.mxu0 0.0
    %v1022 = vand.u32 %v622, 4294901760
    %v1023 = vsub.f32 %v622, %v1022
    %v1024 = vand.u32 %v1023, 4294901760
    %1025 = vmatmul.mubr.f32.gmra.mxu0 %v1024
    %v1026 = vpop.f32.mrf.mxu0
    %v1027 = vadd.f32 %v928, %v1026
    %v1028 = vpop.f32.mrf.mxu0
    %1029 = vdwg.mxu0
    %1030 = vmatprep.subr.mxu0 0.0
    %1031 = vmatpush1.msra.mxu0 0.0
    %1032 = vmatprep.subr.mxu0 0.0
    %1033 = vmatpush1.msra.mxu0 0.0
    %1034 = vmatprep.subr.mxu0 0.0
    %1035 = vmatpush1.msra.mxu0 0.0
    %1036 = vmatprep.subr.mxu0 0.0
    %1037 = vmatpush1.msra.mxu0 0.0
    %1038 = vmatprep.subr.mxu0 0.0
    %1039 = vmatpush1.msra.mxu0 0.0
    %1040 = vmatprep.subr.mxu0 0.0
    %1041 = vmatpush1.msra.mxu0 0.0
    %1042 = vmatprep.subr.mxu0 0.0
    %1043 = vmatpush1.msra.mxu0 0.0
    %1044 = vmatprep.subr.mxu0 0.0
    %1045 = vmatpush1.msra.mxu0 0.0
    %1046 = vmatprep.subr.mxu0 0.0
    %1047 = vmatpush1.msra.mxu0 0.0
    %1048 = vmatprep.subr.mxu0 0.0
    %1049 = vmatpush1.msra.mxu0 0.0
    %1050 = vmatprep.subr.mxu0 0.0
    %1051 = vmatpush1.msra.mxu0 0.0
    %1052 = vmatprep.subr.mxu0 0.0
    %1053 = vmatpush1.msra.mxu0 0.0
    %1054 = vmatprep.subr.mxu0 0.0
    %1055 = vmatpush1.msra.mxu0 0.0
    %1056 = vmatprep.subr.mxu0 0.0
    %1057 = vmatpush1.msra.mxu0 0.0
    %1058 = vmatprep.subr.mxu0 0.0
    %v1059 = vand.u32 %v626, 4294901760
    %v1060 = vsub.f32 %v626, %v1059
    %v1061 = vand.u32 %v1060, 4294901760
    %1062 = vmatpush1.msra.mxu0 %v1061
    %1063 = vmatprep.subr.mxu0 0.0
    %v1064 = vand.u32 %v609, 4294901760
    %v1065 = vsub.f32 %v609, %v1064
    %v1066 = vand.u32 %v1065, 4294901760
    %1067 = vmatpush1.msra.mxu0 %v1066
    %1068 = vmatprep.subr.mxu0 0.0
    %1069 = vmatpush2.msra.mxu0 0.0
    %1070 = vmatprep.subr.mxu0 0.0
    %1071 = vmatpush2.msra.mxu0 0.0
    %1072 = vmatprep.subr.mxu0 0.0
    %1073 = vmatpush2.msra.mxu0 0.0
    %1074 = vmatprep.subr.mxu0 0.0
    %1075 = vmatpush2.msra.mxu0 0.0
    %1076 = vmatprep.subr.mxu0 0.0
    %1077 = vmatpush2.msra.mxu0 0.0
    %1078 = vmatprep.subr.mxu0 0.0
    %1079 = vmatpush2.msra.mxu0 0.0
    %1080 = vmatprep.subr.mxu0 0.0
    %1081 = vmatpush2.msra.mxu0 0.0
    %1082 = vmatprep.subr.mxu0 0.0
    %1083 = vmatpush2.msra.mxu0 0.0
    %1084 = vmatprep.subr.mxu0 0.0
    %1085 = vmatpush2.msra.mxu0 0.0
    %1086 = vmatprep.subr.mxu0 0.0
    %1087 = vmatpush2.msra.mxu0 0.0
    %1088 = vmatprep.subr.mxu0 0.0
    %1089 = vmatpush2.msra.mxu0 0.0
    %1090 = vmatprep.subr.mxu0 0.0
    %1091 = vmatpush2.msra.mxu0 0.0
    %1092 = vmatprep.subr.mxu0 0.0
    %1093 = vmatpush2.msra.mxu0 0.0
    %1094 = vmatprep.subr.mxu0 0.0
    %1095 = vmatpush2.msra.mxu0 0.0
    %1096 = vmatprep.subr.mxu0 0.0
    %1097 = vmatpush2.msra.mxu0 0.0
    %1098 = vmatprep.subr.mxu0 0.0
    %1099 = vmatpush2.msra.mxu0 0.0
    %1100 = vmatprep.mubr.f32.mxu0 0.0
    %v1101 = vand.u32 %v613, 4294901760
    %1102 = vmatmul.mubr.f32.gmra.mxu0 %v1101
    %v1103 = vpop.f32.mrf.mxu0
    %v1104 = vadd.f32 %v1003, %v1103
    %v1105 = vpop.f32.mrf.mxu0
    %1106 = vmatprep.mubr.f32.mxu0 0.0
    %v1107 = vand.u32 %v616, 4294901760
    %1108 = vmatmul.mubr.f32.gmra.mxu0 %v1107
    %v1109 = vpop.f32.mrf.mxu0
    %v1110 = vadd.f32 %v1011, %v1109
    %v1111 = vpop.f32.mrf.mxu0
    %1112 = vmatprep.mubr.f32.mxu0 0.0
    %v1113 = vand.u32 %v619, 4294901760
    %1114 = vmatmul.mubr.f32.gmra.mxu0 %v1113
    %v1115 = vpop.f32.mrf.mxu0
    %v1116 = vadd.f32 %v1019, %v1115
    %v1117 = vpop.f32.mrf.mxu0
    %1118 = vmatprep.mubr.f32.mxu0 0.0
    %v1119 = vand.u32 %v622, 4294901760
    %1120 = vmatmul.mubr.f32.gmra.mxu0 %v1119
    %v1121 = vpop.f32.mrf.mxu0
    %v1122 = vadd.f32 %v1027, %v1121
    %v1123 = vpop.f32.mrf.mxu0
    %1124 = vdwg.mxu0
    %1125 = vmatprep.subr.mxu0 0.0
    %1126 = vmatpush1.msra.mxu0 0.0
    %1127 = vmatprep.subr.mxu0 0.0
    %1128 = vmatpush1.msra.mxu0 0.0
    %1129 = vmatprep.subr.mxu0 0.0
    %1130 = vmatpush1.msra.mxu0 0.0
    %1131 = vmatprep.subr.mxu0 0.0
    %1132 = vmatpush1.msra.mxu0 0.0
    %1133 = vmatprep.subr.mxu0 0.0
    %1134 = vmatpush1.msra.mxu0 0.0
    %1135 = vmatprep.subr.mxu0 0.0
    %1136 = vmatpush1.msra.mxu0 0.0
    %1137 = vmatprep.subr.mxu0 0.0
    %1138 = vmatpush1.msra.mxu0 0.0
    %1139 = vmatprep.subr.mxu0 0.0
    %1140 = vmatpush1.msra.mxu0 0.0
    %1141 = vmatprep.subr.mxu0 0.0
    %1142 = vmatpush1.msra.mxu0 0.0
    %1143 = vmatprep.subr.mxu0 0.0
    %1144 = vmatpush1.msra.mxu0 0.0
    %1145 = vmatprep.subr.mxu0 0.0
    %1146 = vmatpush1.msra.mxu0 0.0
    %1147 = vmatprep.subr.mxu0 0.0
    %1148 = vmatpush1.msra.mxu0 0.0
    %1149 = vmatprep.subr.mxu0 0.0
    %1150 = vmatpush1.msra.mxu0 0.0
    %1151 = vmatprep.subr.mxu0 0.0
    %1152 = vmatpush1.msra.mxu0 0.0
    %1153 = vmatprep.subr.mxu0 0.0
    %v1154 = vand.u32 %v626, 4294901760
    %1155 = vmatpush1.msra.mxu0 %v1154
    %1156 = vmatprep.subr.mxu0 0.0
    %v1157 = vand.u32 %v609, 4294901760
    %1158 = vmatpush1.msra.mxu0 %v1157
    %1159 = vmatprep.subr.mxu0 0.0
    %1160 = vmatpush2.msra.mxu0 0.0
    %1161 = vmatprep.subr.mxu0 0.0
    %1162 = vmatpush2.msra.mxu0 0.0
    %1163 = vmatprep.subr.mxu0 0.0
    %1164 = vmatpush2.msra.mxu0 0.0
    %1165 = vmatprep.subr.mxu0 0.0
    %1166 = vmatpush2.msra.mxu0 0.0
    %1167 = vmatprep.subr.mxu0 0.0
    %1168 = vmatpush2.msra.mxu0 0.0
    %1169 = vmatprep.subr.mxu0 0.0
    %1170 = vmatpush2.msra.mxu0 0.0
    %1171 = vmatprep.subr.mxu0 0.0
    %1172 = vmatpush2.msra.mxu0 0.0
    %1173 = vmatprep.subr.mxu0 0.0
    %1174 = vmatpush2.msra.mxu0 0.0
    %1175 = vmatprep.subr.mxu0 0.0
    %1176 = vmatpush2.msra.mxu0 0.0
    %1177 = vmatprep.subr.mxu0 0.0
    %1178 = vmatpush2.msra.mxu0 0.0
    %1179 = vmatprep.subr.mxu0 0.0
    %1180 = vmatpush2.msra.mxu0 0.0
    %1181 = vmatprep.subr.mxu0 0.0
    %1182 = vmatpush2.msra.mxu0 0.0
    %1183 = vmatprep.subr.mxu0 0.0
    %1184 = vmatpush2.msra.mxu0 0.0
    %1185 = vmatprep.subr.mxu0 0.0
    %1186 = vmatpush2.msra.mxu0 0.0
    %1187 = vmatprep.subr.mxu0 0.0
    %1188 = vmatpush2.msra.mxu0 0.0
    %1189 = vmatprep.subr.mxu0 0.0
    %1190 = vmatpush2.msra.mxu0 0.0
    %1191 = vmatprep.mubr.f32.mxu0 0.0
    %v1192 = vand.u32 %v613, 4294901760
    %1193 = vmatmul.mubr.f32.gmra.mxu0 %v1192
    %v1194 = vpop.f32.mrf.mxu0
    %v1195 = vadd.f32 %v1104, %v1194
    %v1196 = vpop.f32.mrf.mxu0
    %1197 = vmatprep.mubr.f32.mxu0 0.0
    %v1198 = vand.u32 %v616, 4294901760
    %1199 = vmatmul.mubr.f32.gmra.mxu0 %v1198
    %v1200 = vpop.f32.mrf.mxu0
    %v1201 = vadd.f32 %v1110, %v1200
    %v1202 = vpop.f32.mrf.mxu0
    %1203 = vmatprep.mubr.f32.mxu0 0.0
    %v1204 = vand.u32 %v619, 4294901760
    %1205 = vmatmul.mubr.f32.gmra.mxu0 %v1204
    %v1206 = vpop.f32.mrf.mxu0
    %v1207 = vadd.f32 %v1116, %v1206
    %v1208 = vpop.f32.mrf.mxu0
    %1209 = vmatprep.mubr.f32.mxu0 0.0
    %v1210 = vand.u32 %v622, 4294901760
    %1211 = vmatmul.mubr.f32.gmra.mxu0 %v1210
    %v1212 = vpop.f32.mrf.mxu0
    %v1213 = vadd.f32 %v1122, %v1212
    %v1214 = vpop.f32.mrf.mxu0
    %1215 = vdwg.mxu0
    %v1216 = vsub.f32 %v46, %v1195
    %v1217 = vsub.f32 %v47, %v1201
    %v1218 = vsub.f32 %v48, %v1207
    %v1219 = vsub.f32 %v49, %v1213
    %v1220 = vmul.f32 %v1216, %v1216
    %v1221 = vmul.f32 %v1217, %v1217
    %v1222 = vmul.f32 %v1218, %v1218
    %v1223 = vmul.f32 %v1219, %v1219
    %v1225 = vsel %vm77, %v1223, 0
    %1227 = vmatprep.subr.mxu0 0.0
    %1228 = vmatpush1.msra.mxu0 0.0
    %1229 = vmatprep.subr.mxu0 0.0
    %1230 = vmatpush1.msra.mxu0 0.0
    %1231 = vmatprep.subr.mxu0 0.0
    %1232 = vmatpush1.msra.mxu0 0.0
    %1233 = vmatprep.subr.mxu0 0.0
    %1234 = vmatpush1.msra.mxu0 0.0
    %1235 = vmatprep.subr.mxu0 0.0
    %1236 = vmatpush1.msra.mxu0 0.0
    %1237 = vmatprep.subr.mxu0 0.0
    %1238 = vmatpush1.msra.mxu0 0.0
    %1239 = vmatprep.subr.mxu0 0.0
    %1240 = vmatpush1.msra.mxu0 0.0
    %1241 = vmatprep.subr.mxu0 0.0
    %1242 = vmatpush1.msra.mxu0 0.0
    %1243 = vmatprep.subr.mxu0 0.0
    %1244 = vmatpush1.msra.mxu0 0.0
    %1245 = vmatprep.subr.mxu0 0.0
    %1246 = vmatpush1.msra.mxu0 0.0
    %1247 = vmatprep.subr.mxu0 0.0
    %1248 = vmatpush1.msra.mxu0 0.0
    %1249 = vmatprep.subr.mxu0 0.0
    %1250 = vmatpush1.msra.mxu0 0.0
    %1251 = vmatprep.subr.mxu0 0.0
    %v1252 = vand.u32 %v1225, 4294901760
    %1253 = vmatpush1.msra.mxu0 %v1252
    %1254 = vmatprep.subr.mxu0 0.0
    %v1255 = vand.u32 %v1222, 4294901760
    %1256 = vmatpush1.msra.mxu0 %v1255
    %1257 = vmatprep.subr.mxu0 0.0
    %v1258 = vand.u32 %v1221, 4294901760
    %1259 = vmatpush1.msra.mxu0 %v1258
    %1260 = vmatprep.subr.mxu0 0.0
    %v1261 = vand.u32 %v1220, 4294901760
    %1262 = vmatpush1.msra.mxu0 %v1261
    %1263 = vmatprep.subr.mxu0 0.0
    %1264 = vmatpush2.msra.mxu0 0.0
    %1265 = vmatprep.subr.mxu0 0.0
    %1266 = vmatpush2.msra.mxu0 0.0
    %1267 = vmatprep.subr.mxu0 0.0
    %1268 = vmatpush2.msra.mxu0 0.0
    %1269 = vmatprep.subr.mxu0 0.0
    %1270 = vmatpush2.msra.mxu0 0.0
    %1271 = vmatprep.subr.mxu0 0.0
    %1272 = vmatpush2.msra.mxu0 0.0
    %1273 = vmatprep.subr.mxu0 0.0
    %1274 = vmatpush2.msra.mxu0 0.0
    %1275 = vmatprep.subr.mxu0 0.0
    %1276 = vmatpush2.msra.mxu0 0.0
    %1277 = vmatprep.subr.mxu0 0.0
    %1278 = vmatpush2.msra.mxu0 0.0
    %1279 = vmatprep.subr.mxu0 0.0
    %1280 = vmatpush2.msra.mxu0 0.0
    %1281 = vmatprep.subr.mxu0 0.0
    %1282 = vmatpush2.msra.mxu0 0.0
    %1283 = vmatprep.subr.mxu0 0.0
    %1284 = vmatpush2.msra.mxu0 0.0
    %1285 = vmatprep.subr.mxu0 0.0
    %1286 = vmatpush2.msra.mxu0 0.0
    %1287 = vmatprep.subr.mxu0 0.0
    %1288 = vmatpush2.msra.mxu0 0.0
    %1289 = vmatprep.subr.mxu0 0.0
    %1290 = vmatpush2.msra.mxu0 0.0
    %1291 = vmatprep.subr.mxu0 0.0
    %1292 = vmatpush2.msra.mxu0 0.0
    %1293 = vmatprep.subr.mxu0 0.0
    %1294 = vmatpush2.msra.mxu0 0.0
    %1295 = vmatprep.mubr.f32.mxu0 0.0
    %v1296 = vand.u32 %v72, 4294901760
    %v1297 = vsub.f32 %v72, %v1296
    %v1298 = vand.u32 %v1297, 4294901760
    %v1299 = vsub.f32 %v1297, %v1298
    %v1300 = vand.u32 %v1299, 4294901760
    %1301 = vmatmul.mubr.f32.gmra.mxu0 %v1300
    %v1302 = vpop.f32.mrf.mxu0
    %v1303 = vadd.f32 0.0, %v1302
    %v1304 = vpop.f32.mrf.mxu0
    %1305 = vmatprep.mubr.f32.mxu0 0.0
    %v1306 = vand.u32 %v75, 4294901760
    %v1307 = vsub.f32 %v75, %v1306
    %v1308 = vand.u32 %v1307, 4294901760
    %v1309 = vsub.f32 %v1307, %v1308
    %v1310 = vand.u32 %v1309, 4294901760
    %1311 = vmatmul.mubr.f32.gmra.mxu0 %v1310
    %v1312 = vpop.f32.mrf.mxu0
    %v1313 = vadd.f32 0.0, %v1312
    %v1314 = vpop.f32.mrf.mxu0
    %1315 = vdwg.mxu0
    %1316 = vmatprep.subr.mxu0 0.0
    %1317 = vmatpush1.msra.mxu0 0.0
    %1318 = vmatprep.subr.mxu0 0.0
    %1319 = vmatpush1.msra.mxu0 0.0
    %1320 = vmatprep.subr.mxu0 0.0
    %1321 = vmatpush1.msra.mxu0 0.0
    %1322 = vmatprep.subr.mxu0 0.0
    %1323 = vmatpush1.msra.mxu0 0.0
    %1324 = vmatprep.subr.mxu0 0.0
    %1325 = vmatpush1.msra.mxu0 0.0
    %1326 = vmatprep.subr.mxu0 0.0
    %1327 = vmatpush1.msra.mxu0 0.0
    %1328 = vmatprep.subr.mxu0 0.0
    %1329 = vmatpush1.msra.mxu0 0.0
    %1330 = vmatprep.subr.mxu0 0.0
    %1331 = vmatpush1.msra.mxu0 0.0
    %1332 = vmatprep.subr.mxu0 0.0
    %1333 = vmatpush1.msra.mxu0 0.0
    %1334 = vmatprep.subr.mxu0 0.0
    %1335 = vmatpush1.msra.mxu0 0.0
    %1336 = vmatprep.subr.mxu0 0.0
    %1337 = vmatpush1.msra.mxu0 0.0
    %1338 = vmatprep.subr.mxu0 0.0
    %1339 = vmatpush1.msra.mxu0 0.0
    %1340 = vmatprep.subr.mxu0 0.0
    %v1341 = vand.u32 %v1225, 4294901760
    %v1342 = vsub.f32 %v1225, %v1341
    %v1343 = vand.u32 %v1342, 4294901760
    %v1344 = vsub.f32 %v1342, %v1343
    %v1345 = vand.u32 %v1344, 4294901760
    %1346 = vmatpush1.msra.mxu0 %v1345
    %1347 = vmatprep.subr.mxu0 0.0
    %v1348 = vand.u32 %v1222, 4294901760
    %v1349 = vsub.f32 %v1222, %v1348
    %v1350 = vand.u32 %v1349, 4294901760
    %v1351 = vsub.f32 %v1349, %v1350
    %v1352 = vand.u32 %v1351, 4294901760
    %1353 = vmatpush1.msra.mxu0 %v1352
    %1354 = vmatprep.subr.mxu0 0.0
    %v1355 = vand.u32 %v1221, 4294901760
    %v1356 = vsub.f32 %v1221, %v1355
    %v1357 = vand.u32 %v1356, 4294901760
    %v1358 = vsub.f32 %v1356, %v1357
    %v1359 = vand.u32 %v1358, 4294901760
    %1360 = vmatpush1.msra.mxu0 %v1359
    %1361 = vmatprep.subr.mxu0 0.0
    %v1362 = vand.u32 %v1220, 4294901760
    %v1363 = vsub.f32 %v1220, %v1362
    %v1364 = vand.u32 %v1363, 4294901760
    %v1365 = vsub.f32 %v1363, %v1364
    %v1366 = vand.u32 %v1365, 4294901760
    %1367 = vmatpush1.msra.mxu0 %v1366
    %1368 = vmatprep.subr.mxu0 0.0
    %1369 = vmatpush2.msra.mxu0 0.0
    %1370 = vmatprep.subr.mxu0 0.0
    %1371 = vmatpush2.msra.mxu0 0.0
    %1372 = vmatprep.subr.mxu0 0.0
    %1373 = vmatpush2.msra.mxu0 0.0
    %1374 = vmatprep.subr.mxu0 0.0
    %1375 = vmatpush2.msra.mxu0 0.0
    %1376 = vmatprep.subr.mxu0 0.0
    %1377 = vmatpush2.msra.mxu0 0.0
    %1378 = vmatprep.subr.mxu0 0.0
    %1379 = vmatpush2.msra.mxu0 0.0
    %1380 = vmatprep.subr.mxu0 0.0
    %1381 = vmatpush2.msra.mxu0 0.0
    %1382 = vmatprep.subr.mxu0 0.0
    %1383 = vmatpush2.msra.mxu0 0.0
    %1384 = vmatprep.subr.mxu0 0.0
    %1385 = vmatpush2.msra.mxu0 0.0
    %1386 = vmatprep.subr.mxu0 0.0
    %1387 = vmatpush2.msra.mxu0 0.0
    %1388 = vmatprep.subr.mxu0 0.0
    %1389 = vmatpush2.msra.mxu0 0.0
    %1390 = vmatprep.subr.mxu0 0.0
    %1391 = vmatpush2.msra.mxu0 0.0
    %1392 = vmatprep.subr.mxu0 0.0
    %1393 = vmatpush2.msra.mxu0 0.0
    %1394 = vmatprep.subr.mxu0 0.0
    %1395 = vmatpush2.msra.mxu0 0.0
    %1396 = vmatprep.subr.mxu0 0.0
    %1397 = vmatpush2.msra.mxu0 0.0
    %1398 = vmatprep.subr.mxu0 0.0
    %1399 = vmatpush2.msra.mxu0 0.0
    %1400 = vmatprep.mubr.f32.mxu0 0.0
    %v1401 = vand.u32 %v72, 4294901760
    %1402 = vmatmul.mubr.f32.gmra.mxu0 %v1401
    %v1403 = vpop.f32.mrf.mxu0
    %v1404 = vadd.f32 %v1303, %v1403
    %v1405 = vpop.f32.mrf.mxu0
    %1406 = vmatprep.mubr.f32.mxu0 0.0
    %v1407 = vand.u32 %v75, 4294901760
    %1408 = vmatmul.mubr.f32.gmra.mxu0 %v1407
    %v1409 = vpop.f32.mrf.mxu0
    %v1410 = vadd.f32 %v1313, %v1409
    %v1411 = vpop.f32.mrf.mxu0
    %1412 = vdwg.mxu0
    %1413 = vmatprep.subr.mxu0 0.0
    %1414 = vmatpush1.msra.mxu0 0.0
    %1415 = vmatprep.subr.mxu0 0.0
    %1416 = vmatpush1.msra.mxu0 0.0
    %1417 = vmatprep.subr.mxu0 0.0
    %1418 = vmatpush1.msra.mxu0 0.0
    %1419 = vmatprep.subr.mxu0 0.0
    %1420 = vmatpush1.msra.mxu0 0.0
    %1421 = vmatprep.subr.mxu0 0.0
    %1422 = vmatpush1.msra.mxu0 0.0
    %1423 = vmatprep.subr.mxu0 0.0
    %1424 = vmatpush1.msra.mxu0 0.0
    %1425 = vmatprep.subr.mxu0 0.0
    %1426 = vmatpush1.msra.mxu0 0.0
    %1427 = vmatprep.subr.mxu0 0.0
    %1428 = vmatpush1.msra.mxu0 0.0
    %1429 = vmatprep.subr.mxu0 0.0
    %1430 = vmatpush1.msra.mxu0 0.0
    %1431 = vmatprep.subr.mxu0 0.0
    %1432 = vmatpush1.msra.mxu0 0.0
    %1433 = vmatprep.subr.mxu0 0.0
    %1434 = vmatpush1.msra.mxu0 0.0
    %1435 = vmatprep.subr.mxu0 0.0
    %1436 = vmatpush1.msra.mxu0 0.0
    %1437 = vmatprep.subr.mxu0 0.0
    %v1438 = vand.u32 %v1225, 4294901760
    %v1439 = vsub.f32 %v1225, %v1438
    %1440 = vmatpush1.msra.mxu0 %v1439
    %1441 = vmatprep.subr.mxu0 0.0
    %v1442 = vand.u32 %v1222, 4294901760
    %v1443 = vsub.f32 %v1222, %v1442
    %1444 = vmatpush1.msra.mxu0 %v1443
    %1445 = vmatprep.subr.mxu0 0.0
    %v1446 = vand.u32 %v1221, 4294901760
    %v1447 = vsub.f32 %v1221, %v1446
    %1448 = vmatpush1.msra.mxu0 %v1447
    %1449 = vmatprep.subr.mxu0 0.0
    %v1450 = vand.u32 %v1220, 4294901760
    %v1451 = vsub.f32 %v1220, %v1450
    %1452 = vmatpush1.msra.mxu0 %v1451
    %1453 = vmatprep.subr.mxu0 0.0
    %1454 = vmatpush2.msra.mxu0 0.0
    %1455 = vmatprep.subr.mxu0 0.0
    %1456 = vmatpush2.msra.mxu0 0.0
    %1457 = vmatprep.subr.mxu0 0.0
    %1458 = vmatpush2.msra.mxu0 0.0
    %1459 = vmatprep.subr.mxu0 0.0
    %1460 = vmatpush2.msra.mxu0 0.0
    %1461 = vmatprep.subr.mxu0 0.0
    %1462 = vmatpush2.msra.mxu0 0.0
    %1463 = vmatprep.subr.mxu0 0.0
    %1464 = vmatpush2.msra.mxu0 0.0
    %1465 = vmatprep.subr.mxu0 0.0
    %1466 = vmatpush2.msra.mxu0 0.0
    %1467 = vmatprep.subr.mxu0 0.0
    %1468 = vmatpush2.msra.mxu0 0.0
    %1469 = vmatprep.subr.mxu0 0.0
    %1470 = vmatpush2.msra.mxu0 0.0
    %1471 = vmatprep.subr.mxu0 0.0
    %1472 = vmatpush2.msra.mxu0 0.0
    %1473 = vmatprep.subr.mxu0 0.0
    %1474 = vmatpush2.msra.mxu0 0.0
    %1475 = vmatprep.subr.mxu0 0.0
    %1476 = vmatpush2.msra.mxu0 0.0
    %1477 = vmatprep.subr.mxu0 0.0
    %1478 = vmatpush2.msra.mxu0 0.0
    %1479 = vmatprep.subr.mxu0 0.0
    %1480 = vmatpush2.msra.mxu0 0.0
    %1481 = vmatprep.subr.mxu0 0.0
    %1482 = vmatpush2.msra.mxu0 0.0
    %1483 = vmatprep.subr.mxu0 0.0
    %1484 = vmatpush2.msra.mxu0 0.0
    %1485 = vmatprep.mubr.f32.mxu0 0.0
    %v1486 = vand.u32 %v72, 4294901760
    %v1487 = vsub.f32 %v72, %v1486
    %1488 = vmatmul.mubr.f32.gmra.mxu0 %v1487
    %v1489 = vpop.f32.mrf.mxu0
    %v1490 = vadd.f32 %v1404, %v1489
    %v1491 = vpop.f32.mrf.mxu0
    %1492 = vmatprep.mubr.f32.mxu0 0.0
    %v1493 = vand.u32 %v75, 4294901760
    %v1494 = vsub.f32 %v75, %v1493
    %1495 = vmatmul.mubr.f32.gmra.mxu0 %v1494
    %v1496 = vpop.f32.mrf.mxu0
    %v1497 = vadd.f32 %v1410, %v1496
    %v1498 = vpop.f32.mrf.mxu0
    %1499 = vdwg.mxu0
    %1500 = vmatprep.subr.mxu0 0.0
    %1501 = vmatpush1.msra.mxu0 0.0
    %1502 = vmatprep.subr.mxu0 0.0
    %1503 = vmatpush1.msra.mxu0 0.0
    %1504 = vmatprep.subr.mxu0 0.0
    %1505 = vmatpush1.msra.mxu0 0.0
    %1506 = vmatprep.subr.mxu0 0.0
    %1507 = vmatpush1.msra.mxu0 0.0
    %1508 = vmatprep.subr.mxu0 0.0
    %1509 = vmatpush1.msra.mxu0 0.0
    %1510 = vmatprep.subr.mxu0 0.0
    %1511 = vmatpush1.msra.mxu0 0.0
    %1512 = vmatprep.subr.mxu0 0.0
    %1513 = vmatpush1.msra.mxu0 0.0
    %1514 = vmatprep.subr.mxu0 0.0
    %1515 = vmatpush1.msra.mxu0 0.0
    %1516 = vmatprep.subr.mxu0 0.0
    %1517 = vmatpush1.msra.mxu0 0.0
    %1518 = vmatprep.subr.mxu0 0.0
    %1519 = vmatpush1.msra.mxu0 0.0
    %1520 = vmatprep.subr.mxu0 0.0
    %1521 = vmatpush1.msra.mxu0 0.0
    %1522 = vmatprep.subr.mxu0 0.0
    %1523 = vmatpush1.msra.mxu0 0.0
    %1524 = vmatprep.subr.mxu0 0.0
    %v1525 = vand.u32 %v1225, 4294901760
    %1526 = vmatpush1.msra.mxu0 %v1525
    %1527 = vmatprep.subr.mxu0 0.0
    %v1528 = vand.u32 %v1222, 4294901760
    %1529 = vmatpush1.msra.mxu0 %v1528
    %1530 = vmatprep.subr.mxu0 0.0
    %v1531 = vand.u32 %v1221, 4294901760
    %1532 = vmatpush1.msra.mxu0 %v1531
    %1533 = vmatprep.subr.mxu0 0.0
    %v1534 = vand.u32 %v1220, 4294901760
    %1535 = vmatpush1.msra.mxu0 %v1534
    %1536 = vmatprep.subr.mxu0 0.0
    %1537 = vmatpush2.msra.mxu0 0.0
    %1538 = vmatprep.subr.mxu0 0.0
    %1539 = vmatpush2.msra.mxu0 0.0
    %1540 = vmatprep.subr.mxu0 0.0
    %1541 = vmatpush2.msra.mxu0 0.0
    %1542 = vmatprep.subr.mxu0 0.0
    %1543 = vmatpush2.msra.mxu0 0.0
    %1544 = vmatprep.subr.mxu0 0.0
    %1545 = vmatpush2.msra.mxu0 0.0
    %1546 = vmatprep.subr.mxu0 0.0
    %1547 = vmatpush2.msra.mxu0 0.0
    %1548 = vmatprep.subr.mxu0 0.0
    %1549 = vmatpush2.msra.mxu0 0.0
    %1550 = vmatprep.subr.mxu0 0.0
    %1551 = vmatpush2.msra.mxu0 0.0
    %1552 = vmatprep.subr.mxu0 0.0
    %1553 = vmatpush2.msra.mxu0 0.0
    %1554 = vmatprep.subr.mxu0 0.0
    %1555 = vmatpush2.msra.mxu0 0.0
    %1556 = vmatprep.subr.mxu0 0.0
    %1557 = vmatpush2.msra.mxu0 0.0
    %1558 = vmatprep.subr.mxu0 0.0
    %1559 = vmatpush2.msra.mxu0 0.0
    %1560 = vmatprep.subr.mxu0 0.0
    %1561 = vmatpush2.msra.mxu0 0.0
    %1562 = vmatprep.subr.mxu0 0.0
    %1563 = vmatpush2.msra.mxu0 0.0
    %1564 = vmatprep.subr.mxu0 0.0
    %1565 = vmatpush2.msra.mxu0 0.0
    %1566 = vmatprep.subr.mxu0 0.0
    %1567 = vmatpush2.msra.mxu0 0.0
    %1568 = vmatprep.mubr.f32.mxu0 0.0
    %v1569 = vand.u32 %v72, 4294901760
    %v1570 = vsub.f32 %v72, %v1569
    %v1571 = vand.u32 %v1570, 4294901760
    %1572 = vmatmul.mubr.f32.gmra.mxu0 %v1571
    %v1573 = vpop.f32.mrf.mxu0
    %v1574 = vadd.f32 %v1490, %v1573
    %v1575 = vpop.f32.mrf.mxu0
    %1576 = vmatprep.mubr.f32.mxu0 0.0
    %v1577 = vand.u32 %v75, 4294901760
    %v1578 = vsub.f32 %v75, %v1577
    %v1579 = vand.u32 %v1578, 4294901760
    %1580 = vmatmul.mubr.f32.gmra.mxu0 %v1579
    %v1581 = vpop.f32.mrf.mxu0
    %v1582 = vadd.f32 %v1497, %v1581
    %v1583 = vpop.f32.mrf.mxu0
    %1584 = vdwg.mxu0
    %1585 = vmatprep.subr.mxu0 0.0
    %1586 = vmatpush1.msra.mxu0 0.0
    %1587 = vmatprep.subr.mxu0 0.0
    %1588 = vmatpush1.msra.mxu0 0.0
    %1589 = vmatprep.subr.mxu0 0.0
    %1590 = vmatpush1.msra.mxu0 0.0
    %1591 = vmatprep.subr.mxu0 0.0
    %1592 = vmatpush1.msra.mxu0 0.0
    %1593 = vmatprep.subr.mxu0 0.0
    %1594 = vmatpush1.msra.mxu0 0.0
    %1595 = vmatprep.subr.mxu0 0.0
    %1596 = vmatpush1.msra.mxu0 0.0
    %1597 = vmatprep.subr.mxu0 0.0
    %1598 = vmatpush1.msra.mxu0 0.0
    %1599 = vmatprep.subr.mxu0 0.0
    %1600 = vmatpush1.msra.mxu0 0.0
    %1601 = vmatprep.subr.mxu0 0.0
    %1602 = vmatpush1.msra.mxu0 0.0
    %1603 = vmatprep.subr.mxu0 0.0
    %1604 = vmatpush1.msra.mxu0 0.0
    %1605 = vmatprep.subr.mxu0 0.0
    %1606 = vmatpush1.msra.mxu0 0.0
    %1607 = vmatprep.subr.mxu0 0.0
    %1608 = vmatpush1.msra.mxu0 0.0
    %1609 = vmatprep.subr.mxu0 0.0
    %v1610 = vand.u32 %v1225, 4294901760
    %v1611 = vsub.f32 %v1225, %v1610
    %v1612 = vand.u32 %v1611, 4294901760
    %1613 = vmatpush1.msra.mxu0 %v1612
    %1614 = vmatprep.subr.mxu0 0.0
    %v1615 = vand.u32 %v1222, 4294901760
    %v1616 = vsub.f32 %v1222, %v1615
    %v1617 = vand.u32 %v1616, 4294901760
    %1618 = vmatpush1.msra.mxu0 %v1617
    %1619 = vmatprep.subr.mxu0 0.0
    %v1620 = vand.u32 %v1221, 4294901760
    %v1621 = vsub.f32 %v1221, %v1620
    %v1622 = vand.u32 %v1621, 4294901760
    %1623 = vmatpush1.msra.mxu0 %v1622
    %1624 = vmatprep.subr.mxu0 0.0
    %v1625 = vand.u32 %v1220, 4294901760
    %v1626 = vsub.f32 %v1220, %v1625
    %v1627 = vand.u32 %v1626, 4294901760
    %1628 = vmatpush1.msra.mxu0 %v1627
    %1629 = vmatprep.subr.mxu0 0.0
    %1630 = vmatpush2.msra.mxu0 0.0
    %1631 = vmatprep.subr.mxu0 0.0
    %1632 = vmatpush2.msra.mxu0 0.0
    %1633 = vmatprep.subr.mxu0 0.0
    %1634 = vmatpush2.msra.mxu0 0.0
    %1635 = vmatprep.subr.mxu0 0.0
    %1636 = vmatpush2.msra.mxu0 0.0
    %1637 = vmatprep.subr.mxu0 0.0
    %1638 = vmatpush2.msra.mxu0 0.0
    %1639 = vmatprep.subr.mxu0 0.0
    %1640 = vmatpush2.msra.mxu0 0.0
    %1641 = vmatprep.subr.mxu0 0.0
    %1642 = vmatpush2.msra.mxu0 0.0
    %1643 = vmatprep.subr.mxu0 0.0
    %1644 = vmatpush2.msra.mxu0 0.0
    %1645 = vmatprep.subr.mxu0 0.0
    %1646 = vmatpush2.msra.mxu0 0.0
    %1647 = vmatprep.subr.mxu0 0.0
    %1648 = vmatpush2.msra.mxu0 0.0
    %1649 = vmatprep.subr.mxu0 0.0
    %1650 = vmatpush2.msra.mxu0 0.0
    %1651 = vmatprep.subr.mxu0 0.0
    %1652 = vmatpush2.msra.mxu0 0.0
    %1653 = vmatprep.subr.mxu0 0.0
    %1654 = vmatpush2.msra.mxu0 0.0
    %1655 = vmatprep.subr.mxu0 0.0
    %1656 = vmatpush2.msra.mxu0 0.0
    %1657 = vmatprep.subr.mxu0 0.0
    %1658 = vmatpush2.msra.mxu0 0.0
    %1659 = vmatprep.subr.mxu0 0.0
    %1660 = vmatpush2.msra.mxu0 0.0
    %1661 = vmatprep.mubr.f32.mxu0 0.0
    %v1662 = vand.u32 %v72, 4294901760
    %1663 = vmatmul.mubr.f32.gmra.mxu0 %v1662
    %v1664 = vpop.f32.mrf.mxu0
    %v1665 = vadd.f32 %v1574, %v1664
    %v1666 = vpop.f32.mrf.mxu0
    %1667 = vmatprep.mubr.f32.mxu0 0.0
    %v1668 = vand.u32 %v75, 4294901760
    %1669 = vmatmul.mubr.f32.gmra.mxu0 %v1668
    %v1670 = vpop.f32.mrf.mxu0
    %v1671 = vadd.f32 %v1582, %v1670
    %v1672 = vpop.f32.mrf.mxu0
    %1673 = vdwg.mxu0
    %1674 = vmatprep.subr.mxu0 0.0
    %1675 = vmatpush1.msra.mxu0 0.0
    %1676 = vmatprep.subr.mxu0 0.0
    %1677 = vmatpush1.msra.mxu0 0.0
    %1678 = vmatprep.subr.mxu0 0.0
    %1679 = vmatpush1.msra.mxu0 0.0
    %1680 = vmatprep.subr.mxu0 0.0
    %1681 = vmatpush1.msra.mxu0 0.0
    %1682 = vmatprep.subr.mxu0 0.0
    %1683 = vmatpush1.msra.mxu0 0.0
    %1684 = vmatprep.subr.mxu0 0.0
    %1685 = vmatpush1.msra.mxu0 0.0
    %1686 = vmatprep.subr.mxu0 0.0
    %1687 = vmatpush1.msra.mxu0 0.0
    %1688 = vmatprep.subr.mxu0 0.0
    %1689 = vmatpush1.msra.mxu0 0.0
    %1690 = vmatprep.subr.mxu0 0.0
    %1691 = vmatpush1.msra.mxu0 0.0
    %1692 = vmatprep.subr.mxu0 0.0
    %1693 = vmatpush1.msra.mxu0 0.0
    %1694 = vmatprep.subr.mxu0 0.0
    %1695 = vmatpush1.msra.mxu0 0.0
    %1696 = vmatprep.subr.mxu0 0.0
    %1697 = vmatpush1.msra.mxu0 0.0
    %1698 = vmatprep.subr.mxu0 0.0
    %v1699 = vand.u32 %v1225, 4294901760
    %1700 = vmatpush1.msra.mxu0 %v1699
    %1701 = vmatprep.subr.mxu0 0.0
    %v1702 = vand.u32 %v1222, 4294901760
    %1703 = vmatpush1.msra.mxu0 %v1702
    %1704 = vmatprep.subr.mxu0 0.0
    %v1705 = vand.u32 %v1221, 4294901760
    %1706 = vmatpush1.msra.mxu0 %v1705
    %1707 = vmatprep.subr.mxu0 0.0
    %v1708 = vand.u32 %v1220, 4294901760
    %1709 = vmatpush1.msra.mxu0 %v1708
    %1710 = vmatprep.subr.mxu0 0.0
    %1711 = vmatpush2.msra.mxu0 0.0
    %1712 = vmatprep.subr.mxu0 0.0
    %1713 = vmatpush2.msra.mxu0 0.0
    %1714 = vmatprep.subr.mxu0 0.0
    %1715 = vmatpush2.msra.mxu0 0.0
    %1716 = vmatprep.subr.mxu0 0.0
    %1717 = vmatpush2.msra.mxu0 0.0
    %1718 = vmatprep.subr.mxu0 0.0
    %1719 = vmatpush2.msra.mxu0 0.0
    %1720 = vmatprep.subr.mxu0 0.0
    %1721 = vmatpush2.msra.mxu0 0.0
    %1722 = vmatprep.subr.mxu0 0.0
    %1723 = vmatpush2.msra.mxu0 0.0
    %1724 = vmatprep.subr.mxu0 0.0
    %1725 = vmatpush2.msra.mxu0 0.0
    %1726 = vmatprep.subr.mxu0 0.0
    %1727 = vmatpush2.msra.mxu0 0.0
    %1728 = vmatprep.subr.mxu0 0.0
    %1729 = vmatpush2.msra.mxu0 0.0
    %1730 = vmatprep.subr.mxu0 0.0
    %1731 = vmatpush2.msra.mxu0 0.0
    %1732 = vmatprep.subr.mxu0 0.0
    %1733 = vmatpush2.msra.mxu0 0.0
    %1734 = vmatprep.subr.mxu0 0.0
    %1735 = vmatpush2.msra.mxu0 0.0
    %1736 = vmatprep.subr.mxu0 0.0
    %1737 = vmatpush2.msra.mxu0 0.0
    %1738 = vmatprep.subr.mxu0 0.0
    %1739 = vmatpush2.msra.mxu0 0.0
    %1740 = vmatprep.subr.mxu0 0.0
    %1741 = vmatpush2.msra.mxu0 0.0
    %1742 = vmatprep.mubr.f32.mxu0 0.0
    %v1743 = vand.u32 %v72, 4294901760
    %1744 = vmatmul.mubr.f32.gmra.mxu0 %v1743
    %v1745 = vpop.f32.mrf.mxu0
    %v1746 = vadd.f32 %v1665, %v1745
    %v1747 = vpop.f32.mrf.mxu0
    %1748 = vmatprep.mubr.f32.mxu0 0.0
    %v1749 = vand.u32 %v75, 4294901760
    %1750 = vmatmul.mubr.f32.gmra.mxu0 %v1749
    %v1751 = vpop.f32.mrf.mxu0
    %v1752 = vadd.f32 %v1671, %v1751
    %v1753 = vpop.f32.mrf.mxu0
    %1754 = vdwg.mxu0
    %v1755 = vmul.f32 %v1746, 0.33333334
    %v1756 = vmul.f32 %v1752, 0.33333334
    %v1757 = vrsqrt.pop %v1755
    %v1758 = vmul.f32 %v1755, %v1757
    %vm1759 = vcmp.eq.f32.partialorder %v1755, inf
    %v1760 = vsel %vm1759, %v1755, %v1758
    %vm1761 = vcmp.eq.f32.partialorder %v1755, 0.0
    %v1762 = vand.u32 %v1755, 2147483648
    %v1763 = vsel %vm1761, %v1762, %v1760
    %v1764 = vrsqrt.pop %v1756
    %v1765 = vmul.f32 %v1756, %v1764
    %vm1766 = vcmp.eq.f32.partialorder %v1756, inf
    %v1767 = vsel %vm1766, %v1756, %v1765
    %vm1768 = vcmp.eq.f32.partialorder %v1756, 0.0
    %v1769 = vand.u32 %v1756, 2147483648
    %v1770 = vsel %vm1768, %v1769, %v1767
    %v1772 = vsel %vm70, %v64, 0
    %v1775 = vsel %vm70, %v65, 0
    %1777 = vmatprep.subr.mxu0 0.0
    %1778 = vmatpush1.msra.mxu0 0.0
    %1779 = vmatprep.subr.mxu0 0.0
    %1780 = vmatpush1.msra.mxu0 0.0
    %1781 = vmatprep.subr.mxu0 0.0
    %1782 = vmatpush1.msra.mxu0 0.0
    %1783 = vmatprep.subr.mxu0 0.0
    %1784 = vmatpush1.msra.mxu0 0.0
    %1785 = vmatprep.subr.mxu0 0.0
    %1786 = vmatpush1.msra.mxu0 0.0
    %1787 = vmatprep.subr.mxu0 0.0
    %1788 = vmatpush1.msra.mxu0 0.0
    %1789 = vmatprep.subr.mxu0 0.0
    %1790 = vmatpush1.msra.mxu0 0.0
    %1791 = vmatprep.subr.mxu0 0.0
    %1792 = vmatpush1.msra.mxu0 0.0
    %1793 = vmatprep.subr.mxu0 0.0
    %1794 = vmatpush1.msra.mxu0 0.0
    %1795 = vmatprep.subr.mxu0 0.0
    %1796 = vmatpush1.msra.mxu0 0.0
    %1797 = vmatprep.subr.mxu0 0.0
    %1798 = vmatpush1.msra.mxu0 0.0
    %1799 = vmatprep.subr.mxu0 0.0
    %1800 = vmatpush1.msra.mxu0 0.0
    %1801 = vmatprep.subr.mxu0 0.0
    %v1802 = vand.u32 %v79, 4294901760
    %1803 = vmatpush1.msra.mxu0 %v1802
    %1804 = vmatprep.subr.mxu0 0.0
    %v1805 = vand.u32 %v48, 4294901760
    %1806 = vmatpush1.msra.mxu0 %v1805
    %1807 = vmatprep.subr.mxu0 0.0
    %v1808 = vand.u32 %v47, 4294901760
    %1809 = vmatpush1.msra.mxu0 %v1808
    %1810 = vmatprep.subr.mxu0 0.0
    %v1811 = vand.u32 %v46, 4294901760
    %1812 = vmatpush1.msra.mxu0 %v1811
    %1813 = vmatprep.subr.mxu0 0.0
    %1814 = vmatpush2.msra.mxu0 0.0
    %1815 = vmatprep.subr.mxu0 0.0
    %1816 = vmatpush2.msra.mxu0 0.0
    %1817 = vmatprep.subr.mxu0 0.0
    %1818 = vmatpush2.msra.mxu0 0.0
    %1819 = vmatprep.subr.mxu0 0.0
    %1820 = vmatpush2.msra.mxu0 0.0
    %1821 = vmatprep.subr.mxu0 0.0
    %1822 = vmatpush2.msra.mxu0 0.0
    %1823 = vmatprep.subr.mxu0 0.0
    %1824 = vmatpush2.msra.mxu0 0.0
    %1825 = vmatprep.subr.mxu0 0.0
    %1826 = vmatpush2.msra.mxu0 0.0
    %1827 = vmatprep.subr.mxu0 0.0
    %1828 = vmatpush2.msra.mxu0 0.0
    %1829 = vmatprep.subr.mxu0 0.0
    %1830 = vmatpush2.msra.mxu0 0.0
    %1831 = vmatprep.subr.mxu0 0.0
    %1832 = vmatpush2.msra.mxu0 0.0
    %1833 = vmatprep.subr.mxu0 0.0
    %1834 = vmatpush2.msra.mxu0 0.0
    %1835 = vmatprep.subr.mxu0 0.0
    %1836 = vmatpush2.msra.mxu0 0.0
    %1837 = vmatprep.subr.mxu0 0.0
    %1838 = vmatpush2.msra.mxu0 0.0
    %1839 = vmatprep.subr.mxu0 0.0
    %1840 = vmatpush2.msra.mxu0 0.0
    %1841 = vmatprep.subr.mxu0 0.0
    %1842 = vmatpush2.msra.mxu0 0.0
    %1843 = vmatprep.subr.mxu0 0.0
    %1844 = vmatpush2.msra.mxu0 0.0
    %1845 = vmatprep.mubr.f32.mxu0 0.0
    %v1846 = vand.u32 %v1772, 4294901760
    %v1847 = vsub.f32 %v1772, %v1846
    %v1848 = vand.u32 %v1847, 4294901760
    %v1849 = vsub.f32 %v1847, %v1848
    %v1850 = vand.u32 %v1849, 4294901760
    %1851 = vmatmul.mubr.f32.gmra.mxu0 %v1850
    %v1852 = vpop.f32.mrf.mxu0
    %v1853 = vadd.f32 0.0, %v1852
    %v1854 = vpop.f32.mrf.mxu0
    %1855 = vmatprep.mubr.f32.mxu0 0.0
    %v1856 = vand.u32 %v1775, 4294901760
    %v1857 = vsub.f32 %v1775, %v1856
    %v1858 = vand.u32 %v1857, 4294901760
    %v1859 = vsub.f32 %v1857, %v1858
    %v1860 = vand.u32 %v1859, 4294901760
    %1861 = vmatmul.mubr.f32.gmra.mxu0 %v1860
    %v1862 = vpop.f32.mrf.mxu0
    %v1863 = vadd.f32 0.0, %v1862
    %v1864 = vpop.f32.mrf.mxu0
    %1865 = vdwg.mxu0
    %1866 = vmatprep.subr.mxu0 0.0
    %1867 = vmatpush1.msra.mxu0 0.0
    %1868 = vmatprep.subr.mxu0 0.0
    %1869 = vmatpush1.msra.mxu0 0.0
    %1870 = vmatprep.subr.mxu0 0.0
    %1871 = vmatpush1.msra.mxu0 0.0
    %1872 = vmatprep.subr.mxu0 0.0
    %1873 = vmatpush1.msra.mxu0 0.0
    %1874 = vmatprep.subr.mxu0 0.0
    %1875 = vmatpush1.msra.mxu0 0.0
    %1876 = vmatprep.subr.mxu0 0.0
    %1877 = vmatpush1.msra.mxu0 0.0
    %1878 = vmatprep.subr.mxu0 0.0
    %1879 = vmatpush1.msra.mxu0 0.0
    %1880 = vmatprep.subr.mxu0 0.0
    %1881 = vmatpush1.msra.mxu0 0.0
    %1882 = vmatprep.subr.mxu0 0.0
    %1883 = vmatpush1.msra.mxu0 0.0
    %1884 = vmatprep.subr.mxu0 0.0
    %1885 = vmatpush1.msra.mxu0 0.0
    %1886 = vmatprep.subr.mxu0 0.0
    %1887 = vmatpush1.msra.mxu0 0.0
    %1888 = vmatprep.subr.mxu0 0.0
    %1889 = vmatpush1.msra.mxu0 0.0
    %1890 = vmatprep.subr.mxu0 0.0
    %v1891 = vand.u32 %v79, 4294901760
    %v1892 = vsub.f32 %v79, %v1891
    %v1893 = vand.u32 %v1892, 4294901760
    %v1894 = vsub.f32 %v1892, %v1893
    %v1895 = vand.u32 %v1894, 4294901760
    %1896 = vmatpush1.msra.mxu0 %v1895
    %1897 = vmatprep.subr.mxu0 0.0
    %v1898 = vand.u32 %v48, 4294901760
    %v1899 = vsub.f32 %v48, %v1898
    %v1900 = vand.u32 %v1899, 4294901760
    %v1901 = vsub.f32 %v1899, %v1900
    %v1902 = vand.u32 %v1901, 4294901760
    %1903 = vmatpush1.msra.mxu0 %v1902
    %1904 = vmatprep.subr.mxu0 0.0
    %v1905 = vand.u32 %v47, 4294901760
    %v1906 = vsub.f32 %v47, %v1905
    %v1907 = vand.u32 %v1906, 4294901760
    %v1908 = vsub.f32 %v1906, %v1907
    %v1909 = vand.u32 %v1908, 4294901760
    %1910 = vmatpush1.msra.mxu0 %v1909
    %1911 = vmatprep.subr.mxu0 0.0
    %v1912 = vand.u32 %v46, 4294901760
    %v1913 = vsub.f32 %v46, %v1912
    %v1914 = vand.u32 %v1913, 4294901760
    %v1915 = vsub.f32 %v1913, %v1914
    %v1916 = vand.u32 %v1915, 4294901760
    %1917 = vmatpush1.msra.mxu0 %v1916
    %1918 = vmatprep.subr.mxu0 0.0
    %1919 = vmatpush2.msra.mxu0 0.0
    %1920 = vmatprep.subr.mxu0 0.0
    %1921 = vmatpush2.msra.mxu0 0.0
    %1922 = vmatprep.subr.mxu0 0.0
    %1923 = vmatpush2.msra.mxu0 0.0
    %1924 = vmatprep.subr.mxu0 0.0
    %1925 = vmatpush2.msra.mxu0 0.0
    %1926 = vmatprep.subr.mxu0 0.0
    %1927 = vmatpush2.msra.mxu0 0.0
    %1928 = vmatprep.subr.mxu0 0.0
    %1929 = vmatpush2.msra.mxu0 0.0
    %1930 = vmatprep.subr.mxu0 0.0
    %1931 = vmatpush2.msra.mxu0 0.0
    %1932 = vmatprep.subr.mxu0 0.0
    %1933 = vmatpush2.msra.mxu0 0.0
    %1934 = vmatprep.subr.mxu0 0.0
    %1935 = vmatpush2.msra.mxu0 0.0
    %1936 = vmatprep.subr.mxu0 0.0
    %1937 = vmatpush2.msra.mxu0 0.0
    %1938 = vmatprep.subr.mxu0 0.0
    %1939 = vmatpush2.msra.mxu0 0.0
    %1940 = vmatprep.subr.mxu0 0.0
    %1941 = vmatpush2.msra.mxu0 0.0
    %1942 = vmatprep.subr.mxu0 0.0
    %1943 = vmatpush2.msra.mxu0 0.0
    %1944 = vmatprep.subr.mxu0 0.0
    %1945 = vmatpush2.msra.mxu0 0.0
    %1946 = vmatprep.subr.mxu0 0.0
    %1947 = vmatpush2.msra.mxu0 0.0
    %1948 = vmatprep.subr.mxu0 0.0
    %1949 = vmatpush2.msra.mxu0 0.0
    %1950 = vmatprep.mubr.f32.mxu0 0.0
    %v1951 = vand.u32 %v1772, 4294901760
    %1952 = vmatmul.mubr.f32.gmra.mxu0 %v1951
    %v1953 = vpop.f32.mrf.mxu0
    %v1954 = vadd.f32 %v1853, %v1953
    %v1955 = vpop.f32.mrf.mxu0
    %1956 = vmatprep.mubr.f32.mxu0 0.0
    %v1957 = vand.u32 %v1775, 4294901760
    %1958 = vmatmul.mubr.f32.gmra.mxu0 %v1957
    %v1959 = vpop.f32.mrf.mxu0
    %v1960 = vadd.f32 %v1863, %v1959
    %v1961 = vpop.f32.mrf.mxu0
    %1962 = vdwg.mxu0
    %1963 = vmatprep.subr.mxu0 0.0
    %1964 = vmatpush1.msra.mxu0 0.0
    %1965 = vmatprep.subr.mxu0 0.0
    %1966 = vmatpush1.msra.mxu0 0.0
    %1967 = vmatprep.subr.mxu0 0.0
    %1968 = vmatpush1.msra.mxu0 0.0
    %1969 = vmatprep.subr.mxu0 0.0
    %1970 = vmatpush1.msra.mxu0 0.0
    %1971 = vmatprep.subr.mxu0 0.0
    %1972 = vmatpush1.msra.mxu0 0.0
    %1973 = vmatprep.subr.mxu0 0.0
    %1974 = vmatpush1.msra.mxu0 0.0
    %1975 = vmatprep.subr.mxu0 0.0
    %1976 = vmatpush1.msra.mxu0 0.0
    %1977 = vmatprep.subr.mxu0 0.0
    %1978 = vmatpush1.msra.mxu0 0.0
    %1979 = vmatprep.subr.mxu0 0.0
    %1980 = vmatpush1.msra.mxu0 0.0
    %1981 = vmatprep.subr.mxu0 0.0
    %1982 = vmatpush1.msra.mxu0 0.0
    %1983 = vmatprep.subr.mxu0 0.0
    %1984 = vmatpush1.msra.mxu0 0.0
    %1985 = vmatprep.subr.mxu0 0.0
    %1986 = vmatpush1.msra.mxu0 0.0
    %1987 = vmatprep.subr.mxu0 0.0
    %v1988 = vand.u32 %v79, 4294901760
    %v1989 = vsub.f32 %v79, %v1988
    %1990 = vmatpush1.msra.mxu0 %v1989
    %1991 = vmatprep.subr.mxu0 0.0
    %v1992 = vand.u32 %v48, 4294901760
    %v1993 = vsub.f32 %v48, %v1992
    %1994 = vmatpush1.msra.mxu0 %v1993
    %1995 = vmatprep.subr.mxu0 0.0
    %v1996 = vand.u32 %v47, 4294901760
    %v1997 = vsub.f32 %v47, %v1996
    %1998 = vmatpush1.msra.mxu0 %v1997
    %1999 = vmatprep.subr.mxu0 0.0
    %v2000 = vand.u32 %v46, 4294901760
    %v2001 = vsub.f32 %v46, %v2000
    %2002 = vmatpush1.msra.mxu0 %v2001
    %2003 = vmatprep.subr.mxu0 0.0
    %2004 = vmatpush2.msra.mxu0 0.0
    %2005 = vmatprep.subr.mxu0 0.0
    %2006 = vmatpush2.msra.mxu0 0.0
    %2007 = vmatprep.subr.mxu0 0.0
    %2008 = vmatpush2.msra.mxu0 0.0
    %2009 = vmatprep.subr.mxu0 0.0
    %2010 = vmatpush2.msra.mxu0 0.0
    %2011 = vmatprep.subr.mxu0 0.0
    %2012 = vmatpush2.msra.mxu0 0.0
    %2013 = vmatprep.subr.mxu0 0.0
    %2014 = vmatpush2.msra.mxu0 0.0
    %2015 = vmatprep.subr.mxu0 0.0
    %2016 = vmatpush2.msra.mxu0 0.0
    %2017 = vmatprep.subr.mxu0 0.0
    %2018 = vmatpush2.msra.mxu0 0.0
    %2019 = vmatprep.subr.mxu0 0.0
    %2020 = vmatpush2.msra.mxu0 0.0
    %2021 = vmatprep.subr.mxu0 0.0
    %2022 = vmatpush2.msra.mxu0 0.0
    %2023 = vmatprep.subr.mxu0 0.0
    %2024 = vmatpush2.msra.mxu0 0.0
    %2025 = vmatprep.subr.mxu0 0.0
    %2026 = vmatpush2.msra.mxu0 0.0
    %2027 = vmatprep.subr.mxu0 0.0
    %2028 = vmatpush2.msra.mxu0 0.0
    %2029 = vmatprep.subr.mxu0 0.0
    %2030 = vmatpush2.msra.mxu0 0.0
    %2031 = vmatprep.subr.mxu0 0.0
    %2032 = vmatpush2.msra.mxu0 0.0
    %2033 = vmatprep.subr.mxu0 0.0
    %2034 = vmatpush2.msra.mxu0 0.0
    %2035 = vmatprep.mubr.f32.mxu0 0.0
    %v2036 = vand.u32 %v1772, 4294901760
    %v2037 = vsub.f32 %v1772, %v2036
    %2038 = vmatmul.mubr.f32.gmra.mxu0 %v2037
    %v2039 = vpop.f32.mrf.mxu0
    %v2040 = vadd.f32 %v1954, %v2039
    %v2041 = vpop.f32.mrf.mxu0
    %2042 = vmatprep.mubr.f32.mxu0 0.0
    %v2043 = vand.u32 %v1775, 4294901760
    %v2044 = vsub.f32 %v1775, %v2043
    %2045 = vmatmul.mubr.f32.gmra.mxu0 %v2044
    %v2046 = vpop.f32.mrf.mxu0
    %v2047 = vadd.f32 %v1960, %v2046
    %v2048 = vpop.f32.mrf.mxu0
    %2049 = vdwg.mxu0
    %2050 = vmatprep.subr.mxu0 0.0
    %2051 = vmatpush1.msra.mxu0 0.0
    %2052 = vmatprep.subr.mxu0 0.0
    %2053 = vmatpush1.msra.mxu0 0.0
    %2054 = vmatprep.subr.mxu0 0.0
    %2055 = vmatpush1.msra.mxu0 0.0
    %2056 = vmatprep.subr.mxu0 0.0
    %2057 = vmatpush1.msra.mxu0 0.0
    %2058 = vmatprep.subr.mxu0 0.0
    %2059 = vmatpush1.msra.mxu0 0.0
    %2060 = vmatprep.subr.mxu0 0.0
    %2061 = vmatpush1.msra.mxu0 0.0
    %2062 = vmatprep.subr.mxu0 0.0
    %2063 = vmatpush1.msra.mxu0 0.0
    %2064 = vmatprep.subr.mxu0 0.0
    %2065 = vmatpush1.msra.mxu0 0.0
    %2066 = vmatprep.subr.mxu0 0.0
    %2067 = vmatpush1.msra.mxu0 0.0
    %2068 = vmatprep.subr.mxu0 0.0
    %2069 = vmatpush1.msra.mxu0 0.0
    %2070 = vmatprep.subr.mxu0 0.0
    %2071 = vmatpush1.msra.mxu0 0.0
    %2072 = vmatprep.subr.mxu0 0.0
    %2073 = vmatpush1.msra.mxu0 0.0
    %2074 = vmatprep.subr.mxu0 0.0
    %v2075 = vand.u32 %v79, 4294901760
    %2076 = vmatpush1.msra.mxu0 %v2075
    %2077 = vmatprep.subr.mxu0 0.0
    %v2078 = vand.u32 %v48, 4294901760
    %2079 = vmatpush1.msra.mxu0 %v2078
    %2080 = vmatprep.subr.mxu0 0.0
    %v2081 = vand.u32 %v47, 4294901760
    %2082 = vmatpush1.msra.mxu0 %v2081
    %2083 = vmatprep.subr.mxu0 0.0
    %v2084 = vand.u32 %v46, 4294901760
    %2085 = vmatpush1.msra.mxu0 %v2084
    %2086 = vmatprep.subr.mxu0 0.0
    %2087 = vmatpush2.msra.mxu0 0.0
    %2088 = vmatprep.subr.mxu0 0.0
    %2089 = vmatpush2.msra.mxu0 0.0
    %2090 = vmatprep.subr.mxu0 0.0
    %2091 = vmatpush2.msra.mxu0 0.0
    %2092 = vmatprep.subr.mxu0 0.0
    %2093 = vmatpush2.msra.mxu0 0.0
    %2094 = vmatprep.subr.mxu0 0.0
    %2095 = vmatpush2.msra.mxu0 0.0
    %2096 = vmatprep.subr.mxu0 0.0
    %2097 = vmatpush2.msra.mxu0 0.0
    %2098 = vmatprep.subr.mxu0 0.0
    %2099 = vmatpush2.msra.mxu0 0.0
    %2100 = vmatprep.subr.mxu0 0.0
    %2101 = vmatpush2.msra.mxu0 0.0
    %2102 = vmatprep.subr.mxu0 0.0
    %2103 = vmatpush2.msra.mxu0 0.0
    %2104 = vmatprep.subr.mxu0 0.0
    %2105 = vmatpush2.msra.mxu0 0.0
    %2106 = vmatprep.subr.mxu0 0.0
    %2107 = vmatpush2.msra.mxu0 0.0
    %2108 = vmatprep.subr.mxu0 0.0
    %2109 = vmatpush2.msra.mxu0 0.0
    %2110 = vmatprep.subr.mxu0 0.0
    %2111 = vmatpush2.msra.mxu0 0.0
    %2112 = vmatprep.subr.mxu0 0.0
    %2113 = vmatpush2.msra.mxu0 0.0
    %2114 = vmatprep.subr.mxu0 0.0
    %2115 = vmatpush2.msra.mxu0 0.0
    %2116 = vmatprep.subr.mxu0 0.0
    %2117 = vmatpush2.msra.mxu0 0.0
    %2118 = vmatprep.mubr.f32.mxu0 0.0
    %v2119 = vand.u32 %v1772, 4294901760
    %v2120 = vsub.f32 %v1772, %v2119
    %v2121 = vand.u32 %v2120, 4294901760
    %2122 = vmatmul.mubr.f32.gmra.mxu0 %v2121
    %v2123 = vpop.f32.mrf.mxu0
    %v2124 = vadd.f32 %v2040, %v2123
    %v2125 = vpop.f32.mrf.mxu0
    %2126 = vmatprep.mubr.f32.mxu0 0.0
    %v2127 = vand.u32 %v1775, 4294901760
    %v2128 = vsub.f32 %v1775, %v2127
    %v2129 = vand.u32 %v2128, 4294901760
    %2130 = vmatmul.mubr.f32.gmra.mxu0 %v2129
    %v2131 = vpop.f32.mrf.mxu0
    %v2132 = vadd.f32 %v2047, %v2131
    %v2133 = vpop.f32.mrf.mxu0
    %2134 = vdwg.mxu0
    %2135 = vmatprep.subr.mxu0 0.0
    %2136 = vmatpush1.msra.mxu0 0.0
    %2137 = vmatprep.subr.mxu0 0.0
    %2138 = vmatpush1.msra.mxu0 0.0
    %2139 = vmatprep.subr.mxu0 0.0
    %2140 = vmatpush1.msra.mxu0 0.0
    %2141 = vmatprep.subr.mxu0 0.0
    %2142 = vmatpush1.msra.mxu0 0.0
    %2143 = vmatprep.subr.mxu0 0.0
    %2144 = vmatpush1.msra.mxu0 0.0
    %2145 = vmatprep.subr.mxu0 0.0
    %2146 = vmatpush1.msra.mxu0 0.0
    %2147 = vmatprep.subr.mxu0 0.0
    %2148 = vmatpush1.msra.mxu0 0.0
    %2149 = vmatprep.subr.mxu0 0.0
    %2150 = vmatpush1.msra.mxu0 0.0
    %2151 = vmatprep.subr.mxu0 0.0
    %2152 = vmatpush1.msra.mxu0 0.0
    %2153 = vmatprep.subr.mxu0 0.0
    %2154 = vmatpush1.msra.mxu0 0.0
    %2155 = vmatprep.subr.mxu0 0.0
    %2156 = vmatpush1.msra.mxu0 0.0
    %2157 = vmatprep.subr.mxu0 0.0
    %2158 = vmatpush1.msra.mxu0 0.0
    %2159 = vmatprep.subr.mxu0 0.0
    %v2160 = vand.u32 %v79, 4294901760
    %v2161 = vsub.f32 %v79, %v2160
    %v2162 = vand.u32 %v2161, 4294901760
    %2163 = vmatpush1.msra.mxu0 %v2162
    %2164 = vmatprep.subr.mxu0 0.0
    %v2165 = vand.u32 %v48, 4294901760
    %v2166 = vsub.f32 %v48, %v2165
    %v2167 = vand.u32 %v2166, 4294901760
    %2168 = vmatpush1.msra.mxu0 %v2167
    %2169 = vmatprep.subr.mxu0 0.0
    %v2170 = vand.u32 %v47, 4294901760
    %v2171 = vsub.f32 %v47, %v2170
    %v2172 = vand.u32 %v2171, 4294901760
    %2173 = vmatpush1.msra.mxu0 %v2172
    %2174 = vmatprep.subr.mxu0 0.0
    %v2175 = vand.u32 %v46, 4294901760
    %v2176 = vsub.f32 %v46, %v2175
    %v2177 = vand.u32 %v2176, 4294901760
    %2178 = vmatpush1.msra.mxu0 %v2177
    %2179 = vmatprep.subr.mxu0 0.0
    %2180 = vmatpush2.msra.mxu0 0.0
    %2181 = vmatprep.subr.mxu0 0.0
    %2182 = vmatpush2.msra.mxu0 0.0
    %2183 = vmatprep.subr.mxu0 0.0
    %2184 = vmatpush2.msra.mxu0 0.0
    %2185 = vmatprep.subr.mxu0 0.0
    %2186 = vmatpush2.msra.mxu0 0.0
    %2187 = vmatprep.subr.mxu0 0.0
    %2188 = vmatpush2.msra.mxu0 0.0
    %2189 = vmatprep.subr.mxu0 0.0
    %2190 = vmatpush2.msra.mxu0 0.0
    %2191 = vmatprep.subr.mxu0 0.0
    %2192 = vmatpush2.msra.mxu0 0.0
    %2193 = vmatprep.subr.mxu0 0.0
    %2194 = vmatpush2.msra.mxu0 0.0
    %2195 = vmatprep.subr.mxu0 0.0
    %2196 = vmatpush2.msra.mxu0 0.0
    %2197 = vmatprep.subr.mxu0 0.0
    %2198 = vmatpush2.msra.mxu0 0.0
    %2199 = vmatprep.subr.mxu0 0.0
    %2200 = vmatpush2.msra.mxu0 0.0
    %2201 = vmatprep.subr.mxu0 0.0
    %2202 = vmatpush2.msra.mxu0 0.0
    %2203 = vmatprep.subr.mxu0 0.0
    %2204 = vmatpush2.msra.mxu0 0.0
    %2205 = vmatprep.subr.mxu0 0.0
    %2206 = vmatpush2.msra.mxu0 0.0
    %2207 = vmatprep.subr.mxu0 0.0
    %2208 = vmatpush2.msra.mxu0 0.0
    %2209 = vmatprep.subr.mxu0 0.0
    %2210 = vmatpush2.msra.mxu0 0.0
    %2211 = vmatprep.mubr.f32.mxu0 0.0
    %v2212 = vand.u32 %v1772, 4294901760
    %2213 = vmatmul.mubr.f32.gmra.mxu0 %v2212
    %v2214 = vpop.f32.mrf.mxu0
    %v2215 = vadd.f32 %v2124, %v2214
    %v2216 = vpop.f32.mrf.mxu0
    %2217 = vmatprep.mubr.f32.mxu0 0.0
    %v2218 = vand.u32 %v1775, 4294901760
    %2219 = vmatmul.mubr.f32.gmra.mxu0 %v2218
    %v2220 = vpop.f32.mrf.mxu0
    %v2221 = vadd.f32 %v2132, %v2220
    %v2222 = vpop.f32.mrf.mxu0
    %2223 = vdwg.mxu0
    %2224 = vmatprep.subr.mxu0 0.0
    %2225 = vmatpush1.msra.mxu0 0.0
    %2226 = vmatprep.subr.mxu0 0.0
    %2227 = vmatpush1.msra.mxu0 0.0
    %2228 = vmatprep.subr.mxu0 0.0
    %2229 = vmatpush1.msra.mxu0 0.0
    %2230 = vmatprep.subr.mxu0 0.0
    %2231 = vmatpush1.msra.mxu0 0.0
    %2232 = vmatprep.subr.mxu0 0.0
    %2233 = vmatpush1.msra.mxu0 0.0
    %2234 = vmatprep.subr.mxu0 0.0
    %2235 = vmatpush1.msra.mxu0 0.0
    %2236 = vmatprep.subr.mxu0 0.0
    %2237 = vmatpush1.msra.mxu0 0.0
    %2238 = vmatprep.subr.mxu0 0.0
    %2239 = vmatpush1.msra.mxu0 0.0
    %2240 = vmatprep.subr.mxu0 0.0
    %2241 = vmatpush1.msra.mxu0 0.0
    %2242 = vmatprep.subr.mxu0 0.0
    %2243 = vmatpush1.msra.mxu0 0.0
    %2244 = vmatprep.subr.mxu0 0.0
    %2245 = vmatpush1.msra.mxu0 0.0
    %2246 = vmatprep.subr.mxu0 0.0
    %2247 = vmatpush1.msra.mxu0 0.0
    %2248 = vmatprep.subr.mxu0 0.0
    %v2249 = vand.u32 %v79, 4294901760
    %2250 = vmatpush1.msra.mxu0 %v2249
    %2251 = vmatprep.subr.mxu0 0.0
    %v2252 = vand.u32 %v48, 4294901760
    %2253 = vmatpush1.msra.mxu0 %v2252
    %2254 = vmatprep.subr.mxu0 0.0
    %v2255 = vand.u32 %v47, 4294901760
    %2256 = vmatpush1.msra.mxu0 %v2255
    %2257 = vmatprep.subr.mxu0 0.0
    %v2258 = vand.u32 %v46, 4294901760
    %2259 = vmatpush1.msra.mxu0 %v2258
    %2260 = vmatprep.subr.mxu0 0.0
    %2261 = vmatpush2.msra.mxu0 0.0
    %2262 = vmatprep.subr.mxu0 0.0
    %2263 = vmatpush2.msra.mxu0 0.0
    %2264 = vmatprep.subr.mxu0 0.0
    %2265 = vmatpush2.msra.mxu0 0.0
    %2266 = vmatprep.subr.mxu0 0.0
    %2267 = vmatpush2.msra.mxu0 0.0
    %2268 = vmatprep.subr.mxu0 0.0
    %2269 = vmatpush2.msra.mxu0 0.0
    %2270 = vmatprep.subr.mxu0 0.0
    %2271 = vmatpush2.msra.mxu0 0.0
    %2272 = vmatprep.subr.mxu0 0.0
    %2273 = vmatpush2.msra.mxu0 0.0
    %2274 = vmatprep.subr.mxu0 0.0
    %2275 = vmatpush2.msra.mxu0 0.0
    %2276 = vmatprep.subr.mxu0 0.0
    %2277 = vmatpush2.msra.mxu0 0.0
    %2278 = vmatprep.subr.mxu0 0.0
    %2279 = vmatpush2.msra.mxu0 0.0
    %2280 = vmatprep.subr.mxu0 0.0
    %2281 = vmatpush2.msra.mxu0 0.0
    %2282 = vmatprep.subr.mxu0 0.0
    %2283 = vmatpush2.msra.mxu0 0.0
    %2284 = vmatprep.subr.mxu0 0.0
    %2285 = vmatpush2.msra.mxu0 0.0
    %2286 = vmatprep.subr.mxu0 0.0
    %2287 = vmatpush2.msra.mxu0 0.0
    %2288 = vmatprep.subr.mxu0 0.0
    %2289 = vmatpush2.msra.mxu0 0.0
    %2290 = vmatprep.subr.mxu0 0.0
    %2291 = vmatpush2.msra.mxu0 0.0
    %2292 = vmatprep.mubr.f32.mxu0 0.0
    %v2293 = vand.u32 %v1772, 4294901760
    %2294 = vmatmul.mubr.f32.gmra.mxu0 %v2293
    %v2295 = vpop.f32.mrf.mxu0
    %v2296 = vadd.f32 %v2215, %v2295
    %v2297 = vpop.f32.mrf.mxu0
    %2298 = vmatprep.mubr.f32.mxu0 0.0
    %v2299 = vand.u32 %v1775, 4294901760
    %2300 = vmatmul.mubr.f32.gmra.mxu0 %v2299
    %v2301 = vpop.f32.mrf.mxu0
    %v2302 = vadd.f32 %v2221, %v2301
    %v2303 = vpop.f32.mrf.mxu0
    %2304 = vdwg.mxu0
    %v2305 = vadd.f32 %v1763, 0.01
    %v2306 = vadd.f32 %v1770, 0.01
    %v2307 = vrcp.pop %v2305
    %v2308 = vmul.f32 %v609, %v2307
    %v2309 = vrcp.pop %v2306
    %v2310 = vmul.f32 %v610, %v2309
    %v2312 = vsel %vm77, %v61, 0
    %2314 = vmatprep.subr.mxu0 0.0
    %2315 = vmatpush1.msra.mxu0 0.0
    %2316 = vmatprep.subr.mxu0 0.0
    %2317 = vmatpush1.msra.mxu0 0.0
    %2318 = vmatprep.subr.mxu0 0.0
    %2319 = vmatpush1.msra.mxu0 0.0
    %2320 = vmatprep.subr.mxu0 0.0
    %2321 = vmatpush1.msra.mxu0 0.0
    %2322 = vmatprep.subr.mxu0 0.0
    %2323 = vmatpush1.msra.mxu0 0.0
    %2324 = vmatprep.subr.mxu0 0.0
    %2325 = vmatpush1.msra.mxu0 0.0
    %2326 = vmatprep.subr.mxu0 0.0
    %2327 = vmatpush1.msra.mxu0 0.0
    %2328 = vmatprep.subr.mxu0 0.0
    %2329 = vmatpush1.msra.mxu0 0.0
    %2330 = vmatprep.subr.mxu0 0.0
    %2331 = vmatpush1.msra.mxu0 0.0
    %2332 = vmatprep.subr.mxu0 0.0
    %2333 = vmatpush1.msra.mxu0 0.0
    %2334 = vmatprep.subr.mxu0 0.0
    %2335 = vmatpush1.msra.mxu0 0.0
    %2336 = vmatprep.subr.mxu0 0.0
    %2337 = vmatpush1.msra.mxu0 0.0
    %2338 = vmatprep.subr.mxu0 0.0
    %v2339 = vand.u32 %v2312, 4294901760
    %2340 = vmatpush1.msra.mxu0 %v2339
    %2341 = vmatprep.subr.mxu0 0.0
    %v2342 = vand.u32 %v60, 4294901760
    %2343 = vmatpush1.msra.mxu0 %v2342
    %2344 = vmatprep.subr.mxu0 0.0
    %v2345 = vand.u32 %v59, 4294901760
    %2346 = vmatpush1.msra.mxu0 %v2345
    %2347 = vmatprep.subr.mxu0 0.0
    %v2348 = vand.u32 %v58, 4294901760
    %2349 = vmatpush1.msra.mxu0 %v2348
    %2350 = vmatprep.subr.mxu0 0.0
    %2351 = vmatpush2.msra.mxu0 0.0
    %2352 = vmatprep.subr.mxu0 0.0
    %2353 = vmatpush2.msra.mxu0 0.0
    %2354 = vmatprep.subr.mxu0 0.0
    %2355 = vmatpush2.msra.mxu0 0.0
    %2356 = vmatprep.subr.mxu0 0.0
    %2357 = vmatpush2.msra.mxu0 0.0
    %2358 = vmatprep.subr.mxu0 0.0
    %2359 = vmatpush2.msra.mxu0 0.0
    %2360 = vmatprep.subr.mxu0 0.0
    %2361 = vmatpush2.msra.mxu0 0.0
    %2362 = vmatprep.subr.mxu0 0.0
    %2363 = vmatpush2.msra.mxu0 0.0
    %2364 = vmatprep.subr.mxu0 0.0
    %2365 = vmatpush2.msra.mxu0 0.0
    %2366 = vmatprep.subr.mxu0 0.0
    %2367 = vmatpush2.msra.mxu0 0.0
    %2368 = vmatprep.subr.mxu0 0.0
    %2369 = vmatpush2.msra.mxu0 0.0
    %2370 = vmatprep.subr.mxu0 0.0
    %2371 = vmatpush2.msra.mxu0 0.0
    %2372 = vmatprep.subr.mxu0 0.0
    %2373 = vmatpush2.msra.mxu0 0.0
    %2374 = vmatprep.subr.mxu0 0.0
    %2375 = vmatpush2.msra.mxu0 0.0
    %2376 = vmatprep.subr.mxu0 0.0
    %2377 = vmatpush2.msra.mxu0 0.0
    %2378 = vmatprep.subr.mxu0 0.0
    %2379 = vmatpush2.msra.mxu0 0.0
    %2380 = vmatprep.subr.mxu0 0.0
    %2381 = vmatpush2.msra.mxu0 0.0
    %2382 = vmatprep.mubr.f32.mxu0 0.0
    %v2383 = vand.u32 %v72, 4294901760
    %v2384 = vsub.f32 %v72, %v2383
    %v2385 = vand.u32 %v2384, 4294901760
    %v2386 = vsub.f32 %v2384, %v2385
    %v2387 = vand.u32 %v2386, 4294901760
    %2388 = vmatmul.mubr.f32.gmra.mxu0 %v2387
    %v2389 = vpop.f32.mrf.mxu0
    %v2390 = vadd.f32 0.0, %v2389
    %v2391 = vpop.f32.mrf.mxu0
    %2392 = vmatprep.mubr.f32.mxu0 0.0
    %v2393 = vand.u32 %v75, 4294901760
    %v2394 = vsub.f32 %v75, %v2393
    %v2395 = vand.u32 %v2394, 4294901760
    %v2396 = vsub.f32 %v2394, %v2395
    %v2397 = vand.u32 %v2396, 4294901760
    %2398 = vmatmul.mubr.f32.gmra.mxu0 %v2397
    %v2399 = vpop.f32.mrf.mxu0
    %v2400 = vadd.f32 0.0, %v2399
    %v2401 = vpop.f32.mrf.mxu0
    %2402 = vdwg.mxu0
    %2403 = vmatprep.subr.mxu0 0.0
    %2404 = vmatpush1.msra.mxu0 0.0
    %2405 = vmatprep.subr.mxu0 0.0
    %2406 = vmatpush1.msra.mxu0 0.0
    %2407 = vmatprep.subr.mxu0 0.0
    %2408 = vmatpush1.msra.mxu0 0.0
    %2409 = vmatprep.subr.mxu0 0.0
    %2410 = vmatpush1.msra.mxu0 0.0
    %2411 = vmatprep.subr.mxu0 0.0
    %2412 = vmatpush1.msra.mxu0 0.0
    %2413 = vmatprep.subr.mxu0 0.0
    %2414 = vmatpush1.msra.mxu0 0.0
    %2415 = vmatprep.subr.mxu0 0.0
    %2416 = vmatpush1.msra.mxu0 0.0
    %2417 = vmatprep.subr.mxu0 0.0
    %2418 = vmatpush1.msra.mxu0 0.0
    %2419 = vmatprep.subr.mxu0 0.0
    %2420 = vmatpush1.msra.mxu0 0.0
    %2421 = vmatprep.subr.mxu0 0.0
    %2422 = vmatpush1.msra.mxu0 0.0
    %2423 = vmatprep.subr.mxu0 0.0
    %2424 = vmatpush1.msra.mxu0 0.0
    %2425 = vmatprep.subr.mxu0 0.0
    %2426 = vmatpush1.msra.mxu0 0.0
    %2427 = vmatprep.subr.mxu0 0.0
    %v2428 = vand.u32 %v2312, 4294901760
    %v2429 = vsub.f32 %v2312, %v2428
    %v2430 = vand.u32 %v2429, 4294901760
    %v2431 = vsub.f32 %v2429, %v2430
    %v2432 = vand.u32 %v2431, 4294901760
    %2433 = vmatpush1.msra.mxu0 %v2432
    %2434 = vmatprep.subr.mxu0 0.0
    %v2435 = vand.u32 %v60, 4294901760
    %v2436 = vsub.f32 %v60, %v2435
    %v2437 = vand.u32 %v2436, 4294901760
    %v2438 = vsub.f32 %v2436, %v2437
    %v2439 = vand.u32 %v2438, 4294901760
    %2440 = vmatpush1.msra.mxu0 %v2439
    %2441 = vmatprep.subr.mxu0 0.0
    %v2442 = vand.u32 %v59, 4294901760
    %v2443 = vsub.f32 %v59, %v2442
    %v2444 = vand.u32 %v2443, 4294901760
    %v2445 = vsub.f32 %v2443, %v2444
    %v2446 = vand.u32 %v2445, 4294901760
    %2447 = vmatpush1.msra.mxu0 %v2446
    %2448 = vmatprep.subr.mxu0 0.0
    %v2449 = vand.u32 %v58, 4294901760
    %v2450 = vsub.f32 %v58, %v2449
    %v2451 = vand.u32 %v2450, 4294901760
    %v2452 = vsub.f32 %v2450, %v2451
    %v2453 = vand.u32 %v2452, 4294901760
    %2454 = vmatpush1.msra.mxu0 %v2453
    %2455 = vmatprep.subr.mxu0 0.0
    %2456 = vmatpush2.msra.mxu0 0.0
    %2457 = vmatprep.subr.mxu0 0.0
    %2458 = vmatpush2.msra.mxu0 0.0
    %2459 = vmatprep.subr.mxu0 0.0
    %2460 = vmatpush2.msra.mxu0 0.0
    %2461 = vmatprep.subr.mxu0 0.0
    %2462 = vmatpush2.msra.mxu0 0.0
    %2463 = vmatprep.subr.mxu0 0.0
    %2464 = vmatpush2.msra.mxu0 0.0
    %2465 = vmatprep.subr.mxu0 0.0
    %2466 = vmatpush2.msra.mxu0 0.0
    %2467 = vmatprep.subr.mxu0 0.0
    %2468 = vmatpush2.msra.mxu0 0.0
    %2469 = vmatprep.subr.mxu0 0.0
    %2470 = vmatpush2.msra.mxu0 0.0
    %2471 = vmatprep.subr.mxu0 0.0
    %2472 = vmatpush2.msra.mxu0 0.0
    %2473 = vmatprep.subr.mxu0 0.0
    %2474 = vmatpush2.msra.mxu0 0.0
    %2475 = vmatprep.subr.mxu0 0.0
    %2476 = vmatpush2.msra.mxu0 0.0
    %2477 = vmatprep.subr.mxu0 0.0
    %2478 = vmatpush2.msra.mxu0 0.0
    %2479 = vmatprep.subr.mxu0 0.0
    %2480 = vmatpush2.msra.mxu0 0.0
    %2481 = vmatprep.subr.mxu0 0.0
    %2482 = vmatpush2.msra.mxu0 0.0
    %2483 = vmatprep.subr.mxu0 0.0
    %2484 = vmatpush2.msra.mxu0 0.0
    %2485 = vmatprep.subr.mxu0 0.0
    %2486 = vmatpush2.msra.mxu0 0.0
    %2487 = vmatprep.mubr.f32.mxu0 0.0
    %v2488 = vand.u32 %v72, 4294901760
    %2489 = vmatmul.mubr.f32.gmra.mxu0 %v2488
    %v2490 = vpop.f32.mrf.mxu0
    %v2491 = vadd.f32 %v2390, %v2490
    %v2492 = vpop.f32.mrf.mxu0
    %2493 = vmatprep.mubr.f32.mxu0 0.0
    %v2494 = vand.u32 %v75, 4294901760
    %2495 = vmatmul.mubr.f32.gmra.mxu0 %v2494
    %v2496 = vpop.f32.mrf.mxu0
    %v2497 = vadd.f32 %v2400, %v2496
    %v2498 = vpop.f32.mrf.mxu0
    %2499 = vdwg.mxu0
    %2500 = vmatprep.subr.mxu0 0.0
    %2501 = vmatpush1.msra.mxu0 0.0
    %2502 = vmatprep.subr.mxu0 0.0
    %2503 = vmatpush1.msra.mxu0 0.0
    %2504 = vmatprep.subr.mxu0 0.0
    %2505 = vmatpush1.msra.mxu0 0.0
    %2506 = vmatprep.subr.mxu0 0.0
    %2507 = vmatpush1.msra.mxu0 0.0
    %2508 = vmatprep.subr.mxu0 0.0
    %2509 = vmatpush1.msra.mxu0 0.0
    %2510 = vmatprep.subr.mxu0 0.0
    %2511 = vmatpush1.msra.mxu0 0.0
    %2512 = vmatprep.subr.mxu0 0.0
    %2513 = vmatpush1.msra.mxu0 0.0
    %2514 = vmatprep.subr.mxu0 0.0
    %2515 = vmatpush1.msra.mxu0 0.0
    %2516 = vmatprep.subr.mxu0 0.0
    %2517 = vmatpush1.msra.mxu0 0.0
    %2518 = vmatprep.subr.mxu0 0.0
    %2519 = vmatpush1.msra.mxu0 0.0
    %2520 = vmatprep.subr.mxu0 0.0
    %2521 = vmatpush1.msra.mxu0 0.0
    %2522 = vmatprep.subr.mxu0 0.0
    %2523 = vmatpush1.msra.mxu0 0.0
    %2524 = vmatprep.subr.mxu0 0.0
    %v2525 = vand.u32 %v2312, 4294901760
    %v2526 = vsub.f32 %v2312, %v2525
    %2527 = vmatpush1.msra.mxu0 %v2526
    %2528 = vmatprep.subr.mxu0 0.0
    %v2529 = vand.u32 %v60, 4294901760
    %v2530 = vsub.f32 %v60, %v2529
    %2531 = vmatpush1.msra.mxu0 %v2530
    %2532 = vmatprep.subr.mxu0 0.0
    %v2533 = vand.u32 %v59, 4294901760
    %v2534 = vsub.f32 %v59, %v2533
    %2535 = vmatpush1.msra.mxu0 %v2534
    %2536 = vmatprep.subr.mxu0 0.0
    %v2537 = vand.u32 %v58, 4294901760
    %v2538 = vsub.f32 %v58, %v2537
    %2539 = vmatpush1.msra.mxu0 %v2538
    %2540 = vmatprep.subr.mxu0 0.0
    %2541 = vmatpush2.msra.mxu0 0.0
    %2542 = vmatprep.subr.mxu0 0.0
    %2543 = vmatpush2.msra.mxu0 0.0
    %2544 = vmatprep.subr.mxu0 0.0
    %2545 = vmatpush2.msra.mxu0 0.0
    %2546 = vmatprep.subr.mxu0 0.0
    %2547 = vmatpush2.msra.mxu0 0.0
    %2548 = vmatprep.subr.mxu0 0.0
    %2549 = vmatpush2.msra.mxu0 0.0
    %2550 = vmatprep.subr.mxu0 0.0
    %2551 = vmatpush2.msra.mxu0 0.0
    %2552 = vmatprep.subr.mxu0 0.0
    %2553 = vmatpush2.msra.mxu0 0.0
    %2554 = vmatprep.subr.mxu0 0.0
    %2555 = vmatpush2.msra.mxu0 0.0
    %2556 = vmatprep.subr.mxu0 0.0
    %2557 = vmatpush2.msra.mxu0 0.0
    %2558 = vmatprep.subr.mxu0 0.0
    %2559 = vmatpush2.msra.mxu0 0.0
    %2560 = vmatprep.subr.mxu0 0.0
    %2561 = vmatpush2.msra.mxu0 0.0
    %2562 = vmatprep.subr.mxu0 0.0
    %2563 = vmatpush2.msra.mxu0 0.0
    %2564 = vmatprep.subr.mxu0 0.0
    %2565 = vmatpush2.msra.mxu0 0.0
    %2566 = vmatprep.subr.mxu0 0.0
    %2567 = vmatpush2.msra.mxu0 0.0
    %2568 = vmatprep.subr.mxu0 0.0
    %2569 = vmatpush2.msra.mxu0 0.0
    %2570 = vmatprep.subr.mxu0 0.0
    %2571 = vmatpush2.msra.mxu0 0.0
    %2572 = vmatprep.mubr.f32.mxu0 0.0
    %v2573 = vand.u32 %v72, 4294901760
    %v2574 = vsub.f32 %v72, %v2573
    %2575 = vmatmul.mubr.f32.gmra.mxu0 %v2574
    %v2576 = vpop.f32.mrf.mxu0
    %v2577 = vadd.f32 %v2491, %v2576
    %v2578 = vpop.f32.mrf.mxu0
    %2579 = vmatprep.mubr.f32.mxu0 0.0
    %v2580 = vand.u32 %v75, 4294901760
    %v2581 = vsub.f32 %v75, %v2580
    %2582 = vmatmul.mubr.f32.gmra.mxu0 %v2581
    %v2583 = vpop.f32.mrf.mxu0
    %v2584 = vadd.f32 %v2497, %v2583
    %v2585 = vpop.f32.mrf.mxu0
    %2586 = vdwg.mxu0
    %2587 = vmatprep.subr.mxu0 0.0
    %2588 = vmatpush1.msra.mxu0 0.0
    %2589 = vmatprep.subr.mxu0 0.0
    %2590 = vmatpush1.msra.mxu0 0.0
    %2591 = vmatprep.subr.mxu0 0.0
    %2592 = vmatpush1.msra.mxu0 0.0
    %2593 = vmatprep.subr.mxu0 0.0
    %2594 = vmatpush1.msra.mxu0 0.0
    %2595 = vmatprep.subr.mxu0 0.0
    %2596 = vmatpush1.msra.mxu0 0.0
    %2597 = vmatprep.subr.mxu0 0.0
    %2598 = vmatpush1.msra.mxu0 0.0
    %2599 = vmatprep.subr.mxu0 0.0
    %2600 = vmatpush1.msra.mxu0 0.0
    %2601 = vmatprep.subr.mxu0 0.0
    %2602 = vmatpush1.msra.mxu0 0.0
    %2603 = vmatprep.subr.mxu0 0.0
    %2604 = vmatpush1.msra.mxu0 0.0
    %2605 = vmatprep.subr.mxu0 0.0
    %2606 = vmatpush1.msra.mxu0 0.0
    %2607 = vmatprep.subr.mxu0 0.0
    %2608 = vmatpush1.msra.mxu0 0.0
    %2609 = vmatprep.subr.mxu0 0.0
    %2610 = vmatpush1.msra.mxu0 0.0
    %2611 = vmatprep.subr.mxu0 0.0
    %v2612 = vand.u32 %v2312, 4294901760
    %2613 = vmatpush1.msra.mxu0 %v2612
    %2614 = vmatprep.subr.mxu0 0.0
    %v2615 = vand.u32 %v60, 4294901760
    %2616 = vmatpush1.msra.mxu0 %v2615
    %2617 = vmatprep.subr.mxu0 0.0
    %v2618 = vand.u32 %v59, 4294901760
    %2619 = vmatpush1.msra.mxu0 %v2618
    %2620 = vmatprep.subr.mxu0 0.0
    %v2621 = vand.u32 %v58, 4294901760
    %2622 = vmatpush1.msra.mxu0 %v2621
    %2623 = vmatprep.subr.mxu0 0.0
    %2624 = vmatpush2.msra.mxu0 0.0
    %2625 = vmatprep.subr.mxu0 0.0
    %2626 = vmatpush2.msra.mxu0 0.0
    %2627 = vmatprep.subr.mxu0 0.0
    %2628 = vmatpush2.msra.mxu0 0.0
    %2629 = vmatprep.subr.mxu0 0.0
    %2630 = vmatpush2.msra.mxu0 0.0
    %2631 = vmatprep.subr.mxu0 0.0
    %2632 = vmatpush2.msra.mxu0 0.0
    %2633 = vmatprep.subr.mxu0 0.0
    %2634 = vmatpush2.msra.mxu0 0.0
    %2635 = vmatprep.subr.mxu0 0.0
    %2636 = vmatpush2.msra.mxu0 0.0
    %2637 = vmatprep.subr.mxu0 0.0
    %2638 = vmatpush2.msra.mxu0 0.0
    %2639 = vmatprep.subr.mxu0 0.0
    %2640 = vmatpush2.msra.mxu0 0.0
    %2641 = vmatprep.subr.mxu0 0.0
    %2642 = vmatpush2.msra.mxu0 0.0
    %2643 = vmatprep.subr.mxu0 0.0
    %2644 = vmatpush2.msra.mxu0 0.0
    %2645 = vmatprep.subr.mxu0 0.0
    %2646 = vmatpush2.msra.mxu0 0.0
    %2647 = vmatprep.subr.mxu0 0.0
    %2648 = vmatpush2.msra.mxu0 0.0
    %2649 = vmatprep.subr.mxu0 0.0
    %2650 = vmatpush2.msra.mxu0 0.0
    %2651 = vmatprep.subr.mxu0 0.0
    %2652 = vmatpush2.msra.mxu0 0.0
    %2653 = vmatprep.subr.mxu0 0.0
    %2654 = vmatpush2.msra.mxu0 0.0
    %2655 = vmatprep.mubr.f32.mxu0 0.0
    %v2656 = vand.u32 %v72, 4294901760
    %v2657 = vsub.f32 %v72, %v2656
    %v2658 = vand.u32 %v2657, 4294901760
    %2659 = vmatmul.mubr.f32.gmra.mxu0 %v2658
    %v2660 = vpop.f32.mrf.mxu0
    %v2661 = vadd.f32 %v2577, %v2660
    %v2662 = vpop.f32.mrf.mxu0
    %2663 = vmatprep.mubr.f32.mxu0 0.0
    %v2664 = vand.u32 %v75, 4294901760
    %v2665 = vsub.f32 %v75, %v2664
    %v2666 = vand.u32 %v2665, 4294901760
    %2667 = vmatmul.mubr.f32.gmra.mxu0 %v2666
    %v2668 = vpop.f32.mrf.mxu0
    %v2669 = vadd.f32 %v2584, %v2668
    %v2670 = vpop.f32.mrf.mxu0
    %2671 = vdwg.mxu0
    %2672 = vmatprep.subr.mxu0 0.0
    %2673 = vmatpush1.msra.mxu0 0.0
    %2674 = vmatprep.subr.mxu0 0.0
    %2675 = vmatpush1.msra.mxu0 0.0
    %2676 = vmatprep.subr.mxu0 0.0
    %2677 = vmatpush1.msra.mxu0 0.0
    %2678 = vmatprep.subr.mxu0 0.0
    %2679 = vmatpush1.msra.mxu0 0.0
    %2680 = vmatprep.subr.mxu0 0.0
    %2681 = vmatpush1.msra.mxu0 0.0
    %2682 = vmatprep.subr.mxu0 0.0
    %2683 = vmatpush1.msra.mxu0 0.0
    %2684 = vmatprep.subr.mxu0 0.0
    %2685 = vmatpush1.msra.mxu0 0.0
    %2686 = vmatprep.subr.mxu0 0.0
    %2687 = vmatpush1.msra.mxu0 0.0
    %2688 = vmatprep.subr.mxu0 0.0
    %2689 = vmatpush1.msra.mxu0 0.0
    %2690 = vmatprep.subr.mxu0 0.0
    %2691 = vmatpush1.msra.mxu0 0.0
    %2692 = vmatprep.subr.mxu0 0.0
    %2693 = vmatpush1.msra.mxu0 0.0
    %2694 = vmatprep.subr.mxu0 0.0
    %2695 = vmatpush1.msra.mxu0 0.0
    %2696 = vmatprep.subr.mxu0 0.0
    %v2697 = vand.u32 %v2312, 4294901760
    %v2698 = vsub.f32 %v2312, %v2697
    %v2699 = vand.u32 %v2698, 4294901760
    %2700 = vmatpush1.msra.mxu0 %v2699
    %2701 = vmatprep.subr.mxu0 0.0
    %v2702 = vand.u32 %v60, 4294901760
    %v2703 = vsub.f32 %v60, %v2702
    %v2704 = vand.u32 %v2703, 4294901760
    %2705 = vmatpush1.msra.mxu0 %v2704
    %2706 = vmatprep.subr.mxu0 0.0
    %v2707 = vand.u32 %v59, 4294901760
    %v2708 = vsub.f32 %v59, %v2707
    %v2709 = vand.u32 %v2708, 4294901760
    %2710 = vmatpush1.msra.mxu0 %v2709
    %2711 = vmatprep.subr.mxu0 0.0
    %v2712 = vand.u32 %v58, 4294901760
    %v2713 = vsub.f32 %v58, %v2712
    %v2714 = vand.u32 %v2713, 4294901760
    %2715 = vmatpush1.msra.mxu0 %v2714
    %2716 = vmatprep.subr.mxu0 0.0
    %2717 = vmatpush2.msra.mxu0 0.0
    %2718 = vmatprep.subr.mxu0 0.0
    %2719 = vmatpush2.msra.mxu0 0.0
    %2720 = vmatprep.subr.mxu0 0.0
    %2721 = vmatpush2.msra.mxu0 0.0
    %2722 = vmatprep.subr.mxu0 0.0
    %2723 = vmatpush2.msra.mxu0 0.0
    %2724 = vmatprep.subr.mxu0 0.0
    %2725 = vmatpush2.msra.mxu0 0.0
    %2726 = vmatprep.subr.mxu0 0.0
    %2727 = vmatpush2.msra.mxu0 0.0
    %2728 = vmatprep.subr.mxu0 0.0
    %2729 = vmatpush2.msra.mxu0 0.0
    %2730 = vmatprep.subr.mxu0 0.0
    %2731 = vmatpush2.msra.mxu0 0.0
    %2732 = vmatprep.subr.mxu0 0.0
    %2733 = vmatpush2.msra.mxu0 0.0
    %2734 = vmatprep.subr.mxu0 0.0
    %2735 = vmatpush2.msra.mxu0 0.0
    %2736 = vmatprep.subr.mxu0 0.0
    %2737 = vmatpush2.msra.mxu0 0.0
    %2738 = vmatprep.subr.mxu0 0.0
    %2739 = vmatpush2.msra.mxu0 0.0
    %2740 = vmatprep.subr.mxu0 0.0
    %2741 = vmatpush2.msra.mxu0 0.0
    %2742 = vmatprep.subr.mxu0 0.0
    %2743 = vmatpush2.msra.mxu0 0.0
    %2744 = vmatprep.subr.mxu0 0.0
    %2745 = vmatpush2.msra.mxu0 0.0
    %2746 = vmatprep.subr.mxu0 0.0
    %2747 = vmatpush2.msra.mxu0 0.0
    %2748 = vmatprep.mubr.f32.mxu0 0.0
    %v2749 = vand.u32 %v72, 4294901760
    %2750 = vmatmul.mubr.f32.gmra.mxu0 %v2749
    %v2751 = vpop.f32.mrf.mxu0
    %v2752 = vadd.f32 %v2661, %v2751
    %v2753 = vpop.f32.mrf.mxu0
    %2754 = vmatprep.mubr.f32.mxu0 0.0
    %v2755 = vand.u32 %v75, 4294901760
    %2756 = vmatmul.mubr.f32.gmra.mxu0 %v2755
    %v2757 = vpop.f32.mrf.mxu0
    %v2758 = vadd.f32 %v2669, %v2757
    %v2759 = vpop.f32.mrf.mxu0
    %2760 = vdwg.mxu0
    %2761 = vmatprep.subr.mxu0 0.0
    %2762 = vmatpush1.msra.mxu0 0.0
    %2763 = vmatprep.subr.mxu0 0.0
    %2764 = vmatpush1.msra.mxu0 0.0
    %2765 = vmatprep.subr.mxu0 0.0
    %2766 = vmatpush1.msra.mxu0 0.0
    %2767 = vmatprep.subr.mxu0 0.0
    %2768 = vmatpush1.msra.mxu0 0.0
    %2769 = vmatprep.subr.mxu0 0.0
    %2770 = vmatpush1.msra.mxu0 0.0
    %2771 = vmatprep.subr.mxu0 0.0
    %2772 = vmatpush1.msra.mxu0 0.0
    %2773 = vmatprep.subr.mxu0 0.0
    %2774 = vmatpush1.msra.mxu0 0.0
    %2775 = vmatprep.subr.mxu0 0.0
    %2776 = vmatpush1.msra.mxu0 0.0
    %2777 = vmatprep.subr.mxu0 0.0
    %2778 = vmatpush1.msra.mxu0 0.0
    %2779 = vmatprep.subr.mxu0 0.0
    %2780 = vmatpush1.msra.mxu0 0.0
    %2781 = vmatprep.subr.mxu0 0.0
    %2782 = vmatpush1.msra.mxu0 0.0
    %2783 = vmatprep.subr.mxu0 0.0
    %2784 = vmatpush1.msra.mxu0 0.0
    %2785 = vmatprep.subr.mxu0 0.0
    %v2786 = vand.u32 %v2312, 4294901760
    %2787 = vmatpush1.msra.mxu0 %v2786
    %2788 = vmatprep.subr.mxu0 0.0
    %v2789 = vand.u32 %v60, 4294901760
    %2790 = vmatpush1.msra.mxu0 %v2789
    %2791 = vmatprep.subr.mxu0 0.0
    %v2792 = vand.u32 %v59, 4294901760
    %2793 = vmatpush1.msra.mxu0 %v2792
    %2794 = vmatprep.subr.mxu0 0.0
    %v2795 = vand.u32 %v58, 4294901760
    %2796 = vmatpush1.msra.mxu0 %v2795
    %2797 = vmatprep.subr.mxu0 0.0
    %2798 = vmatpush2.msra.mxu0 0.0
    %2799 = vmatprep.subr.mxu0 0.0
    %2800 = vmatpush2.msra.mxu0 0.0
    %2801 = vmatprep.subr.mxu0 0.0
    %2802 = vmatpush2.msra.mxu0 0.0
    %2803 = vmatprep.subr.mxu0 0.0
    %2804 = vmatpush2.msra.mxu0 0.0
    %2805 = vmatprep.subr.mxu0 0.0
    %2806 = vmatpush2.msra.mxu0 0.0
    %2807 = vmatprep.subr.mxu0 0.0
    %2808 = vmatpush2.msra.mxu0 0.0
    %2809 = vmatprep.subr.mxu0 0.0
    %2810 = vmatpush2.msra.mxu0 0.0
    %2811 = vmatprep.subr.mxu0 0.0
    %2812 = vmatpush2.msra.mxu0 0.0
    %2813 = vmatprep.subr.mxu0 0.0
    %2814 = vmatpush2.msra.mxu0 0.0
    %2815 = vmatprep.subr.mxu0 0.0
    %2816 = vmatpush2.msra.mxu0 0.0
    %2817 = vmatprep.subr.mxu0 0.0
    %2818 = vmatpush2.msra.mxu0 0.0
    %2819 = vmatprep.subr.mxu0 0.0
    %2820 = vmatpush2.msra.mxu0 0.0
    %2821 = vmatprep.subr.mxu0 0.0
    %2822 = vmatpush2.msra.mxu0 0.0
    %2823 = vmatprep.subr.mxu0 0.0
    %2824 = vmatpush2.msra.mxu0 0.0
    %2825 = vmatprep.subr.mxu0 0.0
    %2826 = vmatpush2.msra.mxu0 0.0
    %2827 = vmatprep.subr.mxu0 0.0
    %2828 = vmatpush2.msra.mxu0 0.0
    %2829 = vmatprep.mubr.f32.mxu0 0.0
    %v2830 = vand.u32 %v72, 4294901760
    %2831 = vmatmul.mubr.f32.gmra.mxu0 %v2830
    %v2832 = vpop.f32.mrf.mxu0
    %v2833 = vadd.f32 %v2752, %v2832
    %v2834 = vpop.f32.mrf.mxu0
    %2835 = vmatprep.mubr.f32.mxu0 0.0
    %v2836 = vand.u32 %v75, 4294901760
    %2837 = vmatmul.mubr.f32.gmra.mxu0 %v2836
    %v2838 = vpop.f32.mrf.mxu0
    %v2839 = vadd.f32 %v2758, %v2838
    %v2840 = vpop.f32.mrf.mxu0
    %2841 = vdwg.mxu0
    %v2842 = vmul.f32 %v2833, 0.33333334
    %v2843 = vmul.f32 %v2839, 0.33333334
    %v2845 = vsel %vm77, %v53, 0
    %2847 = vmatprep.subr.mxu0 0.0
    %2848 = vmatpush1.msra.mxu0 0.0
    %2849 = vmatprep.subr.mxu0 0.0
    %2850 = vmatpush1.msra.mxu0 0.0
    %2851 = vmatprep.subr.mxu0 0.0
    %2852 = vmatpush1.msra.mxu0 0.0
    %2853 = vmatprep.subr.mxu0 0.0
    %2854 = vmatpush1.msra.mxu0 0.0
    %2855 = vmatprep.subr.mxu0 0.0
    %2856 = vmatpush1.msra.mxu0 0.0
    %2857 = vmatprep.subr.mxu0 0.0
    %2858 = vmatpush1.msra.mxu0 0.0
    %2859 = vmatprep.subr.mxu0 0.0
    %2860 = vmatpush1.msra.mxu0 0.0
    %2861 = vmatprep.subr.mxu0 0.0
    %2862 = vmatpush1.msra.mxu0 0.0
    %2863 = vmatprep.subr.mxu0 0.0
    %2864 = vmatpush1.msra.mxu0 0.0
    %2865 = vmatprep.subr.mxu0 0.0
    %2866 = vmatpush1.msra.mxu0 0.0
    %2867 = vmatprep.subr.mxu0 0.0
    %2868 = vmatpush1.msra.mxu0 0.0
    %2869 = vmatprep.subr.mxu0 0.0
    %2870 = vmatpush1.msra.mxu0 0.0
    %2871 = vmatprep.subr.mxu0 0.0
    %v2872 = vand.u32 %v2845, 4294901760
    %2873 = vmatpush1.msra.mxu0 %v2872
    %2874 = vmatprep.subr.mxu0 0.0
    %v2875 = vand.u32 %v52, 4294901760
    %2876 = vmatpush1.msra.mxu0 %v2875
    %2877 = vmatprep.subr.mxu0 0.0
    %v2878 = vand.u32 %v51, 4294901760
    %2879 = vmatpush1.msra.mxu0 %v2878
    %2880 = vmatprep.subr.mxu0 0.0
    %v2881 = vand.u32 %v50, 4294901760
    %2882 = vmatpush1.msra.mxu0 %v2881
    %2883 = vmatprep.subr.mxu0 0.0
    %2884 = vmatpush2.msra.mxu0 0.0
    %2885 = vmatprep.subr.mxu0 0.0
    %2886 = vmatpush2.msra.mxu0 0.0
    %2887 = vmatprep.subr.mxu0 0.0
    %2888 = vmatpush2.msra.mxu0 0.0
    %2889 = vmatprep.subr.mxu0 0.0
    %2890 = vmatpush2.msra.mxu0 0.0
    %2891 = vmatprep.subr.mxu0 0.0
    %2892 = vmatpush2.msra.mxu0 0.0
    %2893 = vmatprep.subr.mxu0 0.0
    %2894 = vmatpush2.msra.mxu0 0.0
    %2895 = vmatprep.subr.mxu0 0.0
    %2896 = vmatpush2.msra.mxu0 0.0
    %2897 = vmatprep.subr.mxu0 0.0
    %2898 = vmatpush2.msra.mxu0 0.0
    %2899 = vmatprep.subr.mxu0 0.0
    %2900 = vmatpush2.msra.mxu0 0.0
    %2901 = vmatprep.subr.mxu0 0.0
    %2902 = vmatpush2.msra.mxu0 0.0
    %2903 = vmatprep.subr.mxu0 0.0
    %2904 = vmatpush2.msra.mxu0 0.0
    %2905 = vmatprep.subr.mxu0 0.0
    %2906 = vmatpush2.msra.mxu0 0.0
    %2907 = vmatprep.subr.mxu0 0.0
    %2908 = vmatpush2.msra.mxu0 0.0
    %2909 = vmatprep.subr.mxu0 0.0
    %2910 = vmatpush2.msra.mxu0 0.0
    %2911 = vmatprep.subr.mxu0 0.0
    %2912 = vmatpush2.msra.mxu0 0.0
    %2913 = vmatprep.subr.mxu0 0.0
    %2914 = vmatpush2.msra.mxu0 0.0
    %2915 = vmatprep.mubr.f32.mxu0 0.0
    %v2916 = vand.u32 %v72, 4294901760
    %v2917 = vsub.f32 %v72, %v2916
    %v2918 = vand.u32 %v2917, 4294901760
    %v2919 = vsub.f32 %v2917, %v2918
    %v2920 = vand.u32 %v2919, 4294901760
    %2921 = vmatmul.mubr.f32.gmra.mxu0 %v2920
    %v2922 = vpop.f32.mrf.mxu0
    %v2923 = vadd.f32 0.0, %v2922
    %v2924 = vpop.f32.mrf.mxu0
    %2925 = vmatprep.mubr.f32.mxu0 0.0
    %v2926 = vand.u32 %v75, 4294901760
    %v2927 = vsub.f32 %v75, %v2926
    %v2928 = vand.u32 %v2927, 4294901760
    %v2929 = vsub.f32 %v2927, %v2928
    %v2930 = vand.u32 %v2929, 4294901760
    %2931 = vmatmul.mubr.f32.gmra.mxu0 %v2930
    %v2932 = vpop.f32.mrf.mxu0
    %v2933 = vadd.f32 0.0, %v2932
    %v2934 = vpop.f32.mrf.mxu0
    %2935 = vdwg.mxu0
    %2936 = vmatprep.subr.mxu0 0.0
    %2937 = vmatpush1.msra.mxu0 0.0
    %2938 = vmatprep.subr.mxu0 0.0
    %2939 = vmatpush1.msra.mxu0 0.0
    %2940 = vmatprep.subr.mxu0 0.0
    %2941 = vmatpush1.msra.mxu0 0.0
    %2942 = vmatprep.subr.mxu0 0.0
    %2943 = vmatpush1.msra.mxu0 0.0
    %2944 = vmatprep.subr.mxu0 0.0
    %2945 = vmatpush1.msra.mxu0 0.0
    %2946 = vmatprep.subr.mxu0 0.0
    %2947 = vmatpush1.msra.mxu0 0.0
    %2948 = vmatprep.subr.mxu0 0.0
    %2949 = vmatpush1.msra.mxu0 0.0
    %2950 = vmatprep.subr.mxu0 0.0
    %2951 = vmatpush1.msra.mxu0 0.0
    %2952 = vmatprep.subr.mxu0 0.0
    %2953 = vmatpush1.msra.mxu0 0.0
    %2954 = vmatprep.subr.mxu0 0.0
    %2955 = vmatpush1.msra.mxu0 0.0
    %2956 = vmatprep.subr.mxu0 0.0
    %2957 = vmatpush1.msra.mxu0 0.0
    %2958 = vmatprep.subr.mxu0 0.0
    %2959 = vmatpush1.msra.mxu0 0.0
    %2960 = vmatprep.subr.mxu0 0.0
    %v2961 = vand.u32 %v2845, 4294901760
    %v2962 = vsub.f32 %v2845, %v2961
    %v2963 = vand.u32 %v2962, 4294901760
    %v2964 = vsub.f32 %v2962, %v2963
    %v2965 = vand.u32 %v2964, 4294901760
    %2966 = vmatpush1.msra.mxu0 %v2965
    %2967 = vmatprep.subr.mxu0 0.0
    %v2968 = vand.u32 %v52, 4294901760
    %v2969 = vsub.f32 %v52, %v2968
    %v2970 = vand.u32 %v2969, 4294901760
    %v2971 = vsub.f32 %v2969, %v2970
    %v2972 = vand.u32 %v2971, 4294901760
    %2973 = vmatpush1.msra.mxu0 %v2972
    %2974 = vmatprep.subr.mxu0 0.0
    %v2975 = vand.u32 %v51, 4294901760
    %v2976 = vsub.f32 %v51, %v2975
    %v2977 = vand.u32 %v2976, 4294901760
    %v2978 = vsub.f32 %v2976, %v2977
    %v2979 = vand.u32 %v2978, 4294901760
    %2980 = vmatpush1.msra.mxu0 %v2979
    %2981 = vmatprep.subr.mxu0 0.0
    %v2982 = vand.u32 %v50, 4294901760
    %v2983 = vsub.f32 %v50, %v2982
    %v2984 = vand.u32 %v2983, 4294901760
    %v2985 = vsub.f32 %v2983, %v2984
    %v2986 = vand.u32 %v2985, 4294901760
    %2987 = vmatpush1.msra.mxu0 %v2986
    %2988 = vmatprep.subr.mxu0 0.0
    %2989 = vmatpush2.msra.mxu0 0.0
    %2990 = vmatprep.subr.mxu0 0.0
    %2991 = vmatpush2.msra.mxu0 0.0
    %2992 = vmatprep.subr.mxu0 0.0
    %2993 = vmatpush2.msra.mxu0 0.0
    %2994 = vmatprep.subr.mxu0 0.0
    %2995 = vmatpush2.msra.mxu0 0.0
    %2996 = vmatprep.subr.mxu0 0.0
    %2997 = vmatpush2.msra.mxu0 0.0
    %2998 = vmatprep.subr.mxu0 0.0
    %2999 = vmatpush2.msra.mxu0 0.0
    %3000 = vmatprep.subr.mxu0 0.0
    %3001 = vmatpush2.msra.mxu0 0.0
    %3002 = vmatprep.subr.mxu0 0.0
    %3003 = vmatpush2.msra.mxu0 0.0
    %3004 = vmatprep.subr.mxu0 0.0
    %3005 = vmatpush2.msra.mxu0 0.0
    %3006 = vmatprep.subr.mxu0 0.0
    %3007 = vmatpush2.msra.mxu0 0.0
    %3008 = vmatprep.subr.mxu0 0.0
    %3009 = vmatpush2.msra.mxu0 0.0
    %3010 = vmatprep.subr.mxu0 0.0
    %3011 = vmatpush2.msra.mxu0 0.0
    %3012 = vmatprep.subr.mxu0 0.0
    %3013 = vmatpush2.msra.mxu0 0.0
    %3014 = vmatprep.subr.mxu0 0.0
    %3015 = vmatpush2.msra.mxu0 0.0
    %3016 = vmatprep.subr.mxu0 0.0
    %3017 = vmatpush2.msra.mxu0 0.0
    %3018 = vmatprep.subr.mxu0 0.0
    %3019 = vmatpush2.msra.mxu0 0.0
    %3020 = vmatprep.mubr.f32.mxu0 0.0
    %v3021 = vand.u32 %v72, 4294901760
    %3022 = vmatmul.mubr.f32.gmra.mxu0 %v3021
    %v3023 = vpop.f32.mrf.mxu0
    %v3024 = vadd.f32 %v2923, %v3023
    %v3025 = vpop.f32.mrf.mxu0
    %3026 = vmatprep.mubr.f32.mxu0 0.0
    %v3027 = vand.u32 %v75, 4294901760
    %3028 = vmatmul.mubr.f32.gmra.mxu0 %v3027
    %v3029 = vpop.f32.mrf.mxu0
    %v3030 = vadd.f32 %v2933, %v3029
    %v3031 = vpop.f32.mrf.mxu0
    %3032 = vdwg.mxu0
    %3033 = vmatprep.subr.mxu0 0.0
    %3034 = vmatpush1.msra.mxu0 0.0
    %3035 = vmatprep.subr.mxu0 0.0
    %3036 = vmatpush1.msra.mxu0 0.0
    %3037 = vmatprep.subr.mxu0 0.0
    %3038 = vmatpush1.msra.mxu0 0.0
    %3039 = vmatprep.subr.mxu0 0.0
    %3040 = vmatpush1.msra.mxu0 0.0
    %3041 = vmatprep.subr.mxu0 0.0
    %3042 = vmatpush1.msra.mxu0 0.0
    %3043 = vmatprep.subr.mxu0 0.0
    %3044 = vmatpush1.msra.mxu0 0.0
    %3045 = vmatprep.subr.mxu0 0.0
    %3046 = vmatpush1.msra.mxu0 0.0
    %3047 = vmatprep.subr.mxu0 0.0
    %3048 = vmatpush1.msra.mxu0 0.0
    %3049 = vmatprep.subr.mxu0 0.0
    %3050 = vmatpush1.msra.mxu0 0.0
    %3051 = vmatprep.subr.mxu0 0.0
    %3052 = vmatpush1.msra.mxu0 0.0
    %3053 = vmatprep.subr.mxu0 0.0
    %3054 = vmatpush1.msra.mxu0 0.0
    %3055 = vmatprep.subr.mxu0 0.0
    %3056 = vmatpush1.msra.mxu0 0.0
    %3057 = vmatprep.subr.mxu0 0.0
    %v3058 = vand.u32 %v2845, 4294901760
    %v3059 = vsub.f32 %v2845, %v3058
    %3060 = vmatpush1.msra.mxu0 %v3059
    %3061 = vmatprep.subr.mxu0 0.0
    %v3062 = vand.u32 %v52, 4294901760
    %v3063 = vsub.f32 %v52, %v3062
    %3064 = vmatpush1.msra.mxu0 %v3063
    %3065 = vmatprep.subr.mxu0 0.0
    %v3066 = vand.u32 %v51, 4294901760
    %v3067 = vsub.f32 %v51, %v3066
    %3068 = vmatpush1.msra.mxu0 %v3067
    %3069 = vmatprep.subr.mxu0 0.0
    %v3070 = vand.u32 %v50, 4294901760
    %v3071 = vsub.f32 %v50, %v3070
    %3072 = vmatpush1.msra.mxu0 %v3071
    %3073 = vmatprep.subr.mxu0 0.0
    %3074 = vmatpush2.msra.mxu0 0.0
    %3075 = vmatprep.subr.mxu0 0.0
    %3076 = vmatpush2.msra.mxu0 0.0
    %3077 = vmatprep.subr.mxu0 0.0
    %3078 = vmatpush2.msra.mxu0 0.0
    %3079 = vmatprep.subr.mxu0 0.0
    %3080 = vmatpush2.msra.mxu0 0.0
    %3081 = vmatprep.subr.mxu0 0.0
    %3082 = vmatpush2.msra.mxu0 0.0
    %3083 = vmatprep.subr.mxu0 0.0
    %3084 = vmatpush2.msra.mxu0 0.0
    %3085 = vmatprep.subr.mxu0 0.0
    %3086 = vmatpush2.msra.mxu0 0.0
    %3087 = vmatprep.subr.mxu0 0.0
    %3088 = vmatpush2.msra.mxu0 0.0
    %3089 = vmatprep.subr.mxu0 0.0
    %3090 = vmatpush2.msra.mxu0 0.0
    %3091 = vmatprep.subr.mxu0 0.0
    %3092 = vmatpush2.msra.mxu0 0.0
    %3093 = vmatprep.subr.mxu0 0.0
    %3094 = vmatpush2.msra.mxu0 0.0
    %3095 = vmatprep.subr.mxu0 0.0
    %3096 = vmatpush2.msra.mxu0 0.0
    %3097 = vmatprep.subr.mxu0 0.0
    %3098 = vmatpush2.msra.mxu0 0.0
    %3099 = vmatprep.subr.mxu0 0.0
    %3100 = vmatpush2.msra.mxu0 0.0
    %3101 = vmatprep.subr.mxu0 0.0
    %3102 = vmatpush2.msra.mxu0 0.0
    %3103 = vmatprep.subr.mxu0 0.0
    %3104 = vmatpush2.msra.mxu0 0.0
    %3105 = vmatprep.mubr.f32.mxu0 0.0
    %v3106 = vand.u32 %v72, 4294901760
    %v3107 = vsub.f32 %v72, %v3106
    %3108 = vmatmul.mubr.f32.gmra.mxu0 %v3107
    %v3109 = vpop.f32.mrf.mxu0
    %v3110 = vadd.f32 %v3024, %v3109
    %v3111 = vpop.f32.mrf.mxu0
    %3112 = vmatprep.mubr.f32.mxu0 0.0
    %v3113 = vand.u32 %v75, 4294901760
    %v3114 = vsub.f32 %v75, %v3113
    %3115 = vmatmul.mubr.f32.gmra.mxu0 %v3114
    %v3116 = vpop.f32.mrf.mxu0
    %v3117 = vadd.f32 %v3030, %v3116
    %v3118 = vpop.f32.mrf.mxu0
    %3119 = vdwg.mxu0
    %3120 = vmatprep.subr.mxu0 0.0
    %3121 = vmatpush1.msra.mxu0 0.0
    %3122 = vmatprep.subr.mxu0 0.0
    %3123 = vmatpush1.msra.mxu0 0.0
    %3124 = vmatprep.subr.mxu0 0.0
    %3125 = vmatpush1.msra.mxu0 0.0
    %3126 = vmatprep.subr.mxu0 0.0
    %3127 = vmatpush1.msra.mxu0 0.0
    %3128 = vmatprep.subr.mxu0 0.0
    %3129 = vmatpush1.msra.mxu0 0.0
    %3130 = vmatprep.subr.mxu0 0.0
    %3131 = vmatpush1.msra.mxu0 0.0
    %3132 = vmatprep.subr.mxu0 0.0
    %3133 = vmatpush1.msra.mxu0 0.0
    %3134 = vmatprep.subr.mxu0 0.0
    %3135 = vmatpush1.msra.mxu0 0.0
    %3136 = vmatprep.subr.mxu0 0.0
    %3137 = vmatpush1.msra.mxu0 0.0
    %3138 = vmatprep.subr.mxu0 0.0
    %3139 = vmatpush1.msra.mxu0 0.0
    %3140 = vmatprep.subr.mxu0 0.0
    %3141 = vmatpush1.msra.mxu0 0.0
    %3142 = vmatprep.subr.mxu0 0.0
    %3143 = vmatpush1.msra.mxu0 0.0
    %3144 = vmatprep.subr.mxu0 0.0
    %v3145 = vand.u32 %v2845, 4294901760
    %3146 = vmatpush1.msra.mxu0 %v3145
    %3147 = vmatprep.subr.mxu0 0.0
    %v3148 = vand.u32 %v52, 4294901760
    %3149 = vmatpush1.msra.mxu0 %v3148
    %3150 = vmatprep.subr.mxu0 0.0
    %v3151 = vand.u32 %v51, 4294901760
    %3152 = vmatpush1.msra.mxu0 %v3151
    %3153 = vmatprep.subr.mxu0 0.0
    %v3154 = vand.u32 %v50, 4294901760
    %3155 = vmatpush1.msra.mxu0 %v3154
    %3156 = vmatprep.subr.mxu0 0.0
    %3157 = vmatpush2.msra.mxu0 0.0
    %3158 = vmatprep.subr.mxu0 0.0
    %3159 = vmatpush2.msra.mxu0 0.0
    %3160 = vmatprep.subr.mxu0 0.0
    %3161 = vmatpush2.msra.mxu0 0.0
    %3162 = vmatprep.subr.mxu0 0.0
    %3163 = vmatpush2.msra.mxu0 0.0
    %3164 = vmatprep.subr.mxu0 0.0
    %3165 = vmatpush2.msra.mxu0 0.0
    %3166 = vmatprep.subr.mxu0 0.0
    %3167 = vmatpush2.msra.mxu0 0.0
    %3168 = vmatprep.subr.mxu0 0.0
    %3169 = vmatpush2.msra.mxu0 0.0
    %3170 = vmatprep.subr.mxu0 0.0
    %3171 = vmatpush2.msra.mxu0 0.0
    %3172 = vmatprep.subr.mxu0 0.0
    %3173 = vmatpush2.msra.mxu0 0.0
    %3174 = vmatprep.subr.mxu0 0.0
    %3175 = vmatpush2.msra.mxu0 0.0
    %3176 = vmatprep.subr.mxu0 0.0
    %3177 = vmatpush2.msra.mxu0 0.0
    %3178 = vmatprep.subr.mxu0 0.0
    %3179 = vmatpush2.msra.mxu0 0.0
    %3180 = vmatprep.subr.mxu0 0.0
    %3181 = vmatpush2.msra.mxu0 0.0
    %3182 = vmatprep.subr.mxu0 0.0
    %3183 = vmatpush2.msra.mxu0 0.0
    %3184 = vmatprep.subr.mxu0 0.0
    %3185 = vmatpush2.msra.mxu0 0.0
    %3186 = vmatprep.subr.mxu0 0.0
    %3187 = vmatpush2.msra.mxu0 0.0
    %3188 = vmatprep.mubr.f32.mxu0 0.0
    %v3189 = vand.u32 %v72, 4294901760
    %v3190 = vsub.f32 %v72, %v3189
    %v3191 = vand.u32 %v3190, 4294901760
    %3192 = vmatmul.mubr.f32.gmra.mxu0 %v3191
    %v3193 = vpop.f32.mrf.mxu0
    %v3194 = vadd.f32 %v3110, %v3193
    %v3195 = vpop.f32.mrf.mxu0
    %3196 = vmatprep.mubr.f32.mxu0 0.0
    %v3197 = vand.u32 %v75, 4294901760
    %v3198 = vsub.f32 %v75, %v3197
    %v3199 = vand.u32 %v3198, 4294901760
    %3200 = vmatmul.mubr.f32.gmra.mxu0 %v3199
    %v3201 = vpop.f32.mrf.mxu0
    %v3202 = vadd.f32 %v3117, %v3201
    %v3203 = vpop.f32.mrf.mxu0
    %3204 = vdwg.mxu0
    %3205 = vmatprep.subr.mxu0 0.0
    %3206 = vmatpush1.msra.mxu0 0.0
    %3207 = vmatprep.subr.mxu0 0.0
    %3208 = vmatpush1.msra.mxu0 0.0
    %3209 = vmatprep.subr.mxu0 0.0
    %3210 = vmatpush1.msra.mxu0 0.0
    %3211 = vmatprep.subr.mxu0 0.0
    %3212 = vmatpush1.msra.mxu0 0.0
    %3213 = vmatprep.subr.mxu0 0.0
    %3214 = vmatpush1.msra.mxu0 0.0
    %3215 = vmatprep.subr.mxu0 0.0
    %3216 = vmatpush1.msra.mxu0 0.0
    %3217 = vmatprep.subr.mxu0 0.0
    %3218 = vmatpush1.msra.mxu0 0.0
    %3219 = vmatprep.subr.mxu0 0.0
    %3220 = vmatpush1.msra.mxu0 0.0
    %3221 = vmatprep.subr.mxu0 0.0
    %3222 = vmatpush1.msra.mxu0 0.0
    %3223 = vmatprep.subr.mxu0 0.0
    %3224 = vmatpush1.msra.mxu0 0.0
    %3225 = vmatprep.subr.mxu0 0.0
    %3226 = vmatpush1.msra.mxu0 0.0
    %3227 = vmatprep.subr.mxu0 0.0
    %3228 = vmatpush1.msra.mxu0 0.0
    %3229 = vmatprep.subr.mxu0 0.0
    %v3230 = vand.u32 %v2845, 4294901760
    %v3231 = vsub.f32 %v2845, %v3230
    %v3232 = vand.u32 %v3231, 4294901760
    %3233 = vmatpush1.msra.mxu0 %v3232
    %3234 = vmatprep.subr.mxu0 0.0
    %v3235 = vand.u32 %v52, 4294901760
    %v3236 = vsub.f32 %v52, %v3235
    %v3237 = vand.u32 %v3236, 4294901760
    %3238 = vmatpush1.msra.mxu0 %v3237
    %3239 = vmatprep.subr.mxu0 0.0
    %v3240 = vand.u32 %v51, 4294901760
    %v3241 = vsub.f32 %v51, %v3240
    %v3242 = vand.u32 %v3241, 4294901760
    %3243 = vmatpush1.msra.mxu0 %v3242
    %3244 = vmatprep.subr.mxu0 0.0
    %v3245 = vand.u32 %v50, 4294901760
    %v3246 = vsub.f32 %v50, %v3245
    %v3247 = vand.u32 %v3246, 4294901760
    %3248 = vmatpush1.msra.mxu0 %v3247
    %3249 = vmatprep.subr.mxu0 0.0
    %3250 = vmatpush2.msra.mxu0 0.0
    %3251 = vmatprep.subr.mxu0 0.0
    %3252 = vmatpush2.msra.mxu0 0.0
    %3253 = vmatprep.subr.mxu0 0.0
    %3254 = vmatpush2.msra.mxu0 0.0
    %3255 = vmatprep.subr.mxu0 0.0
    %3256 = vmatpush2.msra.mxu0 0.0
    %3257 = vmatprep.subr.mxu0 0.0
    %3258 = vmatpush2.msra.mxu0 0.0
    %3259 = vmatprep.subr.mxu0 0.0
    %3260 = vmatpush2.msra.mxu0 0.0
    %3261 = vmatprep.subr.mxu0 0.0
    %3262 = vmatpush2.msra.mxu0 0.0
    %3263 = vmatprep.subr.mxu0 0.0
    %3264 = vmatpush2.msra.mxu0 0.0
    %3265 = vmatprep.subr.mxu0 0.0
    %3266 = vmatpush2.msra.mxu0 0.0
    %3267 = vmatprep.subr.mxu0 0.0
    %3268 = vmatpush2.msra.mxu0 0.0
    %3269 = vmatprep.subr.mxu0 0.0
    %3270 = vmatpush2.msra.mxu0 0.0
    %3271 = vmatprep.subr.mxu0 0.0
    %3272 = vmatpush2.msra.mxu0 0.0
    %3273 = vmatprep.subr.mxu0 0.0
    %3274 = vmatpush2.msra.mxu0 0.0
    %3275 = vmatprep.subr.mxu0 0.0
    %3276 = vmatpush2.msra.mxu0 0.0
    %3277 = vmatprep.subr.mxu0 0.0
    %3278 = vmatpush2.msra.mxu0 0.0
    %3279 = vmatprep.subr.mxu0 0.0
    %3280 = vmatpush2.msra.mxu0 0.0
    %3281 = vmatprep.mubr.f32.mxu0 0.0
    %v3282 = vand.u32 %v72, 4294901760
    %3283 = vmatmul.mubr.f32.gmra.mxu0 %v3282
    %v3284 = vpop.f32.mrf.mxu0
    %v3285 = vadd.f32 %v3194, %v3284
    %v3286 = vpop.f32.mrf.mxu0
    %3287 = vmatprep.mubr.f32.mxu0 0.0
    %v3288 = vand.u32 %v75, 4294901760
    %3289 = vmatmul.mubr.f32.gmra.mxu0 %v3288
    %v3290 = vpop.f32.mrf.mxu0
    %v3291 = vadd.f32 %v3202, %v3290
    %v3292 = vpop.f32.mrf.mxu0
    %3293 = vdwg.mxu0
    %3294 = vmatprep.subr.mxu0 0.0
    %3295 = vmatpush1.msra.mxu0 0.0
    %3296 = vmatprep.subr.mxu0 0.0
    %3297 = vmatpush1.msra.mxu0 0.0
    %3298 = vmatprep.subr.mxu0 0.0
    %3299 = vmatpush1.msra.mxu0 0.0
    %3300 = vmatprep.subr.mxu0 0.0
    %3301 = vmatpush1.msra.mxu0 0.0
    %3302 = vmatprep.subr.mxu0 0.0
    %3303 = vmatpush1.msra.mxu0 0.0
    %3304 = vmatprep.subr.mxu0 0.0
    %3305 = vmatpush1.msra.mxu0 0.0
    %3306 = vmatprep.subr.mxu0 0.0
    %3307 = vmatpush1.msra.mxu0 0.0
    %3308 = vmatprep.subr.mxu0 0.0
    %3309 = vmatpush1.msra.mxu0 0.0
    %3310 = vmatprep.subr.mxu0 0.0
    %3311 = vmatpush1.msra.mxu0 0.0
    %3312 = vmatprep.subr.mxu0 0.0
    %3313 = vmatpush1.msra.mxu0 0.0
    %3314 = vmatprep.subr.mxu0 0.0
    %3315 = vmatpush1.msra.mxu0 0.0
    %3316 = vmatprep.subr.mxu0 0.0
    %3317 = vmatpush1.msra.mxu0 0.0
    %3318 = vmatprep.subr.mxu0 0.0
    %v3319 = vand.u32 %v2845, 4294901760
    %3320 = vmatpush1.msra.mxu0 %v3319
    %3321 = vmatprep.subr.mxu0 0.0
    %v3322 = vand.u32 %v52, 4294901760
    %3323 = vmatpush1.msra.mxu0 %v3322
    %3324 = vmatprep.subr.mxu0 0.0
    %v3325 = vand.u32 %v51, 4294901760
    %3326 = vmatpush1.msra.mxu0 %v3325
    %3327 = vmatprep.subr.mxu0 0.0
    %v3328 = vand.u32 %v50, 4294901760
    %3329 = vmatpush1.msra.mxu0 %v3328
    %3330 = vmatprep.subr.mxu0 0.0
    %3331 = vmatpush2.msra.mxu0 0.0
    %3332 = vmatprep.subr.mxu0 0.0
    %3333 = vmatpush2.msra.mxu0 0.0
    %3334 = vmatprep.subr.mxu0 0.0
    %3335 = vmatpush2.msra.mxu0 0.0
    %3336 = vmatprep.subr.mxu0 0.0
    %3337 = vmatpush2.msra.mxu0 0.0
    %3338 = vmatprep.subr.mxu0 0.0
    %3339 = vmatpush2.msra.mxu0 0.0
    %3340 = vmatprep.subr.mxu0 0.0
    %3341 = vmatpush2.msra.mxu0 0.0
    %3342 = vmatprep.subr.mxu0 0.0
    %3343 = vmatpush2.msra.mxu0 0.0
    %3344 = vmatprep.subr.mxu0 0.0
    %3345 = vmatpush2.msra.mxu0 0.0
    %3346 = vmatprep.subr.mxu0 0.0
    %3347 = vmatpush2.msra.mxu0 0.0
    %3348 = vmatprep.subr.mxu0 0.0
    %3349 = vmatpush2.msra.mxu0 0.0
    %3350 = vmatprep.subr.mxu0 0.0
    %3351 = vmatpush2.msra.mxu0 0.0
    %3352 = vmatprep.subr.mxu0 0.0
    %3353 = vmatpush2.msra.mxu0 0.0
    %3354 = vmatprep.subr.mxu0 0.0
    %3355 = vmatpush2.msra.mxu0 0.0
    %3356 = vmatprep.subr.mxu0 0.0
    %3357 = vmatpush2.msra.mxu0 0.0
    %3358 = vmatprep.subr.mxu0 0.0
    %3359 = vmatpush2.msra.mxu0 0.0
    %3360 = vmatprep.subr.mxu0 0.0
    %3361 = vmatpush2.msra.mxu0 0.0
    %3362 = vmatprep.mubr.f32.mxu0 0.0
    %v3363 = vand.u32 %v72, 4294901760
    %3364 = vmatmul.mubr.f32.gmra.mxu0 %v3363
    %v3365 = vpop.f32.mrf.mxu0
    %v3366 = vadd.f32 %v3285, %v3365
    %v3367 = vpop.f32.mrf.mxu0
    %3368 = vmatprep.mubr.f32.mxu0 0.0
    %v3369 = vand.u32 %v75, 4294901760
    %3370 = vmatmul.mubr.f32.gmra.mxu0 %v3369
    %v3371 = vpop.f32.mrf.mxu0
    %v3372 = vadd.f32 %v3291, %v3371
    %v3373 = vpop.f32.mrf.mxu0
    %3374 = vdwg.mxu0
    %v3375 = vmul.f32 %v3366, 0.33333334
    %v3376 = vmul.f32 %v3372, 0.33333334
    %v3378 = vsel %vm77, %v57, 0
    %3380 = vmatprep.subr.mxu0 0.0
    %3381 = vmatpush1.msra.mxu0 0.0
    %3382 = vmatprep.subr.mxu0 0.0
    %3383 = vmatpush1.msra.mxu0 0.0
    %3384 = vmatprep.subr.mxu0 0.0
    %3385 = vmatpush1.msra.mxu0 0.0
    %3386 = vmatprep.subr.mxu0 0.0
    %3387 = vmatpush1.msra.mxu0 0.0
    %3388 = vmatprep.subr.mxu0 0.0
    %3389 = vmatpush1.msra.mxu0 0.0
    %3390 = vmatprep.subr.mxu0 0.0
    %3391 = vmatpush1.msra.mxu0 0.0
    %3392 = vmatprep.subr.mxu0 0.0
    %3393 = vmatpush1.msra.mxu0 0.0
    %3394 = vmatprep.subr.mxu0 0.0
    %3395 = vmatpush1.msra.mxu0 0.0
    %3396 = vmatprep.subr.mxu0 0.0
    %3397 = vmatpush1.msra.mxu0 0.0
    %3398 = vmatprep.subr.mxu0 0.0
    %3399 = vmatpush1.msra.mxu0 0.0
    %3400 = vmatprep.subr.mxu0 0.0
    %3401 = vmatpush1.msra.mxu0 0.0
    %3402 = vmatprep.subr.mxu0 0.0
    %3403 = vmatpush1.msra.mxu0 0.0
    %3404 = vmatprep.subr.mxu0 0.0
    %v3405 = vand.u32 %v3378, 4294901760
    %3406 = vmatpush1.msra.mxu0 %v3405
    %3407 = vmatprep.subr.mxu0 0.0
    %v3408 = vand.u32 %v56, 4294901760
    %3409 = vmatpush1.msra.mxu0 %v3408
    %3410 = vmatprep.subr.mxu0 0.0
    %v3411 = vand.u32 %v55, 4294901760
    %3412 = vmatpush1.msra.mxu0 %v3411
    %3413 = vmatprep.subr.mxu0 0.0
    %v3414 = vand.u32 %v54, 4294901760
    %3415 = vmatpush1.msra.mxu0 %v3414
    %3416 = vmatprep.subr.mxu0 0.0
    %3417 = vmatpush2.msra.mxu0 0.0
    %3418 = vmatprep.subr.mxu0 0.0
    %3419 = vmatpush2.msra.mxu0 0.0
    %3420 = vmatprep.subr.mxu0 0.0
    %3421 = vmatpush2.msra.mxu0 0.0
    %3422 = vmatprep.subr.mxu0 0.0
    %3423 = vmatpush2.msra.mxu0 0.0
    %3424 = vmatprep.subr.mxu0 0.0
    %3425 = vmatpush2.msra.mxu0 0.0
    %3426 = vmatprep.subr.mxu0 0.0
    %3427 = vmatpush2.msra.mxu0 0.0
    %3428 = vmatprep.subr.mxu0 0.0
    %3429 = vmatpush2.msra.mxu0 0.0
    %3430 = vmatprep.subr.mxu0 0.0
    %3431 = vmatpush2.msra.mxu0 0.0
    %3432 = vmatprep.subr.mxu0 0.0
    %3433 = vmatpush2.msra.mxu0 0.0
    %3434 = vmatprep.subr.mxu0 0.0
    %3435 = vmatpush2.msra.mxu0 0.0
    %3436 = vmatprep.subr.mxu0 0.0
    %3437 = vmatpush2.msra.mxu0 0.0
    %3438 = vmatprep.subr.mxu0 0.0
    %3439 = vmatpush2.msra.mxu0 0.0
    %3440 = vmatprep.subr.mxu0 0.0
    %3441 = vmatpush2.msra.mxu0 0.0
    %3442 = vmatprep.subr.mxu0 0.0
    %3443 = vmatpush2.msra.mxu0 0.0
    %3444 = vmatprep.subr.mxu0 0.0
    %3445 = vmatpush2.msra.mxu0 0.0
    %3446 = vmatprep.subr.mxu0 0.0
    %3447 = vmatpush2.msra.mxu0 0.0
    %3448 = vmatprep.mubr.f32.mxu0 0.0
    %v3449 = vand.u32 %v72, 4294901760
    %v3450 = vsub.f32 %v72, %v3449
    %v3451 = vand.u32 %v3450, 4294901760
    %v3452 = vsub.f32 %v3450, %v3451
    %v3453 = vand.u32 %v3452, 4294901760
    %3454 = vmatmul.mubr.f32.gmra.mxu0 %v3453
    %v3455 = vpop.f32.mrf.mxu0
    %v3456 = vadd.f32 0.0, %v3455
    %v3457 = vpop.f32.mrf.mxu0
    %3458 = vmatprep.mubr.f32.mxu0 0.0
    %v3459 = vand.u32 %v75, 4294901760
    %v3460 = vsub.f32 %v75, %v3459
    %v3461 = vand.u32 %v3460, 4294901760
    %v3462 = vsub.f32 %v3460, %v3461
    %v3463 = vand.u32 %v3462, 4294901760
    %3464 = vmatmul.mubr.f32.gmra.mxu0 %v3463
    %v3465 = vpop.f32.mrf.mxu0
    %v3466 = vadd.f32 0.0, %v3465
    %v3467 = vpop.f32.mrf.mxu0
    %3468 = vdwg.mxu0
    %3469 = vmatprep.subr.mxu0 0.0
    %3470 = vmatpush1.msra.mxu0 0.0
    %3471 = vmatprep.subr.mxu0 0.0
    %3472 = vmatpush1.msra.mxu0 0.0
    %3473 = vmatprep.subr.mxu0 0.0
    %3474 = vmatpush1.msra.mxu0 0.0
    %3475 = vmatprep.subr.mxu0 0.0
    %3476 = vmatpush1.msra.mxu0 0.0
    %3477 = vmatprep.subr.mxu0 0.0
    %3478 = vmatpush1.msra.mxu0 0.0
    %3479 = vmatprep.subr.mxu0 0.0
    %3480 = vmatpush1.msra.mxu0 0.0
    %3481 = vmatprep.subr.mxu0 0.0
    %3482 = vmatpush1.msra.mxu0 0.0
    %3483 = vmatprep.subr.mxu0 0.0
    %3484 = vmatpush1.msra.mxu0 0.0
    %3485 = vmatprep.subr.mxu0 0.0
    %3486 = vmatpush1.msra.mxu0 0.0
    %3487 = vmatprep.subr.mxu0 0.0
    %3488 = vmatpush1.msra.mxu0 0.0
    %3489 = vmatprep.subr.mxu0 0.0
    %3490 = vmatpush1.msra.mxu0 0.0
    %3491 = vmatprep.subr.mxu0 0.0
    %3492 = vmatpush1.msra.mxu0 0.0
    %3493 = vmatprep.subr.mxu0 0.0
    %v3494 = vand.u32 %v3378, 4294901760
    %v3495 = vsub.f32 %v3378, %v3494
    %v3496 = vand.u32 %v3495, 4294901760
    %v3497 = vsub.f32 %v3495, %v3496
    %v3498 = vand.u32 %v3497, 4294901760
    %3499 = vmatpush1.msra.mxu0 %v3498
    %3500 = vmatprep.subr.mxu0 0.0
    %v3501 = vand.u32 %v56, 4294901760
    %v3502 = vsub.f32 %v56, %v3501
    %v3503 = vand.u32 %v3502, 4294901760
    %v3504 = vsub.f32 %v3502, %v3503
    %v3505 = vand.u32 %v3504, 4294901760
    %3506 = vmatpush1.msra.mxu0 %v3505
    %3507 = vmatprep.subr.mxu0 0.0
    %v3508 = vand.u32 %v55, 4294901760
    %v3509 = vsub.f32 %v55, %v3508
    %v3510 = vand.u32 %v3509, 4294901760
    %v3511 = vsub.f32 %v3509, %v3510
    %v3512 = vand.u32 %v3511, 4294901760
    %3513 = vmatpush1.msra.mxu0 %v3512
    %3514 = vmatprep.subr.mxu0 0.0
    %v3515 = vand.u32 %v54, 4294901760
    %v3516 = vsub.f32 %v54, %v3515
    %v3517 = vand.u32 %v3516, 4294901760
    %v3518 = vsub.f32 %v3516, %v3517
    %v3519 = vand.u32 %v3518, 4294901760
    %3520 = vmatpush1.msra.mxu0 %v3519
    %3521 = vmatprep.subr.mxu0 0.0
    %3522 = vmatpush2.msra.mxu0 0.0
    %3523 = vmatprep.subr.mxu0 0.0
    %3524 = vmatpush2.msra.mxu0 0.0
    %3525 = vmatprep.subr.mxu0 0.0
    %3526 = vmatpush2.msra.mxu0 0.0
    %3527 = vmatprep.subr.mxu0 0.0
    %3528 = vmatpush2.msra.mxu0 0.0
    %3529 = vmatprep.subr.mxu0 0.0
    %3530 = vmatpush2.msra.mxu0 0.0
    %3531 = vmatprep.subr.mxu0 0.0
    %3532 = vmatpush2.msra.mxu0 0.0
    %3533 = vmatprep.subr.mxu0 0.0
    %3534 = vmatpush2.msra.mxu0 0.0
    %3535 = vmatprep.subr.mxu0 0.0
    %3536 = vmatpush2.msra.mxu0 0.0
    %3537 = vmatprep.subr.mxu0 0.0
    %3538 = vmatpush2.msra.mxu0 0.0
    %3539 = vmatprep.subr.mxu0 0.0
    %3540 = vmatpush2.msra.mxu0 0.0
    %3541 = vmatprep.subr.mxu0 0.0
    %3542 = vmatpush2.msra.mxu0 0.0
    %3543 = vmatprep.subr.mxu0 0.0
    %3544 = vmatpush2.msra.mxu0 0.0
    %3545 = vmatprep.subr.mxu0 0.0
    %3546 = vmatpush2.msra.mxu0 0.0
    %3547 = vmatprep.subr.mxu0 0.0
    %3548 = vmatpush2.msra.mxu0 0.0
    %3549 = vmatprep.subr.mxu0 0.0
    %3550 = vmatpush2.msra.mxu0 0.0
    %3551 = vmatprep.subr.mxu0 0.0
    %3552 = vmatpush2.msra.mxu0 0.0
    %3553 = vmatprep.mubr.f32.mxu0 0.0
    %v3554 = vand.u32 %v72, 4294901760
    %3555 = vmatmul.mubr.f32.gmra.mxu0 %v3554
    %v3556 = vpop.f32.mrf.mxu0
    %v3557 = vadd.f32 %v3456, %v3556
    %v3558 = vpop.f32.mrf.mxu0
    %3559 = vmatprep.mubr.f32.mxu0 0.0
    %v3560 = vand.u32 %v75, 4294901760
    %3561 = vmatmul.mubr.f32.gmra.mxu0 %v3560
    %v3562 = vpop.f32.mrf.mxu0
    %v3563 = vadd.f32 %v3466, %v3562
    %v3564 = vpop.f32.mrf.mxu0
    %3565 = vdwg.mxu0
    %3566 = vmatprep.subr.mxu0 0.0
    %3567 = vmatpush1.msra.mxu0 0.0
    %3568 = vmatprep.subr.mxu0 0.0
    %3569 = vmatpush1.msra.mxu0 0.0
    %3570 = vmatprep.subr.mxu0 0.0
    %3571 = vmatpush1.msra.mxu0 0.0
    %3572 = vmatprep.subr.mxu0 0.0
    %3573 = vmatpush1.msra.mxu0 0.0
    %3574 = vmatprep.subr.mxu0 0.0
    %3575 = vmatpush1.msra.mxu0 0.0
    %3576 = vmatprep.subr.mxu0 0.0
    %3577 = vmatpush1.msra.mxu0 0.0
    %3578 = vmatprep.subr.mxu0 0.0
    %3579 = vmatpush1.msra.mxu0 0.0
    %3580 = vmatprep.subr.mxu0 0.0
    %3581 = vmatpush1.msra.mxu0 0.0
    %3582 = vmatprep.subr.mxu0 0.0
    %3583 = vmatpush1.msra.mxu0 0.0
    %3584 = vmatprep.subr.mxu0 0.0
    %3585 = vmatpush1.msra.mxu0 0.0
    %3586 = vmatprep.subr.mxu0 0.0
    %3587 = vmatpush1.msra.mxu0 0.0
    %3588 = vmatprep.subr.mxu0 0.0
    %3589 = vmatpush1.msra.mxu0 0.0
    %3590 = vmatprep.subr.mxu0 0.0
    %v3591 = vand.u32 %v3378, 4294901760
    %v3592 = vsub.f32 %v3378, %v3591
    %3593 = vmatpush1.msra.mxu0 %v3592
    %3594 = vmatprep.subr.mxu0 0.0
    %v3595 = vand.u32 %v56, 4294901760
    %v3596 = vsub.f32 %v56, %v3595
    %3597 = vmatpush1.msra.mxu0 %v3596
    %3598 = vmatprep.subr.mxu0 0.0
    %v3599 = vand.u32 %v55, 4294901760
    %v3600 = vsub.f32 %v55, %v3599
    %3601 = vmatpush1.msra.mxu0 %v3600
    %3602 = vmatprep.subr.mxu0 0.0
    %v3603 = vand.u32 %v54, 4294901760
    %v3604 = vsub.f32 %v54, %v3603
    %3605 = vmatpush1.msra.mxu0 %v3604
    %3606 = vmatprep.subr.mxu0 0.0
    %3607 = vmatpush2.msra.mxu0 0.0
    %3608 = vmatprep.subr.mxu0 0.0
    %3609 = vmatpush2.msra.mxu0 0.0
    %3610 = vmatprep.subr.mxu0 0.0
    %3611 = vmatpush2.msra.mxu0 0.0
    %3612 = vmatprep.subr.mxu0 0.0
    %3613 = vmatpush2.msra.mxu0 0.0
    %3614 = vmatprep.subr.mxu0 0.0
    %3615 = vmatpush2.msra.mxu0 0.0
    %3616 = vmatprep.subr.mxu0 0.0
    %3617 = vmatpush2.msra.mxu0 0.0
    %3618 = vmatprep.subr.mxu0 0.0
    %3619 = vmatpush2.msra.mxu0 0.0
    %3620 = vmatprep.subr.mxu0 0.0
    %3621 = vmatpush2.msra.mxu0 0.0
    %3622 = vmatprep.subr.mxu0 0.0
    %3623 = vmatpush2.msra.mxu0 0.0
    %3624 = vmatprep.subr.mxu0 0.0
    %3625 = vmatpush2.msra.mxu0 0.0
    %3626 = vmatprep.subr.mxu0 0.0
    %3627 = vmatpush2.msra.mxu0 0.0
    %3628 = vmatprep.subr.mxu0 0.0
    %3629 = vmatpush2.msra.mxu0 0.0
    %3630 = vmatprep.subr.mxu0 0.0
    %3631 = vmatpush2.msra.mxu0 0.0
    %3632 = vmatprep.subr.mxu0 0.0
    %3633 = vmatpush2.msra.mxu0 0.0
    %3634 = vmatprep.subr.mxu0 0.0
    %3635 = vmatpush2.msra.mxu0 0.0
    %3636 = vmatprep.subr.mxu0 0.0
    %3637 = vmatpush2.msra.mxu0 0.0
    %3638 = vmatprep.mubr.f32.mxu0 0.0
    %v3639 = vand.u32 %v72, 4294901760
    %v3640 = vsub.f32 %v72, %v3639
    %3641 = vmatmul.mubr.f32.gmra.mxu0 %v3640
    %v3642 = vpop.f32.mrf.mxu0
    %v3643 = vadd.f32 %v3557, %v3642
    %v3644 = vpop.f32.mrf.mxu0
    %3645 = vmatprep.mubr.f32.mxu0 0.0
    %v3646 = vand.u32 %v75, 4294901760
    %v3647 = vsub.f32 %v75, %v3646
    %3648 = vmatmul.mubr.f32.gmra.mxu0 %v3647
    %v3649 = vpop.f32.mrf.mxu0
    %v3650 = vadd.f32 %v3563, %v3649
    %v3651 = vpop.f32.mrf.mxu0
    %3652 = vdwg.mxu0
    %3653 = vmatprep.subr.mxu0 0.0
    %3654 = vmatpush1.msra.mxu0 0.0
    %3655 = vmatprep.subr.mxu0 0.0
    %3656 = vmatpush1.msra.mxu0 0.0
    %3657 = vmatprep.subr.mxu0 0.0
    %3658 = vmatpush1.msra.mxu0 0.0
    %3659 = vmatprep.subr.mxu0 0.0
    %3660 = vmatpush1.msra.mxu0 0.0
    %3661 = vmatprep.subr.mxu0 0.0
    %3662 = vmatpush1.msra.mxu0 0.0
    %3663 = vmatprep.subr.mxu0 0.0
    %3664 = vmatpush1.msra.mxu0 0.0
    %3665 = vmatprep.subr.mxu0 0.0
    %3666 = vmatpush1.msra.mxu0 0.0
    %3667 = vmatprep.subr.mxu0 0.0
    %3668 = vmatpush1.msra.mxu0 0.0
    %3669 = vmatprep.subr.mxu0 0.0
    %3670 = vmatpush1.msra.mxu0 0.0
    %3671 = vmatprep.subr.mxu0 0.0
    %3672 = vmatpush1.msra.mxu0 0.0
    %3673 = vmatprep.subr.mxu0 0.0
    %3674 = vmatpush1.msra.mxu0 0.0
    %3675 = vmatprep.subr.mxu0 0.0
    %3676 = vmatpush1.msra.mxu0 0.0
    %3677 = vmatprep.subr.mxu0 0.0
    %v3678 = vand.u32 %v3378, 4294901760
    %3679 = vmatpush1.msra.mxu0 %v3678
    %3680 = vmatprep.subr.mxu0 0.0
    %v3681 = vand.u32 %v56, 4294901760
    %3682 = vmatpush1.msra.mxu0 %v3681
    %3683 = vmatprep.subr.mxu0 0.0
    %v3684 = vand.u32 %v55, 4294901760
    %3685 = vmatpush1.msra.mxu0 %v3684
    %3686 = vmatprep.subr.mxu0 0.0
    %v3687 = vand.u32 %v54, 4294901760
    %3688 = vmatpush1.msra.mxu0 %v3687
    %3689 = vmatprep.subr.mxu0 0.0
    %3690 = vmatpush2.msra.mxu0 0.0
    %3691 = vmatprep.subr.mxu0 0.0
    %3692 = vmatpush2.msra.mxu0 0.0
    %3693 = vmatprep.subr.mxu0 0.0
    %3694 = vmatpush2.msra.mxu0 0.0
    %3695 = vmatprep.subr.mxu0 0.0
    %3696 = vmatpush2.msra.mxu0 0.0
    %3697 = vmatprep.subr.mxu0 0.0
    %3698 = vmatpush2.msra.mxu0 0.0
    %3699 = vmatprep.subr.mxu0 0.0
    %3700 = vmatpush2.msra.mxu0 0.0
    %3701 = vmatprep.subr.mxu0 0.0
    %3702 = vmatpush2.msra.mxu0 0.0
    %3703 = vmatprep.subr.mxu0 0.0
    %3704 = vmatpush2.msra.mxu0 0.0
    %3705 = vmatprep.subr.mxu0 0.0
    %3706 = vmatpush2.msra.mxu0 0.0
    %3707 = vmatprep.subr.mxu0 0.0
    %3708 = vmatpush2.msra.mxu0 0.0
    %3709 = vmatprep.subr.mxu0 0.0
    %3710 = vmatpush2.msra.mxu0 0.0
    %3711 = vmatprep.subr.mxu0 0.0
    %3712 = vmatpush2.msra.mxu0 0.0
    %3713 = vmatprep.subr.mxu0 0.0
    %3714 = vmatpush2.msra.mxu0 0.0
    %3715 = vmatprep.subr.mxu0 0.0
    %3716 = vmatpush2.msra.mxu0 0.0
    %3717 = vmatprep.subr.mxu0 0.0
    %3718 = vmatpush2.msra.mxu0 0.0
    %3719 = vmatprep.subr.mxu0 0.0
    %3720 = vmatpush2.msra.mxu0 0.0
    %3721 = vmatprep.mubr.f32.mxu0 0.0
    %v3722 = vand.u32 %v72, 4294901760
    %v3723 = vsub.f32 %v72, %v3722
    %v3724 = vand.u32 %v3723, 4294901760
    %3725 = vmatmul.mubr.f32.gmra.mxu0 %v3724
    %v3726 = vpop.f32.mrf.mxu0
    %v3727 = vadd.f32 %v3643, %v3726
    %v3728 = vpop.f32.mrf.mxu0
    %3729 = vmatprep.mubr.f32.mxu0 0.0
    %v3730 = vand.u32 %v75, 4294901760
    %v3731 = vsub.f32 %v75, %v3730
    %v3732 = vand.u32 %v3731, 4294901760
    %3733 = vmatmul.mubr.f32.gmra.mxu0 %v3732
    %v3734 = vpop.f32.mrf.mxu0
    %v3735 = vadd.f32 %v3650, %v3734
    %v3736 = vpop.f32.mrf.mxu0
    %3737 = vdwg.mxu0
    %3738 = vmatprep.subr.mxu0 0.0
    %3739 = vmatpush1.msra.mxu0 0.0
    %3740 = vmatprep.subr.mxu0 0.0
    %3741 = vmatpush1.msra.mxu0 0.0
    %3742 = vmatprep.subr.mxu0 0.0
    %3743 = vmatpush1.msra.mxu0 0.0
    %3744 = vmatprep.subr.mxu0 0.0
    %3745 = vmatpush1.msra.mxu0 0.0
    %3746 = vmatprep.subr.mxu0 0.0
    %3747 = vmatpush1.msra.mxu0 0.0
    %3748 = vmatprep.subr.mxu0 0.0
    %3749 = vmatpush1.msra.mxu0 0.0
    %3750 = vmatprep.subr.mxu0 0.0
    %3751 = vmatpush1.msra.mxu0 0.0
    %3752 = vmatprep.subr.mxu0 0.0
    %3753 = vmatpush1.msra.mxu0 0.0
    %3754 = vmatprep.subr.mxu0 0.0
    %3755 = vmatpush1.msra.mxu0 0.0
    %3756 = vmatprep.subr.mxu0 0.0
    %3757 = vmatpush1.msra.mxu0 0.0
    %3758 = vmatprep.subr.mxu0 0.0
    %3759 = vmatpush1.msra.mxu0 0.0
    %3760 = vmatprep.subr.mxu0 0.0
    %3761 = vmatpush1.msra.mxu0 0.0
    %3762 = vmatprep.subr.mxu0 0.0
    %v3763 = vand.u32 %v3378, 4294901760
    %v3764 = vsub.f32 %v3378, %v3763
    %v3765 = vand.u32 %v3764, 4294901760
    %3766 = vmatpush1.msra.mxu0 %v3765
    %3767 = vmatprep.subr.mxu0 0.0
    %v3768 = vand.u32 %v56, 4294901760
    %v3769 = vsub.f32 %v56, %v3768
    %v3770 = vand.u32 %v3769, 4294901760
    %3771 = vmatpush1.msra.mxu0 %v3770
    %3772 = vmatprep.subr.mxu0 0.0
    %v3773 = vand.u32 %v55, 4294901760
    %v3774 = vsub.f32 %v55, %v3773
    %v3775 = vand.u32 %v3774, 4294901760
    %3776 = vmatpush1.msra.mxu0 %v3775
    %3777 = vmatprep.subr.mxu0 0.0
    %v3778 = vand.u32 %v54, 4294901760
    %v3779 = vsub.f32 %v54, %v3778
    %v3780 = vand.u32 %v3779, 4294901760
    %3781 = vmatpush1.msra.mxu0 %v3780
    %3782 = vmatprep.subr.mxu0 0.0
    %3783 = vmatpush2.msra.mxu0 0.0
    %3784 = vmatprep.subr.mxu0 0.0
    %3785 = vmatpush2.msra.mxu0 0.0
    %3786 = vmatprep.subr.mxu0 0.0
    %3787 = vmatpush2.msra.mxu0 0.0
    %3788 = vmatprep.subr.mxu0 0.0
    %3789 = vmatpush2.msra.mxu0 0.0
    %3790 = vmatprep.subr.mxu0 0.0
    %3791 = vmatpush2.msra.mxu0 0.0
    %3792 = vmatprep.subr.mxu0 0.0
    %3793 = vmatpush2.msra.mxu0 0.0
    %3794 = vmatprep.subr.mxu0 0.0
    %3795 = vmatpush2.msra.mxu0 0.0
    %3796 = vmatprep.subr.mxu0 0.0
    %3797 = vmatpush2.msra.mxu0 0.0
    %3798 = vmatprep.subr.mxu0 0.0
    %3799 = vmatpush2.msra.mxu0 0.0
    %3800 = vmatprep.subr.mxu0 0.0
    %3801 = vmatpush2.msra.mxu0 0.0
    %3802 = vmatprep.subr.mxu0 0.0
    %3803 = vmatpush2.msra.mxu0 0.0
    %3804 = vmatprep.subr.mxu0 0.0
    %3805 = vmatpush2.msra.mxu0 0.0
    %3806 = vmatprep.subr.mxu0 0.0
    %3807 = vmatpush2.msra.mxu0 0.0
    %3808 = vmatprep.subr.mxu0 0.0
    %3809 = vmatpush2.msra.mxu0 0.0
    %3810 = vmatprep.subr.mxu0 0.0
    %3811 = vmatpush2.msra.mxu0 0.0
    %3812 = vmatprep.subr.mxu0 0.0
    %3813 = vmatpush2.msra.mxu0 0.0
    %3814 = vmatprep.mubr.f32.mxu0 0.0
    %v3815 = vand.u32 %v72, 4294901760
    %3816 = vmatmul.mubr.f32.gmra.mxu0 %v3815
    %v3817 = vpop.f32.mrf.mxu0
    %v3818 = vadd.f32 %v3727, %v3817
    %v3819 = vpop.f32.mrf.mxu0
    %3820 = vmatprep.mubr.f32.mxu0 0.0
    %v3821 = vand.u32 %v75, 4294901760
    %3822 = vmatmul.mubr.f32.gmra.mxu0 %v3821
    %v3823 = vpop.f32.mrf.mxu0
    %v3824 = vadd.f32 %v3735, %v3823
    %v3825 = vpop.f32.mrf.mxu0
    %3826 = vdwg.mxu0
    %3827 = vmatprep.subr.mxu0 0.0
    %3828 = vmatpush1.msra.mxu0 0.0
    %3829 = vmatprep.subr.mxu0 0.0
    %3830 = vmatpush1.msra.mxu0 0.0
    %3831 = vmatprep.subr.mxu0 0.0
    %3832 = vmatpush1.msra.mxu0 0.0
    %3833 = vmatprep.subr.mxu0 0.0
    %3834 = vmatpush1.msra.mxu0 0.0
    %3835 = vmatprep.subr.mxu0 0.0
    %3836 = vmatpush1.msra.mxu0 0.0
    %3837 = vmatprep.subr.mxu0 0.0
    %3838 = vmatpush1.msra.mxu0 0.0
    %3839 = vmatprep.subr.mxu0 0.0
    %3840 = vmatpush1.msra.mxu0 0.0
    %3841 = vmatprep.subr.mxu0 0.0
    %3842 = vmatpush1.msra.mxu0 0.0
    %3843 = vmatprep.subr.mxu0 0.0
    %3844 = vmatpush1.msra.mxu0 0.0
    %3845 = vmatprep.subr.mxu0 0.0
    %3846 = vmatpush1.msra.mxu0 0.0
    %3847 = vmatprep.subr.mxu0 0.0
    %3848 = vmatpush1.msra.mxu0 0.0
    %3849 = vmatprep.subr.mxu0 0.0
    %3850 = vmatpush1.msra.mxu0 0.0
    %3851 = vmatprep.subr.mxu0 0.0
    %v3852 = vand.u32 %v3378, 4294901760
    %3853 = vmatpush1.msra.mxu0 %v3852
    %3854 = vmatprep.subr.mxu0 0.0
    %v3855 = vand.u32 %v56, 4294901760
    %3856 = vmatpush1.msra.mxu0 %v3855
    %3857 = vmatprep.subr.mxu0 0.0
    %v3858 = vand.u32 %v55, 4294901760
    %3859 = vmatpush1.msra.mxu0 %v3858
    %3860 = vmatprep.subr.mxu0 0.0
    %v3861 = vand.u32 %v54, 4294901760
    %3862 = vmatpush1.msra.mxu0 %v3861
    %3863 = vmatprep.subr.mxu0 0.0
    %3864 = vmatpush2.msra.mxu0 0.0
    %3865 = vmatprep.subr.mxu0 0.0
    %3866 = vmatpush2.msra.mxu0 0.0
    %3867 = vmatprep.subr.mxu0 0.0
    %3868 = vmatpush2.msra.mxu0 0.0
    %3869 = vmatprep.subr.mxu0 0.0
    %3870 = vmatpush2.msra.mxu0 0.0
    %3871 = vmatprep.subr.mxu0 0.0
    %3872 = vmatpush2.msra.mxu0 0.0
    %3873 = vmatprep.subr.mxu0 0.0
    %3874 = vmatpush2.msra.mxu0 0.0
    %3875 = vmatprep.subr.mxu0 0.0
    %3876 = vmatpush2.msra.mxu0 0.0
    %3877 = vmatprep.subr.mxu0 0.0
    %3878 = vmatpush2.msra.mxu0 0.0
    %3879 = vmatprep.subr.mxu0 0.0
    %3880 = vmatpush2.msra.mxu0 0.0
    %3881 = vmatprep.subr.mxu0 0.0
    %3882 = vmatpush2.msra.mxu0 0.0
    %3883 = vmatprep.subr.mxu0 0.0
    %3884 = vmatpush2.msra.mxu0 0.0
    %3885 = vmatprep.subr.mxu0 0.0
    %3886 = vmatpush2.msra.mxu0 0.0
    %3887 = vmatprep.subr.mxu0 0.0
    %3888 = vmatpush2.msra.mxu0 0.0
    %3889 = vmatprep.subr.mxu0 0.0
    %3890 = vmatpush2.msra.mxu0 0.0
    %3891 = vmatprep.subr.mxu0 0.0
    %3892 = vmatpush2.msra.mxu0 0.0
    %3893 = vmatprep.subr.mxu0 0.0
    %3894 = vmatpush2.msra.mxu0 0.0
    %3895 = vmatprep.mubr.f32.mxu0 0.0
    %v3896 = vand.u32 %v72, 4294901760
    %3897 = vmatmul.mubr.f32.gmra.mxu0 %v3896
    %v3898 = vpop.f32.mrf.mxu0
    %v3899 = vadd.f32 %v3818, %v3898
    %v3900 = vpop.f32.mrf.mxu0
    %3901 = vmatprep.mubr.f32.mxu0 0.0
    %v3902 = vand.u32 %v75, 4294901760
    %3903 = vmatmul.mubr.f32.gmra.mxu0 %v3902
    %v3904 = vpop.f32.mrf.mxu0
    %v3905 = vadd.f32 %v3824, %v3904
    %v3906 = vpop.f32.mrf.mxu0
    %3907 = vdwg.mxu0
    %v3908 = vmul.f32 %v3899, 0.33333334
    %v3909 = vmul.f32 %v3905, 0.33333334
    %v3911 = vsel %vm624, %v3376, 0
    %3913 = vmatprep.subr.mxu0 0.0
    %3914 = vmatpush1.msra.mxu0 0.0
    %3915 = vmatprep.subr.mxu0 0.0
    %3916 = vmatpush1.msra.mxu0 0.0
    %3917 = vmatprep.subr.mxu0 0.0
    %3918 = vmatpush1.msra.mxu0 0.0
    %3919 = vmatprep.subr.mxu0 0.0
    %3920 = vmatpush1.msra.mxu0 0.0
    %3921 = vmatprep.subr.mxu0 0.0
    %3922 = vmatpush1.msra.mxu0 0.0
    %3923 = vmatprep.subr.mxu0 0.0
    %3924 = vmatpush1.msra.mxu0 0.0
    %3925 = vmatprep.subr.mxu0 0.0
    %3926 = vmatpush1.msra.mxu0 0.0
    %3927 = vmatprep.subr.mxu0 0.0
    %3928 = vmatpush1.msra.mxu0 0.0
    %3929 = vmatprep.subr.mxu0 0.0
    %3930 = vmatpush1.msra.mxu0 0.0
    %3931 = vmatprep.subr.mxu0 0.0
    %3932 = vmatpush1.msra.mxu0 0.0
    %3933 = vmatprep.subr.mxu0 0.0
    %3934 = vmatpush1.msra.mxu0 0.0
    %3935 = vmatprep.subr.mxu0 0.0
    %3936 = vmatpush1.msra.mxu0 0.0
    %3937 = vmatprep.subr.mxu0 0.0
    %3938 = vmatpush1.msra.mxu0 0.0
    %3939 = vmatprep.subr.mxu0 0.0
    %3940 = vmatpush1.msra.mxu0 0.0
    %3941 = vmatprep.subr.mxu0 0.0
    %v3942 = vand.u32 %v3911, 4294901760
    %3943 = vmatpush1.msra.mxu0 %v3942
    %3944 = vmatprep.subr.mxu0 0.0
    %v3945 = vand.u32 %v3375, 4294901760
    %3946 = vmatpush1.msra.mxu0 %v3945
    %3947 = vmatprep.subr.mxu0 0.0
    %3948 = vmatpush2.msra.mxu0 0.0
    %3949 = vmatprep.subr.mxu0 0.0
    %3950 = vmatpush2.msra.mxu0 0.0
    %3951 = vmatprep.subr.mxu0 0.0
    %3952 = vmatpush2.msra.mxu0 0.0
    %3953 = vmatprep.subr.mxu0 0.0
    %3954 = vmatpush2.msra.mxu0 0.0
    %3955 = vmatprep.subr.mxu0 0.0
    %3956 = vmatpush2.msra.mxu0 0.0
    %3957 = vmatprep.subr.mxu0 0.0
    %3958 = vmatpush2.msra.mxu0 0.0
    %3959 = vmatprep.subr.mxu0 0.0
    %3960 = vmatpush2.msra.mxu0 0.0
    %3961 = vmatprep.subr.mxu0 0.0
    %3962 = vmatpush2.msra.mxu0 0.0
    %3963 = vmatprep.subr.mxu0 0.0
    %3964 = vmatpush2.msra.mxu0 0.0
    %3965 = vmatprep.subr.mxu0 0.0
    %3966 = vmatpush2.msra.mxu0 0.0
    %3967 = vmatprep.subr.mxu0 0.0
    %3968 = vmatpush2.msra.mxu0 0.0
    %3969 = vmatprep.subr.mxu0 0.0
    %3970 = vmatpush2.msra.mxu0 0.0
    %3971 = vmatprep.subr.mxu0 0.0
    %3972 = vmatpush2.msra.mxu0 0.0
    %3973 = vmatprep.subr.mxu0 0.0
    %3974 = vmatpush2.msra.mxu0 0.0
    %3975 = vmatprep.subr.mxu0 0.0
    %3976 = vmatpush2.msra.mxu0 0.0
    %3977 = vmatprep.subr.mxu0 0.0
    %3978 = vmatpush2.msra.mxu0 0.0
    %3979 = vmatprep.mubr.f32.mxu0 0.0
    %v3980 = vand.u32 %v613, 4294901760
    %v3981 = vsub.f32 %v613, %v3980
    %v3982 = vand.u32 %v3981, 4294901760
    %v3983 = vsub.f32 %v3981, %v3982
    %v3984 = vand.u32 %v3983, 4294901760
    %3985 = vmatmul.mubr.f32.gmra.mxu0 %v3984
    %v3986 = vpop.f32.mrf.mxu0
    %v3987 = vadd.f32 0.0, %v3986
    %v3988 = vpop.f32.mrf.mxu0
    %3989 = vmatprep.mubr.f32.mxu0 0.0
    %v3990 = vand.u32 %v616, 4294901760
    %v3991 = vsub.f32 %v616, %v3990
    %v3992 = vand.u32 %v3991, 4294901760
    %v3993 = vsub.f32 %v3991, %v3992
    %v3994 = vand.u32 %v3993, 4294901760
    %3995 = vmatmul.mubr.f32.gmra.mxu0 %v3994
    %v3996 = vpop.f32.mrf.mxu0
    %v3997 = vadd.f32 0.0, %v3996
    %v3998 = vpop.f32.mrf.mxu0
    %3999 = vmatprep.mubr.f32.mxu0 0.0
    %v4000 = vand.u32 %v619, 4294901760
    %v4001 = vsub.f32 %v619, %v4000
    %v4002 = vand.u32 %v4001, 4294901760
    %v4003 = vsub.f32 %v4001, %v4002
    %v4004 = vand.u32 %v4003, 4294901760
    %4005 = vmatmul.mubr.f32.gmra.mxu0 %v4004
    %v4006 = vpop.f32.mrf.mxu0
    %v4007 = vadd.f32 0.0, %v4006
    %v4008 = vpop.f32.mrf.mxu0
    %4009 = vmatprep.mubr.f32.mxu0 0.0
    %v4010 = vand.u32 %v622, 4294901760
    %v4011 = vsub.f32 %v622, %v4010
    %v4012 = vand.u32 %v4011, 4294901760
    %v4013 = vsub.f32 %v4011, %v4012
    %v4014 = vand.u32 %v4013, 4294901760
    %4015 = vmatmul.mubr.f32.gmra.mxu0 %v4014
    %v4016 = vpop.f32.mrf.mxu0
    %v4017 = vadd.f32 0.0, %v4016
    %v4018 = vpop.f32.mrf.mxu0
    %4019 = vdwg.mxu0
    %4020 = vmatprep.subr.mxu0 0.0
    %4021 = vmatpush1.msra.mxu0 0.0
    %4022 = vmatprep.subr.mxu0 0.0
    %4023 = vmatpush1.msra.mxu0 0.0
    %4024 = vmatprep.subr.mxu0 0.0
    %4025 = vmatpush1.msra.mxu0 0.0
    %4026 = vmatprep.subr.mxu0 0.0
    %4027 = vmatpush1.msra.mxu0 0.0
    %4028 = vmatprep.subr.mxu0 0.0
    %4029 = vmatpush1.msra.mxu0 0.0
    %4030 = vmatprep.subr.mxu0 0.0
    %4031 = vmatpush1.msra.mxu0 0.0
    %4032 = vmatprep.subr.mxu0 0.0
    %4033 = vmatpush1.msra.mxu0 0.0
    %4034 = vmatprep.subr.mxu0 0.0
    %4035 = vmatpush1.msra.mxu0 0.0
    %4036 = vmatprep.subr.mxu0 0.0
    %4037 = vmatpush1.msra.mxu0 0.0
    %4038 = vmatprep.subr.mxu0 0.0
    %4039 = vmatpush1.msra.mxu0 0.0
    %4040 = vmatprep.subr.mxu0 0.0
    %4041 = vmatpush1.msra.mxu0 0.0
    %4042 = vmatprep.subr.mxu0 0.0
    %4043 = vmatpush1.msra.mxu0 0.0
    %4044 = vmatprep.subr.mxu0 0.0
    %4045 = vmatpush1.msra.mxu0 0.0
    %4046 = vmatprep.subr.mxu0 0.0
    %4047 = vmatpush1.msra.mxu0 0.0
    %4048 = vmatprep.subr.mxu0 0.0
    %v4049 = vand.u32 %v3911, 4294901760
    %v4050 = vsub.f32 %v3911, %v4049
    %v4051 = vand.u32 %v4050, 4294901760
    %v4052 = vsub.f32 %v4050, %v4051
    %v4053 = vand.u32 %v4052, 4294901760
    %4054 = vmatpush1.msra.mxu0 %v4053
    %4055 = vmatprep.subr.mxu0 0.0
    %v4056 = vand.u32 %v3375, 4294901760
    %v4057 = vsub.f32 %v3375, %v4056
    %v4058 = vand.u32 %v4057, 4294901760
    %v4059 = vsub.f32 %v4057, %v4058
    %v4060 = vand.u32 %v4059, 4294901760
    %4061 = vmatpush1.msra.mxu0 %v4060
    %4062 = vmatprep.subr.mxu0 0.0
    %4063 = vmatpush2.msra.mxu0 0.0
    %4064 = vmatprep.subr.mxu0 0.0
    %4065 = vmatpush2.msra.mxu0 0.0
    %4066 = vmatprep.subr.mxu0 0.0
    %4067 = vmatpush2.msra.mxu0 0.0
    %4068 = vmatprep.subr.mxu0 0.0
    %4069 = vmatpush2.msra.mxu0 0.0
    %4070 = vmatprep.subr.mxu0 0.0
    %4071 = vmatpush2.msra.mxu0 0.0
    %4072 = vmatprep.subr.mxu0 0.0
    %4073 = vmatpush2.msra.mxu0 0.0
    %4074 = vmatprep.subr.mxu0 0.0
    %4075 = vmatpush2.msra.mxu0 0.0
    %4076 = vmatprep.subr.mxu0 0.0
    %4077 = vmatpush2.msra.mxu0 0.0
    %4078 = vmatprep.subr.mxu0 0.0
    %4079 = vmatpush2.msra.mxu0 0.0
    %4080 = vmatprep.subr.mxu0 0.0
    %4081 = vmatpush2.msra.mxu0 0.0
    %4082 = vmatprep.subr.mxu0 0.0
    %4083 = vmatpush2.msra.mxu0 0.0
    %4084 = vmatprep.subr.mxu0 0.0
    %4085 = vmatpush2.msra.mxu0 0.0
    %4086 = vmatprep.subr.mxu0 0.0
    %4087 = vmatpush2.msra.mxu0 0.0
    %4088 = vmatprep.subr.mxu0 0.0
    %4089 = vmatpush2.msra.mxu0 0.0
    %4090 = vmatprep.subr.mxu0 0.0
    %4091 = vmatpush2.msra.mxu0 0.0
    %4092 = vmatprep.subr.mxu0 0.0
    %4093 = vmatpush2.msra.mxu0 0.0
    %4094 = vmatprep.mubr.f32.mxu0 0.0
    %v4095 = vand.u32 %v613, 4294901760
    %4096 = vmatmul.mubr.f32.gmra.mxu0 %v4095
    %v4097 = vpop.f32.mrf.mxu0
    %v4098 = vadd.f32 %v3987, %v4097
    %v4099 = vpop.f32.mrf.mxu0
    %4100 = vmatprep.mubr.f32.mxu0 0.0
    %v4101 = vand.u32 %v616, 4294901760
    %4102 = vmatmul.mubr.f32.gmra.mxu0 %v4101
    %v4103 = vpop.f32.mrf.mxu0
    %v4104 = vadd.f32 %v3997, %v4103
    %v4105 = vpop.f32.mrf.mxu0
    %4106 = vmatprep.mubr.f32.mxu0 0.0
    %v4107 = vand.u32 %v619, 4294901760
    %4108 = vmatmul.mubr.f32.gmra.mxu0 %v4107
    %v4109 = vpop.f32.mrf.mxu0
    %v4110 = vadd.f32 %v4007, %v4109
    %v4111 = vpop.f32.mrf.mxu0
    %4112 = vmatprep.mubr.f32.mxu0 0.0
    %v4113 = vand.u32 %v622, 4294901760
    %4114 = vmatmul.mubr.f32.gmra.mxu0 %v4113
    %v4115 = vpop.f32.mrf.mxu0
    %v4116 = vadd.f32 %v4017, %v4115
    %v4117 = vpop.f32.mrf.mxu0
    %4118 = vdwg.mxu0
    %4119 = vmatprep.subr.mxu0 0.0
    %4120 = vmatpush1.msra.mxu0 0.0
    %4121 = vmatprep.subr.mxu0 0.0
    %4122 = vmatpush1.msra.mxu0 0.0
    %4123 = vmatprep.subr.mxu0 0.0
    %4124 = vmatpush1.msra.mxu0 0.0
    %4125 = vmatprep.subr.mxu0 0.0
    %4126 = vmatpush1.msra.mxu0 0.0
    %4127 = vmatprep.subr.mxu0 0.0
    %4128 = vmatpush1.msra.mxu0 0.0
    %4129 = vmatprep.subr.mxu0 0.0
    %4130 = vmatpush1.msra.mxu0 0.0
    %4131 = vmatprep.subr.mxu0 0.0
    %4132 = vmatpush1.msra.mxu0 0.0
    %4133 = vmatprep.subr.mxu0 0.0
    %4134 = vmatpush1.msra.mxu0 0.0
    %4135 = vmatprep.subr.mxu0 0.0
    %4136 = vmatpush1.msra.mxu0 0.0
    %4137 = vmatprep.subr.mxu0 0.0
    %4138 = vmatpush1.msra.mxu0 0.0
    %4139 = vmatprep.subr.mxu0 0.0
    %4140 = vmatpush1.msra.mxu0 0.0
    %4141 = vmatprep.subr.mxu0 0.0
    %4142 = vmatpush1.msra.mxu0 0.0
    %4143 = vmatprep.subr.mxu0 0.0
    %4144 = vmatpush1.msra.mxu0 0.0
    %4145 = vmatprep.subr.mxu0 0.0
    %4146 = vmatpush1.msra.mxu0 0.0
    %4147 = vmatprep.subr.mxu0 0.0
    %v4148 = vand.u32 %v3911, 4294901760
    %v4149 = vsub.f32 %v3911, %v4148
    %4150 = vmatpush1.msra.mxu0 %v4149
    %4151 = vmatprep.subr.mxu0 0.0
    %v4152 = vand.u32 %v3375, 4294901760
    %v4153 = vsub.f32 %v3375, %v4152
    %4154 = vmatpush1.msra.mxu0 %v4153
    %4155 = vmatprep.subr.mxu0 0.0
    %4156 = vmatpush2.msra.mxu0 0.0
    %4157 = vmatprep.subr.mxu0 0.0
    %4158 = vmatpush2.msra.mxu0 0.0
    %4159 = vmatprep.subr.mxu0 0.0
    %4160 = vmatpush2.msra.mxu0 0.0
    %4161 = vmatprep.subr.mxu0 0.0
    %4162 = vmatpush2.msra.mxu0 0.0
    %4163 = vmatprep.subr.mxu0 0.0
    %4164 = vmatpush2.msra.mxu0 0.0
    %4165 = vmatprep.subr.mxu0 0.0
    %4166 = vmatpush2.msra.mxu0 0.0
    %4167 = vmatprep.subr.mxu0 0.0
    %4168 = vmatpush2.msra.mxu0 0.0
    %4169 = vmatprep.subr.mxu0 0.0
    %4170 = vmatpush2.msra.mxu0 0.0
    %4171 = vmatprep.subr.mxu0 0.0
    %4172 = vmatpush2.msra.mxu0 0.0
    %4173 = vmatprep.subr.mxu0 0.0
    %4174 = vmatpush2.msra.mxu0 0.0
    %4175 = vmatprep.subr.mxu0 0.0
    %4176 = vmatpush2.msra.mxu0 0.0
    %4177 = vmatprep.subr.mxu0 0.0
    %4178 = vmatpush2.msra.mxu0 0.0
    %4179 = vmatprep.subr.mxu0 0.0
    %4180 = vmatpush2.msra.mxu0 0.0
    %4181 = vmatprep.subr.mxu0 0.0
    %4182 = vmatpush2.msra.mxu0 0.0
    %4183 = vmatprep.subr.mxu0 0.0
    %4184 = vmatpush2.msra.mxu0 0.0
    %4185 = vmatprep.subr.mxu0 0.0
    %4186 = vmatpush2.msra.mxu0 0.0
    %4187 = vmatprep.mubr.f32.mxu0 0.0
    %v4188 = vand.u32 %v613, 4294901760
    %v4189 = vsub.f32 %v613, %v4188
    %4190 = vmatmul.mubr.f32.gmra.mxu0 %v4189
    %v4191 = vpop.f32.mrf.mxu0
    %v4192 = vadd.f32 %v4098, %v4191
    %v4193 = vpop.f32.mrf.mxu0
    %4194 = vmatprep.mubr.f32.mxu0 0.0
    %v4195 = vand.u32 %v616, 4294901760
    %v4196 = vsub.f32 %v616, %v4195
    %4197 = vmatmul.mubr.f32.gmra.mxu0 %v4196
    %v4198 = vpop.f32.mrf.mxu0
    %v4199 = vadd.f32 %v4104, %v4198
    %v4200 = vpop.f32.mrf.mxu0
    %4201 = vmatprep.mubr.f32.mxu0 0.0
    %v4202 = vand.u32 %v619, 4294901760
    %v4203 = vsub.f32 %v619, %v4202
    %4204 = vmatmul.mubr.f32.gmra.mxu0 %v4203
    %v4205 = vpop.f32.mrf.mxu0
    %v4206 = vadd.f32 %v4110, %v4205
    %v4207 = vpop.f32.mrf.mxu0
    %4208 = vmatprep.mubr.f32.mxu0 0.0
    %v4209 = vand.u32 %v622, 4294901760
    %v4210 = vsub.f32 %v622, %v4209
    %4211 = vmatmul.mubr.f32.gmra.mxu0 %v4210
    %v4212 = vpop.f32.mrf.mxu0
    %v4213 = vadd.f32 %v4116, %v4212
    %v4214 = vpop.f32.mrf.mxu0
    %4215 = vdwg.mxu0
    %4216 = vmatprep.subr.mxu0 0.0
    %4217 = vmatpush1.msra.mxu0 0.0
    %4218 = vmatprep.subr.mxu0 0.0
    %4219 = vmatpush1.msra.mxu0 0.0
    %4220 = vmatprep.subr.mxu0 0.0
    %4221 = vmatpush1.msra.mxu0 0.0
    %4222 = vmatprep.subr.mxu0 0.0
    %4223 = vmatpush1.msra.mxu0 0.0
    %4224 = vmatprep.subr.mxu0 0.0
    %4225 = vmatpush1.msra.mxu0 0.0
    %4226 = vmatprep.subr.mxu0 0.0
    %4227 = vmatpush1.msra.mxu0 0.0
    %4228 = vmatprep.subr.mxu0 0.0
    %4229 = vmatpush1.msra.mxu0 0.0
    %4230 = vmatprep.subr.mxu0 0.0
    %4231 = vmatpush1.msra.mxu0 0.0
    %4232 = vmatprep.subr.mxu0 0.0
    %4233 = vmatpush1.msra.mxu0 0.0
    %4234 = vmatprep.subr.mxu0 0.0
    %4235 = vmatpush1.msra.mxu0 0.0
    %4236 = vmatprep.subr.mxu0 0.0
    %4237 = vmatpush1.msra.mxu0 0.0
    %4238 = vmatprep.subr.mxu0 0.0
    %4239 = vmatpush1.msra.mxu0 0.0
    %4240 = vmatprep.subr.mxu0 0.0
    %4241 = vmatpush1.msra.mxu0 0.0
    %4242 = vmatprep.subr.mxu0 0.0
    %4243 = vmatpush1.msra.mxu0 0.0
    %4244 = vmatprep.subr.mxu0 0.0
    %v4245 = vand.u32 %v3911, 4294901760
    %4246 = vmatpush1.msra.mxu0 %v4245
    %4247 = vmatprep.subr.mxu0 0.0
    %v4248 = vand.u32 %v3375, 4294901760
    %4249 = vmatpush1.msra.mxu0 %v4248
    %4250 = vmatprep.subr.mxu0 0.0
    %4251 = vmatpush2.msra.mxu0 0.0
    %4252 = vmatprep.subr.mxu0 0.0
    %4253 = vmatpush2.msra.mxu0 0.0
    %4254 = vmatprep.subr.mxu0 0.0
    %4255 = vmatpush2.msra.mxu0 0.0
    %4256 = vmatprep.subr.mxu0 0.0
    %4257 = vmatpush2.msra.mxu0 0.0
    %4258 = vmatprep.subr.mxu0 0.0
    %4259 = vmatpush2.msra.mxu0 0.0
    %4260 = vmatprep.subr.mxu0 0.0
    %4261 = vmatpush2.msra.mxu0 0.0
    %4262 = vmatprep.subr.mxu0 0.0
    %4263 = vmatpush2.msra.mxu0 0.0
    %4264 = vmatprep.subr.mxu0 0.0
    %4265 = vmatpush2.msra.mxu0 0.0
    %4266 = vmatprep.subr.mxu0 0.0
    %4267 = vmatpush2.msra.mxu0 0.0
    %4268 = vmatprep.subr.mxu0 0.0
    %4269 = vmatpush2.msra.mxu0 0.0
    %4270 = vmatprep.subr.mxu0 0.0
    %4271 = vmatpush2.msra.mxu0 0.0
    %4272 = vmatprep.subr.mxu0 0.0
    %4273 = vmatpush2.msra.mxu0 0.0
    %4274 = vmatprep.subr.mxu0 0.0
    %4275 = vmatpush2.msra.mxu0 0.0
    %4276 = vmatprep.subr.mxu0 0.0
    %4277 = vmatpush2.msra.mxu0 0.0
    %4278 = vmatprep.subr.mxu0 0.0
    %4279 = vmatpush2.msra.mxu0 0.0
    %4280 = vmatprep.subr.mxu0 0.0
    %4281 = vmatpush2.msra.mxu0 0.0
    %4282 = vmatprep.mubr.f32.mxu0 0.0
    %v4283 = vand.u32 %v613, 4294901760
    %v4284 = vsub.f32 %v613, %v4283
    %v4285 = vand.u32 %v4284, 4294901760
    %4286 = vmatmul.mubr.f32.gmra.mxu0 %v4285
    %v4287 = vpop.f32.mrf.mxu0
    %v4288 = vadd.f32 %v4192, %v4287
    %v4289 = vpop.f32.mrf.mxu0
    %4290 = vmatprep.mubr.f32.mxu0 0.0
    %v4291 = vand.u32 %v616, 4294901760
    %v4292 = vsub.f32 %v616, %v4291
    %v4293 = vand.u32 %v4292, 4294901760
    %4294 = vmatmul.mubr.f32.gmra.mxu0 %v4293
    %v4295 = vpop.f32.mrf.mxu0
    %v4296 = vadd.f32 %v4199, %v4295
    %v4297 = vpop.f32.mrf.mxu0
    %4298 = vmatprep.mubr.f32.mxu0 0.0
    %v4299 = vand.u32 %v619, 4294901760
    %v4300 = vsub.f32 %v619, %v4299
    %v4301 = vand.u32 %v4300, 4294901760
    %4302 = vmatmul.mubr.f32.gmra.mxu0 %v4301
    %v4303 = vpop.f32.mrf.mxu0
    %v4304 = vadd.f32 %v4206, %v4303
    %v4305 = vpop.f32.mrf.mxu0
    %4306 = vmatprep.mubr.f32.mxu0 0.0
    %v4307 = vand.u32 %v622, 4294901760
    %v4308 = vsub.f32 %v622, %v4307
    %v4309 = vand.u32 %v4308, 4294901760
    %4310 = vmatmul.mubr.f32.gmra.mxu0 %v4309
    %v4311 = vpop.f32.mrf.mxu0
    %v4312 = vadd.f32 %v4213, %v4311
    %v4313 = vpop.f32.mrf.mxu0
    %4314 = vdwg.mxu0
    %4315 = vmatprep.subr.mxu0 0.0
    %4316 = vmatpush1.msra.mxu0 0.0
    %4317 = vmatprep.subr.mxu0 0.0
    %4318 = vmatpush1.msra.mxu0 0.0
    %4319 = vmatprep.subr.mxu0 0.0
    %4320 = vmatpush1.msra.mxu0 0.0
    %4321 = vmatprep.subr.mxu0 0.0
    %4322 = vmatpush1.msra.mxu0 0.0
    %4323 = vmatprep.subr.mxu0 0.0
    %4324 = vmatpush1.msra.mxu0 0.0
    %4325 = vmatprep.subr.mxu0 0.0
    %4326 = vmatpush1.msra.mxu0 0.0
    %4327 = vmatprep.subr.mxu0 0.0
    %4328 = vmatpush1.msra.mxu0 0.0
    %4329 = vmatprep.subr.mxu0 0.0
    %4330 = vmatpush1.msra.mxu0 0.0
    %4331 = vmatprep.subr.mxu0 0.0
    %4332 = vmatpush1.msra.mxu0 0.0
    %4333 = vmatprep.subr.mxu0 0.0
    %4334 = vmatpush1.msra.mxu0 0.0
    %4335 = vmatprep.subr.mxu0 0.0
    %4336 = vmatpush1.msra.mxu0 0.0
    %4337 = vmatprep.subr.mxu0 0.0
    %4338 = vmatpush1.msra.mxu0 0.0
    %4339 = vmatprep.subr.mxu0 0.0
    %4340 = vmatpush1.msra.mxu0 0.0
    %4341 = vmatprep.subr.mxu0 0.0
    %4342 = vmatpush1.msra.mxu0 0.0
    %4343 = vmatprep.subr.mxu0 0.0
    %v4344 = vand.u32 %v3911, 4294901760
    %v4345 = vsub.f32 %v3911, %v4344
    %v4346 = vand.u32 %v4345, 4294901760
    %4347 = vmatpush1.msra.mxu0 %v4346
    %4348 = vmatprep.subr.mxu0 0.0
    %v4349 = vand.u32 %v3375, 4294901760
    %v4350 = vsub.f32 %v3375, %v4349
    %v4351 = vand.u32 %v4350, 4294901760
    %4352 = vmatpush1.msra.mxu0 %v4351
    %4353 = vmatprep.subr.mxu0 0.0
    %4354 = vmatpush2.msra.mxu0 0.0
    %4355 = vmatprep.subr.mxu0 0.0
    %4356 = vmatpush2.msra.mxu0 0.0
    %4357 = vmatprep.subr.mxu0 0.0
    %4358 = vmatpush2.msra.mxu0 0.0
    %4359 = vmatprep.subr.mxu0 0.0
    %4360 = vmatpush2.msra.mxu0 0.0
    %4361 = vmatprep.subr.mxu0 0.0
    %4362 = vmatpush2.msra.mxu0 0.0
    %4363 = vmatprep.subr.mxu0 0.0
    %4364 = vmatpush2.msra.mxu0 0.0
    %4365 = vmatprep.subr.mxu0 0.0
    %4366 = vmatpush2.msra.mxu0 0.0
    %4367 = vmatprep.subr.mxu0 0.0
    %4368 = vmatpush2.msra.mxu0 0.0
    %4369 = vmatprep.subr.mxu0 0.0
    %4370 = vmatpush2.msra.mxu0 0.0
    %4371 = vmatprep.subr.mxu0 0.0
    %4372 = vmatpush2.msra.mxu0 0.0
    %4373 = vmatprep.subr.mxu0 0.0
    %4374 = vmatpush2.msra.mxu0 0.0
    %4375 = vmatprep.subr.mxu0 0.0
    %4376 = vmatpush2.msra.mxu0 0.0
    %4377 = vmatprep.subr.mxu0 0.0
    %4378 = vmatpush2.msra.mxu0 0.0
    %4379 = vmatprep.subr.mxu0 0.0
    %4380 = vmatpush2.msra.mxu0 0.0
    %4381 = vmatprep.subr.mxu0 0.0
    %4382 = vmatpush2.msra.mxu0 0.0
    %4383 = vmatprep.subr.mxu0 0.0
    %4384 = vmatpush2.msra.mxu0 0.0
    %4385 = vmatprep.mubr.f32.mxu0 0.0
    %v4386 = vand.u32 %v613, 4294901760
    %4387 = vmatmul.mubr.f32.gmra.mxu0 %v4386
    %v4388 = vpop.f32.mrf.mxu0
    %v4389 = vadd.f32 %v4288, %v4388
    %v4390 = vpop.f32.mrf.mxu0
    %4391 = vmatprep.mubr.f32.mxu0 0.0
    %v4392 = vand.u32 %v616, 4294901760
    %4393 = vmatmul.mubr.f32.gmra.mxu0 %v4392
    %v4394 = vpop.f32.mrf.mxu0
    %v4395 = vadd.f32 %v4296, %v4394
    %v4396 = vpop.f32.mrf.mxu0
    %4397 = vmatprep.mubr.f32.mxu0 0.0
    %v4398 = vand.u32 %v619, 4294901760
    %4399 = vmatmul.mubr.f32.gmra.mxu0 %v4398
    %v4400 = vpop.f32.mrf.mxu0
    %v4401 = vadd.f32 %v4304, %v4400
    %v4402 = vpop.f32.mrf.mxu0
    %4403 = vmatprep.mubr.f32.mxu0 0.0
    %v4404 = vand.u32 %v622, 4294901760
    %4405 = vmatmul.mubr.f32.gmra.mxu0 %v4404
    %v4406 = vpop.f32.mrf.mxu0
    %v4407 = vadd.f32 %v4312, %v4406
    %v4408 = vpop.f32.mrf.mxu0
    %4409 = vdwg.mxu0
    %4410 = vmatprep.subr.mxu0 0.0
    %4411 = vmatpush1.msra.mxu0 0.0
    %4412 = vmatprep.subr.mxu0 0.0
    %4413 = vmatpush1.msra.mxu0 0.0
    %4414 = vmatprep.subr.mxu0 0.0
    %4415 = vmatpush1.msra.mxu0 0.0
    %4416 = vmatprep.subr.mxu0 0.0
    %4417 = vmatpush1.msra.mxu0 0.0
    %4418 = vmatprep.subr.mxu0 0.0
    %4419 = vmatpush1.msra.mxu0 0.0
    %4420 = vmatprep.subr.mxu0 0.0
    %4421 = vmatpush1.msra.mxu0 0.0
    %4422 = vmatprep.subr.mxu0 0.0
    %4423 = vmatpush1.msra.mxu0 0.0
    %4424 = vmatprep.subr.mxu0 0.0
    %4425 = vmatpush1.msra.mxu0 0.0
    %4426 = vmatprep.subr.mxu0 0.0
    %4427 = vmatpush1.msra.mxu0 0.0
    %4428 = vmatprep.subr.mxu0 0.0
    %4429 = vmatpush1.msra.mxu0 0.0
    %4430 = vmatprep.subr.mxu0 0.0
    %4431 = vmatpush1.msra.mxu0 0.0
    %4432 = vmatprep.subr.mxu0 0.0
    %4433 = vmatpush1.msra.mxu0 0.0
    %4434 = vmatprep.subr.mxu0 0.0
    %4435 = vmatpush1.msra.mxu0 0.0
    %4436 = vmatprep.subr.mxu0 0.0
    %4437 = vmatpush1.msra.mxu0 0.0
    %4438 = vmatprep.subr.mxu0 0.0
    %v4439 = vand.u32 %v3911, 4294901760
    %4440 = vmatpush1.msra.mxu0 %v4439
    %4441 = vmatprep.subr.mxu0 0.0
    %v4442 = vand.u32 %v3375, 4294901760
    %4443 = vmatpush1.msra.mxu0 %v4442
    %4444 = vmatprep.subr.mxu0 0.0
    %4445 = vmatpush2.msra.mxu0 0.0
    %4446 = vmatprep.subr.mxu0 0.0
    %4447 = vmatpush2.msra.mxu0 0.0
    %4448 = vmatprep.subr.mxu0 0.0
    %4449 = vmatpush2.msra.mxu0 0.0
    %4450 = vmatprep.subr.mxu0 0.0
    %4451 = vmatpush2.msra.mxu0 0.0
    %4452 = vmatprep.subr.mxu0 0.0
    %4453 = vmatpush2.msra.mxu0 0.0
    %4454 = vmatprep.subr.mxu0 0.0
    %4455 = vmatpush2.msra.mxu0 0.0
    %4456 = vmatprep.subr.mxu0 0.0
    %4457 = vmatpush2.msra.mxu0 0.0
    %4458 = vmatprep.subr.mxu0 0.0
    %4459 = vmatpush2.msra.mxu0 0.0
    %4460 = vmatprep.subr.mxu0 0.0
    %4461 = vmatpush2.msra.mxu0 0.0
    %4462 = vmatprep.subr.mxu0 0.0
    %4463 = vmatpush2.msra.mxu0 0.0
    %4464 = vmatprep.subr.mxu0 0.0
    %4465 = vmatpush2.msra.mxu0 0.0
    %4466 = vmatprep.subr.mxu0 0.0
    %4467 = vmatpush2.msra.mxu0 0.0
    %4468 = vmatprep.subr.mxu0 0.0
    %4469 = vmatpush2.msra.mxu0 0.0
    %4470 = vmatprep.subr.mxu0 0.0
    %4471 = vmatpush2.msra.mxu0 0.0
    %4472 = vmatprep.subr.mxu0 0.0
    %4473 = vmatpush2.msra.mxu0 0.0
    %4474 = vmatprep.subr.mxu0 0.0
    %4475 = vmatpush2.msra.mxu0 0.0
    %4476 = vmatprep.mubr.f32.mxu0 0.0
    %v4477 = vand.u32 %v613, 4294901760
    %4478 = vmatmul.mubr.f32.gmra.mxu0 %v4477
    %v4479 = vpop.f32.mrf.mxu0
    %v4480 = vadd.f32 %v4389, %v4479
    %v4481 = vpop.f32.mrf.mxu0
    %4482 = vmatprep.mubr.f32.mxu0 0.0
    %v4483 = vand.u32 %v616, 4294901760
    %4484 = vmatmul.mubr.f32.gmra.mxu0 %v4483
    %v4485 = vpop.f32.mrf.mxu0
    %v4486 = vadd.f32 %v4395, %v4485
    %v4487 = vpop.f32.mrf.mxu0
    %4488 = vmatprep.mubr.f32.mxu0 0.0
    %v4489 = vand.u32 %v619, 4294901760
    %4490 = vmatmul.mubr.f32.gmra.mxu0 %v4489
    %v4491 = vpop.f32.mrf.mxu0
    %v4492 = vadd.f32 %v4401, %v4491
    %v4493 = vpop.f32.mrf.mxu0
    %4494 = vmatprep.mubr.f32.mxu0 0.0
    %v4495 = vand.u32 %v622, 4294901760
    %4496 = vmatmul.mubr.f32.gmra.mxu0 %v4495
    %v4497 = vpop.f32.mrf.mxu0
    %v4498 = vadd.f32 %v4407, %v4497
    %v4499 = vpop.f32.mrf.mxu0
    %4500 = vdwg.mxu0
    %v4501 = vsub.f32 %v50, %v4480
    %v4502 = vsub.f32 %v51, %v4486
    %v4503 = vsub.f32 %v52, %v4492
    %v4504 = vsub.f32 %v53, %v4498
    %v4506 = vsel %vm624, %v3909, 0
    %4508 = vmatprep.subr.mxu0 0.0
    %4509 = vmatpush1.msra.mxu0 0.0
    %4510 = vmatprep.subr.mxu0 0.0
    %4511 = vmatpush1.msra.mxu0 0.0
    %4512 = vmatprep.subr.mxu0 0.0
    %4513 = vmatpush1.msra.mxu0 0.0
    %4514 = vmatprep.subr.mxu0 0.0
    %4515 = vmatpush1.msra.mxu0 0.0
    %4516 = vmatprep.subr.mxu0 0.0
    %4517 = vmatpush1.msra.mxu0 0.0
    %4518 = vmatprep.subr.mxu0 0.0
    %4519 = vmatpush1.msra.mxu0 0.0
    %4520 = vmatprep.subr.mxu0 0.0
    %4521 = vmatpush1.msra.mxu0 0.0
    %4522 = vmatprep.subr.mxu0 0.0
    %4523 = vmatpush1.msra.mxu0 0.0
    %4524 = vmatprep.subr.mxu0 0.0
    %4525 = vmatpush1.msra.mxu0 0.0
    %4526 = vmatprep.subr.mxu0 0.0
    %4527 = vmatpush1.msra.mxu0 0.0
    %4528 = vmatprep.subr.mxu0 0.0
    %4529 = vmatpush1.msra.mxu0 0.0
    %4530 = vmatprep.subr.mxu0 0.0
    %4531 = vmatpush1.msra.mxu0 0.0
    %4532 = vmatprep.subr.mxu0 0.0
    %4533 = vmatpush1.msra.mxu0 0.0
    %4534 = vmatprep.subr.mxu0 0.0
    %4535 = vmatpush1.msra.mxu0 0.0
    %4536 = vmatprep.subr.mxu0 0.0
    %v4537 = vand.u32 %v4506, 4294901760
    %4538 = vmatpush1.msra.mxu0 %v4537
    %4539 = vmatprep.subr.mxu0 0.0
    %v4540 = vand.u32 %v3908, 4294901760
    %4541 = vmatpush1.msra.mxu0 %v4540
    %4542 = vmatprep.subr.mxu0 0.0
    %4543 = vmatpush2.msra.mxu0 0.0
    %4544 = vmatprep.subr.mxu0 0.0
    %4545 = vmatpush2.msra.mxu0 0.0
    %4546 = vmatprep.subr.mxu0 0.0
    %4547 = vmatpush2.msra.mxu0 0.0
    %4548 = vmatprep.subr.mxu0 0.0
    %4549 = vmatpush2.msra.mxu0 0.0
    %4550 = vmatprep.subr.mxu0 0.0
    %4551 = vmatpush2.msra.mxu0 0.0
    %4552 = vmatprep.subr.mxu0 0.0
    %4553 = vmatpush2.msra.mxu0 0.0
    %4554 = vmatprep.subr.mxu0 0.0
    %4555 = vmatpush2.msra.mxu0 0.0
    %4556 = vmatprep.subr.mxu0 0.0
    %4557 = vmatpush2.msra.mxu0 0.0
    %4558 = vmatprep.subr.mxu0 0.0
    %4559 = vmatpush2.msra.mxu0 0.0
    %4560 = vmatprep.subr.mxu0 0.0
    %4561 = vmatpush2.msra.mxu0 0.0
    %4562 = vmatprep.subr.mxu0 0.0
    %4563 = vmatpush2.msra.mxu0 0.0
    %4564 = vmatprep.subr.mxu0 0.0
    %4565 = vmatpush2.msra.mxu0 0.0
    %4566 = vmatprep.subr.mxu0 0.0
    %4567 = vmatpush2.msra.mxu0 0.0
    %4568 = vmatprep.subr.mxu0 0.0
    %4569 = vmatpush2.msra.mxu0 0.0
    %4570 = vmatprep.subr.mxu0 0.0
    %4571 = vmatpush2.msra.mxu0 0.0
    %4572 = vmatprep.subr.mxu0 0.0
    %4573 = vmatpush2.msra.mxu0 0.0
    %4574 = vmatprep.mubr.f32.mxu0 0.0
    %v4575 = vand.u32 %v613, 4294901760
    %v4576 = vsub.f32 %v613, %v4575
    %v4577 = vand.u32 %v4576, 4294901760
    %v4578 = vsub.f32 %v4576, %v4577
    %v4579 = vand.u32 %v4578, 4294901760
    %4580 = vmatmul.mubr.f32.gmra.mxu0 %v4579
    %v4581 = vpop.f32.mrf.mxu0
    %v4582 = vadd.f32 0.0, %v4581
    %v4583 = vpop.f32.mrf.mxu0
    %4584 = vmatprep.mubr.f32.mxu0 0.0
    %v4585 = vand.u32 %v616, 4294901760
    %v4586 = vsub.f32 %v616, %v4585
    %v4587 = vand.u32 %v4586, 4294901760
    %v4588 = vsub.f32 %v4586, %v4587
    %v4589 = vand.u32 %v4588, 4294901760
    %4590 = vmatmul.mubr.f32.gmra.mxu0 %v4589
    %v4591 = vpop.f32.mrf.mxu0
    %v4592 = vadd.f32 0.0, %v4591
    %v4593 = vpop.f32.mrf.mxu0
    %4594 = vmatprep.mubr.f32.mxu0 0.0
    %v4595 = vand.u32 %v619, 4294901760
    %v4596 = vsub.f32 %v619, %v4595
    %v4597 = vand.u32 %v4596, 4294901760
    %v4598 = vsub.f32 %v4596, %v4597
    %v4599 = vand.u32 %v4598, 4294901760
    %4600 = vmatmul.mubr.f32.gmra.mxu0 %v4599
    %v4601 = vpop.f32.mrf.mxu0
    %v4602 = vadd.f32 0.0, %v4601
    %v4603 = vpop.f32.mrf.mxu0
    %4604 = vmatprep.mubr.f32.mxu0 0.0
    %v4605 = vand.u32 %v622, 4294901760
    %v4606 = vsub.f32 %v622, %v4605
    %v4607 = vand.u32 %v4606, 4294901760
    %v4608 = vsub.f32 %v4606, %v4607
    %v4609 = vand.u32 %v4608, 4294901760
    %4610 = vmatmul.mubr.f32.gmra.mxu0 %v4609
    %v4611 = vpop.f32.mrf.mxu0
    %v4612 = vadd.f32 0.0, %v4611
    %v4613 = vpop.f32.mrf.mxu0
    %4614 = vdwg.mxu0
    %4615 = vmatprep.subr.mxu0 0.0
    %4616 = vmatpush1.msra.mxu0 0.0
    %4617 = vmatprep.subr.mxu0 0.0
    %4618 = vmatpush1.msra.mxu0 0.0
    %4619 = vmatprep.subr.mxu0 0.0
    %4620 = vmatpush1.msra.mxu0 0.0
    %4621 = vmatprep.subr.mxu0 0.0
    %4622 = vmatpush1.msra.mxu0 0.0
    %4623 = vmatprep.subr.mxu0 0.0
    %4624 = vmatpush1.msra.mxu0 0.0
    %4625 = vmatprep.subr.mxu0 0.0
    %4626 = vmatpush1.msra.mxu0 0.0
    %4627 = vmatprep.subr.mxu0 0.0
    %4628 = vmatpush1.msra.mxu0 0.0
    %4629 = vmatprep.subr.mxu0 0.0
    %4630 = vmatpush1.msra.mxu0 0.0
    %4631 = vmatprep.subr.mxu0 0.0
    %4632 = vmatpush1.msra.mxu0 0.0
    %4633 = vmatprep.subr.mxu0 0.0
    %4634 = vmatpush1.msra.mxu0 0.0
    %4635 = vmatprep.subr.mxu0 0.0
    %4636 = vmatpush1.msra.mxu0 0.0
    %4637 = vmatprep.subr.mxu0 0.0
    %4638 = vmatpush1.msra.mxu0 0.0
    %4639 = vmatprep.subr.mxu0 0.0
    %4640 = vmatpush1.msra.mxu0 0.0
    %4641 = vmatprep.subr.mxu0 0.0
    %4642 = vmatpush1.msra.mxu0 0.0
    %4643 = vmatprep.subr.mxu0 0.0
    %v4644 = vand.u32 %v4506, 4294901760
    %v4645 = vsub.f32 %v4506, %v4644
    %v4646 = vand.u32 %v4645, 4294901760
    %v4647 = vsub.f32 %v4645, %v4646
    %v4648 = vand.u32 %v4647, 4294901760
    %4649 = vmatpush1.msra.mxu0 %v4648
    %4650 = vmatprep.subr.mxu0 0.0
    %v4651 = vand.u32 %v3908, 4294901760
    %v4652 = vsub.f32 %v3908, %v4651
    %v4653 = vand.u32 %v4652, 4294901760
    %v4654 = vsub.f32 %v4652, %v4653
    %v4655 = vand.u32 %v4654, 4294901760
    %4656 = vmatpush1.msra.mxu0 %v4655
    %4657 = vmatprep.subr.mxu0 0.0
    %4658 = vmatpush2.msra.mxu0 0.0
    %4659 = vmatprep.subr.mxu0 0.0
    %4660 = vmatpush2.msra.mxu0 0.0
    %4661 = vmatprep.subr.mxu0 0.0
    %4662 = vmatpush2.msra.mxu0 0.0
    %4663 = vmatprep.subr.mxu0 0.0
    %4664 = vmatpush2.msra.mxu0 0.0
    %4665 = vmatprep.subr.mxu0 0.0
    %4666 = vmatpush2.msra.mxu0 0.0
    %4667 = vmatprep.subr.mxu0 0.0
    %4668 = vmatpush2.msra.mxu0 0.0
    %4669 = vmatprep.subr.mxu0 0.0
    %4670 = vmatpush2.msra.mxu0 0.0
    %4671 = vmatprep.subr.mxu0 0.0
    %4672 = vmatpush2.msra.mxu0 0.0
    %4673 = vmatprep.subr.mxu0 0.0
    %4674 = vmatpush2.msra.mxu0 0.0
    %4675 = vmatprep.subr.mxu0 0.0
    %4676 = vmatpush2.msra.mxu0 0.0
    %4677 = vmatprep.subr.mxu0 0.0
    %4678 = vmatpush2.msra.mxu0 0.0
    %4679 = vmatprep.subr.mxu0 0.0
    %4680 = vmatpush2.msra.mxu0 0.0
    %4681 = vmatprep.subr.mxu0 0.0
    %4682 = vmatpush2.msra.mxu0 0.0
    %4683 = vmatprep.subr.mxu0 0.0
    %4684 = vmatpush2.msra.mxu0 0.0
    %4685 = vmatprep.subr.mxu0 0.0
    %4686 = vmatpush2.msra.mxu0 0.0
    %4687 = vmatprep.subr.mxu0 0.0
    %4688 = vmatpush2.msra.mxu0 0.0
    %4689 = vmatprep.mubr.f32.mxu0 0.0
    %v4690 = vand.u32 %v613, 4294901760
    %4691 = vmatmul.mubr.f32.gmra.mxu0 %v4690
    %v4692 = vpop.f32.mrf.mxu0
    %v4693 = vadd.f32 %v4582, %v4692
    %v4694 = vpop.f32.mrf.mxu0
    %4695 = vmatprep.mubr.f32.mxu0 0.0
    %v4696 = vand.u32 %v616, 4294901760
    %4697 = vmatmul.mubr.f32.gmra.mxu0 %v4696
    %v4698 = vpop.f32.mrf.mxu0
    %v4699 = vadd.f32 %v4592, %v4698
    %v4700 = vpop.f32.mrf.mxu0
    %4701 = vmatprep.mubr.f32.mxu0 0.0
    %v4702 = vand.u32 %v619, 4294901760
    %4703 = vmatmul.mubr.f32.gmra.mxu0 %v4702
    %v4704 = vpop.f32.mrf.mxu0
    %v4705 = vadd.f32 %v4602, %v4704
    %v4706 = vpop.f32.mrf.mxu0
    %4707 = vmatprep.mubr.f32.mxu0 0.0
    %v4708 = vand.u32 %v622, 4294901760
    %4709 = vmatmul.mubr.f32.gmra.mxu0 %v4708
    %v4710 = vpop.f32.mrf.mxu0
    %v4711 = vadd.f32 %v4612, %v4710
    %v4712 = vpop.f32.mrf.mxu0
    %4713 = vdwg.mxu0
    %4714 = vmatprep.subr.mxu0 0.0
    %4715 = vmatpush1.msra.mxu0 0.0
    %4716 = vmatprep.subr.mxu0 0.0
    %4717 = vmatpush1.msra.mxu0 0.0
    %4718 = vmatprep.subr.mxu0 0.0
    %4719 = vmatpush1.msra.mxu0 0.0
    %4720 = vmatprep.subr.mxu0 0.0
    %4721 = vmatpush1.msra.mxu0 0.0
    %4722 = vmatprep.subr.mxu0 0.0
    %4723 = vmatpush1.msra.mxu0 0.0
    %4724 = vmatprep.subr.mxu0 0.0
    %4725 = vmatpush1.msra.mxu0 0.0
    %4726 = vmatprep.subr.mxu0 0.0
    %4727 = vmatpush1.msra.mxu0 0.0
    %4728 = vmatprep.subr.mxu0 0.0
    %4729 = vmatpush1.msra.mxu0 0.0
    %4730 = vmatprep.subr.mxu0 0.0
    %4731 = vmatpush1.msra.mxu0 0.0
    %4732 = vmatprep.subr.mxu0 0.0
    %4733 = vmatpush1.msra.mxu0 0.0
    %4734 = vmatprep.subr.mxu0 0.0
    %4735 = vmatpush1.msra.mxu0 0.0
    %4736 = vmatprep.subr.mxu0 0.0
    %4737 = vmatpush1.msra.mxu0 0.0
    %4738 = vmatprep.subr.mxu0 0.0
    %4739 = vmatpush1.msra.mxu0 0.0
    %4740 = vmatprep.subr.mxu0 0.0
    %4741 = vmatpush1.msra.mxu0 0.0
    %4742 = vmatprep.subr.mxu0 0.0
    %v4743 = vand.u32 %v4506, 4294901760
    %v4744 = vsub.f32 %v4506, %v4743
    %4745 = vmatpush1.msra.mxu0 %v4744
    %4746 = vmatprep.subr.mxu0 0.0
    %v4747 = vand.u32 %v3908, 4294901760
    %v4748 = vsub.f32 %v3908, %v4747
    %4749 = vmatpush1.msra.mxu0 %v4748
    %4750 = vmatprep.subr.mxu0 0.0
    %4751 = vmatpush2.msra.mxu0 0.0
    %4752 = vmatprep.subr.mxu0 0.0
    %4753 = vmatpush2.msra.mxu0 0.0
    %4754 = vmatprep.subr.mxu0 0.0
    %4755 = vmatpush2.msra.mxu0 0.0
    %4756 = vmatprep.subr.mxu0 0.0
    %4757 = vmatpush2.msra.mxu0 0.0
    %4758 = vmatprep.subr.mxu0 0.0
    %4759 = vmatpush2.msra.mxu0 0.0
    %4760 = vmatprep.subr.mxu0 0.0
    %4761 = vmatpush2.msra.mxu0 0.0
    %4762 = vmatprep.subr.mxu0 0.0
    %4763 = vmatpush2.msra.mxu0 0.0
    %4764 = vmatprep.subr.mxu0 0.0
    %4765 = vmatpush2.msra.mxu0 0.0
    %4766 = vmatprep.subr.mxu0 0.0
    %4767 = vmatpush2.msra.mxu0 0.0
    %4768 = vmatprep.subr.mxu0 0.0
    %4769 = vmatpush2.msra.mxu0 0.0
    %4770 = vmatprep.subr.mxu0 0.0
    %4771 = vmatpush2.msra.mxu0 0.0
    %4772 = vmatprep.subr.mxu0 0.0
    %4773 = vmatpush2.msra.mxu0 0.0
    %4774 = vmatprep.subr.mxu0 0.0
    %4775 = vmatpush2.msra.mxu0 0.0
    %4776 = vmatprep.subr.mxu0 0.0
    %4777 = vmatpush2.msra.mxu0 0.0
    %4778 = vmatprep.subr.mxu0 0.0
    %4779 = vmatpush2.msra.mxu0 0.0
    %4780 = vmatprep.subr.mxu0 0.0
    %4781 = vmatpush2.msra.mxu0 0.0
    %4782 = vmatprep.mubr.f32.mxu0 0.0
    %v4783 = vand.u32 %v613, 4294901760
    %v4784 = vsub.f32 %v613, %v4783
    %4785 = vmatmul.mubr.f32.gmra.mxu0 %v4784
    %v4786 = vpop.f32.mrf.mxu0
    %v4787 = vadd.f32 %v4693, %v4786
    %v4788 = vpop.f32.mrf.mxu0
    %4789 = vmatprep.mubr.f32.mxu0 0.0
    %v4790 = vand.u32 %v616, 4294901760
    %v4791 = vsub.f32 %v616, %v4790
    %4792 = vmatmul.mubr.f32.gmra.mxu0 %v4791
    %v4793 = vpop.f32.mrf.mxu0
    %v4794 = vadd.f32 %v4699, %v4793
    %v4795 = vpop.f32.mrf.mxu0
    %4796 = vmatprep.mubr.f32.mxu0 0.0
    %v4797 = vand.u32 %v619, 4294901760
    %v4798 = vsub.f32 %v619, %v4797
    %4799 = vmatmul.mubr.f32.gmra.mxu0 %v4798
    %v4800 = vpop.f32.mrf.mxu0
    %v4801 = vadd.f32 %v4705, %v4800
    %v4802 = vpop.f32.mrf.mxu0
    %4803 = vmatprep.mubr.f32.mxu0 0.0
    %v4804 = vand.u32 %v622, 4294901760
    %v4805 = vsub.f32 %v622, %v4804
    %4806 = vmatmul.mubr.f32.gmra.mxu0 %v4805
    %v4807 = vpop.f32.mrf.mxu0
    %v4808 = vadd.f32 %v4711, %v4807
    %v4809 = vpop.f32.mrf.mxu0
    %4810 = vdwg.mxu0
    %4811 = vmatprep.subr.mxu0 0.0
    %4812 = vmatpush1.msra.mxu0 0.0
    %4813 = vmatprep.subr.mxu0 0.0
    %4814 = vmatpush1.msra.mxu0 0.0
    %4815 = vmatprep.subr.mxu0 0.0
    %4816 = vmatpush1.msra.mxu0 0.0
    %4817 = vmatprep.subr.mxu0 0.0
    %4818 = vmatpush1.msra.mxu0 0.0
    %4819 = vmatprep.subr.mxu0 0.0
    %4820 = vmatpush1.msra.mxu0 0.0
    %4821 = vmatprep.subr.mxu0 0.0
    %4822 = vmatpush1.msra.mxu0 0.0
    %4823 = vmatprep.subr.mxu0 0.0
    %4824 = vmatpush1.msra.mxu0 0.0
    %4825 = vmatprep.subr.mxu0 0.0
    %4826 = vmatpush1.msra.mxu0 0.0
    %4827 = vmatprep.subr.mxu0 0.0
    %4828 = vmatpush1.msra.mxu0 0.0
    %4829 = vmatprep.subr.mxu0 0.0
    %4830 = vmatpush1.msra.mxu0 0.0
    %4831 = vmatprep.subr.mxu0 0.0
    %4832 = vmatpush1.msra.mxu0 0.0
    %4833 = vmatprep.subr.mxu0 0.0
    %4834 = vmatpush1.msra.mxu0 0.0
    %4835 = vmatprep.subr.mxu0 0.0
    %4836 = vmatpush1.msra.mxu0 0.0
    %4837 = vmatprep.subr.mxu0 0.0
    %4838 = vmatpush1.msra.mxu0 0.0
    %4839 = vmatprep.subr.mxu0 0.0
    %v4840 = vand.u32 %v4506, 4294901760
    %4841 = vmatpush1.msra.mxu0 %v4840
    %4842 = vmatprep.subr.mxu0 0.0
    %v4843 = vand.u32 %v3908, 4294901760
    %4844 = vmatpush1.msra.mxu0 %v4843
    %4845 = vmatprep.subr.mxu0 0.0
    %4846 = vmatpush2.msra.mxu0 0.0
    %4847 = vmatprep.subr.mxu0 0.0
    %4848 = vmatpush2.msra.mxu0 0.0
    %4849 = vmatprep.subr.mxu0 0.0
    %4850 = vmatpush2.msra.mxu0 0.0
    %4851 = vmatprep.subr.mxu0 0.0
    %4852 = vmatpush2.msra.mxu0 0.0
    %4853 = vmatprep.subr.mxu0 0.0
    %4854 = vmatpush2.msra.mxu0 0.0
    %4855 = vmatprep.subr.mxu0 0.0
    %4856 = vmatpush2.msra.mxu0 0.0
    %4857 = vmatprep.subr.mxu0 0.0
    %4858 = vmatpush2.msra.mxu0 0.0
    %4859 = vmatprep.subr.mxu0 0.0
    %4860 = vmatpush2.msra.mxu0 0.0
    %4861 = vmatprep.subr.mxu0 0.0
    %4862 = vmatpush2.msra.mxu0 0.0
    %4863 = vmatprep.subr.mxu0 0.0
    %4864 = vmatpush2.msra.mxu0 0.0
    %4865 = vmatprep.subr.mxu0 0.0
    %4866 = vmatpush2.msra.mxu0 0.0
    %4867 = vmatprep.subr.mxu0 0.0
    %4868 = vmatpush2.msra.mxu0 0.0
    %4869 = vmatprep.subr.mxu0 0.0
    %4870 = vmatpush2.msra.mxu0 0.0
    %4871 = vmatprep.subr.mxu0 0.0
    %4872 = vmatpush2.msra.mxu0 0.0
    %4873 = vmatprep.subr.mxu0 0.0
    %4874 = vmatpush2.msra.mxu0 0.0
    %4875 = vmatprep.subr.mxu0 0.0
    %4876 = vmatpush2.msra.mxu0 0.0
    %4877 = vmatprep.mubr.f32.mxu0 0.0
    %v4878 = vand.u32 %v613, 4294901760
    %v4879 = vsub.f32 %v613, %v4878
    %v4880 = vand.u32 %v4879, 4294901760
    %4881 = vmatmul.mubr.f32.gmra.mxu0 %v4880
    %v4882 = vpop.f32.mrf.mxu0
    %v4883 = vadd.f32 %v4787, %v4882
    %v4884 = vpop.f32.mrf.mxu0
    %4885 = vmatprep.mubr.f32.mxu0 0.0
    %v4886 = vand.u32 %v616, 4294901760
    %v4887 = vsub.f32 %v616, %v4886
    %v4888 = vand.u32 %v4887, 4294901760
    %4889 = vmatmul.mubr.f32.gmra.mxu0 %v4888
    %v4890 = vpop.f32.mrf.mxu0
    %v4891 = vadd.f32 %v4794, %v4890
    %v4892 = vpop.f32.mrf.mxu0
    %4893 = vmatprep.mubr.f32.mxu0 0.0
    %v4894 = vand.u32 %v619, 4294901760
    %v4895 = vsub.f32 %v619, %v4894
    %v4896 = vand.u32 %v4895, 4294901760
    %4897 = vmatmul.mubr.f32.gmra.mxu0 %v4896
    %v4898 = vpop.f32.mrf.mxu0
    %v4899 = vadd.f32 %v4801, %v4898
    %v4900 = vpop.f32.mrf.mxu0
    %4901 = vmatprep.mubr.f32.mxu0 0.0
    %v4902 = vand.u32 %v622, 4294901760
    %v4903 = vsub.f32 %v622, %v4902
    %v4904 = vand.u32 %v4903, 4294901760
    %4905 = vmatmul.mubr.f32.gmra.mxu0 %v4904
    %v4906 = vpop.f32.mrf.mxu0
    %v4907 = vadd.f32 %v4808, %v4906
    %v4908 = vpop.f32.mrf.mxu0
    %4909 = vdwg.mxu0
    %4910 = vmatprep.subr.mxu0 0.0
    %4911 = vmatpush1.msra.mxu0 0.0
    %4912 = vmatprep.subr.mxu0 0.0
    %4913 = vmatpush1.msra.mxu0 0.0
    %4914 = vmatprep.subr.mxu0 0.0
    %4915 = vmatpush1.msra.mxu0 0.0
    %4916 = vmatprep.subr.mxu0 0.0
    %4917 = vmatpush1.msra.mxu0 0.0
    %4918 = vmatprep.subr.mxu0 0.0
    %4919 = vmatpush1.msra.mxu0 0.0
    %4920 = vmatprep.subr.mxu0 0.0
    %4921 = vmatpush1.msra.mxu0 0.0
    %4922 = vmatprep.subr.mxu0 0.0
    %4923 = vmatpush1.msra.mxu0 0.0
    %4924 = vmatprep.subr.mxu0 0.0
    %4925 = vmatpush1.msra.mxu0 0.0
    %4926 = vmatprep.subr.mxu0 0.0
    %4927 = vmatpush1.msra.mxu0 0.0
    %4928 = vmatprep.subr.mxu0 0.0
    %4929 = vmatpush1.msra.mxu0 0.0
    %4930 = vmatprep.subr.mxu0 0.0
    %4931 = vmatpush1.msra.mxu0 0.0
    %4932 = vmatprep.subr.mxu0 0.0
    %4933 = vmatpush1.msra.mxu0 0.0
    %4934 = vmatprep.subr.mxu0 0.0
    %4935 = vmatpush1.msra.mxu0 0.0
    %4936 = vmatprep.subr.mxu0 0.0
    %4937 = vmatpush1.msra.mxu0 0.0
    %4938 = vmatprep.subr.mxu0 0.0
    %v4939 = vand.u32 %v4506, 4294901760
    %v4940 = vsub.f32 %v4506, %v4939
    %v4941 = vand.u32 %v4940, 4294901760
    %4942 = vmatpush1.msra.mxu0 %v4941
    %4943 = vmatprep.subr.mxu0 0.0
    %v4944 = vand.u32 %v3908, 4294901760
    %v4945 = vsub.f32 %v3908, %v4944
    %v4946 = vand.u32 %v4945, 4294901760
    %4947 = vmatpush1.msra.mxu0 %v4946
    %4948 = vmatprep.subr.mxu0 0.0
    %4949 = vmatpush2.msra.mxu0 0.0
    %4950 = vmatprep.subr.mxu0 0.0
    %4951 = vmatpush2.msra.mxu0 0.0
    %4952 = vmatprep.subr.mxu0 0.0
    %4953 = vmatpush2.msra.mxu0 0.0
    %4954 = vmatprep.subr.mxu0 0.0
    %4955 = vmatpush2.msra.mxu0 0.0
    %4956 = vmatprep.subr.mxu0 0.0
    %4957 = vmatpush2.msra.mxu0 0.0
    %4958 = vmatprep.subr.mxu0 0.0
    %4959 = vmatpush2.msra.mxu0 0.0
    %4960 = vmatprep.subr.mxu0 0.0
    %4961 = vmatpush2.msra.mxu0 0.0
    %4962 = vmatprep.subr.mxu0 0.0
    %4963 = vmatpush2.msra.mxu0 0.0
    %4964 = vmatprep.subr.mxu0 0.0
    %4965 = vmatpush2.msra.mxu0 0.0
    %4966 = vmatprep.subr.mxu0 0.0
    %4967 = vmatpush2.msra.mxu0 0.0
    %4968 = vmatprep.subr.mxu0 0.0
    %4969 = vmatpush2.msra.mxu0 0.0
    %4970 = vmatprep.subr.mxu0 0.0
    %4971 = vmatpush2.msra.mxu0 0.0
    %4972 = vmatprep.subr.mxu0 0.0
    %4973 = vmatpush2.msra.mxu0 0.0
    %4974 = vmatprep.subr.mxu0 0.0
    %4975 = vmatpush2.msra.mxu0 0.0
    %4976 = vmatprep.subr.mxu0 0.0
    %4977 = vmatpush2.msra.mxu0 0.0
    %4978 = vmatprep.subr.mxu0 0.0
    %4979 = vmatpush2.msra.mxu0 0.0
    %4980 = vmatprep.mubr.f32.mxu0 0.0
    %v4981 = vand.u32 %v613, 4294901760
    %4982 = vmatmul.mubr.f32.gmra.mxu0 %v4981
    %v4983 = vpop.f32.mrf.mxu0
    %v4984 = vadd.f32 %v4883, %v4983
    %v4985 = vpop.f32.mrf.mxu0
    %4986 = vmatprep.mubr.f32.mxu0 0.0
    %v4987 = vand.u32 %v616, 4294901760
    %4988 = vmatmul.mubr.f32.gmra.mxu0 %v4987
    %v4989 = vpop.f32.mrf.mxu0
    %v4990 = vadd.f32 %v4891, %v4989
    %v4991 = vpop.f32.mrf.mxu0
    %4992 = vmatprep.mubr.f32.mxu0 0.0
    %v4993 = vand.u32 %v619, 4294901760
    %4994 = vmatmul.mubr.f32.gmra.mxu0 %v4993
    %v4995 = vpop.f32.mrf.mxu0
    %v4996 = vadd.f32 %v4899, %v4995
    %v4997 = vpop.f32.mrf.mxu0
    %4998 = vmatprep.mubr.f32.mxu0 0.0
    %v4999 = vand.u32 %v622, 4294901760
    %5000 = vmatmul.mubr.f32.gmra.mxu0 %v4999
    %v5001 = vpop.f32.mrf.mxu0
    %v5002 = vadd.f32 %v4907, %v5001
    %v5003 = vpop.f32.mrf.mxu0
    %5004 = vdwg.mxu0
    %5005 = vmatprep.subr.mxu0 0.0
    %5006 = vmatpush1.msra.mxu0 0.0
    %5007 = vmatprep.subr.mxu0 0.0
    %5008 = vmatpush1.msra.mxu0 0.0
    %5009 = vmatprep.subr.mxu0 0.0
    %5010 = vmatpush1.msra.mxu0 0.0
    %5011 = vmatprep.subr.mxu0 0.0
    %5012 = vmatpush1.msra.mxu0 0.0
    %5013 = vmatprep.subr.mxu0 0.0
    %5014 = vmatpush1.msra.mxu0 0.0
    %5015 = vmatprep.subr.mxu0 0.0
    %5016 = vmatpush1.msra.mxu0 0.0
    %5017 = vmatprep.subr.mxu0 0.0
    %5018 = vmatpush1.msra.mxu0 0.0
    %5019 = vmatprep.subr.mxu0 0.0
    %5020 = vmatpush1.msra.mxu0 0.0
    %5021 = vmatprep.subr.mxu0 0.0
    %5022 = vmatpush1.msra.mxu0 0.0
    %5023 = vmatprep.subr.mxu0 0.0
    %5024 = vmatpush1.msra.mxu0 0.0
    %5025 = vmatprep.subr.mxu0 0.0
    %5026 = vmatpush1.msra.mxu0 0.0
    %5027 = vmatprep.subr.mxu0 0.0
    %5028 = vmatpush1.msra.mxu0 0.0
    %5029 = vmatprep.subr.mxu0 0.0
    %5030 = vmatpush1.msra.mxu0 0.0
    %5031 = vmatprep.subr.mxu0 0.0
    %5032 = vmatpush1.msra.mxu0 0.0
    %5033 = vmatprep.subr.mxu0 0.0
    %v5034 = vand.u32 %v4506, 4294901760
    %5035 = vmatpush1.msra.mxu0 %v5034
    %5036 = vmatprep.subr.mxu0 0.0
    %v5037 = vand.u32 %v3908, 4294901760
    %5038 = vmatpush1.msra.mxu0 %v5037
    %5039 = vmatprep.subr.mxu0 0.0
    %5040 = vmatpush2.msra.mxu0 0.0
    %5041 = vmatprep.subr.mxu0 0.0
    %5042 = vmatpush2.msra.mxu0 0.0
    %5043 = vmatprep.subr.mxu0 0.0
    %5044 = vmatpush2.msra.mxu0 0.0
    %5045 = vmatprep.subr.mxu0 0.0
    %5046 = vmatpush2.msra.mxu0 0.0
    %5047 = vmatprep.subr.mxu0 0.0
    %5048 = vmatpush2.msra.mxu0 0.0
    %5049 = vmatprep.subr.mxu0 0.0
    %5050 = vmatpush2.msra.mxu0 0.0
    %5051 = vmatprep.subr.mxu0 0.0
    %5052 = vmatpush2.msra.mxu0 0.0
    %5053 = vmatprep.subr.mxu0 0.0
    %5054 = vmatpush2.msra.mxu0 0.0
    %5055 = vmatprep.subr.mxu0 0.0
    %5056 = vmatpush2.msra.mxu0 0.0
    %5057 = vmatprep.subr.mxu0 0.0
    %5058 = vmatpush2.msra.mxu0 0.0
    %5059 = vmatprep.subr.mxu0 0.0
    %5060 = vmatpush2.msra.mxu0 0.0
    %5061 = vmatprep.subr.mxu0 0.0
    %5062 = vmatpush2.msra.mxu0 0.0
    %5063 = vmatprep.subr.mxu0 0.0
    %5064 = vmatpush2.msra.mxu0 0.0
    %5065 = vmatprep.subr.mxu0 0.0
    %5066 = vmatpush2.msra.mxu0 0.0
    %5067 = vmatprep.subr.mxu0 0.0
    %5068 = vmatpush2.msra.mxu0 0.0
    %5069 = vmatprep.subr.mxu0 0.0
    %5070 = vmatpush2.msra.mxu0 0.0
    %5071 = vmatprep.mubr.f32.mxu0 0.0
    %v5072 = vand.u32 %v613, 4294901760
    %5073 = vmatmul.mubr.f32.gmra.mxu0 %v5072
    %v5074 = vpop.f32.mrf.mxu0
    %v5075 = vadd.f32 %v4984, %v5074
    %v5076 = vpop.f32.mrf.mxu0
    %5077 = vmatprep.mubr.f32.mxu0 0.0
    %v5078 = vand.u32 %v616, 4294901760
    %5079 = vmatmul.mubr.f32.gmra.mxu0 %v5078
    %v5080 = vpop.f32.mrf.mxu0
    %v5081 = vadd.f32 %v4990, %v5080
    %v5082 = vpop.f32.mrf.mxu0
    %5083 = vmatprep.mubr.f32.mxu0 0.0
    %v5084 = vand.u32 %v619, 4294901760
    %5085 = vmatmul.mubr.f32.gmra.mxu0 %v5084
    %v5086 = vpop.f32.mrf.mxu0
    %v5087 = vadd.f32 %v4996, %v5086
    %v5088 = vpop.f32.mrf.mxu0
    %5089 = vmatprep.mubr.f32.mxu0 0.0
    %v5090 = vand.u32 %v622, 4294901760
    %5091 = vmatmul.mubr.f32.gmra.mxu0 %v5090
    %v5092 = vpop.f32.mrf.mxu0
    %v5093 = vadd.f32 %v5002, %v5092
    %v5094 = vpop.f32.mrf.mxu0
    %5095 = vdwg.mxu0
    %v5096 = vsub.f32 %v54, %v5075
    %v5097 = vsub.f32 %v55, %v5081
    %v5098 = vsub.f32 %v56, %v5087
    %v5099 = vsub.f32 %v57, %v5093
    %v5100 = vmul.f32 %v4501, %v4501
    %v5101 = vmul.f32 %v4502, %v4502
    %v5102 = vmul.f32 %v4503, %v4503
    %v5103 = vmul.f32 %v4504, %v4504
    %v5105 = vsel %vm77, %v5103, 0
    %5107 = vmatprep.subr.mxu0 0.0
    %5108 = vmatpush1.msra.mxu0 0.0
    %5109 = vmatprep.subr.mxu0 0.0
    %5110 = vmatpush1.msra.mxu0 0.0
    %5111 = vmatprep.subr.mxu0 0.0
    %5112 = vmatpush1.msra.mxu0 0.0
    %5113 = vmatprep.subr.mxu0 0.0
    %5114 = vmatpush1.msra.mxu0 0.0
    %5115 = vmatprep.subr.mxu0 0.0
    %5116 = vmatpush1.msra.mxu0 0.0
    %5117 = vmatprep.subr.mxu0 0.0
    %5118 = vmatpush1.msra.mxu0 0.0
    %5119 = vmatprep.subr.mxu0 0.0
    %5120 = vmatpush1.msra.mxu0 0.0
    %5121 = vmatprep.subr.mxu0 0.0
    %5122 = vmatpush1.msra.mxu0 0.0
    %5123 = vmatprep.subr.mxu0 0.0
    %5124 = vmatpush1.msra.mxu0 0.0
    %5125 = vmatprep.subr.mxu0 0.0
    %5126 = vmatpush1.msra.mxu0 0.0
    %5127 = vmatprep.subr.mxu0 0.0
    %5128 = vmatpush1.msra.mxu0 0.0
    %5129 = vmatprep.subr.mxu0 0.0
    %5130 = vmatpush1.msra.mxu0 0.0
    %5131 = vmatprep.subr.mxu0 0.0
    %v5132 = vand.u32 %v5105, 4294901760
    %5133 = vmatpush1.msra.mxu0 %v5132
    %5134 = vmatprep.subr.mxu0 0.0
    %v5135 = vand.u32 %v5102, 4294901760
    %5136 = vmatpush1.msra.mxu0 %v5135
    %5137 = vmatprep.subr.mxu0 0.0
    %v5138 = vand.u32 %v5101, 4294901760
    %5139 = vmatpush1.msra.mxu0 %v5138
    %5140 = vmatprep.subr.mxu0 0.0
    %v5141 = vand.u32 %v5100, 4294901760
    %5142 = vmatpush1.msra.mxu0 %v5141
    %5143 = vmatprep.subr.mxu0 0.0
    %5144 = vmatpush2.msra.mxu0 0.0
    %5145 = vmatprep.subr.mxu0 0.0
    %5146 = vmatpush2.msra.mxu0 0.0
    %5147 = vmatprep.subr.mxu0 0.0
    %5148 = vmatpush2.msra.mxu0 0.0
    %5149 = vmatprep.subr.mxu0 0.0
    %5150 = vmatpush2.msra.mxu0 0.0
    %5151 = vmatprep.subr.mxu0 0.0
    %5152 = vmatpush2.msra.mxu0 0.0
    %5153 = vmatprep.subr.mxu0 0.0
    %5154 = vmatpush2.msra.mxu0 0.0
    %5155 = vmatprep.subr.mxu0 0.0
    %5156 = vmatpush2.msra.mxu0 0.0
    %5157 = vmatprep.subr.mxu0 0.0
    %5158 = vmatpush2.msra.mxu0 0.0
    %5159 = vmatprep.subr.mxu0 0.0
    %5160 = vmatpush2.msra.mxu0 0.0
    %5161 = vmatprep.subr.mxu0 0.0
    %5162 = vmatpush2.msra.mxu0 0.0
    %5163 = vmatprep.subr.mxu0 0.0
    %5164 = vmatpush2.msra.mxu0 0.0
    %5165 = vmatprep.subr.mxu0 0.0
    %5166 = vmatpush2.msra.mxu0 0.0
    %5167 = vmatprep.subr.mxu0 0.0
    %5168 = vmatpush2.msra.mxu0 0.0
    %5169 = vmatprep.subr.mxu0 0.0
    %5170 = vmatpush2.msra.mxu0 0.0
    %5171 = vmatprep.subr.mxu0 0.0
    %5172 = vmatpush2.msra.mxu0 0.0
    %5173 = vmatprep.subr.mxu0 0.0
    %5174 = vmatpush2.msra.mxu0 0.0
    %5175 = vmatprep.mubr.f32.mxu0 0.0
    %v5176 = vand.u32 %v72, 4294901760
    %v5177 = vsub.f32 %v72, %v5176
    %v5178 = vand.u32 %v5177, 4294901760
    %v5179 = vsub.f32 %v5177, %v5178
    %v5180 = vand.u32 %v5179, 4294901760
    %5181 = vmatmul.mubr.f32.gmra.mxu0 %v5180
    %v5182 = vpop.f32.mrf.mxu0
    %v5183 = vadd.f32 0.0, %v5182
    %v5184 = vpop.f32.mrf.mxu0
    %5185 = vmatprep.mubr.f32.mxu0 0.0
    %v5186 = vand.u32 %v75, 4294901760
    %v5187 = vsub.f32 %v75, %v5186
    %v5188 = vand.u32 %v5187, 4294901760
    %v5189 = vsub.f32 %v5187, %v5188
    %v5190 = vand.u32 %v5189, 4294901760
    %5191 = vmatmul.mubr.f32.gmra.mxu0 %v5190
    %v5192 = vpop.f32.mrf.mxu0
    %v5193 = vadd.f32 0.0, %v5192
    %v5194 = vpop.f32.mrf.mxu0
    %5195 = vdwg.mxu0
    %5196 = vmatprep.subr.mxu0 0.0
    %5197 = vmatpush1.msra.mxu0 0.0
    %5198 = vmatprep.subr.mxu0 0.0
    %5199 = vmatpush1.msra.mxu0 0.0
    %5200 = vmatprep.subr.mxu0 0.0
    %5201 = vmatpush1.msra.mxu0 0.0
    %5202 = vmatprep.subr.mxu0 0.0
    %5203 = vmatpush1.msra.mxu0 0.0
    %5204 = vmatprep.subr.mxu0 0.0
    %5205 = vmatpush1.msra.mxu0 0.0
    %5206 = vmatprep.subr.mxu0 0.0
    %5207 = vmatpush1.msra.mxu0 0.0
    %5208 = vmatprep.subr.mxu0 0.0
    %5209 = vmatpush1.msra.mxu0 0.0
    %5210 = vmatprep.subr.mxu0 0.0
    %5211 = vmatpush1.msra.mxu0 0.0
    %5212 = vmatprep.subr.mxu0 0.0
    %5213 = vmatpush1.msra.mxu0 0.0
    %5214 = vmatprep.subr.mxu0 0.0
    %5215 = vmatpush1.msra.mxu0 0.0
    %5216 = vmatprep.subr.mxu0 0.0
    %5217 = vmatpush1.msra.mxu0 0.0
    %5218 = vmatprep.subr.mxu0 0.0
    %5219 = vmatpush1.msra.mxu0 0.0
    %5220 = vmatprep.subr.mxu0 0.0
    %v5221 = vand.u32 %v5105, 4294901760
    %v5222 = vsub.f32 %v5105, %v5221
    %v5223 = vand.u32 %v5222, 4294901760
    %v5224 = vsub.f32 %v5222, %v5223
    %v5225 = vand.u32 %v5224, 4294901760
    %5226 = vmatpush1.msra.mxu0 %v5225
    %5227 = vmatprep.subr.mxu0 0.0
    %v5228 = vand.u32 %v5102, 4294901760
    %v5229 = vsub.f32 %v5102, %v5228
    %v5230 = vand.u32 %v5229, 4294901760
    %v5231 = vsub.f32 %v5229, %v5230
    %v5232 = vand.u32 %v5231, 4294901760
    %5233 = vmatpush1.msra.mxu0 %v5232
    %5234 = vmatprep.subr.mxu0 0.0
    %v5235 = vand.u32 %v5101, 4294901760
    %v5236 = vsub.f32 %v5101, %v5235
    %v5237 = vand.u32 %v5236, 4294901760
    %v5238 = vsub.f32 %v5236, %v5237
    %v5239 = vand.u32 %v5238, 4294901760
    %5240 = vmatpush1.msra.mxu0 %v5239
    %5241 = vmatprep.subr.mxu0 0.0
    %v5242 = vand.u32 %v5100, 4294901760
    %v5243 = vsub.f32 %v5100, %v5242
    %v5244 = vand.u32 %v5243, 4294901760
    %v5245 = vsub.f32 %v5243, %v5244
    %v5246 = vand.u32 %v5245, 4294901760
    %5247 = vmatpush1.msra.mxu0 %v5246
    %5248 = vmatprep.subr.mxu0 0.0
    %5249 = vmatpush2.msra.mxu0 0.0
    %5250 = vmatprep.subr.mxu0 0.0
    %5251 = vmatpush2.msra.mxu0 0.0
    %5252 = vmatprep.subr.mxu0 0.0
    %5253 = vmatpush2.msra.mxu0 0.0
    %5254 = vmatprep.subr.mxu0 0.0
    %5255 = vmatpush2.msra.mxu0 0.0
    %5256 = vmatprep.subr.mxu0 0.0
    %5257 = vmatpush2.msra.mxu0 0.0
    %5258 = vmatprep.subr.mxu0 0.0
    %5259 = vmatpush2.msra.mxu0 0.0
    %5260 = vmatprep.subr.mxu0 0.0
    %5261 = vmatpush2.msra.mxu0 0.0
    %5262 = vmatprep.subr.mxu0 0.0
    %5263 = vmatpush2.msra.mxu0 0.0
    %5264 = vmatprep.subr.mxu0 0.0
    %5265 = vmatpush2.msra.mxu0 0.0
    %5266 = vmatprep.subr.mxu0 0.0
    %5267 = vmatpush2.msra.mxu0 0.0
    %5268 = vmatprep.subr.mxu0 0.0
    %5269 = vmatpush2.msra.mxu0 0.0
    %5270 = vmatprep.subr.mxu0 0.0
    %5271 = vmatpush2.msra.mxu0 0.0
    %5272 = vmatprep.subr.mxu0 0.0
    %5273 = vmatpush2.msra.mxu0 0.0
    %5274 = vmatprep.subr.mxu0 0.0
    %5275 = vmatpush2.msra.mxu0 0.0
    %5276 = vmatprep.subr.mxu0 0.0
    %5277 = vmatpush2.msra.mxu0 0.0
    %5278 = vmatprep.subr.mxu0 0.0
    %5279 = vmatpush2.msra.mxu0 0.0
    %5280 = vmatprep.mubr.f32.mxu0 0.0
    %v5281 = vand.u32 %v72, 4294901760
    %5282 = vmatmul.mubr.f32.gmra.mxu0 %v5281
    %v5283 = vpop.f32.mrf.mxu0
    %v5284 = vadd.f32 %v5183, %v5283
    %v5285 = vpop.f32.mrf.mxu0
    %5286 = vmatprep.mubr.f32.mxu0 0.0
    %v5287 = vand.u32 %v75, 4294901760
    %5288 = vmatmul.mubr.f32.gmra.mxu0 %v5287
    %v5289 = vpop.f32.mrf.mxu0
    %v5290 = vadd.f32 %v5193, %v5289
    %v5291 = vpop.f32.mrf.mxu0
    %5292 = vdwg.mxu0
    %5293 = vmatprep.subr.mxu0 0.0
    %5294 = vmatpush1.msra.mxu0 0.0
    %5295 = vmatprep.subr.mxu0 0.0
    %5296 = vmatpush1.msra.mxu0 0.0
    %5297 = vmatprep.subr.mxu0 0.0
    %5298 = vmatpush1.msra.mxu0 0.0
    %5299 = vmatprep.subr.mxu0 0.0
    %5300 = vmatpush1.msra.mxu0 0.0
    %5301 = vmatprep.subr.mxu0 0.0
    %5302 = vmatpush1.msra.mxu0 0.0
    %5303 = vmatprep.subr.mxu0 0.0
    %5304 = vmatpush1.msra.mxu0 0.0
    %5305 = vmatprep.subr.mxu0 0.0
    %5306 = vmatpush1.msra.mxu0 0.0
    %5307 = vmatprep.subr.mxu0 0.0
    %5308 = vmatpush1.msra.mxu0 0.0
    %5309 = vmatprep.subr.mxu0 0.0
    %5310 = vmatpush1.msra.mxu0 0.0
    %5311 = vmatprep.subr.mxu0 0.0
    %5312 = vmatpush1.msra.mxu0 0.0
    %5313 = vmatprep.subr.mxu0 0.0
    %5314 = vmatpush1.msra.mxu0 0.0
    %5315 = vmatprep.subr.mxu0 0.0
    %5316 = vmatpush1.msra.mxu0 0.0
    %5317 = vmatprep.subr.mxu0 0.0
    %v5318 = vand.u32 %v5105, 4294901760
    %v5319 = vsub.f32 %v5105, %v5318
    %5320 = vmatpush1.msra.mxu0 %v5319
    %5321 = vmatprep.subr.mxu0 0.0
    %v5322 = vand.u32 %v5102, 4294901760
    %v5323 = vsub.f32 %v5102, %v5322
    %5324 = vmatpush1.msra.mxu0 %v5323
    %5325 = vmatprep.subr.mxu0 0.0
    %v5326 = vand.u32 %v5101, 4294901760
    %v5327 = vsub.f32 %v5101, %v5326
    %5328 = vmatpush1.msra.mxu0 %v5327
    %5329 = vmatprep.subr.mxu0 0.0
    %v5330 = vand.u32 %v5100, 4294901760
    %v5331 = vsub.f32 %v5100, %v5330
    %5332 = vmatpush1.msra.mxu0 %v5331
    %5333 = vmatprep.subr.mxu0 0.0
    %5334 = vmatpush2.msra.mxu0 0.0
    %5335 = vmatprep.subr.mxu0 0.0
    %5336 = vmatpush2.msra.mxu0 0.0
    %5337 = vmatprep.subr.mxu0 0.0
    %5338 = vmatpush2.msra.mxu0 0.0
    %5339 = vmatprep.subr.mxu0 0.0
    %5340 = vmatpush2.msra.mxu0 0.0
    %5341 = vmatprep.subr.mxu0 0.0
    %5342 = vmatpush2.msra.mxu0 0.0
    %5343 = vmatprep.subr.mxu0 0.0
    %5344 = vmatpush2.msra.mxu0 0.0
    %5345 = vmatprep.subr.mxu0 0.0
    %5346 = vmatpush2.msra.mxu0 0.0
    %5347 = vmatprep.subr.mxu0 0.0
    %5348 = vmatpush2.msra.mxu0 0.0
    %5349 = vmatprep.subr.mxu0 0.0
    %5350 = vmatpush2.msra.mxu0 0.0
    %5351 = vmatprep.subr.mxu0 0.0
    %5352 = vmatpush2.msra.mxu0 0.0
    %5353 = vmatprep.subr.mxu0 0.0
    %5354 = vmatpush2.msra.mxu0 0.0
    %5355 = vmatprep.subr.mxu0 0.0
    %5356 = vmatpush2.msra.mxu0 0.0
    %5357 = vmatprep.subr.mxu0 0.0
    %5358 = vmatpush2.msra.mxu0 0.0
    %5359 = vmatprep.subr.mxu0 0.0
    %5360 = vmatpush2.msra.mxu0 0.0
    %5361 = vmatprep.subr.mxu0 0.0
    %5362 = vmatpush2.msra.mxu0 0.0
    %5363 = vmatprep.subr.mxu0 0.0
    %5364 = vmatpush2.msra.mxu0 0.0
    %5365 = vmatprep.mubr.f32.mxu0 0.0
    %v5366 = vand.u32 %v72, 4294901760
    %v5367 = vsub.f32 %v72, %v5366
    %5368 = vmatmul.mubr.f32.gmra.mxu0 %v5367
    %v5369 = vpop.f32.mrf.mxu0
    %v5370 = vadd.f32 %v5284, %v5369
    %v5371 = vpop.f32.mrf.mxu0
    %5372 = vmatprep.mubr.f32.mxu0 0.0
    %v5373 = vand.u32 %v75, 4294901760
    %v5374 = vsub.f32 %v75, %v5373
    %5375 = vmatmul.mubr.f32.gmra.mxu0 %v5374
    %v5376 = vpop.f32.mrf.mxu0
    %v5377 = vadd.f32 %v5290, %v5376
    %v5378 = vpop.f32.mrf.mxu0
    %5379 = vdwg.mxu0
    %5380 = vmatprep.subr.mxu0 0.0
    %5381 = vmatpush1.msra.mxu0 0.0
    %5382 = vmatprep.subr.mxu0 0.0
    %5383 = vmatpush1.msra.mxu0 0.0
    %5384 = vmatprep.subr.mxu0 0.0
    %5385 = vmatpush1.msra.mxu0 0.0
    %5386 = vmatprep.subr.mxu0 0.0
    %5387 = vmatpush1.msra.mxu0 0.0
    %5388 = vmatprep.subr.mxu0 0.0
    %5389 = vmatpush1.msra.mxu0 0.0
    %5390 = vmatprep.subr.mxu0 0.0
    %5391 = vmatpush1.msra.mxu0 0.0
    %5392 = vmatprep.subr.mxu0 0.0
    %5393 = vmatpush1.msra.mxu0 0.0
    %5394 = vmatprep.subr.mxu0 0.0
    %5395 = vmatpush1.msra.mxu0 0.0
    %5396 = vmatprep.subr.mxu0 0.0
    %5397 = vmatpush1.msra.mxu0 0.0
    %5398 = vmatprep.subr.mxu0 0.0
    %5399 = vmatpush1.msra.mxu0 0.0
    %5400 = vmatprep.subr.mxu0 0.0
    %5401 = vmatpush1.msra.mxu0 0.0
    %5402 = vmatprep.subr.mxu0 0.0
    %5403 = vmatpush1.msra.mxu0 0.0
    %5404 = vmatprep.subr.mxu0 0.0
    %v5405 = vand.u32 %v5105, 4294901760
    %5406 = vmatpush1.msra.mxu0 %v5405
    %5407 = vmatprep.subr.mxu0 0.0
    %v5408 = vand.u32 %v5102, 4294901760
    %5409 = vmatpush1.msra.mxu0 %v5408
    %5410 = vmatprep.subr.mxu0 0.0
    %v5411 = vand.u32 %v5101, 4294901760
    %5412 = vmatpush1.msra.mxu0 %v5411
    %5413 = vmatprep.subr.mxu0 0.0
    %v5414 = vand.u32 %v5100, 4294901760
    %5415 = vmatpush1.msra.mxu0 %v5414
    %5416 = vmatprep.subr.mxu0 0.0
    %5417 = vmatpush2.msra.mxu0 0.0
    %5418 = vmatprep.subr.mxu0 0.0
    %5419 = vmatpush2.msra.mxu0 0.0
    %5420 = vmatprep.subr.mxu0 0.0
    %5421 = vmatpush2.msra.mxu0 0.0
    %5422 = vmatprep.subr.mxu0 0.0
    %5423 = vmatpush2.msra.mxu0 0.0
    %5424 = vmatprep.subr.mxu0 0.0
    %5425 = vmatpush2.msra.mxu0 0.0
    %5426 = vmatprep.subr.mxu0 0.0
    %5427 = vmatpush2.msra.mxu0 0.0
    %5428 = vmatprep.subr.mxu0 0.0
    %5429 = vmatpush2.msra.mxu0 0.0
    %5430 = vmatprep.subr.mxu0 0.0
    %5431 = vmatpush2.msra.mxu0 0.0
    %5432 = vmatprep.subr.mxu0 0.0
    %5433 = vmatpush2.msra.mxu0 0.0
    %5434 = vmatprep.subr.mxu0 0.0
    %5435 = vmatpush2.msra.mxu0 0.0
    %5436 = vmatprep.subr.mxu0 0.0
    %5437 = vmatpush2.msra.mxu0 0.0
    %5438 = vmatprep.subr.mxu0 0.0
    %5439 = vmatpush2.msra.mxu0 0.0
    %5440 = vmatprep.subr.mxu0 0.0
    %5441 = vmatpush2.msra.mxu0 0.0
    %5442 = vmatprep.subr.mxu0 0.0
    %5443 = vmatpush2.msra.mxu0 0.0
    %5444 = vmatprep.subr.mxu0 0.0
    %5445 = vmatpush2.msra.mxu0 0.0
    %5446 = vmatprep.subr.mxu0 0.0
    %5447 = vmatpush2.msra.mxu0 0.0
    %5448 = vmatprep.mubr.f32.mxu0 0.0
    %v5449 = vand.u32 %v72, 4294901760
    %v5450 = vsub.f32 %v72, %v5449
    %v5451 = vand.u32 %v5450, 4294901760
    %5452 = vmatmul.mubr.f32.gmra.mxu0 %v5451
    %v5453 = vpop.f32.mrf.mxu0
    %v5454 = vadd.f32 %v5370, %v5453
    %v5455 = vpop.f32.mrf.mxu0
    %5456 = vmatprep.mubr.f32.mxu0 0.0
    %v5457 = vand.u32 %v75, 4294901760
    %v5458 = vsub.f32 %v75, %v5457
    %v5459 = vand.u32 %v5458, 4294901760
    %5460 = vmatmul.mubr.f32.gmra.mxu0 %v5459
    %v5461 = vpop.f32.mrf.mxu0
    %v5462 = vadd.f32 %v5377, %v5461
    %v5463 = vpop.f32.mrf.mxu0
    %5464 = vdwg.mxu0
    %5465 = vmatprep.subr.mxu0 0.0
    %5466 = vmatpush1.msra.mxu0 0.0
    %5467 = vmatprep.subr.mxu0 0.0
    %5468 = vmatpush1.msra.mxu0 0.0
    %5469 = vmatprep.subr.mxu0 0.0
    %5470 = vmatpush1.msra.mxu0 0.0
    %5471 = vmatprep.subr.mxu0 0.0
    %5472 = vmatpush1.msra.mxu0 0.0
    %5473 = vmatprep.subr.mxu0 0.0
    %5474 = vmatpush1.msra.mxu0 0.0
    %5475 = vmatprep.subr.mxu0 0.0
    %5476 = vmatpush1.msra.mxu0 0.0
    %5477 = vmatprep.subr.mxu0 0.0
    %5478 = vmatpush1.msra.mxu0 0.0
    %5479 = vmatprep.subr.mxu0 0.0
    %5480 = vmatpush1.msra.mxu0 0.0
    %5481 = vmatprep.subr.mxu0 0.0
    %5482 = vmatpush1.msra.mxu0 0.0
    %5483 = vmatprep.subr.mxu0 0.0
    %5484 = vmatpush1.msra.mxu0 0.0
    %5485 = vmatprep.subr.mxu0 0.0
    %5486 = vmatpush1.msra.mxu0 0.0
    %5487 = vmatprep.subr.mxu0 0.0
    %5488 = vmatpush1.msra.mxu0 0.0
    %5489 = vmatprep.subr.mxu0 0.0
    %v5490 = vand.u32 %v5105, 4294901760
    %v5491 = vsub.f32 %v5105, %v5490
    %v5492 = vand.u32 %v5491, 4294901760
    %5493 = vmatpush1.msra.mxu0 %v5492
    %5494 = vmatprep.subr.mxu0 0.0
    %v5495 = vand.u32 %v5102, 4294901760
    %v5496 = vsub.f32 %v5102, %v5495
    %v5497 = vand.u32 %v5496, 4294901760
    %5498 = vmatpush1.msra.mxu0 %v5497
    %5499 = vmatprep.subr.mxu0 0.0
    %v5500 = vand.u32 %v5101, 4294901760
    %v5501 = vsub.f32 %v5101, %v5500
    %v5502 = vand.u32 %v5501, 4294901760
    %5503 = vmatpush1.msra.mxu0 %v5502
    %5504 = vmatprep.subr.mxu0 0.0
    %v5505 = vand.u32 %v5100, 4294901760
    %v5506 = vsub.f32 %v5100, %v5505
    %v5507 = vand.u32 %v5506, 4294901760
    %5508 = vmatpush1.msra.mxu0 %v5507
    %5509 = vmatprep.subr.mxu0 0.0
    %5510 = vmatpush2.msra.mxu0 0.0
    %5511 = vmatprep.subr.mxu0 0.0
    %5512 = vmatpush2.msra.mxu0 0.0
    %5513 = vmatprep.subr.mxu0 0.0
    %5514 = vmatpush2.msra.mxu0 0.0
    %5515 = vmatprep.subr.mxu0 0.0
    %5516 = vmatpush2.msra.mxu0 0.0
    %5517 = vmatprep.subr.mxu0 0.0
    %5518 = vmatpush2.msra.mxu0 0.0
    %5519 = vmatprep.subr.mxu0 0.0
    %5520 = vmatpush2.msra.mxu0 0.0
    %5521 = vmatprep.subr.mxu0 0.0
    %5522 = vmatpush2.msra.mxu0 0.0
    %5523 = vmatprep.subr.mxu0 0.0
    %5524 = vmatpush2.msra.mxu0 0.0
    %5525 = vmatprep.subr.mxu0 0.0
    %5526 = vmatpush2.msra.mxu0 0.0
    %5527 = vmatprep.subr.mxu0 0.0
    %5528 = vmatpush2.msra.mxu0 0.0
    %5529 = vmatprep.subr.mxu0 0.0
    %5530 = vmatpush2.msra.mxu0 0.0
    %5531 = vmatprep.subr.mxu0 0.0
    %5532 = vmatpush2.msra.mxu0 0.0
    %5533 = vmatprep.subr.mxu0 0.0
    %5534 = vmatpush2.msra.mxu0 0.0
    %5535 = vmatprep.subr.mxu0 0.0
    %5536 = vmatpush2.msra.mxu0 0.0
    %5537 = vmatprep.subr.mxu0 0.0
    %5538 = vmatpush2.msra.mxu0 0.0
    %5539 = vmatprep.subr.mxu0 0.0
    %5540 = vmatpush2.msra.mxu0 0.0
    %5541 = vmatprep.mubr.f32.mxu0 0.0
    %v5542 = vand.u32 %v72, 4294901760
    %5543 = vmatmul.mubr.f32.gmra.mxu0 %v5542
    %v5544 = vpop.f32.mrf.mxu0
    %v5545 = vadd.f32 %v5454, %v5544
    %v5546 = vpop.f32.mrf.mxu0
    %5547 = vmatprep.mubr.f32.mxu0 0.0
    %v5548 = vand.u32 %v75, 4294901760
    %5549 = vmatmul.mubr.f32.gmra.mxu0 %v5548
    %v5550 = vpop.f32.mrf.mxu0
    %v5551 = vadd.f32 %v5462, %v5550
    %v5552 = vpop.f32.mrf.mxu0
    %5553 = vdwg.mxu0
    %5554 = vmatprep.subr.mxu0 0.0
    %5555 = vmatpush1.msra.mxu0 0.0
    %5556 = vmatprep.subr.mxu0 0.0
    %5557 = vmatpush1.msra.mxu0 0.0
    %5558 = vmatprep.subr.mxu0 0.0
    %5559 = vmatpush1.msra.mxu0 0.0
    %5560 = vmatprep.subr.mxu0 0.0
    %5561 = vmatpush1.msra.mxu0 0.0
    %5562 = vmatprep.subr.mxu0 0.0
    %5563 = vmatpush1.msra.mxu0 0.0
    %5564 = vmatprep.subr.mxu0 0.0
    %5565 = vmatpush1.msra.mxu0 0.0
    %5566 = vmatprep.subr.mxu0 0.0
    %5567 = vmatpush1.msra.mxu0 0.0
    %5568 = vmatprep.subr.mxu0 0.0
    %5569 = vmatpush1.msra.mxu0 0.0
    %5570 = vmatprep.subr.mxu0 0.0
    %5571 = vmatpush1.msra.mxu0 0.0
    %5572 = vmatprep.subr.mxu0 0.0
    %5573 = vmatpush1.msra.mxu0 0.0
    %5574 = vmatprep.subr.mxu0 0.0
    %5575 = vmatpush1.msra.mxu0 0.0
    %5576 = vmatprep.subr.mxu0 0.0
    %5577 = vmatpush1.msra.mxu0 0.0
    %5578 = vmatprep.subr.mxu0 0.0
    %v5579 = vand.u32 %v5105, 4294901760
    %5580 = vmatpush1.msra.mxu0 %v5579
    %5581 = vmatprep.subr.mxu0 0.0
    %v5582 = vand.u32 %v5102, 4294901760
    %5583 = vmatpush1.msra.mxu0 %v5582
    %5584 = vmatprep.subr.mxu0 0.0
    %v5585 = vand.u32 %v5101, 4294901760
    %5586 = vmatpush1.msra.mxu0 %v5585
    %5587 = vmatprep.subr.mxu0 0.0
    %v5588 = vand.u32 %v5100, 4294901760
    %5589 = vmatpush1.msra.mxu0 %v5588
    %5590 = vmatprep.subr.mxu0 0.0
    %5591 = vmatpush2.msra.mxu0 0.0
    %5592 = vmatprep.subr.mxu0 0.0
    %5593 = vmatpush2.msra.mxu0 0.0
    %5594 = vmatprep.subr.mxu0 0.0
    %5595 = vmatpush2.msra.mxu0 0.0
    %5596 = vmatprep.subr.mxu0 0.0
    %5597 = vmatpush2.msra.mxu0 0.0
    %5598 = vmatprep.subr.mxu0 0.0
    %5599 = vmatpush2.msra.mxu0 0.0
    %5600 = vmatprep.subr.mxu0 0.0
    %5601 = vmatpush2.msra.mxu0 0.0
    %5602 = vmatprep.subr.mxu0 0.0
    %5603 = vmatpush2.msra.mxu0 0.0
    %5604 = vmatprep.subr.mxu0 0.0
    %5605 = vmatpush2.msra.mxu0 0.0
    %5606 = vmatprep.subr.mxu0 0.0
    %5607 = vmatpush2.msra.mxu0 0.0
    %5608 = vmatprep.subr.mxu0 0.0
    %5609 = vmatpush2.msra.mxu0 0.0
    %5610 = vmatprep.subr.mxu0 0.0
    %5611 = vmatpush2.msra.mxu0 0.0
    %5612 = vmatprep.subr.mxu0 0.0
    %5613 = vmatpush2.msra.mxu0 0.0
    %5614 = vmatprep.subr.mxu0 0.0
    %5615 = vmatpush2.msra.mxu0 0.0
    %5616 = vmatprep.subr.mxu0 0.0
    %5617 = vmatpush2.msra.mxu0 0.0
    %5618 = vmatprep.subr.mxu0 0.0
    %5619 = vmatpush2.msra.mxu0 0.0
    %5620 = vmatprep.subr.mxu0 0.0
    %5621 = vmatpush2.msra.mxu0 0.0
    %5622 = vmatprep.mubr.f32.mxu0 0.0
    %v5623 = vand.u32 %v72, 4294901760
    %5624 = vmatmul.mubr.f32.gmra.mxu0 %v5623
    %v5625 = vpop.f32.mrf.mxu0
    %v5626 = vadd.f32 %v5545, %v5625
    %v5627 = vpop.f32.mrf.mxu0
    %5628 = vmatprep.mubr.f32.mxu0 0.0
    %v5629 = vand.u32 %v75, 4294901760
    %5630 = vmatmul.mubr.f32.gmra.mxu0 %v5629
    %v5631 = vpop.f32.mrf.mxu0
    %v5632 = vadd.f32 %v5551, %v5631
    %v5633 = vpop.f32.mrf.mxu0
    %5634 = vdwg.mxu0
    %v5635 = vmul.f32 %v5626, 0.33333334
    %v5636 = vmul.f32 %v5632, 0.33333334
    %v5637 = vrsqrt.pop %v5635
    %v5638 = vmul.f32 %v5635, %v5637
    %vm5639 = vcmp.eq.f32.partialorder %v5635, inf
    %v5640 = vsel %vm5639, %v5635, %v5638
    %vm5641 = vcmp.eq.f32.partialorder %v5635, 0.0
    %v5642 = vand.u32 %v5635, 2147483648
    %v5643 = vsel %vm5641, %v5642, %v5640
    %v5644 = vrsqrt.pop %v5636
    %v5645 = vmul.f32 %v5636, %v5644
    %vm5646 = vcmp.eq.f32.partialorder %v5636, inf
    %v5647 = vsel %vm5646, %v5636, %v5645
    %vm5648 = vcmp.eq.f32.partialorder %v5636, 0.0
    %v5649 = vand.u32 %v5636, 2147483648
    %v5650 = vsel %vm5648, %v5649, %v5647
    %v5651 = vmul.f32 %v5096, %v5096
    %v5652 = vmul.f32 %v5097, %v5097
    %v5653 = vmul.f32 %v5098, %v5098
    %v5654 = vmul.f32 %v5099, %v5099
    %v5656 = vsel %vm77, %v5654, 0
    %5658 = vmatprep.subr.mxu0 0.0
    %5659 = vmatpush1.msra.mxu0 0.0
    %5660 = vmatprep.subr.mxu0 0.0
    %5661 = vmatpush1.msra.mxu0 0.0
    %5662 = vmatprep.subr.mxu0 0.0
    %5663 = vmatpush1.msra.mxu0 0.0
    %5664 = vmatprep.subr.mxu0 0.0
    %5665 = vmatpush1.msra.mxu0 0.0
    %5666 = vmatprep.subr.mxu0 0.0
    %5667 = vmatpush1.msra.mxu0 0.0
    %5668 = vmatprep.subr.mxu0 0.0
    %5669 = vmatpush1.msra.mxu0 0.0
    %5670 = vmatprep.subr.mxu0 0.0
    %5671 = vmatpush1.msra.mxu0 0.0
    %5672 = vmatprep.subr.mxu0 0.0
    %5673 = vmatpush1.msra.mxu0 0.0
    %5674 = vmatprep.subr.mxu0 0.0
    %5675 = vmatpush1.msra.mxu0 0.0
    %5676 = vmatprep.subr.mxu0 0.0
    %5677 = vmatpush1.msra.mxu0 0.0
    %5678 = vmatprep.subr.mxu0 0.0
    %5679 = vmatpush1.msra.mxu0 0.0
    %5680 = vmatprep.subr.mxu0 0.0
    %5681 = vmatpush1.msra.mxu0 0.0
    %5682 = vmatprep.subr.mxu0 0.0
    %v5683 = vand.u32 %v5656, 4294901760
    %5684 = vmatpush1.msra.mxu0 %v5683
    %5685 = vmatprep.subr.mxu0 0.0
    %v5686 = vand.u32 %v5653, 4294901760
    %5687 = vmatpush1.msra.mxu0 %v5686
    %5688 = vmatprep.subr.mxu0 0.0
    %v5689 = vand.u32 %v5652, 4294901760
    %5690 = vmatpush1.msra.mxu0 %v5689
    %5691 = vmatprep.subr.mxu0 0.0
    %v5692 = vand.u32 %v5651, 4294901760
    %5693 = vmatpush1.msra.mxu0 %v5692
    %5694 = vmatprep.subr.mxu0 0.0
    %5695 = vmatpush2.msra.mxu0 0.0
    %5696 = vmatprep.subr.mxu0 0.0
    %5697 = vmatpush2.msra.mxu0 0.0
    %5698 = vmatprep.subr.mxu0 0.0
    %5699 = vmatpush2.msra.mxu0 0.0
    %5700 = vmatprep.subr.mxu0 0.0
    %5701 = vmatpush2.msra.mxu0 0.0
    %5702 = vmatprep.subr.mxu0 0.0
    %5703 = vmatpush2.msra.mxu0 0.0
    %5704 = vmatprep.subr.mxu0 0.0
    %5705 = vmatpush2.msra.mxu0 0.0
    %5706 = vmatprep.subr.mxu0 0.0
    %5707 = vmatpush2.msra.mxu0 0.0
    %5708 = vmatprep.subr.mxu0 0.0
    %5709 = vmatpush2.msra.mxu0 0.0
    %5710 = vmatprep.subr.mxu0 0.0
    %5711 = vmatpush2.msra.mxu0 0.0
    %5712 = vmatprep.subr.mxu0 0.0
    %5713 = vmatpush2.msra.mxu0 0.0
    %5714 = vmatprep.subr.mxu0 0.0
    %5715 = vmatpush2.msra.mxu0 0.0
    %5716 = vmatprep.subr.mxu0 0.0
    %5717 = vmatpush2.msra.mxu0 0.0
    %5718 = vmatprep.subr.mxu0 0.0
    %5719 = vmatpush2.msra.mxu0 0.0
    %5720 = vmatprep.subr.mxu0 0.0
    %5721 = vmatpush2.msra.mxu0 0.0
    %5722 = vmatprep.subr.mxu0 0.0
    %5723 = vmatpush2.msra.mxu0 0.0
    %5724 = vmatprep.subr.mxu0 0.0
    %5725 = vmatpush2.msra.mxu0 0.0
    %5726 = vmatprep.mubr.f32.mxu0 0.0
    %v5727 = vand.u32 %v72, 4294901760
    %v5728 = vsub.f32 %v72, %v5727
    %v5729 = vand.u32 %v5728, 4294901760
    %v5730 = vsub.f32 %v5728, %v5729
    %v5731 = vand.u32 %v5730, 4294901760
    %5732 = vmatmul.mubr.f32.gmra.mxu0 %v5731
    %v5733 = vpop.f32.mrf.mxu0
    %v5734 = vadd.f32 0.0, %v5733
    %v5735 = vpop.f32.mrf.mxu0
    %5736 = vmatprep.mubr.f32.mxu0 0.0
    %v5737 = vand.u32 %v75, 4294901760
    %v5738 = vsub.f32 %v75, %v5737
    %v5739 = vand.u32 %v5738, 4294901760
    %v5740 = vsub.f32 %v5738, %v5739
    %v5741 = vand.u32 %v5740, 4294901760
    %5742 = vmatmul.mubr.f32.gmra.mxu0 %v5741
    %v5743 = vpop.f32.mrf.mxu0
    %v5744 = vadd.f32 0.0, %v5743
    %v5745 = vpop.f32.mrf.mxu0
    %5746 = vdwg.mxu0
    %5747 = vmatprep.subr.mxu0 0.0
    %5748 = vmatpush1.msra.mxu0 0.0
    %5749 = vmatprep.subr.mxu0 0.0
    %5750 = vmatpush1.msra.mxu0 0.0
    %5751 = vmatprep.subr.mxu0 0.0
    %5752 = vmatpush1.msra.mxu0 0.0
    %5753 = vmatprep.subr.mxu0 0.0
    %5754 = vmatpush1.msra.mxu0 0.0
    %5755 = vmatprep.subr.mxu0 0.0
    %5756 = vmatpush1.msra.mxu0 0.0
    %5757 = vmatprep.subr.mxu0 0.0
    %5758 = vmatpush1.msra.mxu0 0.0
    %5759 = vmatprep.subr.mxu0 0.0
    %5760 = vmatpush1.msra.mxu0 0.0
    %5761 = vmatprep.subr.mxu0 0.0
    %5762 = vmatpush1.msra.mxu0 0.0
    %5763 = vmatprep.subr.mxu0 0.0
    %5764 = vmatpush1.msra.mxu0 0.0
    %5765 = vmatprep.subr.mxu0 0.0
    %5766 = vmatpush1.msra.mxu0 0.0
    %5767 = vmatprep.subr.mxu0 0.0
    %5768 = vmatpush1.msra.mxu0 0.0
    %5769 = vmatprep.subr.mxu0 0.0
    %5770 = vmatpush1.msra.mxu0 0.0
    %5771 = vmatprep.subr.mxu0 0.0
    %v5772 = vand.u32 %v5656, 4294901760
    %v5773 = vsub.f32 %v5656, %v5772
    %v5774 = vand.u32 %v5773, 4294901760
    %v5775 = vsub.f32 %v5773, %v5774
    %v5776 = vand.u32 %v5775, 4294901760
    %5777 = vmatpush1.msra.mxu0 %v5776
    %5778 = vmatprep.subr.mxu0 0.0
    %v5779 = vand.u32 %v5653, 4294901760
    %v5780 = vsub.f32 %v5653, %v5779
    %v5781 = vand.u32 %v5780, 4294901760
    %v5782 = vsub.f32 %v5780, %v5781
    %v5783 = vand.u32 %v5782, 4294901760
    %5784 = vmatpush1.msra.mxu0 %v5783
    %5785 = vmatprep.subr.mxu0 0.0
    %v5786 = vand.u32 %v5652, 4294901760
    %v5787 = vsub.f32 %v5652, %v5786
    %v5788 = vand.u32 %v5787, 4294901760
    %v5789 = vsub.f32 %v5787, %v5788
    %v5790 = vand.u32 %v5789, 4294901760
    %5791 = vmatpush1.msra.mxu0 %v5790
    %5792 = vmatprep.subr.mxu0 0.0
    %v5793 = vand.u32 %v5651, 4294901760
    %v5794 = vsub.f32 %v5651, %v5793
    %v5795 = vand.u32 %v5794, 4294901760
    %v5796 = vsub.f32 %v5794, %v5795
    %v5797 = vand.u32 %v5796, 4294901760
    %5798 = vmatpush1.msra.mxu0 %v5797
    %5799 = vmatprep.subr.mxu0 0.0
    %5800 = vmatpush2.msra.mxu0 0.0
    %5801 = vmatprep.subr.mxu0 0.0
    %5802 = vmatpush2.msra.mxu0 0.0
    %5803 = vmatprep.subr.mxu0 0.0
    %5804 = vmatpush2.msra.mxu0 0.0
    %5805 = vmatprep.subr.mxu0 0.0
    %5806 = vmatpush2.msra.mxu0 0.0
    %5807 = vmatprep.subr.mxu0 0.0
    %5808 = vmatpush2.msra.mxu0 0.0
    %5809 = vmatprep.subr.mxu0 0.0
    %5810 = vmatpush2.msra.mxu0 0.0
    %5811 = vmatprep.subr.mxu0 0.0
    %5812 = vmatpush2.msra.mxu0 0.0
    %5813 = vmatprep.subr.mxu0 0.0
    %5814 = vmatpush2.msra.mxu0 0.0
    %5815 = vmatprep.subr.mxu0 0.0
    %5816 = vmatpush2.msra.mxu0 0.0
    %5817 = vmatprep.subr.mxu0 0.0
    %5818 = vmatpush2.msra.mxu0 0.0
    %5819 = vmatprep.subr.mxu0 0.0
    %5820 = vmatpush2.msra.mxu0 0.0
    %5821 = vmatprep.subr.mxu0 0.0
    %5822 = vmatpush2.msra.mxu0 0.0
    %5823 = vmatprep.subr.mxu0 0.0
    %5824 = vmatpush2.msra.mxu0 0.0
    %5825 = vmatprep.subr.mxu0 0.0
    %5826 = vmatpush2.msra.mxu0 0.0
    %5827 = vmatprep.subr.mxu0 0.0
    %5828 = vmatpush2.msra.mxu0 0.0
    %5829 = vmatprep.subr.mxu0 0.0
    %5830 = vmatpush2.msra.mxu0 0.0
    %5831 = vmatprep.mubr.f32.mxu0 0.0
    %v5832 = vand.u32 %v72, 4294901760
    %5833 = vmatmul.mubr.f32.gmra.mxu0 %v5832
    %v5834 = vpop.f32.mrf.mxu0
    %v5835 = vadd.f32 %v5734, %v5834
    %v5836 = vpop.f32.mrf.mxu0
    %5837 = vmatprep.mubr.f32.mxu0 0.0
    %v5838 = vand.u32 %v75, 4294901760
    %5839 = vmatmul.mubr.f32.gmra.mxu0 %v5838
    %v5840 = vpop.f32.mrf.mxu0
    %v5841 = vadd.f32 %v5744, %v5840
    %v5842 = vpop.f32.mrf.mxu0
    %5843 = vdwg.mxu0
    %5844 = vmatprep.subr.mxu0 0.0
    %5845 = vmatpush1.msra.mxu0 0.0
    %5846 = vmatprep.subr.mxu0 0.0
    %5847 = vmatpush1.msra.mxu0 0.0
    %5848 = vmatprep.subr.mxu0 0.0
    %5849 = vmatpush1.msra.mxu0 0.0
    %5850 = vmatprep.subr.mxu0 0.0
    %5851 = vmatpush1.msra.mxu0 0.0
    %5852 = vmatprep.subr.mxu0 0.0
    %5853 = vmatpush1.msra.mxu0 0.0
    %5854 = vmatprep.subr.mxu0 0.0
    %5855 = vmatpush1.msra.mxu0 0.0
    %5856 = vmatprep.subr.mxu0 0.0
    %5857 = vmatpush1.msra.mxu0 0.0
    %5858 = vmatprep.subr.mxu0 0.0
    %5859 = vmatpush1.msra.mxu0 0.0
    %5860 = vmatprep.subr.mxu0 0.0
    %5861 = vmatpush1.msra.mxu0 0.0
    %5862 = vmatprep.subr.mxu0 0.0
    %5863 = vmatpush1.msra.mxu0 0.0
    %5864 = vmatprep.subr.mxu0 0.0
    %5865 = vmatpush1.msra.mxu0 0.0
    %5866 = vmatprep.subr.mxu0 0.0
    %5867 = vmatpush1.msra.mxu0 0.0
    %5868 = vmatprep.subr.mxu0 0.0
    %v5869 = vand.u32 %v5656, 4294901760
    %v5870 = vsub.f32 %v5656, %v5869
    %5871 = vmatpush1.msra.mxu0 %v5870
    %5872 = vmatprep.subr.mxu0 0.0
    %v5873 = vand.u32 %v5653, 4294901760
    %v5874 = vsub.f32 %v5653, %v5873
    %5875 = vmatpush1.msra.mxu0 %v5874
    %5876 = vmatprep.subr.mxu0 0.0
    %v5877 = vand.u32 %v5652, 4294901760
    %v5878 = vsub.f32 %v5652, %v5877
    %5879 = vmatpush1.msra.mxu0 %v5878
    %5880 = vmatprep.subr.mxu0 0.0
    %v5881 = vand.u32 %v5651, 4294901760
    %v5882 = vsub.f32 %v5651, %v5881
    %5883 = vmatpush1.msra.mxu0 %v5882
    %5884 = vmatprep.subr.mxu0 0.0
    %5885 = vmatpush2.msra.mxu0 0.0
    %5886 = vmatprep.subr.mxu0 0.0
    %5887 = vmatpush2.msra.mxu0 0.0
    %5888 = vmatprep.subr.mxu0 0.0
    %5889 = vmatpush2.msra.mxu0 0.0
    %5890 = vmatprep.subr.mxu0 0.0
    %5891 = vmatpush2.msra.mxu0 0.0
    %5892 = vmatprep.subr.mxu0 0.0
    %5893 = vmatpush2.msra.mxu0 0.0
    %5894 = vmatprep.subr.mxu0 0.0
    %5895 = vmatpush2.msra.mxu0 0.0
    %5896 = vmatprep.subr.mxu0 0.0
    %5897 = vmatpush2.msra.mxu0 0.0
    %5898 = vmatprep.subr.mxu0 0.0
    %5899 = vmatpush2.msra.mxu0 0.0
    %5900 = vmatprep.subr.mxu0 0.0
    %5901 = vmatpush2.msra.mxu0 0.0
    %5902 = vmatprep.subr.mxu0 0.0
    %5903 = vmatpush2.msra.mxu0 0.0
    %5904 = vmatprep.subr.mxu0 0.0
    %5905 = vmatpush2.msra.mxu0 0.0
    %5906 = vmatprep.subr.mxu0 0.0
    %5907 = vmatpush2.msra.mxu0 0.0
    %5908 = vmatprep.subr.mxu0 0.0
    %5909 = vmatpush2.msra.mxu0 0.0
    %5910 = vmatprep.subr.mxu0 0.0
    %5911 = vmatpush2.msra.mxu0 0.0
    %5912 = vmatprep.subr.mxu0 0.0
    %5913 = vmatpush2.msra.mxu0 0.0
    %5914 = vmatprep.subr.mxu0 0.0
    %5915 = vmatpush2.msra.mxu0 0.0
    %5916 = vmatprep.mubr.f32.mxu0 0.0
    %v5917 = vand.u32 %v72, 4294901760
    %v5918 = vsub.f32 %v72, %v5917
    %5919 = vmatmul.mubr.f32.gmra.mxu0 %v5918
    %v5920 = vpop.f32.mrf.mxu0
    %v5921 = vadd.f32 %v5835, %v5920
    %v5922 = vpop.f32.mrf.mxu0
    %5923 = vmatprep.mubr.f32.mxu0 0.0
    %v5924 = vand.u32 %v75, 4294901760
    %v5925 = vsub.f32 %v75, %v5924
    %5926 = vmatmul.mubr.f32.gmra.mxu0 %v5925
    %v5927 = vpop.f32.mrf.mxu0
    %v5928 = vadd.f32 %v5841, %v5927
    %v5929 = vpop.f32.mrf.mxu0
    %5930 = vdwg.mxu0
    %5931 = vmatprep.subr.mxu0 0.0
    %5932 = vmatpush1.msra.mxu0 0.0
    %5933 = vmatprep.subr.mxu0 0.0
    %5934 = vmatpush1.msra.mxu0 0.0
    %5935 = vmatprep.subr.mxu0 0.0
    %5936 = vmatpush1.msra.mxu0 0.0
    %5937 = vmatprep.subr.mxu0 0.0
    %5938 = vmatpush1.msra.mxu0 0.0
    %5939 = vmatprep.subr.mxu0 0.0
    %5940 = vmatpush1.msra.mxu0 0.0
    %5941 = vmatprep.subr.mxu0 0.0
    %5942 = vmatpush1.msra.mxu0 0.0
    %5943 = vmatprep.subr.mxu0 0.0
    %5944 = vmatpush1.msra.mxu0 0.0
    %5945 = vmatprep.subr.mxu0 0.0
    %5946 = vmatpush1.msra.mxu0 0.0
    %5947 = vmatprep.subr.mxu0 0.0
    %5948 = vmatpush1.msra.mxu0 0.0
    %5949 = vmatprep.subr.mxu0 0.0
    %5950 = vmatpush1.msra.mxu0 0.0
    %5951 = vmatprep.subr.mxu0 0.0
    %5952 = vmatpush1.msra.mxu0 0.0
    %5953 = vmatprep.subr.mxu0 0.0
    %5954 = vmatpush1.msra.mxu0 0.0
    %5955 = vmatprep.subr.mxu0 0.0
    %v5956 = vand.u32 %v5656, 4294901760
    %5957 = vmatpush1.msra.mxu0 %v5956
    %5958 = vmatprep.subr.mxu0 0.0
    %v5959 = vand.u32 %v5653, 4294901760
    %5960 = vmatpush1.msra.mxu0 %v5959
    %5961 = vmatprep.subr.mxu0 0.0
    %v5962 = vand.u32 %v5652, 4294901760
    %5963 = vmatpush1.msra.mxu0 %v5962
    %5964 = vmatprep.subr.mxu0 0.0
    %v5965 = vand.u32 %v5651, 4294901760
    %5966 = vmatpush1.msra.mxu0 %v5965
    %5967 = vmatprep.subr.mxu0 0.0
    %5968 = vmatpush2.msra.mxu0 0.0
    %5969 = vmatprep.subr.mxu0 0.0
    %5970 = vmatpush2.msra.mxu0 0.0
    %5971 = vmatprep.subr.mxu0 0.0
    %5972 = vmatpush2.msra.mxu0 0.0
    %5973 = vmatprep.subr.mxu0 0.0
    %5974 = vmatpush2.msra.mxu0 0.0
    %5975 = vmatprep.subr.mxu0 0.0
    %5976 = vmatpush2.msra.mxu0 0.0
    %5977 = vmatprep.subr.mxu0 0.0
    %5978 = vmatpush2.msra.mxu0 0.0
    %5979 = vmatprep.subr.mxu0 0.0
    %5980 = vmatpush2.msra.mxu0 0.0
    %5981 = vmatprep.subr.mxu0 0.0
    %5982 = vmatpush2.msra.mxu0 0.0
    %5983 = vmatprep.subr.mxu0 0.0
    %5984 = vmatpush2.msra.mxu0 0.0
    %5985 = vmatprep.subr.mxu0 0.0
    %5986 = vmatpush2.msra.mxu0 0.0
    %5987 = vmatprep.subr.mxu0 0.0
    %5988 = vmatpush2.msra.mxu0 0.0
    %5989 = vmatprep.subr.mxu0 0.0
    %5990 = vmatpush2.msra.mxu0 0.0
    %5991 = vmatprep.subr.mxu0 0.0
    %5992 = vmatpush2.msra.mxu0 0.0
    %5993 = vmatprep.subr.mxu0 0.0
    %5994 = vmatpush2.msra.mxu0 0.0
    %5995 = vmatprep.subr.mxu0 0.0
    %5996 = vmatpush2.msra.mxu0 0.0
    %5997 = vmatprep.subr.mxu0 0.0
    %5998 = vmatpush2.msra.mxu0 0.0
    %5999 = vmatprep.mubr.f32.mxu0 0.0
    %v6000 = vand.u32 %v72, 4294901760
    %v6001 = vsub.f32 %v72, %v6000
    %v6002 = vand.u32 %v6001, 4294901760
    %6003 = vmatmul.mubr.f32.gmra.mxu0 %v6002
    %v6004 = vpop.f32.mrf.mxu0
    %v6005 = vadd.f32 %v5921, %v6004
    %v6006 = vpop.f32.mrf.mxu0
    %6007 = vmatprep.mubr.f32.mxu0 0.0
    %v6008 = vand.u32 %v75, 4294901760
    %v6009 = vsub.f32 %v75, %v6008
    %v6010 = vand.u32 %v6009, 4294901760
    %6011 = vmatmul.mubr.f32.gmra.mxu0 %v6010
    %v6012 = vpop.f32.mrf.mxu0
    %v6013 = vadd.f32 %v5928, %v6012
    %v6014 = vpop.f32.mrf.mxu0
    %6015 = vdwg.mxu0
    %6016 = vmatprep.subr.mxu0 0.0
    %6017 = vmatpush1.msra.mxu0 0.0
    %6018 = vmatprep.subr.mxu0 0.0
    %6019 = vmatpush1.msra.mxu0 0.0
    %6020 = vmatprep.subr.mxu0 0.0
    %6021 = vmatpush1.msra.mxu0 0.0
    %6022 = vmatprep.subr.mxu0 0.0
    %6023 = vmatpush1.msra.mxu0 0.0
    %6024 = vmatprep.subr.mxu0 0.0
    %6025 = vmatpush1.msra.mxu0 0.0
    %6026 = vmatprep.subr.mxu0 0.0
    %6027 = vmatpush1.msra.mxu0 0.0
    %6028 = vmatprep.subr.mxu0 0.0
    %6029 = vmatpush1.msra.mxu0 0.0
    %6030 = vmatprep.subr.mxu0 0.0
    %6031 = vmatpush1.msra.mxu0 0.0
    %6032 = vmatprep.subr.mxu0 0.0
    %6033 = vmatpush1.msra.mxu0 0.0
    %6034 = vmatprep.subr.mxu0 0.0
    %6035 = vmatpush1.msra.mxu0 0.0
    %6036 = vmatprep.subr.mxu0 0.0
    %6037 = vmatpush1.msra.mxu0 0.0
    %6038 = vmatprep.subr.mxu0 0.0
    %6039 = vmatpush1.msra.mxu0 0.0
    %6040 = vmatprep.subr.mxu0 0.0
    %v6041 = vand.u32 %v5656, 4294901760
    %v6042 = vsub.f32 %v5656, %v6041
    %v6043 = vand.u32 %v6042, 4294901760
    %6044 = vmatpush1.msra.mxu0 %v6043
    %6045 = vmatprep.subr.mxu0 0.0
    %v6046 = vand.u32 %v5653, 4294901760
    %v6047 = vsub.f32 %v5653, %v6046
    %v6048 = vand.u32 %v6047, 4294901760
    %6049 = vmatpush1.msra.mxu0 %v6048
    %6050 = vmatprep.subr.mxu0 0.0
    %v6051 = vand.u32 %v5652, 4294901760
    %v6052 = vsub.f32 %v5652, %v6051
    %v6053 = vand.u32 %v6052, 4294901760
    %6054 = vmatpush1.msra.mxu0 %v6053
    %6055 = vmatprep.subr.mxu0 0.0
    %v6056 = vand.u32 %v5651, 4294901760
    %v6057 = vsub.f32 %v5651, %v6056
    %v6058 = vand.u32 %v6057, 4294901760
    %6059 = vmatpush1.msra.mxu0 %v6058
    %6060 = vmatprep.subr.mxu0 0.0
    %6061 = vmatpush2.msra.mxu0 0.0
    %6062 = vmatprep.subr.mxu0 0.0
    %6063 = vmatpush2.msra.mxu0 0.0
    %6064 = vmatprep.subr.mxu0 0.0
    %6065 = vmatpush2.msra.mxu0 0.0
    %6066 = vmatprep.subr.mxu0 0.0
    %6067 = vmatpush2.msra.mxu0 0.0
    %6068 = vmatprep.subr.mxu0 0.0
    %6069 = vmatpush2.msra.mxu0 0.0
    %6070 = vmatprep.subr.mxu0 0.0
    %6071 = vmatpush2.msra.mxu0 0.0
    %6072 = vmatprep.subr.mxu0 0.0
    %6073 = vmatpush2.msra.mxu0 0.0
    %6074 = vmatprep.subr.mxu0 0.0
    %6075 = vmatpush2.msra.mxu0 0.0
    %6076 = vmatprep.subr.mxu0 0.0
    %6077 = vmatpush2.msra.mxu0 0.0
    %6078 = vmatprep.subr.mxu0 0.0
    %6079 = vmatpush2.msra.mxu0 0.0
    %6080 = vmatprep.subr.mxu0 0.0
    %6081 = vmatpush2.msra.mxu0 0.0
    %6082 = vmatprep.subr.mxu0 0.0
    %6083 = vmatpush2.msra.mxu0 0.0
    %6084 = vmatprep.subr.mxu0 0.0
    %6085 = vmatpush2.msra.mxu0 0.0
    %6086 = vmatprep.subr.mxu0 0.0
    %6087 = vmatpush2.msra.mxu0 0.0
    %6088 = vmatprep.subr.mxu0 0.0
    %6089 = vmatpush2.msra.mxu0 0.0
    %6090 = vmatprep.subr.mxu0 0.0
    %6091 = vmatpush2.msra.mxu0 0.0
    %6092 = vmatprep.mubr.f32.mxu0 0.0
    %v6093 = vand.u32 %v72, 4294901760
    %6094 = vmatmul.mubr.f32.gmra.mxu0 %v6093
    %v6095 = vpop.f32.mrf.mxu0
    %v6096 = vadd.f32 %v6005, %v6095
    %v6097 = vpop.f32.mrf.mxu0
    %6098 = vmatprep.mubr.f32.mxu0 0.0
    %v6099 = vand.u32 %v75, 4294901760
    %6100 = vmatmul.mubr.f32.gmra.mxu0 %v6099
    %v6101 = vpop.f32.mrf.mxu0
    %v6102 = vadd.f32 %v6013, %v6101
    %v6103 = vpop.f32.mrf.mxu0
    %6104 = vdwg.mxu0
    %6105 = vmatprep.subr.mxu0 0.0
    %6106 = vmatpush1.msra.mxu0 0.0
    %6107 = vmatprep.subr.mxu0 0.0
    %6108 = vmatpush1.msra.mxu0 0.0
    %6109 = vmatprep.subr.mxu0 0.0
    %6110 = vmatpush1.msra.mxu0 0.0
    %6111 = vmatprep.subr.mxu0 0.0
    %6112 = vmatpush1.msra.mxu0 0.0
    %6113 = vmatprep.subr.mxu0 0.0
    %6114 = vmatpush1.msra.mxu0 0.0
    %6115 = vmatprep.subr.mxu0 0.0
    %6116 = vmatpush1.msra.mxu0 0.0
    %6117 = vmatprep.subr.mxu0 0.0
    %6118 = vmatpush1.msra.mxu0 0.0
    %6119 = vmatprep.subr.mxu0 0.0
    %6120 = vmatpush1.msra.mxu0 0.0
    %6121 = vmatprep.subr.mxu0 0.0
    %6122 = vmatpush1.msra.mxu0 0.0
    %6123 = vmatprep.subr.mxu0 0.0
    %6124 = vmatpush1.msra.mxu0 0.0
    %6125 = vmatprep.subr.mxu0 0.0
    %6126 = vmatpush1.msra.mxu0 0.0
    %6127 = vmatprep.subr.mxu0 0.0
    %6128 = vmatpush1.msra.mxu0 0.0
    %6129 = vmatprep.subr.mxu0 0.0
    %v6130 = vand.u32 %v5656, 4294901760
    %6131 = vmatpush1.msra.mxu0 %v6130
    %6132 = vmatprep.subr.mxu0 0.0
    %v6133 = vand.u32 %v5653, 4294901760
    %6134 = vmatpush1.msra.mxu0 %v6133
    %6135 = vmatprep.subr.mxu0 0.0
    %v6136 = vand.u32 %v5652, 4294901760
    %6137 = vmatpush1.msra.mxu0 %v6136
    %6138 = vmatprep.subr.mxu0 0.0
    %v6139 = vand.u32 %v5651, 4294901760
    %6140 = vmatpush1.msra.mxu0 %v6139
    %6141 = vmatprep.subr.mxu0 0.0
    %6142 = vmatpush2.msra.mxu0 0.0
    %6143 = vmatprep.subr.mxu0 0.0
    %6144 = vmatpush2.msra.mxu0 0.0
    %6145 = vmatprep.subr.mxu0 0.0
    %6146 = vmatpush2.msra.mxu0 0.0
    %6147 = vmatprep.subr.mxu0 0.0
    %6148 = vmatpush2.msra.mxu0 0.0
    %6149 = vmatprep.subr.mxu0 0.0
    %6150 = vmatpush2.msra.mxu0 0.0
    %6151 = vmatprep.subr.mxu0 0.0
    %6152 = vmatpush2.msra.mxu0 0.0
    %6153 = vmatprep.subr.mxu0 0.0
    %6154 = vmatpush2.msra.mxu0 0.0
    %6155 = vmatprep.subr.mxu0 0.0
    %6156 = vmatpush2.msra.mxu0 0.0
    %6157 = vmatprep.subr.mxu0 0.0
    %6158 = vmatpush2.msra.mxu0 0.0
    %6159 = vmatprep.subr.mxu0 0.0
    %6160 = vmatpush2.msra.mxu0 0.0
    %6161 = vmatprep.subr.mxu0 0.0
    %6162 = vmatpush2.msra.mxu0 0.0
    %6163 = vmatprep.subr.mxu0 0.0
    %6164 = vmatpush2.msra.mxu0 0.0
    %6165 = vmatprep.subr.mxu0 0.0
    %6166 = vmatpush2.msra.mxu0 0.0
    %6167 = vmatprep.subr.mxu0 0.0
    %6168 = vmatpush2.msra.mxu0 0.0
    %6169 = vmatprep.subr.mxu0 0.0
    %6170 = vmatpush2.msra.mxu0 0.0
    %6171 = vmatprep.subr.mxu0 0.0
    %6172 = vmatpush2.msra.mxu0 0.0
    %6173 = vmatprep.mubr.f32.mxu0 0.0
    %v6174 = vand.u32 %v72, 4294901760
    %6175 = vmatmul.mubr.f32.gmra.mxu0 %v6174
    %v6176 = vpop.f32.mrf.mxu0
    %v6177 = vadd.f32 %v6096, %v6176
    %v6178 = vpop.f32.mrf.mxu0
    %6179 = vmatprep.mubr.f32.mxu0 0.0
    %v6180 = vand.u32 %v75, 4294901760
    %6181 = vmatmul.mubr.f32.gmra.mxu0 %v6180
    %v6182 = vpop.f32.mrf.mxu0
    %v6183 = vadd.f32 %v6102, %v6182
    %v6184 = vpop.f32.mrf.mxu0
    %6185 = vdwg.mxu0
    %v6186 = vmul.f32 %v6177, 0.33333334
    %v6187 = vmul.f32 %v6183, 0.33333334
    %v6188 = vrsqrt.pop %v6186
    %v6189 = vmul.f32 %v6186, %v6188
    %vm6190 = vcmp.eq.f32.partialorder %v6186, inf
    %v6191 = vsel %vm6190, %v6186, %v6189
    %vm6192 = vcmp.eq.f32.partialorder %v6186, 0.0
    %v6193 = vand.u32 %v6186, 2147483648
    %v6194 = vsel %vm6192, %v6193, %v6191
    %v6195 = vrsqrt.pop %v6187
    %v6196 = vmul.f32 %v6187, %v6195
    %vm6197 = vcmp.eq.f32.partialorder %v6187, inf
    %v6198 = vsel %vm6197, %v6187, %v6196
    %vm6199 = vcmp.eq.f32.partialorder %v6187, 0.0
    %v6200 = vand.u32 %v6187, 2147483648
    %v6201 = vsel %vm6199, %v6200, %v6198
    %v6202 = vmul.f32 %v4501, %v5096
    %v6203 = vmul.f32 %v4502, %v5097
    %v6204 = vmul.f32 %v4503, %v5098
    %v6205 = vmul.f32 %v4504, %v5099
    %v6207 = vsel %vm77, %v6205, 0
    %6209 = vmatprep.subr.mxu0 0.0
    %6210 = vmatpush1.msra.mxu0 0.0
    %6211 = vmatprep.subr.mxu0 0.0
    %6212 = vmatpush1.msra.mxu0 0.0
    %6213 = vmatprep.subr.mxu0 0.0
    %6214 = vmatpush1.msra.mxu0 0.0
    %6215 = vmatprep.subr.mxu0 0.0
    %6216 = vmatpush1.msra.mxu0 0.0
    %6217 = vmatprep.subr.mxu0 0.0
    %6218 = vmatpush1.msra.mxu0 0.0
    %6219 = vmatprep.subr.mxu0 0.0
    %6220 = vmatpush1.msra.mxu0 0.0
    %6221 = vmatprep.subr.mxu0 0.0
    %6222 = vmatpush1.msra.mxu0 0.0
    %6223 = vmatprep.subr.mxu0 0.0
    %6224 = vmatpush1.msra.mxu0 0.0
    %6225 = vmatprep.subr.mxu0 0.0
    %6226 = vmatpush1.msra.mxu0 0.0
    %6227 = vmatprep.subr.mxu0 0.0
    %6228 = vmatpush1.msra.mxu0 0.0
    %6229 = vmatprep.subr.mxu0 0.0
    %6230 = vmatpush1.msra.mxu0 0.0
    %6231 = vmatprep.subr.mxu0 0.0
    %6232 = vmatpush1.msra.mxu0 0.0
    %6233 = vmatprep.subr.mxu0 0.0
    %v6234 = vand.u32 %v6207, 4294901760
    %6235 = vmatpush1.msra.mxu0 %v6234
    %6236 = vmatprep.subr.mxu0 0.0
    %v6237 = vand.u32 %v6204, 4294901760
    %6238 = vmatpush1.msra.mxu0 %v6237
    %6239 = vmatprep.subr.mxu0 0.0
    %v6240 = vand.u32 %v6203, 4294901760
    %6241 = vmatpush1.msra.mxu0 %v6240
    %6242 = vmatprep.subr.mxu0 0.0
    %v6243 = vand.u32 %v6202, 4294901760
    %6244 = vmatpush1.msra.mxu0 %v6243
    %6245 = vmatprep.subr.mxu0 0.0
    %6246 = vmatpush2.msra.mxu0 0.0
    %6247 = vmatprep.subr.mxu0 0.0
    %6248 = vmatpush2.msra.mxu0 0.0
    %6249 = vmatprep.subr.mxu0 0.0
    %6250 = vmatpush2.msra.mxu0 0.0
    %6251 = vmatprep.subr.mxu0 0.0
    %6252 = vmatpush2.msra.mxu0 0.0
    %6253 = vmatprep.subr.mxu0 0.0
    %6254 = vmatpush2.msra.mxu0 0.0
    %6255 = vmatprep.subr.mxu0 0.0
    %6256 = vmatpush2.msra.mxu0 0.0
    %6257 = vmatprep.subr.mxu0 0.0
    %6258 = vmatpush2.msra.mxu0 0.0
    %6259 = vmatprep.subr.mxu0 0.0
    %6260 = vmatpush2.msra.mxu0 0.0
    %6261 = vmatprep.subr.mxu0 0.0
    %6262 = vmatpush2.msra.mxu0 0.0
    %6263 = vmatprep.subr.mxu0 0.0
    %6264 = vmatpush2.msra.mxu0 0.0
    %6265 = vmatprep.subr.mxu0 0.0
    %6266 = vmatpush2.msra.mxu0 0.0
    %6267 = vmatprep.subr.mxu0 0.0
    %6268 = vmatpush2.msra.mxu0 0.0
    %6269 = vmatprep.subr.mxu0 0.0
    %6270 = vmatpush2.msra.mxu0 0.0
    %6271 = vmatprep.subr.mxu0 0.0
    %6272 = vmatpush2.msra.mxu0 0.0
    %6273 = vmatprep.subr.mxu0 0.0
    %6274 = vmatpush2.msra.mxu0 0.0
    %6275 = vmatprep.subr.mxu0 0.0
    %6276 = vmatpush2.msra.mxu0 0.0
    %6277 = vmatprep.mubr.f32.mxu0 0.0
    %v6278 = vand.u32 %v72, 4294901760
    %v6279 = vsub.f32 %v72, %v6278
    %v6280 = vand.u32 %v6279, 4294901760
    %v6281 = vsub.f32 %v6279, %v6280
    %v6282 = vand.u32 %v6281, 4294901760
    %6283 = vmatmul.mubr.f32.gmra.mxu0 %v6282
    %v6284 = vpop.f32.mrf.mxu0
    %v6285 = vadd.f32 0.0, %v6284
    %v6286 = vpop.f32.mrf.mxu0
    %6287 = vmatprep.mubr.f32.mxu0 0.0
    %v6288 = vand.u32 %v75, 4294901760
    %v6289 = vsub.f32 %v75, %v6288
    %v6290 = vand.u32 %v6289, 4294901760
    %v6291 = vsub.f32 %v6289, %v6290
    %v6292 = vand.u32 %v6291, 4294901760
    %6293 = vmatmul.mubr.f32.gmra.mxu0 %v6292
    %v6294 = vpop.f32.mrf.mxu0
    %v6295 = vadd.f32 0.0, %v6294
    %v6296 = vpop.f32.mrf.mxu0
    %6297 = vdwg.mxu0
    %6298 = vmatprep.subr.mxu0 0.0
    %6299 = vmatpush1.msra.mxu0 0.0
    %6300 = vmatprep.subr.mxu0 0.0
    %6301 = vmatpush1.msra.mxu0 0.0
    %6302 = vmatprep.subr.mxu0 0.0
    %6303 = vmatpush1.msra.mxu0 0.0
    %6304 = vmatprep.subr.mxu0 0.0
    %6305 = vmatpush1.msra.mxu0 0.0
    %6306 = vmatprep.subr.mxu0 0.0
    %6307 = vmatpush1.msra.mxu0 0.0
    %6308 = vmatprep.subr.mxu0 0.0
    %6309 = vmatpush1.msra.mxu0 0.0
    %6310 = vmatprep.subr.mxu0 0.0
    %6311 = vmatpush1.msra.mxu0 0.0
    %6312 = vmatprep.subr.mxu0 0.0
    %6313 = vmatpush1.msra.mxu0 0.0
    %6314 = vmatprep.subr.mxu0 0.0
    %6315 = vmatpush1.msra.mxu0 0.0
    %6316 = vmatprep.subr.mxu0 0.0
    %6317 = vmatpush1.msra.mxu0 0.0
    %6318 = vmatprep.subr.mxu0 0.0
    %6319 = vmatpush1.msra.mxu0 0.0
    %6320 = vmatprep.subr.mxu0 0.0
    %6321 = vmatpush1.msra.mxu0 0.0
    %6322 = vmatprep.subr.mxu0 0.0
    %v6323 = vand.u32 %v6207, 4294901760
    %v6324 = vsub.f32 %v6207, %v6323
    %v6325 = vand.u32 %v6324, 4294901760
    %v6326 = vsub.f32 %v6324, %v6325
    %v6327 = vand.u32 %v6326, 4294901760
    %6328 = vmatpush1.msra.mxu0 %v6327
    %6329 = vmatprep.subr.mxu0 0.0
    %v6330 = vand.u32 %v6204, 4294901760
    %v6331 = vsub.f32 %v6204, %v6330
    %v6332 = vand.u32 %v6331, 4294901760
    %v6333 = vsub.f32 %v6331, %v6332
    %v6334 = vand.u32 %v6333, 4294901760
    %6335 = vmatpush1.msra.mxu0 %v6334
    %6336 = vmatprep.subr.mxu0 0.0
    %v6337 = vand.u32 %v6203, 4294901760
    %v6338 = vsub.f32 %v6203, %v6337
    %v6339 = vand.u32 %v6338, 4294901760
    %v6340 = vsub.f32 %v6338, %v6339
    %v6341 = vand.u32 %v6340, 4294901760
    %6342 = vmatpush1.msra.mxu0 %v6341
    %6343 = vmatprep.subr.mxu0 0.0
    %v6344 = vand.u32 %v6202, 4294901760
    %v6345 = vsub.f32 %v6202, %v6344
    %v6346 = vand.u32 %v6345, 4294901760
    %v6347 = vsub.f32 %v6345, %v6346
    %v6348 = vand.u32 %v6347, 4294901760
    %6349 = vmatpush1.msra.mxu0 %v6348
    %6350 = vmatprep.subr.mxu0 0.0
    %6351 = vmatpush2.msra.mxu0 0.0
    %6352 = vmatprep.subr.mxu0 0.0
    %6353 = vmatpush2.msra.mxu0 0.0
    %6354 = vmatprep.subr.mxu0 0.0
    %6355 = vmatpush2.msra.mxu0 0.0
    %6356 = vmatprep.subr.mxu0 0.0
    %6357 = vmatpush2.msra.mxu0 0.0
    %6358 = vmatprep.subr.mxu0 0.0
    %6359 = vmatpush2.msra.mxu0 0.0
    %6360 = vmatprep.subr.mxu0 0.0
    %6361 = vmatpush2.msra.mxu0 0.0
    %6362 = vmatprep.subr.mxu0 0.0
    %6363 = vmatpush2.msra.mxu0 0.0
    %6364 = vmatprep.subr.mxu0 0.0
    %6365 = vmatpush2.msra.mxu0 0.0
    %6366 = vmatprep.subr.mxu0 0.0
    %6367 = vmatpush2.msra.mxu0 0.0
    %6368 = vmatprep.subr.mxu0 0.0
    %6369 = vmatpush2.msra.mxu0 0.0
    %6370 = vmatprep.subr.mxu0 0.0
    %6371 = vmatpush2.msra.mxu0 0.0
    %6372 = vmatprep.subr.mxu0 0.0
    %6373 = vmatpush2.msra.mxu0 0.0
    %6374 = vmatprep.subr.mxu0 0.0
    %6375 = vmatpush2.msra.mxu0 0.0
    %6376 = vmatprep.subr.mxu0 0.0
    %6377 = vmatpush2.msra.mxu0 0.0
    %6378 = vmatprep.subr.mxu0 0.0
    %6379 = vmatpush2.msra.mxu0 0.0
    %6380 = vmatprep.subr.mxu0 0.0
    %6381 = vmatpush2.msra.mxu0 0.0
    %6382 = vmatprep.mubr.f32.mxu0 0.0
    %v6383 = vand.u32 %v72, 4294901760
    %6384 = vmatmul.mubr.f32.gmra.mxu0 %v6383
    %v6385 = vpop.f32.mrf.mxu0
    %v6386 = vadd.f32 %v6285, %v6385
    %v6387 = vpop.f32.mrf.mxu0
    %6388 = vmatprep.mubr.f32.mxu0 0.0
    %v6389 = vand.u32 %v75, 4294901760
    %6390 = vmatmul.mubr.f32.gmra.mxu0 %v6389
    %v6391 = vpop.f32.mrf.mxu0
    %v6392 = vadd.f32 %v6295, %v6391
    %v6393 = vpop.f32.mrf.mxu0
    %6394 = vdwg.mxu0
    %6395 = vmatprep.subr.mxu0 0.0
    %6396 = vmatpush1.msra.mxu0 0.0
    %6397 = vmatprep.subr.mxu0 0.0
    %6398 = vmatpush1.msra.mxu0 0.0
    %6399 = vmatprep.subr.mxu0 0.0
    %6400 = vmatpush1.msra.mxu0 0.0
    %6401 = vmatprep.subr.mxu0 0.0
    %6402 = vmatpush1.msra.mxu0 0.0
    %6403 = vmatprep.subr.mxu0 0.0
    %6404 = vmatpush1.msra.mxu0 0.0
    %6405 = vmatprep.subr.mxu0 0.0
    %6406 = vmatpush1.msra.mxu0 0.0
    %6407 = vmatprep.subr.mxu0 0.0
    %6408 = vmatpush1.msra.mxu0 0.0
    %6409 = vmatprep.subr.mxu0 0.0
    %6410 = vmatpush1.msra.mxu0 0.0
    %6411 = vmatprep.subr.mxu0 0.0
    %6412 = vmatpush1.msra.mxu0 0.0
    %6413 = vmatprep.subr.mxu0 0.0
    %6414 = vmatpush1.msra.mxu0 0.0
    %6415 = vmatprep.subr.mxu0 0.0
    %6416 = vmatpush1.msra.mxu0 0.0
    %6417 = vmatprep.subr.mxu0 0.0
    %6418 = vmatpush1.msra.mxu0 0.0
    %6419 = vmatprep.subr.mxu0 0.0
    %v6420 = vand.u32 %v6207, 4294901760
    %v6421 = vsub.f32 %v6207, %v6420
    %6422 = vmatpush1.msra.mxu0 %v6421
    %6423 = vmatprep.subr.mxu0 0.0
    %v6424 = vand.u32 %v6204, 4294901760
    %v6425 = vsub.f32 %v6204, %v6424
    %6426 = vmatpush1.msra.mxu0 %v6425
    %6427 = vmatprep.subr.mxu0 0.0
    %v6428 = vand.u32 %v6203, 4294901760
    %v6429 = vsub.f32 %v6203, %v6428
    %6430 = vmatpush1.msra.mxu0 %v6429
    %6431 = vmatprep.subr.mxu0 0.0
    %v6432 = vand.u32 %v6202, 4294901760
    %v6433 = vsub.f32 %v6202, %v6432
    %6434 = vmatpush1.msra.mxu0 %v6433
    %6435 = vmatprep.subr.mxu0 0.0
    %6436 = vmatpush2.msra.mxu0 0.0
    %6437 = vmatprep.subr.mxu0 0.0
    %6438 = vmatpush2.msra.mxu0 0.0
    %6439 = vmatprep.subr.mxu0 0.0
    %6440 = vmatpush2.msra.mxu0 0.0
    %6441 = vmatprep.subr.mxu0 0.0
    %6442 = vmatpush2.msra.mxu0 0.0
    %6443 = vmatprep.subr.mxu0 0.0
    %6444 = vmatpush2.msra.mxu0 0.0
    %6445 = vmatprep.subr.mxu0 0.0
    %6446 = vmatpush2.msra.mxu0 0.0
    %6447 = vmatprep.subr.mxu0 0.0
    %6448 = vmatpush2.msra.mxu0 0.0
    %6449 = vmatprep.subr.mxu0 0.0
    %6450 = vmatpush2.msra.mxu0 0.0
    %6451 = vmatprep.subr.mxu0 0.0
    %6452 = vmatpush2.msra.mxu0 0.0
    %6453 = vmatprep.subr.mxu0 0.0
    %6454 = vmatpush2.msra.mxu0 0.0
    %6455 = vmatprep.subr.mxu0 0.0
    %6456 = vmatpush2.msra.mxu0 0.0
    %6457 = vmatprep.subr.mxu0 0.0
    %6458 = vmatpush2.msra.mxu0 0.0
    %6459 = vmatprep.subr.mxu0 0.0
    %6460 = vmatpush2.msra.mxu0 0.0
    %6461 = vmatprep.subr.mxu0 0.0
    %6462 = vmatpush2.msra.mxu0 0.0
    %6463 = vmatprep.subr.mxu0 0.0
    %6464 = vmatpush2.msra.mxu0 0.0
    %6465 = vmatprep.subr.mxu0 0.0
    %6466 = vmatpush2.msra.mxu0 0.0
    %6467 = vmatprep.mubr.f32.mxu0 0.0
    %v6468 = vand.u32 %v72, 4294901760
    %v6469 = vsub.f32 %v72, %v6468
    %6470 = vmatmul.mubr.f32.gmra.mxu0 %v6469
    %v6471 = vpop.f32.mrf.mxu0
    %v6472 = vadd.f32 %v6386, %v6471
    %v6473 = vpop.f32.mrf.mxu0
    %6474 = vmatprep.mubr.f32.mxu0 0.0
    %v6475 = vand.u32 %v75, 4294901760
    %v6476 = vsub.f32 %v75, %v6475
    %6477 = vmatmul.mubr.f32.gmra.mxu0 %v6476
    %v6478 = vpop.f32.mrf.mxu0
    %v6479 = vadd.f32 %v6392, %v6478
    %v6480 = vpop.f32.mrf.mxu0
    %6481 = vdwg.mxu0
    %6482 = vmatprep.subr.mxu0 0.0
    %6483 = vmatpush1.msra.mxu0 0.0
    %6484 = vmatprep.subr.mxu0 0.0
    %6485 = vmatpush1.msra.mxu0 0.0
    %6486 = vmatprep.subr.mxu0 0.0
    %6487 = vmatpush1.msra.mxu0 0.0
    %6488 = vmatprep.subr.mxu0 0.0
    %6489 = vmatpush1.msra.mxu0 0.0
    %6490 = vmatprep.subr.mxu0 0.0
    %6491 = vmatpush1.msra.mxu0 0.0
    %6492 = vmatprep.subr.mxu0 0.0
    %6493 = vmatpush1.msra.mxu0 0.0
    %6494 = vmatprep.subr.mxu0 0.0
    %6495 = vmatpush1.msra.mxu0 0.0
    %6496 = vmatprep.subr.mxu0 0.0
    %6497 = vmatpush1.msra.mxu0 0.0
    %6498 = vmatprep.subr.mxu0 0.0
    %6499 = vmatpush1.msra.mxu0 0.0
    %6500 = vmatprep.subr.mxu0 0.0
    %6501 = vmatpush1.msra.mxu0 0.0
    %6502 = vmatprep.subr.mxu0 0.0
    %6503 = vmatpush1.msra.mxu0 0.0
    %6504 = vmatprep.subr.mxu0 0.0
    %6505 = vmatpush1.msra.mxu0 0.0
    %6506 = vmatprep.subr.mxu0 0.0
    %v6507 = vand.u32 %v6207, 4294901760
    %6508 = vmatpush1.msra.mxu0 %v6507
    %6509 = vmatprep.subr.mxu0 0.0
    %v6510 = vand.u32 %v6204, 4294901760
    %6511 = vmatpush1.msra.mxu0 %v6510
    %6512 = vmatprep.subr.mxu0 0.0
    %v6513 = vand.u32 %v6203, 4294901760
    %6514 = vmatpush1.msra.mxu0 %v6513
    %6515 = vmatprep.subr.mxu0 0.0
    %v6516 = vand.u32 %v6202, 4294901760
    %6517 = vmatpush1.msra.mxu0 %v6516
    %6518 = vmatprep.subr.mxu0 0.0
    %6519 = vmatpush2.msra.mxu0 0.0
    %6520 = vmatprep.subr.mxu0 0.0
    %6521 = vmatpush2.msra.mxu0 0.0
    %6522 = vmatprep.subr.mxu0 0.0
    %6523 = vmatpush2.msra.mxu0 0.0
    %6524 = vmatprep.subr.mxu0 0.0
    %6525 = vmatpush2.msra.mxu0 0.0
    %6526 = vmatprep.subr.mxu0 0.0
    %6527 = vmatpush2.msra.mxu0 0.0
    %6528 = vmatprep.subr.mxu0 0.0
    %6529 = vmatpush2.msra.mxu0 0.0
    %6530 = vmatprep.subr.mxu0 0.0
    %6531 = vmatpush2.msra.mxu0 0.0
    %6532 = vmatprep.subr.mxu0 0.0
    %6533 = vmatpush2.msra.mxu0 0.0
    %6534 = vmatprep.subr.mxu0 0.0
    %6535 = vmatpush2.msra.mxu0 0.0
    %6536 = vmatprep.subr.mxu0 0.0
    %6537 = vmatpush2.msra.mxu0 0.0
    %6538 = vmatprep.subr.mxu0 0.0
    %6539 = vmatpush2.msra.mxu0 0.0
    %6540 = vmatprep.subr.mxu0 0.0
    %6541 = vmatpush2.msra.mxu0 0.0
    %6542 = vmatprep.subr.mxu0 0.0
    %6543 = vmatpush2.msra.mxu0 0.0
    %6544 = vmatprep.subr.mxu0 0.0
    %6545 = vmatpush2.msra.mxu0 0.0
    %6546 = vmatprep.subr.mxu0 0.0
    %6547 = vmatpush2.msra.mxu0 0.0
    %6548 = vmatprep.subr.mxu0 0.0
    %6549 = vmatpush2.msra.mxu0 0.0
    %6550 = vmatprep.mubr.f32.mxu0 0.0
    %v6551 = vand.u32 %v72, 4294901760
    %v6552 = vsub.f32 %v72, %v6551
    %v6553 = vand.u32 %v6552, 4294901760
    %6554 = vmatmul.mubr.f32.gmra.mxu0 %v6553
    %v6555 = vpop.f32.mrf.mxu0
    %v6556 = vadd.f32 %v6472, %v6555
    %v6557 = vpop.f32.mrf.mxu0
    %6558 = vmatprep.mubr.f32.mxu0 0.0
    %v6559 = vand.u32 %v75, 4294901760
    %v6560 = vsub.f32 %v75, %v6559
    %v6561 = vand.u32 %v6560, 4294901760
    %6562 = vmatmul.mubr.f32.gmra.mxu0 %v6561
    %v6563 = vpop.f32.mrf.mxu0
    %v6564 = vadd.f32 %v6479, %v6563
    %v6565 = vpop.f32.mrf.mxu0
    %6566 = vdwg.mxu0
    %6567 = vmatprep.subr.mxu0 0.0
    %6568 = vmatpush1.msra.mxu0 0.0
    %6569 = vmatprep.subr.mxu0 0.0
    %6570 = vmatpush1.msra.mxu0 0.0
    %6571 = vmatprep.subr.mxu0 0.0
    %6572 = vmatpush1.msra.mxu0 0.0
    %6573 = vmatprep.subr.mxu0 0.0
    %6574 = vmatpush1.msra.mxu0 0.0
    %6575 = vmatprep.subr.mxu0 0.0
    %6576 = vmatpush1.msra.mxu0 0.0
    %6577 = vmatprep.subr.mxu0 0.0
    %6578 = vmatpush1.msra.mxu0 0.0
    %6579 = vmatprep.subr.mxu0 0.0
    %6580 = vmatpush1.msra.mxu0 0.0
    %6581 = vmatprep.subr.mxu0 0.0
    %6582 = vmatpush1.msra.mxu0 0.0
    %6583 = vmatprep.subr.mxu0 0.0
    %6584 = vmatpush1.msra.mxu0 0.0
    %6585 = vmatprep.subr.mxu0 0.0
    %6586 = vmatpush1.msra.mxu0 0.0
    %6587 = vmatprep.subr.mxu0 0.0
    %6588 = vmatpush1.msra.mxu0 0.0
    %6589 = vmatprep.subr.mxu0 0.0
    %6590 = vmatpush1.msra.mxu0 0.0
    %6591 = vmatprep.subr.mxu0 0.0
    %v6592 = vand.u32 %v6207, 4294901760
    %v6593 = vsub.f32 %v6207, %v6592
    %v6594 = vand.u32 %v6593, 4294901760
    %6595 = vmatpush1.msra.mxu0 %v6594
    %6596 = vmatprep.subr.mxu0 0.0
    %v6597 = vand.u32 %v6204, 4294901760
    %v6598 = vsub.f32 %v6204, %v6597
    %v6599 = vand.u32 %v6598, 4294901760
    %6600 = vmatpush1.msra.mxu0 %v6599
    %6601 = vmatprep.subr.mxu0 0.0
    %v6602 = vand.u32 %v6203, 4294901760
    %v6603 = vsub.f32 %v6203, %v6602
    %v6604 = vand.u32 %v6603, 4294901760
    %6605 = vmatpush1.msra.mxu0 %v6604
    %6606 = vmatprep.subr.mxu0 0.0
    %v6607 = vand.u32 %v6202, 4294901760
    %v6608 = vsub.f32 %v6202, %v6607
    %v6609 = vand.u32 %v6608, 4294901760
    %6610 = vmatpush1.msra.mxu0 %v6609
    %6611 = vmatprep.subr.mxu0 0.0
    %6612 = vmatpush2.msra.mxu0 0.0
    %6613 = vmatprep.subr.mxu0 0.0
    %6614 = vmatpush2.msra.mxu0 0.0
    %6615 = vmatprep.subr.mxu0 0.0
    %6616 = vmatpush2.msra.mxu0 0.0
    %6617 = vmatprep.subr.mxu0 0.0
    %6618 = vmatpush2.msra.mxu0 0.0
    %6619 = vmatprep.subr.mxu0 0.0
    %6620 = vmatpush2.msra.mxu0 0.0
    %6621 = vmatprep.subr.mxu0 0.0
    %6622 = vmatpush2.msra.mxu0 0.0
    %6623 = vmatprep.subr.mxu0 0.0
    %6624 = vmatpush2.msra.mxu0 0.0
    %6625 = vmatprep.subr.mxu0 0.0
    %6626 = vmatpush2.msra.mxu0 0.0
    %6627 = vmatprep.subr.mxu0 0.0
    %6628 = vmatpush2.msra.mxu0 0.0
    %6629 = vmatprep.subr.mxu0 0.0
    %6630 = vmatpush2.msra.mxu0 0.0
    %6631 = vmatprep.subr.mxu0 0.0
    %6632 = vmatpush2.msra.mxu0 0.0
    %6633 = vmatprep.subr.mxu0 0.0
    %6634 = vmatpush2.msra.mxu0 0.0
    %6635 = vmatprep.subr.mxu0 0.0
    %6636 = vmatpush2.msra.mxu0 0.0
    %6637 = vmatprep.subr.mxu0 0.0
    %6638 = vmatpush2.msra.mxu0 0.0
    %6639 = vmatprep.subr.mxu0 0.0
    %6640 = vmatpush2.msra.mxu0 0.0
    %6641 = vmatprep.subr.mxu0 0.0
    %6642 = vmatpush2.msra.mxu0 0.0
    %6643 = vmatprep.mubr.f32.mxu0 0.0
    %v6644 = vand.u32 %v72, 4294901760
    %6645 = vmatmul.mubr.f32.gmra.mxu0 %v6644
    %v6646 = vpop.f32.mrf.mxu0
    %v6647 = vadd.f32 %v6556, %v6646
    %v6648 = vpop.f32.mrf.mxu0
    %6649 = vmatprep.mubr.f32.mxu0 0.0
    %v6650 = vand.u32 %v75, 4294901760
    %6651 = vmatmul.mubr.f32.gmra.mxu0 %v6650
    %v6652 = vpop.f32.mrf.mxu0
    %v6653 = vadd.f32 %v6564, %v6652
    %v6654 = vpop.f32.mrf.mxu0
    %6655 = vdwg.mxu0
    %6656 = vmatprep.subr.mxu0 0.0
    %6657 = vmatpush1.msra.mxu0 0.0
    %6658 = vmatprep.subr.mxu0 0.0
    %6659 = vmatpush1.msra.mxu0 0.0
    %6660 = vmatprep.subr.mxu0 0.0
    %6661 = vmatpush1.msra.mxu0 0.0
    %6662 = vmatprep.subr.mxu0 0.0
    %6663 = vmatpush1.msra.mxu0 0.0
    %6664 = vmatprep.subr.mxu0 0.0
    %6665 = vmatpush1.msra.mxu0 0.0
    %6666 = vmatprep.subr.mxu0 0.0
    %6667 = vmatpush1.msra.mxu0 0.0
    %6668 = vmatprep.subr.mxu0 0.0
    %6669 = vmatpush1.msra.mxu0 0.0
    %6670 = vmatprep.subr.mxu0 0.0
    %6671 = vmatpush1.msra.mxu0 0.0
    %6672 = vmatprep.subr.mxu0 0.0
    %6673 = vmatpush1.msra.mxu0 0.0
    %6674 = vmatprep.subr.mxu0 0.0
    %6675 = vmatpush1.msra.mxu0 0.0
    %6676 = vmatprep.subr.mxu0 0.0
    %6677 = vmatpush1.msra.mxu0 0.0
    %6678 = vmatprep.subr.mxu0 0.0
    %6679 = vmatpush1.msra.mxu0 0.0
    %6680 = vmatprep.subr.mxu0 0.0
    %v6681 = vand.u32 %v6207, 4294901760
    %6682 = vmatpush1.msra.mxu0 %v6681
    %6683 = vmatprep.subr.mxu0 0.0
    %v6684 = vand.u32 %v6204, 4294901760
    %6685 = vmatpush1.msra.mxu0 %v6684
    %6686 = vmatprep.subr.mxu0 0.0
    %v6687 = vand.u32 %v6203, 4294901760
    %6688 = vmatpush1.msra.mxu0 %v6687
    %6689 = vmatprep.subr.mxu0 0.0
    %v6690 = vand.u32 %v6202, 4294901760
    %6691 = vmatpush1.msra.mxu0 %v6690
    %6692 = vmatprep.subr.mxu0 0.0
    %6693 = vmatpush2.msra.mxu0 0.0
    %6694 = vmatprep.subr.mxu0 0.0
    %6695 = vmatpush2.msra.mxu0 0.0
    %6696 = vmatprep.subr.mxu0 0.0
    %6697 = vmatpush2.msra.mxu0 0.0
    %6698 = vmatprep.subr.mxu0 0.0
    %6699 = vmatpush2.msra.mxu0 0.0
    %6700 = vmatprep.subr.mxu0 0.0
    %6701 = vmatpush2.msra.mxu0 0.0
    %6702 = vmatprep.subr.mxu0 0.0
    %6703 = vmatpush2.msra.mxu0 0.0
    %6704 = vmatprep.subr.mxu0 0.0
    %6705 = vmatpush2.msra.mxu0 0.0
    %6706 = vmatprep.subr.mxu0 0.0
    %6707 = vmatpush2.msra.mxu0 0.0
    %6708 = vmatprep.subr.mxu0 0.0
    %6709 = vmatpush2.msra.mxu0 0.0
    %6710 = vmatprep.subr.mxu0 0.0
    %6711 = vmatpush2.msra.mxu0 0.0
    %6712 = vmatprep.subr.mxu0 0.0
    %6713 = vmatpush2.msra.mxu0 0.0
    %6714 = vmatprep.subr.mxu0 0.0
    %6715 = vmatpush2.msra.mxu0 0.0
    %6716 = vmatprep.subr.mxu0 0.0
    %6717 = vmatpush2.msra.mxu0 0.0
    %6718 = vmatprep.subr.mxu0 0.0
    %6719 = vmatpush2.msra.mxu0 0.0
    %6720 = vmatprep.subr.mxu0 0.0
    %6721 = vmatpush2.msra.mxu0 0.0
    %6722 = vmatprep.subr.mxu0 0.0
    %6723 = vmatpush2.msra.mxu0 0.0
    %6724 = vmatprep.mubr.f32.mxu0 0.0
    %v6725 = vand.u32 %v72, 4294901760
    %6726 = vmatmul.mubr.f32.gmra.mxu0 %v6725
    %v6727 = vpop.f32.mrf.mxu0
    %v6728 = vadd.f32 %v6647, %v6727
    %v6729 = vpop.f32.mrf.mxu0
    %6730 = vmatprep.mubr.f32.mxu0 0.0
    %v6731 = vand.u32 %v75, 4294901760
    %6732 = vmatmul.mubr.f32.gmra.mxu0 %v6731
    %v6733 = vpop.f32.mrf.mxu0
    %v6734 = vadd.f32 %v6653, %v6733
    %v6735 = vpop.f32.mrf.mxu0
    %6736 = vdwg.mxu0
    %v6737 = vmul.f32 %v6728, 0.5
    %v6738 = vmul.f32 %v6734, 0.5
    %v6739 = vmul.f32 %v5643, %v6194
    %v6740 = vmul.f32 %v5650, %v6201
    %v6741 = vadd.f32 %v6739, 0.01
    %v6742 = vadd.f32 %v6740, 0.01
    %v6743 = vrcp.pop %v6741
    %v6744 = vmul.f32 %v6737, %v6743
    %v6745 = vrcp.pop %v6742
    %v6746 = vmul.f32 %v6738, %v6745
    %v6747 = vmul.f32 %v50, %v54
    %v6748 = vmul.f32 %v51, %v55
    %v6749 = vmul.f32 %v52, %v56
    %v6750 = vmul.f32 %v53, %v57
    %v6752 = vsel %vm77, %v6750, 0
    %6754 = vmatprep.subr.mxu0 0.0
    %6755 = vmatpush1.msra.mxu0 0.0
    %6756 = vmatprep.subr.mxu0 0.0
    %6757 = vmatpush1.msra.mxu0 0.0
    %6758 = vmatprep.subr.mxu0 0.0
    %6759 = vmatpush1.msra.mxu0 0.0
    %6760 = vmatprep.subr.mxu0 0.0
    %6761 = vmatpush1.msra.mxu0 0.0
    %6762 = vmatprep.subr.mxu0 0.0
    %6763 = vmatpush1.msra.mxu0 0.0
    %6764 = vmatprep.subr.mxu0 0.0
    %6765 = vmatpush1.msra.mxu0 0.0
    %6766 = vmatprep.subr.mxu0 0.0
    %6767 = vmatpush1.msra.mxu0 0.0
    %6768 = vmatprep.subr.mxu0 0.0
    %6769 = vmatpush1.msra.mxu0 0.0
    %6770 = vmatprep.subr.mxu0 0.0
    %6771 = vmatpush1.msra.mxu0 0.0
    %6772 = vmatprep.subr.mxu0 0.0
    %6773 = vmatpush1.msra.mxu0 0.0
    %6774 = vmatprep.subr.mxu0 0.0
    %6775 = vmatpush1.msra.mxu0 0.0
    %6776 = vmatprep.subr.mxu0 0.0
    %6777 = vmatpush1.msra.mxu0 0.0
    %6778 = vmatprep.subr.mxu0 0.0
    %v6779 = vand.u32 %v6752, 4294901760
    %6780 = vmatpush1.msra.mxu0 %v6779
    %6781 = vmatprep.subr.mxu0 0.0
    %v6782 = vand.u32 %v6749, 4294901760
    %6783 = vmatpush1.msra.mxu0 %v6782
    %6784 = vmatprep.subr.mxu0 0.0
    %v6785 = vand.u32 %v6748, 4294901760
    %6786 = vmatpush1.msra.mxu0 %v6785
    %6787 = vmatprep.subr.mxu0 0.0
    %v6788 = vand.u32 %v6747, 4294901760
    %6789 = vmatpush1.msra.mxu0 %v6788
    %6790 = vmatprep.subr.mxu0 0.0
    %6791 = vmatpush2.msra.mxu0 0.0
    %6792 = vmatprep.subr.mxu0 0.0
    %6793 = vmatpush2.msra.mxu0 0.0
    %6794 = vmatprep.subr.mxu0 0.0
    %6795 = vmatpush2.msra.mxu0 0.0
    %6796 = vmatprep.subr.mxu0 0.0
    %6797 = vmatpush2.msra.mxu0 0.0
    %6798 = vmatprep.subr.mxu0 0.0
    %6799 = vmatpush2.msra.mxu0 0.0
    %6800 = vmatprep.subr.mxu0 0.0
    %6801 = vmatpush2.msra.mxu0 0.0
    %6802 = vmatprep.subr.mxu0 0.0
    %6803 = vmatpush2.msra.mxu0 0.0
    %6804 = vmatprep.subr.mxu0 0.0
    %6805 = vmatpush2.msra.mxu0 0.0
    %6806 = vmatprep.subr.mxu0 0.0
    %6807 = vmatpush2.msra.mxu0 0.0
    %6808 = vmatprep.subr.mxu0 0.0
    %6809 = vmatpush2.msra.mxu0 0.0
    %6810 = vmatprep.subr.mxu0 0.0
    %6811 = vmatpush2.msra.mxu0 0.0
    %6812 = vmatprep.subr.mxu0 0.0
    %6813 = vmatpush2.msra.mxu0 0.0
    %6814 = vmatprep.subr.mxu0 0.0
    %6815 = vmatpush2.msra.mxu0 0.0
    %6816 = vmatprep.subr.mxu0 0.0
    %6817 = vmatpush2.msra.mxu0 0.0
    %6818 = vmatprep.subr.mxu0 0.0
    %6819 = vmatpush2.msra.mxu0 0.0
    %6820 = vmatprep.subr.mxu0 0.0
    %6821 = vmatpush2.msra.mxu0 0.0
    %6822 = vmatprep.mubr.f32.mxu0 0.0
    %v6823 = vand.u32 %v72, 4294901760
    %v6824 = vsub.f32 %v72, %v6823
    %v6825 = vand.u32 %v6824, 4294901760
    %v6826 = vsub.f32 %v6824, %v6825
    %v6827 = vand.u32 %v6826, 4294901760
    %6828 = vmatmul.mubr.f32.gmra.mxu0 %v6827
    %v6829 = vpop.f32.mrf.mxu0
    %v6830 = vadd.f32 0.0, %v6829
    %v6831 = vpop.f32.mrf.mxu0
    %6832 = vmatprep.mubr.f32.mxu0 0.0
    %v6833 = vand.u32 %v75, 4294901760
    %v6834 = vsub.f32 %v75, %v6833
    %v6835 = vand.u32 %v6834, 4294901760
    %v6836 = vsub.f32 %v6834, %v6835
    %v6837 = vand.u32 %v6836, 4294901760
    %6838 = vmatmul.mubr.f32.gmra.mxu0 %v6837
    %v6839 = vpop.f32.mrf.mxu0
    %v6840 = vadd.f32 0.0, %v6839
    %v6841 = vpop.f32.mrf.mxu0
    %6842 = vdwg.mxu0
    %6843 = vmatprep.subr.mxu0 0.0
    %6844 = vmatpush1.msra.mxu0 0.0
    %6845 = vmatprep.subr.mxu0 0.0
    %6846 = vmatpush1.msra.mxu0 0.0
    %6847 = vmatprep.subr.mxu0 0.0
    %6848 = vmatpush1.msra.mxu0 0.0
    %6849 = vmatprep.subr.mxu0 0.0
    %6850 = vmatpush1.msra.mxu0 0.0
    %6851 = vmatprep.subr.mxu0 0.0
    %6852 = vmatpush1.msra.mxu0 0.0
    %6853 = vmatprep.subr.mxu0 0.0
    %6854 = vmatpush1.msra.mxu0 0.0
    %6855 = vmatprep.subr.mxu0 0.0
    %6856 = vmatpush1.msra.mxu0 0.0
    %6857 = vmatprep.subr.mxu0 0.0
    %6858 = vmatpush1.msra.mxu0 0.0
    %6859 = vmatprep.subr.mxu0 0.0
    %6860 = vmatpush1.msra.mxu0 0.0
    %6861 = vmatprep.subr.mxu0 0.0
    %6862 = vmatpush1.msra.mxu0 0.0
    %6863 = vmatprep.subr.mxu0 0.0
    %6864 = vmatpush1.msra.mxu0 0.0
    %6865 = vmatprep.subr.mxu0 0.0
    %6866 = vmatpush1.msra.mxu0 0.0
    %6867 = vmatprep.subr.mxu0 0.0
    %v6868 = vand.u32 %v6752, 4294901760
    %v6869 = vsub.f32 %v6752, %v6868
    %v6870 = vand.u32 %v6869, 4294901760
    %v6871 = vsub.f32 %v6869, %v6870
    %v6872 = vand.u32 %v6871, 4294901760
    %6873 = vmatpush1.msra.mxu0 %v6872
    %6874 = vmatprep.subr.mxu0 0.0
    %v6875 = vand.u32 %v6749, 4294901760
    %v6876 = vsub.f32 %v6749, %v6875
    %v6877 = vand.u32 %v6876, 4294901760
    %v6878 = vsub.f32 %v6876, %v6877
    %v6879 = vand.u32 %v6878, 4294901760
    %6880 = vmatpush1.msra.mxu0 %v6879
    %6881 = vmatprep.subr.mxu0 0.0
    %v6882 = vand.u32 %v6748, 4294901760
    %v6883 = vsub.f32 %v6748, %v6882
    %v6884 = vand.u32 %v6883, 4294901760
    %v6885 = vsub.f32 %v6883, %v6884
    %v6886 = vand.u32 %v6885, 4294901760
    %6887 = vmatpush1.msra.mxu0 %v6886
    %6888 = vmatprep.subr.mxu0 0.0
    %v6889 = vand.u32 %v6747, 4294901760
    %v6890 = vsub.f32 %v6747, %v6889
    %v6891 = vand.u32 %v6890, 4294901760
    %v6892 = vsub.f32 %v6890, %v6891
    %v6893 = vand.u32 %v6892, 4294901760
    %6894 = vmatpush1.msra.mxu0 %v6893
    %6895 = vmatprep.subr.mxu0 0.0
    %6896 = vmatpush2.msra.mxu0 0.0
    %6897 = vmatprep.subr.mxu0 0.0
    %6898 = vmatpush2.msra.mxu0 0.0
    %6899 = vmatprep.subr.mxu0 0.0
    %6900 = vmatpush2.msra.mxu0 0.0
    %6901 = vmatprep.subr.mxu0 0.0
    %6902 = vmatpush2.msra.mxu0 0.0
    %6903 = vmatprep.subr.mxu0 0.0
    %6904 = vmatpush2.msra.mxu0 0.0
    %6905 = vmatprep.subr.mxu0 0.0
    %6906 = vmatpush2.msra.mxu0 0.0
    %6907 = vmatprep.subr.mxu0 0.0
    %6908 = vmatpush2.msra.mxu0 0.0
    %6909 = vmatprep.subr.mxu0 0.0
    %6910 = vmatpush2.msra.mxu0 0.0
    %6911 = vmatprep.subr.mxu0 0.0
    %6912 = vmatpush2.msra.mxu0 0.0
    %6913 = vmatprep.subr.mxu0 0.0
    %6914 = vmatpush2.msra.mxu0 0.0
    %6915 = vmatprep.subr.mxu0 0.0
    %6916 = vmatpush2.msra.mxu0 0.0
    %6917 = vmatprep.subr.mxu0 0.0
    %6918 = vmatpush2.msra.mxu0 0.0
    %6919 = vmatprep.subr.mxu0 0.0
    %6920 = vmatpush2.msra.mxu0 0.0
    %6921 = vmatprep.subr.mxu0 0.0
    %6922 = vmatpush2.msra.mxu0 0.0
    %6923 = vmatprep.subr.mxu0 0.0
    %6924 = vmatpush2.msra.mxu0 0.0
    %6925 = vmatprep.subr.mxu0 0.0
    %6926 = vmatpush2.msra.mxu0 0.0
    %6927 = vmatprep.mubr.f32.mxu0 0.0
    %v6928 = vand.u32 %v72, 4294901760
    %6929 = vmatmul.mubr.f32.gmra.mxu0 %v6928
    %v6930 = vpop.f32.mrf.mxu0
    %v6931 = vadd.f32 %v6830, %v6930
    %v6932 = vpop.f32.mrf.mxu0
    %6933 = vmatprep.mubr.f32.mxu0 0.0
    %v6934 = vand.u32 %v75, 4294901760
    %6935 = vmatmul.mubr.f32.gmra.mxu0 %v6934
    %v6936 = vpop.f32.mrf.mxu0
    %v6937 = vadd.f32 %v6840, %v6936
    %v6938 = vpop.f32.mrf.mxu0
    %6939 = vdwg.mxu0
    %6940 = vmatprep.subr.mxu0 0.0
    %6941 = vmatpush1.msra.mxu0 0.0
    %6942 = vmatprep.subr.mxu0 0.0
    %6943 = vmatpush1.msra.mxu0 0.0
    %6944 = vmatprep.subr.mxu0 0.0
    %6945 = vmatpush1.msra.mxu0 0.0
    %6946 = vmatprep.subr.mxu0 0.0
    %6947 = vmatpush1.msra.mxu0 0.0
    %6948 = vmatprep.subr.mxu0 0.0
    %6949 = vmatpush1.msra.mxu0 0.0
    %6950 = vmatprep.subr.mxu0 0.0
    %6951 = vmatpush1.msra.mxu0 0.0
    %6952 = vmatprep.subr.mxu0 0.0
    %6953 = vmatpush1.msra.mxu0 0.0
    %6954 = vmatprep.subr.mxu0 0.0
    %6955 = vmatpush1.msra.mxu0 0.0
    %6956 = vmatprep.subr.mxu0 0.0
    %6957 = vmatpush1.msra.mxu0 0.0
    %6958 = vmatprep.subr.mxu0 0.0
    %6959 = vmatpush1.msra.mxu0 0.0
    %6960 = vmatprep.subr.mxu0 0.0
    %6961 = vmatpush1.msra.mxu0 0.0
    %6962 = vmatprep.subr.mxu0 0.0
    %6963 = vmatpush1.msra.mxu0 0.0
    %6964 = vmatprep.subr.mxu0 0.0
    %v6965 = vand.u32 %v6752, 4294901760
    %v6966 = vsub.f32 %v6752, %v6965
    %6967 = vmatpush1.msra.mxu0 %v6966
    %6968 = vmatprep.subr.mxu0 0.0
    %v6969 = vand.u32 %v6749, 4294901760
    %v6970 = vsub.f32 %v6749, %v6969
    %6971 = vmatpush1.msra.mxu0 %v6970
    %6972 = vmatprep.subr.mxu0 0.0
    %v6973 = vand.u32 %v6748, 4294901760
    %v6974 = vsub.f32 %v6748, %v6973
    %6975 = vmatpush1.msra.mxu0 %v6974
    %6976 = vmatprep.subr.mxu0 0.0
    %v6977 = vand.u32 %v6747, 4294901760
    %v6978 = vsub.f32 %v6747, %v6977
    %6979 = vmatpush1.msra.mxu0 %v6978
    %6980 = vmatprep.subr.mxu0 0.0
    %6981 = vmatpush2.msra.mxu0 0.0
    %6982 = vmatprep.subr.mxu0 0.0
    %6983 = vmatpush2.msra.mxu0 0.0
    %6984 = vmatprep.subr.mxu0 0.0
    %6985 = vmatpush2.msra.mxu0 0.0
    %6986 = vmatprep.subr.mxu0 0.0
    %6987 = vmatpush2.msra.mxu0 0.0
    %6988 = vmatprep.subr.mxu0 0.0
    %6989 = vmatpush2.msra.mxu0 0.0
    %6990 = vmatprep.subr.mxu0 0.0
    %6991 = vmatpush2.msra.mxu0 0.0
    %6992 = vmatprep.subr.mxu0 0.0
    %6993 = vmatpush2.msra.mxu0 0.0
    %6994 = vmatprep.subr.mxu0 0.0
    %6995 = vmatpush2.msra.mxu0 0.0
    %6996 = vmatprep.subr.mxu0 0.0
    %6997 = vmatpush2.msra.mxu0 0.0
    %6998 = vmatprep.subr.mxu0 0.0
    %6999 = vmatpush2.msra.mxu0 0.0
    %7000 = vmatprep.subr.mxu0 0.0
    %7001 = vmatpush2.msra.mxu0 0.0
    %7002 = vmatprep.subr.mxu0 0.0
    %7003 = vmatpush2.msra.mxu0 0.0
    %7004 = vmatprep.subr.mxu0 0.0
    %7005 = vmatpush2.msra.mxu0 0.0
    %7006 = vmatprep.subr.mxu0 0.0
    %7007 = vmatpush2.msra.mxu0 0.0
    %7008 = vmatprep.subr.mxu0 0.0
    %7009 = vmatpush2.msra.mxu0 0.0
    %7010 = vmatprep.subr.mxu0 0.0
    %7011 = vmatpush2.msra.mxu0 0.0
    %7012 = vmatprep.mubr.f32.mxu0 0.0
    %v7013 = vand.u32 %v72, 4294901760
    %v7014 = vsub.f32 %v72, %v7013
    %7015 = vmatmul.mubr.f32.gmra.mxu0 %v7014
    %v7016 = vpop.f32.mrf.mxu0
    %v7017 = vadd.f32 %v6931, %v7016
    %v7018 = vpop.f32.mrf.mxu0
    %7019 = vmatprep.mubr.f32.mxu0 0.0
    %v7020 = vand.u32 %v75, 4294901760
    %v7021 = vsub.f32 %v75, %v7020
    %7022 = vmatmul.mubr.f32.gmra.mxu0 %v7021
    %v7023 = vpop.f32.mrf.mxu0
    %v7024 = vadd.f32 %v6937, %v7023
    %v7025 = vpop.f32.mrf.mxu0
    %7026 = vdwg.mxu0
    %7027 = vmatprep.subr.mxu0 0.0
    %7028 = vmatpush1.msra.mxu0 0.0
    %7029 = vmatprep.subr.mxu0 0.0
    %7030 = vmatpush1.msra.mxu0 0.0
    %7031 = vmatprep.subr.mxu0 0.0
    %7032 = vmatpush1.msra.mxu0 0.0
    %7033 = vmatprep.subr.mxu0 0.0
    %7034 = vmatpush1.msra.mxu0 0.0
    %7035 = vmatprep.subr.mxu0 0.0
    %7036 = vmatpush1.msra.mxu0 0.0
    %7037 = vmatprep.subr.mxu0 0.0
    %7038 = vmatpush1.msra.mxu0 0.0
    %7039 = vmatprep.subr.mxu0 0.0
    %7040 = vmatpush1.msra.mxu0 0.0
    %7041 = vmatprep.subr.mxu0 0.0
    %7042 = vmatpush1.msra.mxu0 0.0
    %7043 = vmatprep.subr.mxu0 0.0
    %7044 = vmatpush1.msra.mxu0 0.0
    %7045 = vmatprep.subr.mxu0 0.0
    %7046 = vmatpush1.msra.mxu0 0.0
    %7047 = vmatprep.subr.mxu0 0.0
    %7048 = vmatpush1.msra.mxu0 0.0
    %7049 = vmatprep.subr.mxu0 0.0
    %7050 = vmatpush1.msra.mxu0 0.0
    %7051 = vmatprep.subr.mxu0 0.0
    %v7052 = vand.u32 %v6752, 4294901760
    %7053 = vmatpush1.msra.mxu0 %v7052
    %7054 = vmatprep.subr.mxu0 0.0
    %v7055 = vand.u32 %v6749, 4294901760
    %7056 = vmatpush1.msra.mxu0 %v7055
    %7057 = vmatprep.subr.mxu0 0.0
    %v7058 = vand.u32 %v6748, 4294901760
    %7059 = vmatpush1.msra.mxu0 %v7058
    %7060 = vmatprep.subr.mxu0 0.0
    %v7061 = vand.u32 %v6747, 4294901760
    %7062 = vmatpush1.msra.mxu0 %v7061
    %7063 = vmatprep.subr.mxu0 0.0
    %7064 = vmatpush2.msra.mxu0 0.0
    %7065 = vmatprep.subr.mxu0 0.0
    %7066 = vmatpush2.msra.mxu0 0.0
    %7067 = vmatprep.subr.mxu0 0.0
    %7068 = vmatpush2.msra.mxu0 0.0
    %7069 = vmatprep.subr.mxu0 0.0
    %7070 = vmatpush2.msra.mxu0 0.0
    %7071 = vmatprep.subr.mxu0 0.0
    %7072 = vmatpush2.msra.mxu0 0.0
    %7073 = vmatprep.subr.mxu0 0.0
    %7074 = vmatpush2.msra.mxu0 0.0
    %7075 = vmatprep.subr.mxu0 0.0
    %7076 = vmatpush2.msra.mxu0 0.0
    %7077 = vmatprep.subr.mxu0 0.0
    %7078 = vmatpush2.msra.mxu0 0.0
    %7079 = vmatprep.subr.mxu0 0.0
    %7080 = vmatpush2.msra.mxu0 0.0
    %7081 = vmatprep.subr.mxu0 0.0
    %7082 = vmatpush2.msra.mxu0 0.0
    %7083 = vmatprep.subr.mxu0 0.0
    %7084 = vmatpush2.msra.mxu0 0.0
    %7085 = vmatprep.subr.mxu0 0.0
    %7086 = vmatpush2.msra.mxu0 0.0
    %7087 = vmatprep.subr.mxu0 0.0
    %7088 = vmatpush2.msra.mxu0 0.0
    %7089 = vmatprep.subr.mxu0 0.0
    %7090 = vmatpush2.msra.mxu0 0.0
    %7091 = vmatprep.subr.mxu0 0.0
    %7092 = vmatpush2.msra.mxu0 0.0
    %7093 = vmatprep.subr.mxu0 0.0
    %7094 = vmatpush2.msra.mxu0 0.0
    %7095 = vmatprep.mubr.f32.mxu0 0.0
    %v7096 = vand.u32 %v72, 4294901760
    %v7097 = vsub.f32 %v72, %v7096
    %v7098 = vand.u32 %v7097, 4294901760
    %7099 = vmatmul.mubr.f32.gmra.mxu0 %v7098
    %v7100 = vpop.f32.mrf.mxu0
    %v7101 = vadd.f32 %v7017, %v7100
    %v7102 = vpop.f32.mrf.mxu0
    %7103 = vmatprep.mubr.f32.mxu0 0.0
    %v7104 = vand.u32 %v75, 4294901760
    %v7105 = vsub.f32 %v75, %v7104
    %v7106 = vand.u32 %v7105, 4294901760
    %7107 = vmatmul.mubr.f32.gmra.mxu0 %v7106
    %v7108 = vpop.f32.mrf.mxu0
    %v7109 = vadd.f32 %v7024, %v7108
    %v7110 = vpop.f32.mrf.mxu0
    %7111 = vdwg.mxu0
    %7112 = vmatprep.subr.mxu0 0.0
    %7113 = vmatpush1.msra.mxu0 0.0
    %7114 = vmatprep.subr.mxu0 0.0
    %7115 = vmatpush1.msra.mxu0 0.0
    %7116 = vmatprep.subr.mxu0 0.0
    %7117 = vmatpush1.msra.mxu0 0.0
    %7118 = vmatprep.subr.mxu0 0.0
    %7119 = vmatpush1.msra.mxu0 0.0
    %7120 = vmatprep.subr.mxu0 0.0
    %7121 = vmatpush1.msra.mxu0 0.0
    %7122 = vmatprep.subr.mxu0 0.0
    %7123 = vmatpush1.msra.mxu0 0.0
    %7124 = vmatprep.subr.mxu0 0.0
    %7125 = vmatpush1.msra.mxu0 0.0
    %7126 = vmatprep.subr.mxu0 0.0
    %7127 = vmatpush1.msra.mxu0 0.0
    %7128 = vmatprep.subr.mxu0 0.0
    %7129 = vmatpush1.msra.mxu0 0.0
    %7130 = vmatprep.subr.mxu0 0.0
    %7131 = vmatpush1.msra.mxu0 0.0
    %7132 = vmatprep.subr.mxu0 0.0
    %7133 = vmatpush1.msra.mxu0 0.0
    %7134 = vmatprep.subr.mxu0 0.0
    %7135 = vmatpush1.msra.mxu0 0.0
    %7136 = vmatprep.subr.mxu0 0.0
    %v7137 = vand.u32 %v6752, 4294901760
    %v7138 = vsub.f32 %v6752, %v7137
    %v7139 = vand.u32 %v7138, 4294901760
    %7140 = vmatpush1.msra.mxu0 %v7139
    %7141 = vmatprep.subr.mxu0 0.0
    %v7142 = vand.u32 %v6749, 4294901760
    %v7143 = vsub.f32 %v6749, %v7142
    %v7144 = vand.u32 %v7143, 4294901760
    %7145 = vmatpush1.msra.mxu0 %v7144
    %7146 = vmatprep.subr.mxu0 0.0
    %v7147 = vand.u32 %v6748, 4294901760
    %v7148 = vsub.f32 %v6748, %v7147
    %v7149 = vand.u32 %v7148, 4294901760
    %7150 = vmatpush1.msra.mxu0 %v7149
    %7151 = vmatprep.subr.mxu0 0.0
    %v7152 = vand.u32 %v6747, 4294901760
    %v7153 = vsub.f32 %v6747, %v7152
    %v7154 = vand.u32 %v7153, 4294901760
    %7155 = vmatpush1.msra.mxu0 %v7154
    %7156 = vmatprep.subr.mxu0 0.0
    %7157 = vmatpush2.msra.mxu0 0.0
    %7158 = vmatprep.subr.mxu0 0.0
    %7159 = vmatpush2.msra.mxu0 0.0
    %7160 = vmatprep.subr.mxu0 0.0
    %7161 = vmatpush2.msra.mxu0 0.0
    %7162 = vmatprep.subr.mxu0 0.0
    %7163 = vmatpush2.msra.mxu0 0.0
    %7164 = vmatprep.subr.mxu0 0.0
    %7165 = vmatpush2.msra.mxu0 0.0
    %7166 = vmatprep.subr.mxu0 0.0
    %7167 = vmatpush2.msra.mxu0 0.0
    %7168 = vmatprep.subr.mxu0 0.0
    %7169 = vmatpush2.msra.mxu0 0.0
    %7170 = vmatprep.subr.mxu0 0.0
    %7171 = vmatpush2.msra.mxu0 0.0
    %7172 = vmatprep.subr.mxu0 0.0
    %7173 = vmatpush2.msra.mxu0 0.0
    %7174 = vmatprep.subr.mxu0 0.0
    %7175 = vmatpush2.msra.mxu0 0.0
    %7176 = vmatprep.subr.mxu0 0.0
    %7177 = vmatpush2.msra.mxu0 0.0
    %7178 = vmatprep.subr.mxu0 0.0
    %7179 = vmatpush2.msra.mxu0 0.0
    %7180 = vmatprep.subr.mxu0 0.0
    %7181 = vmatpush2.msra.mxu0 0.0
    %7182 = vmatprep.subr.mxu0 0.0
    %7183 = vmatpush2.msra.mxu0 0.0
    %7184 = vmatprep.subr.mxu0 0.0
    %7185 = vmatpush2.msra.mxu0 0.0
    %7186 = vmatprep.subr.mxu0 0.0
    %7187 = vmatpush2.msra.mxu0 0.0
    %7188 = vmatprep.mubr.f32.mxu0 0.0
    %v7189 = vand.u32 %v72, 4294901760
    %7190 = vmatmul.mubr.f32.gmra.mxu0 %v7189
    %v7191 = vpop.f32.mrf.mxu0
    %v7192 = vadd.f32 %v7101, %v7191
    %v7193 = vpop.f32.mrf.mxu0
    %7194 = vmatprep.mubr.f32.mxu0 0.0
    %v7195 = vand.u32 %v75, 4294901760
    %7196 = vmatmul.mubr.f32.gmra.mxu0 %v7195
    %v7197 = vpop.f32.mrf.mxu0
    %v7198 = vadd.f32 %v7109, %v7197
    %v7199 = vpop.f32.mrf.mxu0
    %7200 = vdwg.mxu0
    %7201 = vmatprep.subr.mxu0 0.0
    %7202 = vmatpush1.msra.mxu0 0.0
    %7203 = vmatprep.subr.mxu0 0.0
    %7204 = vmatpush1.msra.mxu0 0.0
    %7205 = vmatprep.subr.mxu0 0.0
    %7206 = vmatpush1.msra.mxu0 0.0
    %7207 = vmatprep.subr.mxu0 0.0
    %7208 = vmatpush1.msra.mxu0 0.0
    %7209 = vmatprep.subr.mxu0 0.0
    %7210 = vmatpush1.msra.mxu0 0.0
    %7211 = vmatprep.subr.mxu0 0.0
    %7212 = vmatpush1.msra.mxu0 0.0
    %7213 = vmatprep.subr.mxu0 0.0
    %7214 = vmatpush1.msra.mxu0 0.0
    %7215 = vmatprep.subr.mxu0 0.0
    %7216 = vmatpush1.msra.mxu0 0.0
    %7217 = vmatprep.subr.mxu0 0.0
    %7218 = vmatpush1.msra.mxu0 0.0
    %7219 = vmatprep.subr.mxu0 0.0
    %7220 = vmatpush1.msra.mxu0 0.0
    %7221 = vmatprep.subr.mxu0 0.0
    %7222 = vmatpush1.msra.mxu0 0.0
    %7223 = vmatprep.subr.mxu0 0.0
    %7224 = vmatpush1.msra.mxu0 0.0
    %7225 = vmatprep.subr.mxu0 0.0
    %v7226 = vand.u32 %v6752, 4294901760
    %7227 = vmatpush1.msra.mxu0 %v7226
    %7228 = vmatprep.subr.mxu0 0.0
    %v7229 = vand.u32 %v6749, 4294901760
    %7230 = vmatpush1.msra.mxu0 %v7229
    %7231 = vmatprep.subr.mxu0 0.0
    %v7232 = vand.u32 %v6748, 4294901760
    %7233 = vmatpush1.msra.mxu0 %v7232
    %7234 = vmatprep.subr.mxu0 0.0
    %v7235 = vand.u32 %v6747, 4294901760
    %7236 = vmatpush1.msra.mxu0 %v7235
    %7237 = vmatprep.subr.mxu0 0.0
    %7238 = vmatpush2.msra.mxu0 0.0
    %7239 = vmatprep.subr.mxu0 0.0
    %7240 = vmatpush2.msra.mxu0 0.0
    %7241 = vmatprep.subr.mxu0 0.0
    %7242 = vmatpush2.msra.mxu0 0.0
    %7243 = vmatprep.subr.mxu0 0.0
    %7244 = vmatpush2.msra.mxu0 0.0
    %7245 = vmatprep.subr.mxu0 0.0
    %7246 = vmatpush2.msra.mxu0 0.0
    %7247 = vmatprep.subr.mxu0 0.0
    %7248 = vmatpush2.msra.mxu0 0.0
    %7249 = vmatprep.subr.mxu0 0.0
    %7250 = vmatpush2.msra.mxu0 0.0
    %7251 = vmatprep.subr.mxu0 0.0
    %7252 = vmatpush2.msra.mxu0 0.0
    %7253 = vmatprep.subr.mxu0 0.0
    %7254 = vmatpush2.msra.mxu0 0.0
    %7255 = vmatprep.subr.mxu0 0.0
    %7256 = vmatpush2.msra.mxu0 0.0
    %7257 = vmatprep.subr.mxu0 0.0
    %7258 = vmatpush2.msra.mxu0 0.0
    %7259 = vmatprep.subr.mxu0 0.0
    %7260 = vmatpush2.msra.mxu0 0.0
    %7261 = vmatprep.subr.mxu0 0.0
    %7262 = vmatpush2.msra.mxu0 0.0
    %7263 = vmatprep.subr.mxu0 0.0
    %7264 = vmatpush2.msra.mxu0 0.0
    %7265 = vmatprep.subr.mxu0 0.0
    %7266 = vmatpush2.msra.mxu0 0.0
    %7267 = vmatprep.subr.mxu0 0.0
    %7268 = vmatpush2.msra.mxu0 0.0
    %7269 = vmatprep.mubr.f32.mxu0 0.0
    %v7270 = vand.u32 %v72, 4294901760
    %7271 = vmatmul.mubr.f32.gmra.mxu0 %v7270
    %v7272 = vpop.f32.mrf.mxu0
    %v7273 = vadd.f32 %v7192, %v7272
    %v7274 = vpop.f32.mrf.mxu0
    %7275 = vmatprep.mubr.f32.mxu0 0.0
    %v7276 = vand.u32 %v75, 4294901760
    %7277 = vmatmul.mubr.f32.gmra.mxu0 %v7276
    %v7278 = vpop.f32.mrf.mxu0
    %v7279 = vadd.f32 %v7198, %v7278
    %v7280 = vpop.f32.mrf.mxu0
    %7281 = vdwg.mxu0
    %v7282 = vmul.f32 %v7273, 0.33333334
    %v7283 = vmul.f32 %v7279, 0.33333334
    %s7284 = sld [smem:[#allocation2]]
    %s7285 = sld [smem:[#allocation2 + $0x1]]
    %vm7286 = vcmask 736256
    %v7287 = vsel %vm7286, %v6737, 0.0
    %vm7288 = vcmask 730112
    %v7289 = vsel %vm7288, %v6738, 0.0
    %v7290 = vadd.f32 %v7287, %v7289
    %7291 = vadd.xlane.f32.xlu0 %v7290
    %v7292 = vpop.xlane.xlu0 %7291
    %v7293 = vrot.slane %v7292, 4
    %v7294 = vadd.f32 %v7292, %v7293
    %v7295 = vrot.slane %v7294, 2
    %v7296 = vadd.f32 %v7294, %v7295
    %v7297 = vrot.slane %v7296, 1
    %v7298 = vadd.f32 %v7296, %v7297
    %s7299 = vtos %v7298
    %v7300 = vstv %s7299
    %v7301 = vrcp.pop 900.0
    %v7302 = vmul.f32 %v7300, %v7301
    %v7303 = vsub.f32 %v6737, %v7302
    %v7304 = vsub.f32 %v6738, %v7302
    %v7305 = vmul.f32 %v7303, %v7303
    %v7306 = vmul.f32 %v7304, %v7304
    %v7307 = vsel %vm7286, %v7305, 0.0
    %v7308 = vsel %vm7288, %v7306, 0.0
    %v7309 = vadd.f32 %v7307, %v7308
    %7310 = vadd.xlane.f32.xlu0 %v7309
    %v7311 = vpop.xlane.xlu0 %7310
    %v7312 = vrot.slane %v7311, 4
    %v7313 = vadd.f32 %v7311, %v7312
    %v7314 = vrot.slane %v7313, 2
    %v7315 = vadd.f32 %v7313, %v7314
    %v7316 = vrot.slane %v7315, 1
    %v7317 = vadd.f32 %v7315, %v7316
    %s7318 = vtos %v7317
    %v7319 = vstv %s7318
    %v7320 = vmul.f32 %v7319, %v7301
    %v7321 = vadd.f32 %v7320, 1e-05
    %v7322 = vrsqrt.pop %v7321
    %v7323 = vstv %s7284
    %v7324 = vmul.f32 %v7323, %v7322
    %v7325 = vmul.f32 %v7303, %v7324
    %v7326 = vmul.f32 %v7304, %v7324
    %v7327 = vstv %s7285
    %v7328 = vadd.f32 %v7325, %v7327
    %v7329 = vadd.f32 %v7326, %v7327
    %s7330 = sld [smem:[#allocation2 + $0x2]]
    %s7331 = sld [smem:[#allocation2 + $0x3]]
    %v7332 = vsel %vm7286, %v6744, 0.0
    %v7333 = vsel %vm7288, %v6746, 0.0
    %v7334 = vadd.f32 %v7332, %v7333
    %7335 = vadd.xlane.f32.xlu0 %v7334
    %v7336 = vpop.xlane.xlu0 %7335
    %v7337 = vrot.slane %v7336, 4
    %v7338 = vadd.f32 %v7336, %v7337
    %v7339 = vrot.slane %v7338, 2
    %v7340 = vadd.f32 %v7338, %v7339
    %v7341 = vrot.slane %v7340, 1
    %v7342 = vadd.f32 %v7340, %v7341
    %s7343 = vtos %v7342
    %v7344 = vstv %s7343
    %v7345 = vmul.f32 %v7344, %v7301
    %v7346 = vsub.f32 %v6744, %v7345
    %v7347 = vsub.f32 %v6746, %v7345
    %v7348 = vmul.f32 %v7346, %v7346
    %v7349 = vmul.f32 %v7347, %v7347
    %v7350 = vsel %vm7286, %v7348, 0.0
    %v7351 = vsel %vm7288, %v7349, 0.0
    %v7352 = vadd.f32 %v7350, %v7351
    %7353 = vadd.xlane.f32.xlu0 %v7352
    %v7354 = vpop.xlane.xlu0 %7353
    %v7355 = vrot.slane %v7354, 4
    %v7356 = vadd.f32 %v7354, %v7355
    %v7357 = vrot.slane %v7356, 2
    %v7358 = vadd.f32 %v7356, %v7357
    %v7359 = vrot.slane %v7358, 1
    %v7360 = vadd.f32 %v7358, %v7359
    %s7361 = vtos %v7360
    %v7362 = vstv %s7361
    %v7363 = vmul.f32 %v7362, %v7301
    %v7364 = vadd.f32 %v7363, 1e-05
    %v7365 = vrsqrt.pop %v7364
    %v7366 = vstv %s7330
    %v7367 = vmul.f32 %v7366, %v7365
    %v7368 = vmul.f32 %v7346, %v7367
    %v7369 = vmul.f32 %v7347, %v7367
    %v7370 = vstv %s7331
    %v7371 = vadd.f32 %v7368, %v7370
    %v7372 = vadd.f32 %v7369, %v7370
    %s7373 = sld [smem:[#allocation2 + $0x4]]
    %s7374 = sld [smem:[#allocation2 + $0x5]]
    %vm7375 = vcmask 146432
    %v7376 = vsel %vm7375, %v2296, 0.0
    %vm7377 = vcmask 140288
    %v7378 = vsel %vm7377, %v2302, 0.0
    %v7379 = vadd.f32 %v7376, %v7378
    %7380 = vadd.xlane.f32.xlu0 %v7379
    %v7381 = vpop.xlane.xlu0 %7380
    %v7382 = vrot.slane %v7381, 4
    %v7383 = vadd.f32 %v7381, %v7382
    %v7384 = vrot.slane %v7383, 2
    %v7385 = vadd.f32 %v7383, %v7384
    %v7386 = vrot.slane %v7385, 1
    %v7387 = vadd.f32 %v7385, %v7386
    %s7388 = vtos %v7387
    %v7389 = vstv %s7388
    %v7390 = vrcp.pop 180.0
    %v7391 = vmul.f32 %v7389, %v7390
    %v7392 = vsub.f32 %v2296, %v7391
    %v7393 = vsub.f32 %v2302, %v7391
    %v7394 = vmul.f32 %v7392, %v7392
    %v7395 = vmul.f32 %v7393, %v7393
    %v7396 = vsel %vm7375, %v7394, 0.0
    %v7397 = vsel %vm7377, %v7395, 0.0
    %v7398 = vadd.f32 %v7396, %v7397
    %7399 = vadd.xlane.f32.xlu0 %v7398
    %v7400 = vpop.xlane.xlu0 %7399
    %v7401 = vrot.slane %v7400, 4
    %v7402 = vadd.f32 %v7400, %v7401
    %v7403 = vrot.slane %v7402, 2
    %v7404 = vadd.f32 %v7402, %v7403
    %v7405 = vrot.slane %v7404, 1
    %v7406 = vadd.f32 %v7404, %v7405
    %s7407 = vtos %v7406
    %v7408 = vstv %s7407
    %v7409 = vmul.f32 %v7408, %v7390
    %v7410 = vadd.f32 %v7409, 1e-05
    %v7411 = vrsqrt.pop %v7410
    %v7412 = vstv %s7373
    %v7413 = vmul.f32 %v7412, %v7411
    %v7414 = vmul.f32 %v7392, %v7413
    %v7415 = vmul.f32 %v7393, %v7413
    %v7416 = vstv %s7374
    %v7417 = vadd.f32 %v7414, %v7416
    %v7418 = vadd.f32 %v7415, %v7416
    %s7419 = sld [smem:[#allocation2 + $0x6]]
    %s7420 = sld [smem:[#allocation2 + $0x7]]
    %v7421 = vsel %vm7375, %v1763, 0.0
    %v7422 = vsel %vm7377, %v1770, 0.0
    %v7423 = vadd.f32 %v7421, %v7422
    %7424 = vadd.xlane.f32.xlu0 %v7423
    %v7425 = vpop.xlane.xlu0 %7424
    %v7426 = vrot.slane %v7425, 4
    %v7427 = vadd.f32 %v7425, %v7426
    %v7428 = vrot.slane %v7427, 2
    %v7429 = vadd.f32 %v7427, %v7428
    %v7430 = vrot.slane %v7429, 1
    %v7431 = vadd.f32 %v7429, %v7430
    %s7432 = vtos %v7431
    %v7433 = vstv %s7432
    %v7434 = vmul.f32 %v7433, %v7390
    %v7435 = vsub.f32 %v1763, %v7434
    %v7436 = vsub.f32 %v1770, %v7434
    %v7437 = vmul.f32 %v7435, %v7435
    %v7438 = vmul.f32 %v7436, %v7436
    %v7439 = vsel %vm7375, %v7437, 0.0
    %v7440 = vsel %vm7377, %v7438, 0.0
    %v7441 = vadd.f32 %v7439, %v7440
    %7442 = vadd.xlane.f32.xlu0 %v7441
    %v7443 = vpop.xlane.xlu0 %7442
    %v7444 = vrot.slane %v7443, 4
    %v7445 = vadd.f32 %v7443, %v7444
    %v7446 = vrot.slane %v7445, 2
    %v7447 = vadd.f32 %v7445, %v7446
    %v7448 = vrot.slane %v7447, 1
    %v7449 = vadd.f32 %v7447, %v7448
    %s7450 = vtos %v7449
    %v7451 = vstv %s7450
    %v7452 = vmul.f32 %v7451, %v7390
    %v7453 = vadd.f32 %v7452, 1e-05
    %v7454 = vrsqrt.pop %v7453
    %v7455 = vstv %s7419
    %v7456 = vmul.f32 %v7455, %v7454
    %v7457 = vmul.f32 %v7435, %v7456
    %v7458 = vmul.f32 %v7436, %v7456
    %v7459 = vstv %s7420
    %v7460 = vadd.f32 %v7457, %v7459
    %v7461 = vadd.f32 %v7458, %v7459
    %s7462 = sld [smem:[#allocation2 + $0x8]]
    %s7463 = sld [smem:[#allocation2 + $0x9]]
    %v7464 = vsel %vm7375, %v2842, 0.0
    %v7465 = vsel %vm7377, %v2843, 0.0
    %v7466 = vadd.f32 %v7464, %v7465
    %7467 = vadd.xlane.f32.xlu0 %v7466
    %v7468 = vpop.xlane.xlu0 %7467
    %v7469 = vrot.slane %v7468, 4
    %v7470 = vadd.f32 %v7468, %v7469
    %v7471 = vrot.slane %v7470, 2
    %v7472 = vadd.f32 %v7470, %v7471
    %v7473 = vrot.slane %v7472, 1
    %v7474 = vadd.f32 %v7472, %v7473
    %s7475 = vtos %v7474
    %v7476 = vstv %s7475
    %v7477 = vmul.f32 %v7476, %v7390
    %v7478 = vsub.f32 %v2842, %v7477
    %v7479 = vsub.f32 %v2843, %v7477
    %v7480 = vmul.f32 %v7478, %v7478
    %v7481 = vmul.f32 %v7479, %v7479
    %v7482 = vsel %vm7375, %v7480, 0.0
    %v7483 = vsel %vm7377, %v7481, 0.0
    %v7484 = vadd.f32 %v7482, %v7483
    %7485 = vadd.xlane.f32.xlu0 %v7484
    %v7486 = vpop.xlane.xlu0 %7485
    %v7487 = vrot.slane %v7486, 4
    %v7488 = vadd.f32 %v7486, %v7487
    %v7489 = vrot.slane %v7488, 2
    %v7490 = vadd.f32 %v7488, %v7489
    %v7491 = vrot.slane %v7490, 1
    %v7492 = vadd.f32 %v7490, %v7491
    %s7493 = vtos %v7492
    %v7494 = vstv %s7493
    %v7495 = vmul.f32 %v7494, %v7390
    %v7496 = vadd.f32 %v7495, 1e-05
    %v7497 = vrsqrt.pop %v7496
    %v7498 = vstv %s7462
    %v7499 = vmul.f32 %v7498, %v7497
    %v7500 = vmul.f32 %v7478, %v7499
    %v7501 = vmul.f32 %v7479, %v7499
    %v7502 = vstv %s7463
    %v7503 = vadd.f32 %v7500, %v7502
    %v7504 = vadd.f32 %v7501, %v7502
    %s7505 = sld [smem:[#allocation2 + $0xa]]
    %s7506 = sld [smem:[#allocation2 + $0xb]]
    %v7507 = vsel %vm7375, %v2308, 0.0
    %v7508 = vsel %vm7377, %v2310, 0.0
    %v7509 = vadd.f32 %v7507, %v7508
    %7510 = vadd.xlane.f32.xlu0 %v7509
    %v7511 = vpop.xlane.xlu0 %7510
    %v7512 = vrot.slane %v7511, 4
    %v7513 = vadd.f32 %v7511, %v7512
    %v7514 = vrot.slane %v7513, 2
    %v7515 = vadd.f32 %v7513, %v7514
    %v7516 = vrot.slane %v7515, 1
    %v7517 = vadd.f32 %v7515, %v7516
    %s7518 = vtos %v7517
    %v7519 = vstv %s7518
    %v7520 = vmul.f32 %v7519, %v7390
    %v7521 = vsub.f32 %v2308, %v7520
    %v7522 = vsub.f32 %v2310, %v7520
    %v7523 = vmul.f32 %v7521, %v7521
    %v7524 = vmul.f32 %v7522, %v7522
    %v7525 = vsel %vm7375, %v7523, 0.0
    %v7526 = vsel %vm7377, %v7524, 0.0
    %v7527 = vadd.f32 %v7525, %v7526
    %7528 = vadd.xlane.f32.xlu0 %v7527
    %v7529 = vpop.xlane.xlu0 %7528
    %v7530 = vrot.slane %v7529, 4
    %v7531 = vadd.f32 %v7529, %v7530
    %v7532 = vrot.slane %v7531, 2
    %v7533 = vadd.f32 %v7531, %v7532
    %v7534 = vrot.slane %v7533, 1
    %v7535 = vadd.f32 %v7533, %v7534
    %s7536 = vtos %v7535
    %v7537 = vstv %s7536
    %v7538 = vmul.f32 %v7537, %v7390
    %v7539 = vadd.f32 %v7538, 1e-05
    %v7540 = vrsqrt.pop %v7539
    %v7541 = vstv %s7505
    %v7542 = vmul.f32 %v7541, %v7540
    %v7543 = vmul.f32 %v7521, %v7542
    %v7544 = vmul.f32 %v7522, %v7542
    %v7545 = vstv %s7506
    %v7546 = vadd.f32 %v7543, %v7545
    %v7547 = vadd.f32 %v7544, %v7545
    %s7548 = sld [smem:[#allocation2 + $0xc]]
    %s7549 = sld [smem:[#allocation2 + $0xd]]
    %v7550 = vsel %vm7286, %v7282, 0.0
    %v7551 = vsel %vm7288, %v7283, 0.0
    %v7552 = vadd.f32 %v7550, %v7551
    %7553 = vadd.xlane.f32.xlu0 %v7552
    %v7554 = vpop.xlane.xlu0 %7553
    %v7555 = vrot.slane %v7554, 4
    %v7556 = vadd.f32 %v7554, %v7555
    %v7557 = vrot.slane %v7556, 2
    %v7558 = vadd.f32 %v7556, %v7557
    %v7559 = vrot.slane %v7558, 1
    %v7560 = vadd.f32 %v7558, %v7559
    %s7561 = vtos %v7560
    %v7562 = vstv %s7561
    %v7563 = vmul.f32 %v7562, %v7301
    %v7564 = vsub.f32 %v7282, %v7563
    %v7565 = vsub.f32 %v7283, %v7563
    %v7566 = vmul.f32 %v7564, %v7564
    %v7567 = vmul.f32 %v7565, %v7565
    %v7568 = vsel %vm7286, %v7566, 0.0
    %v7569 = vsel %vm7288, %v7567, 0.0
    %v7570 = vadd.f32 %v7568, %v7569
    %7571 = vadd.xlane.f32.xlu0 %v7570
    %v7572 = vpop.xlane.xlu0 %7571
    %v7573 = vrot.slane %v7572, 4
    %v7574 = vadd.f32 %v7572, %v7573
    %v7575 = vrot.slane %v7574, 2
    %v7576 = vadd.f32 %v7574, %v7575
    %v7577 = vrot.slane %v7576, 1
    %v7578 = vadd.f32 %v7576, %v7577
    %s7579 = vtos %v7578
    %v7580 = vstv %s7579
    %v7581 = vmul.f32 %v7580, %v7301
    %v7582 = vadd.f32 %v7581, 1e-05
    %v7583 = vrsqrt.pop %v7582
    %v7584 = vstv %s7548
    %v7585 = vmul.f32 %v7584, %v7583
    %v7586 = vmul.f32 %v7564, %v7585
    %v7587 = vmul.f32 %v7565, %v7585
    %v7588 = vstv %s7549
    %v7589 = vadd.f32 %v7586, %v7588
    %v7590 = vadd.f32 %v7587, %v7588
    %v7591 = vsel %vm7286, %v7328, -inf
    %v7592 = vsel %vm7288, %v7329, -inf
    %v7593 = vmax.f32 %v7591, %v7592
    %v7594 = vrot.slane %v7593, 4
    %v7595 = vmax.f32 %v7593, %v7594
    %v7596 = vrot.slane %v7595, 2
    %v7597 = vmax.f32 %v7595, %v7596
    %v7598 = vrot.slane %v7597, 1
    %v7599 = vmax.f32 %v7597, %v7598
    %v7600 = vsel %vm7286, %v7328, 0.0
    %v7601 = vsel %vm7288, %v7329, 0.0
    %v7602 = vadd.f32 %v7600, %v7601
    %v7603 = vrot.slane %v7602, 4
    %v7604 = vadd.f32 %v7602, %v7603
    %v7605 = vrot.slane %v7604, 2
    %v7606 = vadd.f32 %v7604, %v7605
    %v7607 = vrot.slane %v7606, 1
    %v7608 = vadd.f32 %v7606, %v7607
    %v7609 = vrcp.pop 10.0
    %v7610 = vmul.f32 %v7608, %v7609
    %v7611 = vsel %vm7286, %v7328, inf
    %v7612 = vsel %vm7288, %v7329, inf
    %v7613 = vmin.f32 %v7611, %v7612
    %v7614 = vrot.slane %v7613, 4
    %v7615 = vmin.f32 %v7613, %v7614
    %v7616 = vrot.slane %v7615, 2
    %v7617 = vmin.f32 %v7615, %v7616
    %v7618 = vrot.slane %v7617, 1
    %v7619 = vmin.f32 %v7617, %v7618
    %v7620 = vsel %vm7286, %v7371, -inf
    %v7621 = vsel %vm7288, %v7372, -inf
    %v7622 = vmax.f32 %v7620, %v7621
    %v7623 = vrot.slane %v7622, 4
    %v7624 = vmax.f32 %v7622, %v7623
    %v7625 = vrot.slane %v7624, 2
    %v7626 = vmax.f32 %v7624, %v7625
    %v7627 = vrot.slane %v7626, 1
    %v7628 = vmax.f32 %v7626, %v7627
    %v7629 = vsel %vm7286, %v7371, 0.0
    %v7630 = vsel %vm7288, %v7372, 0.0
    %v7631 = vadd.f32 %v7629, %v7630
    %v7632 = vrot.slane %v7631, 4
    %v7633 = vadd.f32 %v7631, %v7632
    %v7634 = vrot.slane %v7633, 2
    %v7635 = vadd.f32 %v7633, %v7634
    %v7636 = vrot.slane %v7635, 1
    %v7637 = vadd.f32 %v7635, %v7636
    %v7638 = vmul.f32 %v7637, %v7609
    %v7639 = vsel %vm7286, %v7371, inf
    %v7640 = vsel %vm7288, %v7372, inf
    %v7641 = vmin.f32 %v7639, %v7640
    %v7642 = vrot.slane %v7641, 4
    %v7643 = vmin.f32 %v7641, %v7642
    %v7644 = vrot.slane %v7643, 2
    %v7645 = vmin.f32 %v7643, %v7644
    %v7646 = vrot.slane %v7645, 1
    %v7647 = vmin.f32 %v7645, %v7646
    %v7648 = vsel %vm7375, %v7417, -inf
    %v7649 = vsel %vm7377, %v7418, -inf
    %v7650 = vmax.f32 %v7648, %v7649
    %v7651 = vrot.slane %v7650, 4
    %v7652 = vmax.f32 %v7650, %v7651
    %v7653 = vrot.slane %v7652, 2
    %v7654 = vmax.f32 %v7652, %v7653
    %v7655 = vrot.slane %v7654, 1
    %v7656 = vmax.f32 %v7654, %v7655
    %v7657 = vsel %vm7375, %v7417, 0.0
    %v7658 = vsel %vm7377, %v7418, 0.0
    %v7659 = vadd.f32 %v7657, %v7658
    %v7660 = vrot.slane %v7659, 4
    %v7661 = vadd.f32 %v7659, %v7660
    %v7662 = vrot.slane %v7661, 2
    %v7663 = vadd.f32 %v7661, %v7662
    %v7664 = vrot.slane %v7663, 1
    %v7665 = vadd.f32 %v7663, %v7664
    %v7666 = vmul.f32 %v7665, %v7609
    %v7667 = vsel %vm7375, %v7417, inf
    %v7668 = vsel %vm7377, %v7418, inf
    %v7669 = vmin.f32 %v7667, %v7668
    %v7670 = vrot.slane %v7669, 4
    %v7671 = vmin.f32 %v7669, %v7670
    %v7672 = vrot.slane %v7671, 2
    %v7673 = vmin.f32 %v7671, %v7672
    %v7674 = vrot.slane %v7673, 1
    %v7675 = vmin.f32 %v7673, %v7674
    %v7676 = vsel %vm7375, %v7460, -inf
    %v7677 = vsel %vm7377, %v7461, -inf
    %v7678 = vmax.f32 %v7676, %v7677
    %v7679 = vrot.slane %v7678, 4
    %v7680 = vmax.f32 %v7678, %v7679
    %v7681 = vrot.slane %v7680, 2
    %v7682 = vmax.f32 %v7680, %v7681
    %v7683 = vrot.slane %v7682, 1
    %v7684 = vmax.f32 %v7682, %v7683
    %v7685 = vsel %vm7375, %v7460, 0.0
    %v7686 = vsel %vm7377, %v7461, 0.0
    %v7687 = vadd.f32 %v7685, %v7686
    %v7688 = vrot.slane %v7687, 4
    %v7689 = vadd.f32 %v7687, %v7688
    %v7690 = vrot.slane %v7689, 2
    %v7691 = vadd.f32 %v7689, %v7690
    %v7692 = vrot.slane %v7691, 1
    %v7693 = vadd.f32 %v7691, %v7692
    %v7694 = vmul.f32 %v7693, %v7609
    %v7695 = vsel %vm7375, %v7460, inf
    %v7696 = vsel %vm7377, %v7461, inf
    %v7697 = vmin.f32 %v7695, %v7696
    %v7698 = vrot.slane %v7697, 4
    %v7699 = vmin.f32 %v7697, %v7698
    %v7700 = vrot.slane %v7699, 2
    %v7701 = vmin.f32 %v7699, %v7700
    %v7702 = vrot.slane %v7701, 1
    %v7703 = vmin.f32 %v7701, %v7702
    %v7704 = vsel %vm7375, %v7503, -inf
    %v7705 = vsel %vm7377, %v7504, -inf
    %v7706 = vmax.f32 %v7704, %v7705
    %v7707 = vrot.slane %v7706, 4
    %v7708 = vmax.f32 %v7706, %v7707
    %v7709 = vrot.slane %v7708, 2
    %v7710 = vmax.f32 %v7708, %v7709
    %v7711 = vrot.slane %v7710, 1
    %v7712 = vmax.f32 %v7710, %v7711
    %v7713 = vsel %vm7375, %v7503, 0.0
    %v7714 = vsel %vm7377, %v7504, 0.0
    %v7715 = vadd.f32 %v7713, %v7714
    %v7716 = vrot.slane %v7715, 4
    %v7717 = vadd.f32 %v7715, %v7716
    %v7718 = vrot.slane %v7717, 2
    %v7719 = vadd.f32 %v7717, %v7718
    %v7720 = vrot.slane %v7719, 1
    %v7721 = vadd.f32 %v7719, %v7720
    %v7722 = vmul.f32 %v7721, %v7609
    %v7723 = vsel %vm7375, %v7503, inf
    %v7724 = vsel %vm7377, %v7504, inf
    %v7725 = vmin.f32 %v7723, %v7724
    %v7726 = vrot.slane %v7725, 4
    %v7727 = vmin.f32 %v7725, %v7726
    %v7728 = vrot.slane %v7727, 2
    %v7729 = vmin.f32 %v7727, %v7728
    %v7730 = vrot.slane %v7729, 1
    %v7731 = vmin.f32 %v7729, %v7730
    %v7732 = vsel %vm7375, %v7546, -inf
    %v7733 = vsel %vm7377, %v7547, -inf
    %v7734 = vmax.f32 %v7732, %v7733
    %v7735 = vrot.slane %v7734, 4
    %v7736 = vmax.f32 %v7734, %v7735
    %v7737 = vrot.slane %v7736, 2
    %v7738 = vmax.f32 %v7736, %v7737
    %v7739 = vrot.slane %v7738, 1
    %v7740 = vmax.f32 %v7738, %v7739
    %v7741 = vsel %vm7375, %v7546, 0.0
    %v7742 = vsel %vm7377, %v7547, 0.0
    %v7743 = vadd.f32 %v7741, %v7742
    %v7744 = vrot.slane %v7743, 4
    %v7745 = vadd.f32 %v7743, %v7744
    %v7746 = vrot.slane %v7745, 2
    %v7747 = vadd.f32 %v7745, %v7746
    %v7748 = vrot.slane %v7747, 1
    %v7749 = vadd.f32 %v7747, %v7748
    %v7750 = vmul.f32 %v7749, %v7609
    %v7751 = vsel %vm7375, %v7546, inf
    %v7752 = vsel %vm7377, %v7547, inf
    %v7753 = vmin.f32 %v7751, %v7752
    %v7754 = vrot.slane %v7753, 4
    %v7755 = vmin.f32 %v7753, %v7754
    %v7756 = vrot.slane %v7755, 2
    %v7757 = vmin.f32 %v7755, %v7756
    %v7758 = vrot.slane %v7757, 1
    %v7759 = vmin.f32 %v7757, %v7758
    %v7760 = vsel %vm7286, %v7589, -inf
    %v7761 = vsel %vm7288, %v7590, -inf
    %v7762 = vmax.f32 %v7760, %v7761
    %v7763 = vrot.slane %v7762, 4
    %v7764 = vmax.f32 %v7762, %v7763
    %v7765 = vrot.slane %v7764, 2
    %v7766 = vmax.f32 %v7764, %v7765
    %v7767 = vrot.slane %v7766, 1
    %v7768 = vmax.f32 %v7766, %v7767
    %v7769 = vsel %vm7286, %v7589, 0.0
    %v7770 = vsel %vm7288, %v7590, 0.0
    %v7771 = vadd.f32 %v7769, %v7770
    %v7772 = vrot.slane %v7771, 4
    %v7773 = vadd.f32 %v7771, %v7772
    %v7774 = vrot.slane %v7773, 2
    %v7775 = vadd.f32 %v7773, %v7774
    %v7776 = vrot.slane %v7775, 1
    %v7777 = vadd.f32 %v7775, %v7776
    %v7778 = vmul.f32 %v7777, %v7609
    %v7779 = vsel %vm7286, %v7589, inf
    %v7780 = vsel %vm7288, %v7590, inf
    %v7781 = vmin.f32 %v7779, %v7780
    %v7782 = vrot.slane %v7781, 4
    %v7783 = vmin.f32 %v7781, %v7782
    %v7784 = vrot.slane %v7783, 2
    %v7785 = vmin.f32 %v7783, %v7784
    %v7786 = vrot.slane %v7785, 1
    %v7787 = vmin.f32 %v7785, %v7786
    %v7788 = vsel %vm7286, %v7599, 0.0
    %7789 = vadd.xlane.f32.xlu0 %v7788
    %v7790 = vpop.xlane.xlu0 %7789
    %s7791 = vtos %v7790
    %s7792 = sadd.f32 %s7791, 0.0
    %v7793 = vsel %vm7286, %v7628, 0.0
    %7794 = vadd.xlane.f32.xlu0 %v7793
    %v7795 = vpop.xlane.xlu0 %7794
    %s7796 = vtos %v7795
    %s7797 = sadd.f32 %s7792, %s7796
    %v7798 = vsel %vm7375, %v7656, 0.0
    %7799 = vadd.xlane.f32.xlu0 %v7798
    %v7800 = vpop.xlane.xlu0 %7799
    %s7801 = vtos %v7800
    %s7802 = sadd.f32 %s7797, %s7801
    %v7803 = vsel %vm7375, %v7684, 0.0
    %7804 = vadd.xlane.f32.xlu0 %v7803
    %v7805 = vpop.xlane.xlu0 %7804
    %s7806 = vtos %v7805
    %s7807 = sadd.f32 %s7802, %s7806
    %v7808 = vsel %vm7375, %v7712, 0.0
    %7809 = vadd.xlane.f32.xlu0 %v7808
    %v7810 = vpop.xlane.xlu0 %7809
    %s7811 = vtos %v7810
    %s7812 = sadd.f32 %s7807, %s7811
    %v7813 = vsel %vm7375, %v7740, 0.0
    %7814 = vadd.xlane.f32.xlu0 %v7813
    %v7815 = vpop.xlane.xlu0 %7814
    %s7816 = vtos %v7815
    %s7817 = sadd.f32 %s7812, %s7816
    %v7818 = vsel %vm7286, %v7768, 0.0
    %7819 = vadd.xlane.f32.xlu0 %v7818
    %v7820 = vpop.xlane.xlu0 %7819
    %s7821 = vtos %v7820
    %s7822 = sadd.f32 %s7817, %s7821
    %v7823 = vrcp.pop 342.0
    %s7824 = vtos %v7823
    %s7825 = smul.f32 %s7822, %s7824
    %v7826 = vstv %s7825
    %v7827 = vsub.f32 %v7599, %v7826
    %v7828 = vmul.f32 %v7827, %v7827
    %v7829 = vsel %vm7286, %v7828, 0.0
    %7830 = vadd.xlane.f32.xlu0 %v7829
    %v7831 = vpop.xlane.xlu0 %7830
    %s7832 = vtos %v7831
    %s7833 = sadd.f32 %s7832, 0.0
    %v7834 = vsub.f32 %v7628, %v7826
    %v7835 = vmul.f32 %v7834, %v7834
    %v7836 = vsel %vm7286, %v7835, 0.0
    %7837 = vadd.xlane.f32.xlu0 %v7836
    %v7838 = vpop.xlane.xlu0 %7837
    %s7839 = vtos %v7838
    %s7840 = sadd.f32 %s7833, %s7839
    %v7841 = vsub.f32 %v7656, %v7826
    %v7842 = vmul.f32 %v7841, %v7841
    %v7843 = vsel %vm7375, %v7842, 0.0
    %7844 = vadd.xlane.f32.xlu0 %v7843
    %v7845 = vpop.xlane.xlu0 %7844
    %s7846 = vtos %v7845
    %s7847 = sadd.f32 %s7840, %s7846
    %v7848 = vsub.f32 %v7684, %v7826
    %v7849 = vmul.f32 %v7848, %v7848
    %v7850 = vsel %vm7375, %v7849, 0.0
    %7851 = vadd.xlane.f32.xlu0 %v7850
    %v7852 = vpop.xlane.xlu0 %7851
    %s7853 = vtos %v7852
    %s7854 = sadd.f32 %s7847, %s7853
    %v7855 = vsub.f32 %v7712, %v7826
    %v7856 = vmul.f32 %v7855, %v7855
    %v7857 = vsel %vm7375, %v7856, 0.0
    %7858 = vadd.xlane.f32.xlu0 %v7857
    %v7859 = vpop.xlane.xlu0 %7858
    %s7860 = vtos %v7859
    %s7861 = sadd.f32 %s7854, %s7860
    %v7862 = vsub.f32 %v7740, %v7826
    %v7863 = vmul.f32 %v7862, %v7862
    %v7864 = vsel %vm7375, %v7863, 0.0
    %7865 = vadd.xlane.f32.xlu0 %v7864
    %v7866 = vpop.xlane.xlu0 %7865
    %s7867 = vtos %v7866
    %s7868 = sadd.f32 %s7861, %s7867
    %v7869 = vsub.f32 %v7768, %v7826
    %v7870 = vmul.f32 %v7869, %v7869
    %v7871 = vsel %vm7286, %v7870, 0.0
    %7872 = vadd.xlane.f32.xlu0 %v7871
    %v7873 = vpop.xlane.xlu0 %7872
    %s7874 = vtos %v7873
    %s7875 = sadd.f32 %s7868, %s7874
    %v7876 = vrcp.pop 342.0
    %s7877 = vtos %v7876
    %s7878 = smul.f32 %s7875, %s7877
    %s7879 = sld [smem:[#allocation2 + $0xe]]
    %s7880 = sld [smem:[#allocation2 + $0xf]]
    %s7881 = sadd.f32 %s7878, 1e-05
    %v7882 = vstv %s7881
    %v7883 = vrsqrt.pop %v7882
    %s7884 = vtos %v7883
    %s7885 = smul.f32 %s7879, %s7884
    %v7886 = vstv %s7885
    %v7887 = vmul.f32 %v7827, %v7886
    %v7888 = vstv %s7880
    %v7889 = vadd.f32 %v7887, %v7888
    %vm7890 = vcmask 729088
    %7891 = vst.msk [vmem:[#allocation6] sm:$0x1] %vm7890, %v7889
    %v7892 = vmul.f32 %v7834, %v7886
    %v7893 = vadd.f32 %v7892, %v7888
    %7894 = vst.msk [vmem:[#allocation6 + $0x1] sm:$0x1] %vm7890, %v7893
    %v7895 = vmul.f32 %v7841, %v7886
    %v7896 = vadd.f32 %v7895, %v7888
    %vm7897 = vcmask 139264
    %7898 = vst.msk [vmem:[#allocation5] sm:$0x1] %vm7897, %v7896
    %v7899 = vmul.f32 %v7848, %v7886
    %v7900 = vadd.f32 %v7899, %v7888
    %7901 = vst.msk [vmem:[#allocation5 + $0x1] sm:$0x1] %vm7897, %v7900
    %v7902 = vmul.f32 %v7855, %v7886
    %v7903 = vadd.f32 %v7902, %v7888
    %7904 = vst.msk [vmem:[#allocation5 + $0x2] sm:$0x1] %vm7897, %v7903
    %v7905 = vmul.f32 %v7862, %v7886
    %v7906 = vadd.f32 %v7905, %v7888
    %7907 = vst.msk [vmem:[#allocation5 + $0x3] sm:$0x1] %vm7897, %v7906
    %v7908 = vmul.f32 %v7869, %v7886
    %v7909 = vadd.f32 %v7908, %v7888
    %7910 = vst.msk [vmem:[#allocation6 + $0x2] sm:$0x1] %vm7890, %v7909
    %v7911 = vsel %vm7286, %v7610, 0.0
    %7912 = vadd.xlane.f32.xlu0 %v7911
    %v7913 = vpop.xlane.xlu0 %7912
    %s7914 = vtos %v7913
    %s7915 = sadd.f32 %s7914, 0.0
    %v7916 = vsel %vm7286, %v7638, 0.0
    %7917 = vadd.xlane.f32.xlu0 %v7916
    %v7918 = vpop.xlane.xlu0 %7917
    %s7919 = vtos %v7918
    %s7920 = sadd.f32 %s7915, %s7919
    %v7921 = vsel %vm7375, %v7666, 0.0
    %7922 = vadd.xlane.f32.xlu0 %v7921
    %v7923 = vpop.xlane.xlu0 %7922
    %s7924 = vtos %v7923
    %s7925 = sadd.f32 %s7920, %s7924
    %v7926 = vsel %vm7375, %v7694, 0.0
    %7927 = vadd.xlane.f32.xlu0 %v7926
    %v7928 = vpop.xlane.xlu0 %7927
    %s7929 = vtos %v7928
    %s7930 = sadd.f32 %s7925, %s7929
    %v7931 = vsel %vm7375, %v7722, 0.0
    %7932 = vadd.xlane.f32.xlu0 %v7931
    %v7933 = vpop.xlane.xlu0 %7932
    %s7934 = vtos %v7933
    %s7935 = sadd.f32 %s7930, %s7934
    %v7936 = vsel %vm7375, %v7750, 0.0
    %7937 = vadd.xlane.f32.xlu0 %v7936
    %v7938 = vpop.xlane.xlu0 %7937
    %s7939 = vtos %v7938
    %s7940 = sadd.f32 %s7935, %s7939
    %v7941 = vsel %vm7286, %v7778, 0.0
    %7942 = vadd.xlane.f32.xlu0 %v7941
    %v7943 = vpop.xlane.xlu0 %7942
    %s7944 = vtos %v7943
    %s7945 = sadd.f32 %s7940, %s7944
    %v7946 = vrcp.pop 342.0
    %s7947 = vtos %v7946
    %s7948 = smul.f32 %s7945, %s7947
    %v7949 = vstv %s7948
    %v7950 = vsub.f32 %v7610, %v7949
    %v7951 = vmul.f32 %v7950, %v7950
    %v7952 = vsel %vm7286, %v7951, 0.0
    %7953 = vadd.xlane.f32.xlu0 %v7952
    %v7954 = vpop.xlane.xlu0 %7953
    %s7955 = vtos %v7954
    %s7956 = sadd.f32 %s7955, 0.0
    %v7957 = vsub.f32 %v7638, %v7949
    %v7958 = vmul.f32 %v7957, %v7957
    %v7959 = vsel %vm7286, %v7958, 0.0
    %7960 = vadd.xlane.f32.xlu0 %v7959
    %v7961 = vpop.xlane.xlu0 %7960
    %s7962 = vtos %v7961
    %s7963 = sadd.f32 %s7956, %s7962
    %v7964 = vsub.f32 %v7666, %v7949
    %v7965 = vmul.f32 %v7964, %v7964
    %v7966 = vsel %vm7375, %v7965, 0.0
    %7967 = vadd.xlane.f32.xlu0 %v7966
    %v7968 = vpop.xlane.xlu0 %7967
    %s7969 = vtos %v7968
    %s7970 = sadd.f32 %s7963, %s7969
    %v7971 = vsub.f32 %v7694, %v7949
    %v7972 = vmul.f32 %v7971, %v7971
    %v7973 = vsel %vm7375, %v7972, 0.0
    %7974 = vadd.xlane.f32.xlu0 %v7973
    %v7975 = vpop.xlane.xlu0 %7974
    %s7976 = vtos %v7975
    %s7977 = sadd.f32 %s7970, %s7976
    %v7978 = vsub.f32 %v7722, %v7949
    %v7979 = vmul.f32 %v7978, %v7978
    %v7980 = vsel %vm7375, %v7979, 0.0
    %7981 = vadd.xlane.f32.xlu0 %v7980
    %v7982 = vpop.xlane.xlu0 %7981
    %s7983 = vtos %v7982
    %s7984 = sadd.f32 %s7977, %s7983
    %v7985 = vsub.f32 %v7750, %v7949
    %v7986 = vmul.f32 %v7985, %v7985
    %v7987 = vsel %vm7375, %v7986, 0.0
    %7988 = vadd.xlane.f32.xlu0 %v7987
    %v7989 = vpop.xlane.xlu0 %7988
    %s7990 = vtos %v7989
    %s7991 = sadd.f32 %s7984, %s7990
    %v7992 = vsub.f32 %v7778, %v7949
    %v7993 = vmul.f32 %v7992, %v7992
    %v7994 = vsel %vm7286, %v7993, 0.0
    %7995 = vadd.xlane.f32.xlu0 %v7994
    %v7996 = vpop.xlane.xlu0 %7995
    %s7997 = vtos %v7996
    %s7998 = sadd.f32 %s7991, %s7997
    %v7999 = vrcp.pop 342.0
    %s8000 = vtos %v7999
    %s8001 = smul.f32 %s7998, %s8000
    %s8002 = sld [smem:[#allocation2 + $0x10]]
    %s8003 = sld [smem:[#allocation2 + $0x11]]
    %s8004 = sadd.f32 %s8001, 1e-05
    %v8005 = vstv %s8004
    %v8006 = vrsqrt.pop %v8005
    %s8007 = vtos %v8006
    %s8008 = smul.f32 %s8002, %s8007
    %v8009 = vstv %s8008
    %v8010 = vmul.f32 %v7950, %v8009
    %v8011 = vstv %s8003
    %v8012 = vadd.f32 %v8010, %v8011
    %s8013 = scalar_lea.vmem [#allocation6], 4
    %8014 = vst.msk [vmem:[%s8013] sm:$0x1] %vm7890, %v8012
    %v8015 = vmul.f32 %v7957, %v8009
    %v8016 = vadd.f32 %v8015, %v8011
    %8017 = vst.msk [vmem:[%s8013 + $0x1] sm:$0x1] %vm7890, %v8016
    %v8018 = vmul.f32 %v7964, %v8009
    %v8019 = vadd.f32 %v8018, %v8011
    %s8020 = scalar_lea.vmem [#allocation5], 4
    %8021 = vst.msk [vmem:[%s8020] sm:$0x1] %vm7897, %v8019
    %v8022 = vmul.f32 %v7971, %v8009
    %v8023 = vadd.f32 %v8022, %v8011
    %8024 = vst.msk [vmem:[%s8020 + $0x1] sm:$0x1] %vm7897, %v8023
    %v8025 = vmul.f32 %v7978, %v8009
    %v8026 = vadd.f32 %v8025, %v8011
    %8027 = vst.msk [vmem:[%s8020 + $0x2] sm:$0x1] %vm7897, %v8026
    %v8028 = vmul.f32 %v7985, %v8009
    %v8029 = vadd.f32 %v8028, %v8011
    %8030 = vst.msk [vmem:[%s8020 + $0x3] sm:$0x1] %vm7897, %v8029
    %v8031 = vmul.f32 %v7992, %v8009
    %v8032 = vadd.f32 %v8031, %v8011
    %8033 = vst.msk [vmem:[%s8013 + $0x2] sm:$0x1] %vm7890, %v8032
    %v8034 = vsel %vm7286, %v7619, 0.0
    %8035 = vadd.xlane.f32.xlu0 %v8034
    %v8036 = vpop.xlane.xlu0 %8035
    %s8037 = vtos %v8036
    %s8038 = sadd.f32 %s8037, 0.0
    %v8039 = vsel %vm7286, %v7647, 0.0
    %8040 = vadd.xlane.f32.xlu0 %v8039
    %v8041 = vpop.xlane.xlu0 %8040
    %s8042 = vtos %v8041
    %s8043 = sadd.f32 %s8038, %s8042
    %v8044 = vsel %vm7375, %v7675, 0.0
    %8045 = vadd.xlane.f32.xlu0 %v8044
    %v8046 = vpop.xlane.xlu0 %8045
    %s8047 = vtos %v8046
    %s8048 = sadd.f32 %s8043, %s8047
    %v8049 = vsel %vm7375, %v7703, 0.0
    %8050 = vadd.xlane.f32.xlu0 %v8049
    %v8051 = vpop.xlane.xlu0 %8050
    %s8052 = vtos %v8051
    %s8053 = sadd.f32 %s8048, %s8052
    %v8054 = vsel %vm7375, %v7731, 0.0
    %8055 = vadd.xlane.f32.xlu0 %v8054
    %v8056 = vpop.xlane.xlu0 %8055
    %s8057 = vtos %v8056
    %s8058 = sadd.f32 %s8053, %s8057
    %v8059 = vsel %vm7375, %v7759, 0.0
    %8060 = vadd.xlane.f32.xlu0 %v8059
    %v8061 = vpop.xlane.xlu0 %8060
    %s8062 = vtos %v8061
    %s8063 = sadd.f32 %s8058, %s8062
    %v8064 = vsel %vm7286, %v7787, 0.0
    %8065 = vadd.xlane.f32.xlu0 %v8064
    %v8066 = vpop.xlane.xlu0 %8065
    %s8067 = vtos %v8066
    %s8068 = sadd.f32 %s8063, %s8067
    %v8069 = vrcp.pop 342.0
    %s8070 = vtos %v8069
    %s8071 = smul.f32 %s8068, %s8070
    %v8072 = vstv %s8071
    %v8073 = vsub.f32 %v7619, %v8072
    %v8074 = vmul.f32 %v8073, %v8073
    %v8075 = vsel %vm7286, %v8074, 0.0
    %8076 = vadd.xlane.f32.xlu0 %v8075
    %v8077 = vpop.xlane.xlu0 %8076
    %s8078 = vtos %v8077
    %s8079 = sadd.f32 %s8078, 0.0
    %v8080 = vsub.f32 %v7647, %v8072
    %v8081 = vmul.f32 %v8080, %v8080
    %v8082 = vsel %vm7286, %v8081, 0.0
    %8083 = vadd.xlane.f32.xlu0 %v8082
    %v8084 = vpop.xlane.xlu0 %8083
    %s8085 = vtos %v8084
    %s8086 = sadd.f32 %s8079, %s8085
    %v8087 = vsub.f32 %v7675, %v8072
    %v8088 = vmul.f32 %v8087, %v8087
    %v8089 = vsel %vm7375, %v8088, 0.0
    %8090 = vadd.xlane.f32.xlu0 %v8089
    %v8091 = vpop.xlane.xlu0 %8090
    %s8092 = vtos %v8091
    %s8093 = sadd.f32 %s8086, %s8092
    %v8094 = vsub.f32 %v7703, %v8072
    %v8095 = vmul.f32 %v8094, %v8094
    %v8096 = vsel %vm7375, %v8095, 0.0
    %8097 = vadd.xlane.f32.xlu0 %v8096
    %v8098 = vpop.xlane.xlu0 %8097
    %s8099 = vtos %v8098
    %s8100 = sadd.f32 %s8093, %s8099
    %v8101 = vsub.f32 %v7731, %v8072
    %v8102 = vmul.f32 %v8101, %v8101
    %v8103 = vsel %vm7375, %v8102, 0.0
    %8104 = vadd.xlane.f32.xlu0 %v8103
    %v8105 = vpop.xlane.xlu0 %8104
    %s8106 = vtos %v8105
    %s8107 = sadd.f32 %s8100, %s8106
    %v8108 = vsub.f32 %v7759, %v8072
    %v8109 = vmul.f32 %v8108, %v8108
    %v8110 = vsel %vm7375, %v8109, 0.0
    %8111 = vadd.xlane.f32.xlu0 %v8110
    %v8112 = vpop.xlane.xlu0 %8111
    %s8113 = vtos %v8112
    %s8114 = sadd.f32 %s8107, %s8113
    %v8115 = vsub.f32 %v7787, %v8072
    %v8116 = vmul.f32 %v8115, %v8115
    %v8117 = vsel %vm7286, %v8116, 0.0
    %8118 = vadd.xlane.f32.xlu0 %v8117
    %v8119 = vpop.xlane.xlu0 %8118
    %s8120 = vtos %v8119
    %s8121 = sadd.f32 %s8114, %s8120
    %v8122 = vrcp.pop 342.0
    %s8123 = vtos %v8122
    %s8124 = smul.f32 %s8121, %s8123
    %s8125 = sld [smem:[#allocation2 + $0x12]]
    %s8126 = sld [smem:[#allocation2 + $0x13]]
    %s8127 = sadd.f32 %s8124, 1e-05
    %v8128 = vstv %s8127
    %v8129 = vrsqrt.pop %v8128
    %s8130 = vtos %v8129
    %s8131 = smul.f32 %s8125, %s8130
    %v8132 = vstv %s8131
    %v8133 = vmul.f32 %v8073, %v8132
    %v8134 = vstv %s8126
    %v8135 = vadd.f32 %v8133, %v8134
    %s8136 = scalar_lea.vmem [#allocation6], 8
    %8137 = vst.msk [vmem:[%s8136] sm:$0x1] %vm7890, %v8135
    %v8138 = vmul.f32 %v8080, %v8132
    %v8139 = vadd.f32 %v8138, %v8134
    %8140 = vst.msk [vmem:[%s8136 + $0x1] sm:$0x1] %vm7890, %v8139
    %v8141 = vmul.f32 %v8087, %v8132
    %v8142 = vadd.f32 %v8141, %v8134
    %s8143 = scalar_lea.vmem [#allocation5], 8
    %8144 = vst.msk [vmem:[%s8143] sm:$0x1] %vm7897, %v8142
    %v8145 = vmul.f32 %v8094, %v8132
    %v8146 = vadd.f32 %v8145, %v8134
    %8147 = vst.msk [vmem:[%s8143 + $0x1] sm:$0x1] %vm7897, %v8146
    %v8148 = vmul.f32 %v8101, %v8132
    %v8149 = vadd.f32 %v8148, %v8134
    %8150 = vst.msk [vmem:[%s8143 + $0x2] sm:$0x1] %vm7897, %v8149
    %v8151 = vmul.f32 %v8108, %v8132
    %v8152 = vadd.f32 %v8151, %v8134
    %8153 = vst.msk [vmem:[%s8143 + $0x3] sm:$0x1] %vm7897, %v8152
    %v8154 = vmul.f32 %v8115, %v8132
    %v8155 = vadd.f32 %v8154, %v8134
    %8156 = vst.msk [vmem:[%s8136 + $0x2] sm:$0x1] %vm7890, %v8155
    // Predicated region
    $region38: #{tpu_custom_call.1} parent=1 // pred_check
      _
    $region39: #{tpu_custom_call.1} parent=1 // pred_check_branch
      %8158 = sbr.rel (0) target = $region41
    $region40: #{tpu_custom_call.1} parent=1 // pred_region
      %s8160 = ssub.s32 192, 192
      %8161 = vsyncadd [#allocation3], %s8160
      %s8162 = sshll.u32 [#allocation5], 4
      %s8163 = int_to_ptr.vmem [resolvable:$true] %s8162
      %8168 = dma.vmem_to_hbm [thread:$0]  %s8163, 192, %s8, [#allocation3], 64, 64, 4
    $region41: #{tpu_custom_call.1} parent=1 // pred_fallthru
      _
    // Predicated region
    $region42: #{tpu_custom_call.1} parent=1 // pred_check
      _
    $region43: #{tpu_custom_call.1} parent=1 // pred_check_branch
      %8170 = sbr.rel (0) target = $region45
    $region44: #{tpu_custom_call.1} parent=1 // pred_region
      %s8172 = ssub.s32 192, 192
      %8173 = vsyncadd [#allocation7], %s8172
      %s8174 = sshll.u32 [#allocation6], 4
      %s8175 = int_to_ptr.vmem [resolvable:$true] %s8174
      %8180 = dma.vmem_to_hbm [thread:$0]  %s8175, 192, %s9, [#allocation7], 64, 64, 4
    $region45: #{tpu_custom_call.1} parent=1 // pred_fallthru
      _
    // Predicated region
    $region46: #{tpu_custom_call.1} parent=1 // pred_check
      _
    $region47: #{tpu_custom_call.1} parent=1 // pred_check_branch
      %8182 = sbr.rel (0) target = $region49
    $region48: #{tpu_custom_call.1} parent=1 // pred_region
      %8183 = dma.done [#allocation3], 192
    $region49: #{tpu_custom_call.1} parent=1 // pred_fallthru
      _
    // Predicated region
    $region50: #{tpu_custom_call.1} parent=1 // pred_check
      _
    $region51: #{tpu_custom_call.1} parent=1 // pred_check_branch
      %8185 = sbr.rel (0) target = $region53
    $region52: #{tpu_custom_call.1} parent=1 // pred_region
      %8186 = dma.done [#allocation7], 192
    $region53: #{tpu_custom_call.1} parent=1 // pred_fallthru
      _
    %8187 = vsyncpa [#allocation3], 1
    %8188 = vsyncpa [#allocation7], 1
    %8189 = vsyncpa [#allocation4], 1

</llo_original>
